<compile_context>
chip_gen: v7x
topology: tpu7x:2x2x1
jax: 0.10.0
libtpu: 0.0.40
codegen_flags: <defaults>
</compile_context>

<pallas_src>
import functools

import jax
import jax.numpy as jnp
from jax.experimental import pallas as pl
from jax.experimental.pallas import tpu as pltpu


LANE = 128   # lane width: HBM-visible outputs are padded to a multiple of this
SUB = 8      # f32 sublane tile


def _round_up(n, m):
    return ((n + m - 1) // m) * m


# ----------------------------------------------------------------------------- kernel

def _mlp_block(x, w1, b1, g, be, w2, b2, n_per_view):
    """Linear -> BatchNorm1d (per-view batch stats, eps=1e-5) -> ReLU -> Linear.

    x: (2N, Din) f32; rows [:N] are view 1 and rows [N:] are view 2.  BN stats
    are computed per view (the PyTorch module runs the MLP once per view).
    N is a multiple of 8 so the half-slices stay sublane aligned (no masks).
    """
    h = jnp.dot(x.astype(jnp.bfloat16), w1,
                preferred_element_type=jnp.float32) + b1

    def bn(hv):
        m = jnp.mean(hv, axis=0, keepdims=True)
        d = hv - m
        v = jnp.mean(d * d, axis=0, keepdims=True)   # biased var (training mode)
        return d * jax.lax.rsqrt(v + 1e-5)

    hn = jnp.concatenate([bn(h[:n_per_view]), bn(h[n_per_view:])], axis=0)
    hn = jnp.maximum(hn * g + be, 0.0)                # ReLU (use_gelu=False); drop_p=0
    return jnp.dot(hn.astype(jnp.bfloat16), w2,
                   preferred_element_type=jnp.float32) + b2


def _byol_kernel(H, W,
                 x_ref, mask_ref,
                 scw_ref, scb_ref, tcw_ref, tcb_ref,
                 pw1, pb1, pg, pbe, pw2, pb2,          # student projector
                 tw1, tb1, tg, tbe, tw2, tb2,          # teacher projector
                 qw1, qb1, qg, qbe, qw2, qb2,          # predictor q
                 logits_ref, targ_ref,
                 pooled_s_ref, pooled_t_ref):
    """One grid step = conv+ReLU+pool of ONE padded image (student and teacher
    backbones); the three MLPs run on the accumulated pooled scratch at the
    last step only."""
    i = pl.program_id(0)
    x2d = x_ref[0]                                     # (S_pad, Cp) f32, one padded image
    s_pad = x2d.shape[0]
    wp2 = W + 2

    def conv_pool(cw_ref, cb_ref):
        # In-VMEM im2col: each 3x3 tap is a flat-row shift of the padded image.
        # Wrap-around from the roll only lands on border/pad rows, which the
        # pooling mask zeroes out, so valid outputs are exact.
        acc = jnp.zeros((s_pad, cw_ref.shape[-1]), jnp.float32)
        for dy in range(3):
            for dx in range(3):
                off = (dy - 1) * wp2 + (dx - 1)        # static flat-row offset
                tap = x2d if off == 0 else pltpu.roll(x2d, (-off) % s_pad, 0)
                acc = acc + jnp.dot(tap.astype(jnp.bfloat16), cw_ref[dy * 3 + dx],
                                    preferred_element_type=jnp.float32)
        act = jnp.maximum(acc + cb_ref[...], 0.0)
        # mask holds 1/(H*W) on interior rows, 0 on border/pad rows
        # -> masked global average pool in one reduction.
        return jnp.sum(act * mask_ref[...], axis=0, keepdims=True)    # (1, F)

    pooled_s_ref[pl.ds(i, 1), :] = conv_pool(scw_ref, scb_ref)        # student backbone
    pooled_t_ref[pl.ds(i, 1), :] = conv_pool(tcw_ref, tcb_ref)        # teacher backbone

    @pl.when(i == pl.num_programs(0) - 1)
    def _():
        n_view = pooled_s_ref.shape[0] // 2
        proj = _mlp_block(pooled_s_ref[...], pw1[...], pb1[...], pg[...], pbe[...],
                          pw2[...], pb2[...], n_view)                  # student projector
        targ = _mlp_block(pooled_t_ref[...], tw1[...], tb1[...], tg[...], tbe[...],
                          tw2[...], tb2[...], n_view)                  # teacher projector
        logits = _mlp_block(proj, qw1[...], qb1[...], qg[...], qbe[...],
                            qw2[...], qb2[...], n_view)                # predictor q
        logits_ref[...] = logits.astype(logits_ref.dtype)
        targ_ref[...] = targ.astype(targ_ref.dtype)


# ----------------------------------------------------------------------------- wrapper

def _full_spec(a):
    nd = a.ndim
    return pl.BlockSpec(a.shape, lambda i, _nd=nd: (0,) * _nd)


def byol_forward(x1, x2, params, *, img_hw, proj_dim):
    """Returns (logits_1, logits_2, targ_1, targ_2) as in BYOL.forward."""
    s_conv_w, s_conv_b, s_proj, t_conv_w, t_conv_b, t_proj, q_mlp = params
    H, W = img_hw
    n = x1.shape[0]
    b2 = 2 * n
    cin = x1.shape[1]
    cp = s_conv_w.shape[1]            # channel dim padded to one sublane tile
    feat = s_conv_w.shape[2]
    dh = s_proj[0].shape[1]
    pp = s_proj[4].shape[1]           # lane-padded projection dim
    s = (H + 2) * (W + 2)
    s_pad = _round_up(s, SUB)

    # Cheap wrapper glue (no 9x im2col replication): NCHW -> NHWC, zero-pad the
    # spatial border (+1) and the channels (cin -> cp), flatten each padded
    # image to (S_pad, cp) rows.  This is the only image HBM stream.
    x = jnp.concatenate([x1, x2], axis=0)                      # (2N, C, H, W)
    x = jnp.transpose(x, (0, 2, 3, 1))                         # NHWC
    x = jnp.pad(x, ((0, 0), (1, 1), (1, 1), (0, cp - cin)))
    x = x.reshape(b2, s, cp)
    x = jnp.pad(x, ((0, 0), (0, s_pad - s), (0, 0)))           # row-pad to sublane mult.

    # Valid-pixel mask with the 1/(H*W) of the global average pool folded in.
    idx = jnp.arange(s_pad)
    r, c = idx // (W + 2), idx % (W + 2)
    valid = (idx < s) & (r >= 1) & (r <= H) & (c >= 1) & (c <= W)
    pool_mask = (valid.astype(jnp.float32) / float(H * W)).reshape(s_pad, 1)

    inputs = (x, pool_mask, s_conv_w, s_conv_b, t_conv_w, t_conv_b,
              *s_proj, *t_proj, *q_mlp)

    in_specs = [pl.BlockSpec((1, s_pad, cp), lambda i: (i, 0, 0))]   # image: tiled per step
    in_specs += [_full_spec(a) for a in inputs[1:]]                  # weights: resident

    conv_flops = 2 * b2 * 2 * 9 * s_pad * cp * feat                  # student + teacher
    mlp_flops = 2 * 2 * b2 * (feat * dh + dh * pp)                   # both projectors
    mlp_flops += 2 * b2 * (pp * dh + dh * pp)                        # predictor q
    nbytes = sum(a.size * a.dtype.itemsize for a in inputs) + 2 * b2 * pp * 4
    cost = pl.CostEstimate(flops=int(conv_flops + mlp_flops),
                           transcendentals=int(6 * dh),
                           bytes_accessed=int(nbytes))

    logits_p, targ_p = pl.pallas_call(
        functools.partial(_byol_kernel, H, W),
        grid=(b2,),
        in_specs=in_specs,
        out_specs=(pl.BlockSpec((b2, pp), lambda i: (0, 0)),
                   pl.BlockSpec((b2, pp), lambda i: (0, 0))),
        out_shape=(jax.ShapeDtypeStruct((b2, pp), jnp.float32),
                   jax.ShapeDtypeStruct((b2, pp), jnp.float32)),
        scratch_shapes=[pltpu.VMEM((b2, feat), jnp.float32),   # pooled student feats
                        pltpu.VMEM((b2, feat), jnp.float32)],  # pooled teacher feats
        compiler_params=pltpu.CompilerParams(
            # "arbitrary": the last step reads the pooled scratch written by all
            # previous steps (a per-core scratch carry, so no megacore split here).
            dimension_semantics=("arbitrary",),
            vmem_limit_bytes=32 * 1024 * 1024),
        cost_estimate=cost,
    )(*inputs)

    # Outputs are lane-dense (pp = 128); slice back to the logical proj_dim.
    logits_1, logits_2 = logits_p[:n, :proj_dim], logits_p[n:, :proj_dim]
    targ_1, targ_2 = targ_p[:n, :proj_dim], targ_p[n:, :proj_dim]
    return logits_1, logits_2, targ_1, targ_2


# ----------------------------------------------------------------------------- params

def _make_mlp_params(key, din, dh, dout, *, din_pad=None, dout_pad=None):
    """Linear(din->dh) / BN(dh) / ReLU / Linear(dh->dout); zero-pad only where needed."""
    din_pad = din if din_pad is None else din_pad
    dout_pad = dout if dout_pad is None else dout_pad
    k1, k2 = jax.random.split(key)
    w1 = jax.random.normal(k1, (din, dh), jnp.float32) * 0.05
    w1 = jnp.pad(w1, ((0, din_pad - din), (0, 0))).astype(jnp.bfloat16)
    b1 = jnp.zeros((1, dh), jnp.float32)
    gamma = jnp.ones((1, dh), jnp.float32)
    beta = jnp.zeros((1, dh), jnp.float32)
    w2 = jax.random.normal(k2, (dh, dout), jnp.float32) * 0.05
    w2 = jnp.pad(w2, ((0, 0), (0, dout_pad - dout))).astype(jnp.bfloat16)
    b2 = jnp.zeros((1, dout_pad), jnp.float32)
    return (w1, b1, gamma, beta, w2, b2)


def _make_conv_params(key, cin, cp, feat):
    w = jax.random.normal(key, (3, 3, cin, feat), jnp.float32) * 0.1
    w = jnp.pad(w, ((0, 0), (0, 0), (0, cp - cin), (0, 0)))    # zero-pad input channels
    w = w.reshape(9, cp, feat).astype(jnp.bfloat16)            # (tap, cin_pad, cout)
    b = jnp.zeros((1, feat), jnp.float32)
    return w, b


# ----------------------------------------------------------------------------- main

if __name__ == "__main__":
    # Small shapes consistent with BYOL.forward (two image views).
    N, CIN, H, W = 8, 3, 16, 16     # N per view -> effective batch 2N = 16 (>=8, mult of 8)
    CP = 8                          # image channels zero-padded to one sublane tile
    FEAT = 32                       # backbone output channels (scaled down)
    HIDDEN = 32                     # BYOL hidden_dim (scaled down from 4096)
    PROJ = 16                       # BYOL proj_dim   (scaled down from 256)
    PROJ_PAD = _round_up(PROJ, LANE)

    key = jax.random.PRNGKey(0)
    kx1, kx2, kconv, kproj, kq = jax.random.split(key, 5)

    x1 = jax.random.normal(kx1, (N, CIN, H, W), jnp.float32)
    x2 = jax.random.normal(kx2, (N, CIN, H, W), jnp.float32)

    s_conv_w, s_conv_b = _make_conv_params(kconv, CIN, CP, FEAT)
    s_proj = _make_mlp_params(kproj, FEAT, HIDDEN, PROJ, dout_pad=PROJ_PAD)
    q_mlp = _make_mlp_params(kq, PROJ, HIDDEN, PROJ, din_pad=PROJ_PAD, dout_pad=PROJ_PAD)

    # _init_teacher_weights: teacher starts as an exact copy of the student, but
    # it is kept as a SEPARATE parameter set (and a separate in-kernel pass) so
    # the kernel remains correct once update_teacher() EMA diverges the weights.
    t_conv_w, t_conv_b = s_conv_w, s_conv_b
    t_proj = s_proj

    params = (s_conv_w, s_conv_b, s_proj, t_conv_w, t_conv_b, t_proj, q_mlp)

    fwd = jax.jit(functools.partial(byol_forward, img_hw=(H, W), proj_dim=PROJ))
    logits_1, logits_2, targ_1, targ_2 = fwd(x1, x2, params)
    jax.block_until_ready((logits_1, logits_2, targ_1, targ_2))

    assert logits_1.shape == (N, PROJ) and logits_2.shape == (N, PROJ)
    assert targ_1.shape == (N, PROJ) and targ_2.shape == (N, PROJ)
    assert bool(jnp.isfinite(logits_1).all() & jnp.isfinite(logits_2).all()
                & jnp.isfinite(targ_1).all() & jnp.isfinite(targ_2).all())
    print("KERNEL_OK")
</pallas_src>

<mosaic_0001>
module attributes {stable_mosaic.version = 11 : i64} {
  func.func @_byol_kernel(%arg0: i32, %arg1: memref<1x328x8xf32, #tpu.memory_space<vmem>>, %arg2: memref<328x1xf32, #tpu.memory_space<vmem>>, %arg3: memref<9x8x32xbf16, #tpu.memory_space<vmem>>, %arg4: memref<1x32xf32, #tpu.memory_space<vmem>>, %arg5: memref<9x8x32xbf16, #tpu.memory_space<vmem>>, %arg6: memref<1x32xf32, #tpu.memory_space<vmem>>, %arg7: memref<32x32xbf16, #tpu.memory_space<vmem>>, %arg8: memref<1x32xf32, #tpu.memory_space<vmem>>, %arg9: memref<1x32xf32, #tpu.memory_space<vmem>>, %arg10: memref<1x32xf32, #tpu.memory_space<vmem>>, %arg11: memref<32x128xbf16, #tpu.memory_space<vmem>>, %arg12: memref<1x128xf32, #tpu.memory_space<vmem>>, %arg13: memref<32x32xbf16, #tpu.memory_space<vmem>>, %arg14: memref<1x32xf32, #tpu.memory_space<vmem>>, %arg15: memref<1x32xf32, #tpu.memory_space<vmem>>, %arg16: memref<1x32xf32, #tpu.memory_space<vmem>>, %arg17: memref<32x128xbf16, #tpu.memory_space<vmem>>, %arg18: memref<1x128xf32, #tpu.memory_space<vmem>>, %arg19: memref<128x32xbf16, #tpu.memory_space<vmem>>, %arg20: memref<1x32xf32, #tpu.memory_space<vmem>>, %arg21: memref<1x32xf32, #tpu.memory_space<vmem>>, %arg22: memref<1x32xf32, #tpu.memory_space<vmem>>, %arg23: memref<32x128xbf16, #tpu.memory_space<vmem>>, %arg24: memref<1x128xf32, #tpu.memory_space<vmem>>, %arg25: memref<16x128xf32, #tpu.memory_space<vmem>>, %arg26: memref<16x128xf32, #tpu.memory_space<vmem>>, %arg27: memref<16x32xf32, #tpu.memory_space<vmem>>, %arg28: memref<16x32xf32, #tpu.memory_space<vmem>>) attributes {dimension_semantics = [#tpu.dimension_semantics<arbitrary>], iteration_bounds = array<i64: 16>, scalar_prefetch = 0 : i64, scratch_operands = 2 : i64, tpu.core_type = #tpu.core_type<tc>, window_params = [{transform_indices = @transform_0, window_bounds = array<i64: 1, 328, 8>}, {pipeline_mode = #tpu.pipeline_mode<synchronous>, transform_indices = @transform_1, window_bounds = array<i64: 328, 1>}, {pipeline_mode = #tpu.pipeline_mode<synchronous>, transform_indices = @transform_2, window_bounds = array<i64: 9, 8, 32>}, {pipeline_mode = #tpu.pipeline_mode<synchronous>, transform_indices = @transform_3, window_bounds = array<i64: 1, 32>}, {pipeline_mode = #tpu.pipeline_mode<synchronous>, transform_indices = @transform_4, window_bounds = array<i64: 9, 8, 32>}, {pipeline_mode = #tpu.pipeline_mode<synchronous>, transform_indices = @transform_5, window_bounds = array<i64: 1, 32>}, {pipeline_mode = #tpu.pipeline_mode<synchronous>, transform_indices = @transform_6, window_bounds = array<i64: 32, 32>}, {pipeline_mode = #tpu.pipeline_mode<synchronous>, transform_indices = @transform_7, window_bounds = array<i64: 1, 32>}, {pipeline_mode = #tpu.pipeline_mode<synchronous>, transform_indices = @transform_8, window_bounds = array<i64: 1, 32>}, {pipeline_mode = #tpu.pipeline_mode<synchronous>, transform_indices = @transform_9, window_bounds = array<i64: 1, 32>}, {pipeline_mode = #tpu.pipeline_mode<synchronous>, transform_indices = @transform_10, window_bounds = array<i64: 32, 128>}, {pipeline_mode = #tpu.pipeline_mode<synchronous>, transform_indices = @transform_11, window_bounds = array<i64: 1, 128>}, {pipeline_mode = #tpu.pipeline_mode<synchronous>, transform_indices = @transform_12, window_bounds = array<i64: 32, 32>}, {pipeline_mode = #tpu.pipeline_mode<synchronous>, transform_indices = @transform_13, window_bounds = array<i64: 1, 32>}, {pipeline_mode = #tpu.pipeline_mode<synchronous>, transform_indices = @transform_14, window_bounds = array<i64: 1, 32>}, {pipeline_mode = #tpu.pipeline_mode<synchronous>, transform_indices = @transform_15, window_bounds = array<i64: 1, 32>}, {pipeline_mode = #tpu.pipeline_mode<synchronous>, transform_indices = @transform_16, window_bounds = array<i64: 32, 128>}, {pipeline_mode = #tpu.pipeline_mode<synchronous>, transform_indices = @transform_17, window_bounds = array<i64: 1, 128>}, {pipeline_mode = #tpu.pipeline_mode<synchronous>, transform_indices = @transform_18, window_bounds = array<i64: 128, 32>}, {pipeline_mode = #tpu.pipeline_mode<synchronous>, transform_indices = @transform_19, window_bounds = array<i64: 1, 32>}, {pipeline_mode = #tpu.pipeline_mode<synchronous>, transform_indices = @transform_20, window_bounds = array<i64: 1, 32>}, {pipeline_mode = #tpu.pipeline_mode<synchronous>, transform_indices = @transform_21, window_bounds = array<i64: 1, 32>}, {pipeline_mode = #tpu.pipeline_mode<synchronous>, transform_indices = @transform_22, window_bounds = array<i64: 32, 128>}, {pipeline_mode = #tpu.pipeline_mode<synchronous>, transform_indices = @transform_23, window_bounds = array<i64: 1, 128>}, {pipeline_mode = #tpu.pipeline_mode<synchronous>, transform_indices = @transform_24, window_bounds = array<i64: 16, 128>}, {pipeline_mode = #tpu.pipeline_mode<synchronous>, transform_indices = @transform_25, window_bounds = array<i64: 16, 128>}]} {
    %c0 = arith.constant 0 : index
    %c0_0 = arith.constant 0 : index
    %c0_1 = arith.constant 0 : index
    %0 = vector.load %arg1[%c0, %c0_0, %c0_1] : memref<1x328x8xf32, #tpu.memory_space<vmem>>, vector<1x328x8xf32>
    %1 = vector.shape_cast %0 : vector<1x328x8xf32> to vector<328x8xf32>
    %cst = arith.constant 0.000000e+00 : f32
    %2 = vector.broadcast %cst : f32 to vector<328x32xf32>
    %c19_i32 = arith.constant 19 : i32
    %3 = tpu.dynamic_rotate %1 by %c19_i32 dim 0 : vector<328x8xf32>, i32 -> vector<328x8xf32>
    %4 = arith.truncf %3 : vector<328x8xf32> to vector<328x8xbf16>
    %c0_2 = arith.constant 0 : index
    %c0_3 = arith.constant 0 : index
    %c0_4 = arith.constant 0 : index
    %5 = vector.load %arg3[%c0_2, %c0_3, %c0_4] : memref<9x8x32xbf16, #tpu.memory_space<vmem>>, vector<1x8x32xbf16>
    %6 = vector.shape_cast %5 : vector<1x8x32xbf16> to vector<8x32xbf16>
    %cst_5 = arith.constant dense<0.000000e+00> : vector<328x32xf32>
    %7 = tpu.matmul %4, %6, %cst_5 {dimension_numbers = #tpu.dot_dimension_numbers<[1], [0], [0], [1], [0, 0, 1, 1], [], []>} : vector<328x8xbf16>, vector<8x32xbf16>, vector<328x32xf32> -> vector<328x32xf32>
    %8 = arith.addf %2, %7 : vector<328x32xf32>
    %c18_i32 = arith.constant 18 : i32
    %9 = tpu.dynamic_rotate %1 by %c18_i32 dim 0 : vector<328x8xf32>, i32 -> vector<328x8xf32>
    %10 = arith.truncf %9 : vector<328x8xf32> to vector<328x8xbf16>
    %c1 = arith.constant 1 : index
    %c0_6 = arith.constant 0 : index
    %c0_7 = arith.constant 0 : index
    %11 = vector.load %arg3[%c1, %c0_6, %c0_7] : memref<9x8x32xbf16, #tpu.memory_space<vmem>>, vector<1x8x32xbf16>
    %12 = vector.shape_cast %11 : vector<1x8x32xbf16> to vector<8x32xbf16>
    %cst_8 = arith.constant dense<0.000000e+00> : vector<328x32xf32>
    %13 = tpu.matmul %10, %12, %cst_8 {dimension_numbers = #tpu.dot_dimension_numbers<[1], [0], [0], [1], [0, 0, 1, 1], [], []>} : vector<328x8xbf16>, vector<8x32xbf16>, vector<328x32xf32> -> vector<328x32xf32>
    %14 = arith.addf %8, %13 : vector<328x32xf32>
    %c17_i32 = arith.constant 17 : i32
    %15 = tpu.dynamic_rotate %1 by %c17_i32 dim 0 : vector<328x8xf32>, i32 -> vector<328x8xf32>
    %16 = arith.truncf %15 : vector<328x8xf32> to vector<328x8xbf16>
    %c2 = arith.constant 2 : index
    %c0_9 = arith.constant 0 : index
    %c0_10 = arith.constant 0 : index
    %17 = vector.load %arg3[%c2, %c0_9, %c0_10] : memref<9x8x32xbf16, #tpu.memory_space<vmem>>, vector<1x8x32xbf16>
    %18 = vector.shape_cast %17 : vector<1x8x32xbf16> to vector<8x32xbf16>
    %cst_11 = arith.constant dense<0.000000e+00> : vector<328x32xf32>
    %19 = tpu.matmul %16, %18, %cst_11 {dimension_numbers = #tpu.dot_dimension_numbers<[1], [0], [0], [1], [0, 0, 1, 1], [], []>} : vector<328x8xbf16>, vector<8x32xbf16>, vector<328x32xf32> -> vector<328x32xf32>
    %20 = arith.addf %14, %19 : vector<328x32xf32>
    %c1_i32 = arith.constant 1 : i32
    %21 = tpu.dynamic_rotate %1 by %c1_i32 dim 0 : vector<328x8xf32>, i32 -> vector<328x8xf32>
    %22 = arith.truncf %21 : vector<328x8xf32> to vector<328x8xbf16>
    %c3 = arith.constant 3 : index
    %c0_12 = arith.constant 0 : index
    %c0_13 = arith.constant 0 : index
    %23 = vector.load %arg3[%c3, %c0_12, %c0_13] : memref<9x8x32xbf16, #tpu.memory_space<vmem>>, vector<1x8x32xbf16>
    %24 = vector.shape_cast %23 : vector<1x8x32xbf16> to vector<8x32xbf16>
    %cst_14 = arith.constant dense<0.000000e+00> : vector<328x32xf32>
    %25 = tpu.matmul %22, %24, %cst_14 {dimension_numbers = #tpu.dot_dimension_numbers<[1], [0], [0], [1], [0, 0, 1, 1], [], []>} : vector<328x8xbf16>, vector<8x32xbf16>, vector<328x32xf32> -> vector<328x32xf32>
    %26 = arith.addf %20, %25 : vector<328x32xf32>
    %27 = arith.truncf %1 : vector<328x8xf32> to vector<328x8xbf16>
    %c4 = arith.constant 4 : index
    %c0_15 = arith.constant 0 : index
    %c0_16 = arith.constant 0 : index
    %28 = vector.load %arg3[%c4, %c0_15, %c0_16] : memref<9x8x32xbf16, #tpu.memory_space<vmem>>, vector<1x8x32xbf16>
    %29 = vector.shape_cast %28 : vector<1x8x32xbf16> to vector<8x32xbf16>
    %cst_17 = arith.constant dense<0.000000e+00> : vector<328x32xf32>
    %30 = tpu.matmul %27, %29, %cst_17 {dimension_numbers = #tpu.dot_dimension_numbers<[1], [0], [0], [1], [0, 0, 1, 1], [], []>} : vector<328x8xbf16>, vector<8x32xbf16>, vector<328x32xf32> -> vector<328x32xf32>
    %31 = arith.addf %26, %30 : vector<328x32xf32>
    %c327_i32 = arith.constant 327 : i32
    %32 = tpu.dynamic_rotate %1 by %c327_i32 dim 0 : vector<328x8xf32>, i32 -> vector<328x8xf32>
    %33 = arith.truncf %32 : vector<328x8xf32> to vector<328x8xbf16>
    %c5 = arith.constant 5 : index
    %c0_18 = arith.constant 0 : index
    %c0_19 = arith.constant 0 : index
    %34 = vector.load %arg3[%c5, %c0_18, %c0_19] : memref<9x8x32xbf16, #tpu.memory_space<vmem>>, vector<1x8x32xbf16>
    %35 = vector.shape_cast %34 : vector<1x8x32xbf16> to vector<8x32xbf16>
    %cst_20 = arith.constant dense<0.000000e+00> : vector<328x32xf32>
    %36 = tpu.matmul %33, %35, %cst_20 {dimension_numbers = #tpu.dot_dimension_numbers<[1], [0], [0], [1], [0, 0, 1, 1], [], []>} : vector<328x8xbf16>, vector<8x32xbf16>, vector<328x32xf32> -> vector<328x32xf32>
    %37 = arith.addf %31, %36 : vector<328x32xf32>
    %c311_i32 = arith.constant 311 : i32
    %38 = tpu.dynamic_rotate %1 by %c311_i32 dim 0 : vector<328x8xf32>, i32 -> vector<328x8xf32>
    %39 = arith.truncf %38 : vector<328x8xf32> to vector<328x8xbf16>
    %c6 = arith.constant 6 : index
    %c0_21 = arith.constant 0 : index
    %c0_22 = arith.constant 0 : index
    %40 = vector.load %arg3[%c6, %c0_21, %c0_22] : memref<9x8x32xbf16, #tpu.memory_space<vmem>>, vector<1x8x32xbf16>
    %41 = vector.shape_cast %40 : vector<1x8x32xbf16> to vector<8x32xbf16>
    %cst_23 = arith.constant dense<0.000000e+00> : vector<328x32xf32>
    %42 = tpu.matmul %39, %41, %cst_23 {dimension_numbers = #tpu.dot_dimension_numbers<[1], [0], [0], [1], [0, 0, 1, 1], [], []>} : vector<328x8xbf16>, vector<8x32xbf16>, vector<328x32xf32> -> vector<328x32xf32>
    %43 = arith.addf %37, %42 : vector<328x32xf32>
    %c310_i32 = arith.constant 310 : i32
    %44 = tpu.dynamic_rotate %1 by %c310_i32 dim 0 : vector<328x8xf32>, i32 -> vector<328x8xf32>
    %45 = arith.truncf %44 : vector<328x8xf32> to vector<328x8xbf16>
    %c7 = arith.constant 7 : index
    %c0_24 = arith.constant 0 : index
    %c0_25 = arith.constant 0 : index
    %46 = vector.load %arg3[%c7, %c0_24, %c0_25] : memref<9x8x32xbf16, #tpu.memory_space<vmem>>, vector<1x8x32xbf16>
    %47 = vector.shape_cast %46 : vector<1x8x32xbf16> to vector<8x32xbf16>
    %cst_26 = arith.constant dense<0.000000e+00> : vector<328x32xf32>
    %48 = tpu.matmul %45, %47, %cst_26 {dimension_numbers = #tpu.dot_dimension_numbers<[1], [0], [0], [1], [0, 0, 1, 1], [], []>} : vector<328x8xbf16>, vector<8x32xbf16>, vector<328x32xf32> -> vector<328x32xf32>
    %49 = arith.addf %43, %48 : vector<328x32xf32>
    %c309_i32 = arith.constant 309 : i32
    %50 = tpu.dynamic_rotate %1 by %c309_i32 dim 0 : vector<328x8xf32>, i32 -> vector<328x8xf32>
    %51 = arith.truncf %50 : vector<328x8xf32> to vector<328x8xbf16>
    %c8 = arith.constant 8 : index
    %c0_27 = arith.constant 0 : index
    %c0_28 = arith.constant 0 : index
    %52 = vector.load %arg3[%c8, %c0_27, %c0_28] : memref<9x8x32xbf16, #tpu.memory_space<vmem>>, vector<1x8x32xbf16>
    %53 = vector.shape_cast %52 : vector<1x8x32xbf16> to vector<8x32xbf16>
    %cst_29 = arith.constant dense<0.000000e+00> : vector<328x32xf32>
    %54 = tpu.matmul %51, %53, %cst_29 {dimension_numbers = #tpu.dot_dimension_numbers<[1], [0], [0], [1], [0, 0, 1, 1], [], []>} : vector<328x8xbf16>, vector<8x32xbf16>, vector<328x32xf32> -> vector<328x32xf32>
    %55 = arith.addf %49, %54 : vector<328x32xf32>
    %c0_30 = arith.constant 0 : index
    %c0_31 = arith.constant 0 : index
    %56 = vector.load %arg4[%c0_30, %c0_31] : memref<1x32xf32, #tpu.memory_space<vmem>>, vector<1x32xf32>
    %57 = vector.broadcast %56 : vector<1x32xf32> to vector<328x32xf32>
    %58 = arith.addf %55, %57 : vector<328x32xf32>
    %cst_32 = arith.constant 0.000000e+00 : f32
    %59 = vector.broadcast %cst_32 : f32 to vector<328x32xf32>
    %60 = arith.maximumf %58, %59 : vector<328x32xf32>
    %c0_33 = arith.constant 0 : index
    %c0_34 = arith.constant 0 : index
    %61 = vector.load %arg2[%c0_33, %c0_34] : memref<328x1xf32, #tpu.memory_space<vmem>>, vector<328x1xf32>
    %62 = vector.broadcast %61 : vector<328x1xf32> to vector<328x32xf32>
    %63 = arith.mulf %60, %62 : vector<328x32xf32>
    %cst_35 = arith.constant dense<0.000000e+00> : vector<32xf32>
    %64 = vector.multi_reduction <add>, %63, %cst_35 [0] : vector<328x32xf32> to vector<32xf32>
    %65 = vector.shape_cast %64 : vector<32xf32> to vector<1x32xf32>
    %66 = arith.index_cast %arg0 : i32 to index
    %c0_36 = arith.constant 0 : index
    %67 = vector.load %arg27[%66, %c0_36] : memref<16x32xf32, #tpu.memory_space<vmem>>, vector<1x32xf32>
    tpu.vector_store %arg27[%66, %c0_36], %65 {strides = array<i32>} : memref<16x32xf32, #tpu.memory_space<vmem>>, vector<1x32xf32>,
    %cst_37 = arith.constant 0.000000e+00 : f32
    %68 = vector.broadcast %cst_37 : f32 to vector<328x32xf32>
    %c19_i32_38 = arith.constant 19 : i32
    %69 = tpu.dynamic_rotate %1 by %c19_i32_38 dim 0 : vector<328x8xf32>, i32 -> vector<328x8xf32>
    %70 = arith.truncf %69 : vector<328x8xf32> to vector<328x8xbf16>
    %c0_39 = arith.constant 0 : index
    %c0_40 = arith.constant 0 : index
    %c0_41 = arith.constant 0 : index
    %71 = vector.load %arg5[%c0_39, %c0_40, %c0_41] : memref<9x8x32xbf16, #tpu.memory_space<vmem>>, vector<1x8x32xbf16>
    %72 = vector.shape_cast %71 : vector<1x8x32xbf16> to vector<8x32xbf16>
    %cst_42 = arith.constant dense<0.000000e+00> : vector<328x32xf32>
    %73 = tpu.matmul %70, %72, %cst_42 {dimension_numbers = #tpu.dot_dimension_numbers<[1], [0], [0], [1], [0, 0, 1, 1], [], []>} : vector<328x8xbf16>, vector<8x32xbf16>, vector<328x32xf32> -> vector<328x32xf32>
    %74 = arith.addf %68, %73 : vector<328x32xf32>
    %c18_i32_43 = arith.constant 18 : i32
    %75 = tpu.dynamic_rotate %1 by %c18_i32_43 dim 0 : vector<328x8xf32>, i32 -> vector<328x8xf32>
    %76 = arith.truncf %75 : vector<328x8xf32> to vector<328x8xbf16>
    %c1_44 = arith.constant 1 : index
    %c0_45 = arith.constant 0 : index
    %c0_46 = arith.constant 0 : index
    %77 = vector.load %arg5[%c1_44, %c0_45, %c0_46] : memref<9x8x32xbf16, #tpu.memory_space<vmem>>, vector<1x8x32xbf16>
    %78 = vector.shape_cast %77 : vector<1x8x32xbf16> to vector<8x32xbf16>
    %cst_47 = arith.constant dense<0.000000e+00> : vector<328x32xf32>
    %79 = tpu.matmul %76, %78, %cst_47 {dimension_numbers = #tpu.dot_dimension_numbers<[1], [0], [0], [1], [0, 0, 1, 1], [], []>} : vector<328x8xbf16>, vector<8x32xbf16>, vector<328x32xf32> -> vector<328x32xf32>
    %80 = arith.addf %74, %79 : vector<328x32xf32>
    %c17_i32_48 = arith.constant 17 : i32
    %81 = tpu.dynamic_rotate %1 by %c17_i32_48 dim 0 : vector<328x8xf32>, i32 -> vector<328x8xf32>
    %82 = arith.truncf %81 : vector<328x8xf32> to vector<328x8xbf16>
    %c2_49 = arith.constant 2 : index
    %c0_50 = arith.constant 0 : index
    %c0_51 = arith.constant 0 : index
    %83 = vector.load %arg5[%c2_49, %c0_50, %c0_51] : memref<9x8x32xbf16, #tpu.memory_space<vmem>>, vector<1x8x32xbf16>
    %84 = vector.shape_cast %83 : vector<1x8x32xbf16> to vector<8x32xbf16>
    %cst_52 = arith.constant dense<0.000000e+00> : vector<328x32xf32>
    %85 = tpu.matmul %82, %84, %cst_52 {dimension_numbers = #tpu.dot_dimension_numbers<[1], [0], [0], [1], [0, 0, 1, 1], [], []>} : vector<328x8xbf16>, vector<8x32xbf16>, vector<328x32xf32> -> vector<328x32xf32>
    %86 = arith.addf %80, %85 : vector<328x32xf32>
    %c1_i32_53 = arith.constant 1 : i32
    %87 = tpu.dynamic_rotate %1 by %c1_i32_53 dim 0 : vector<328x8xf32>, i32 -> vector<328x8xf32>
    %88 = arith.truncf %87 : vector<328x8xf32> to vector<328x8xbf16>
    %c3_54 = arith.constant 3 : index
    %c0_55 = arith.constant 0 : index
    %c0_56 = arith.constant 0 : index
    %89 = vector.load %arg5[%c3_54, %c0_55, %c0_56] : memref<9x8x32xbf16, #tpu.memory_space<vmem>>, vector<1x8x32xbf16>
    %90 = vector.shape_cast %89 : vector<1x8x32xbf16> to vector<8x32xbf16>
    %cst_57 = arith.constant dense<0.000000e+00> : vector<328x32xf32>
    %91 = tpu.matmul %88, %90, %cst_57 {dimension_numbers = #tpu.dot_dimension_numbers<[1], [0], [0], [1], [0, 0, 1, 1], [], []>} : vector<328x8xbf16>, vector<8x32xbf16>, vector<328x32xf32> -> vector<328x32xf32>
    %92 = arith.addf %86, %91 : vector<328x32xf32>
    %93 = arith.truncf %1 : vector<328x8xf32> to vector<328x8xbf16>
    %c4_58 = arith.constant 4 : index
    %c0_59 = arith.constant 0 : index
    %c0_60 = arith.constant 0 : index
    %94 = vector.load %arg5[%c4_58, %c0_59, %c0_60] : memref<9x8x32xbf16, #tpu.memory_space<vmem>>, vector<1x8x32xbf16>
    %95 = vector.shape_cast %94 : vector<1x8x32xbf16> to vector<8x32xbf16>
    %cst_61 = arith.constant dense<0.000000e+00> : vector<328x32xf32>
    %96 = tpu.matmul %93, %95, %cst_61 {dimension_numbers = #tpu.dot_dimension_numbers<[1], [0], [0], [1], [0, 0, 1, 1], [], []>} : vector<328x8xbf16>, vector<8x32xbf16>, vector<328x32xf32> -> vector<328x32xf32>
    %97 = arith.addf %92, %96 : vector<328x32xf32>
    %c327_i32_62 = arith.constant 327 : i32
    %98 = tpu.dynamic_rotate %1 by %c327_i32_62 dim 0 : vector<328x8xf32>, i32 -> vector<328x8xf32>
    %99 = arith.truncf %98 : vector<328x8xf32> to vector<328x8xbf16>
    %c5_63 = arith.constant 5 : index
    %c0_64 = arith.constant 0 : index
    %c0_65 = arith.constant 0 : index
    %100 = vector.load %arg5[%c5_63, %c0_64, %c0_65] : memref<9x8x32xbf16, #tpu.memory_space<vmem>>, vector<1x8x32xbf16>
    %101 = vector.shape_cast %100 : vector<1x8x32xbf16> to vector<8x32xbf16>
    %cst_66 = arith.constant dense<0.000000e+00> : vector<328x32xf32>
    %102 = tpu.matmul %99, %101, %cst_66 {dimension_numbers = #tpu.dot_dimension_numbers<[1], [0], [0], [1], [0, 0, 1, 1], [], []>} : vector<328x8xbf16>, vector<8x32xbf16>, vector<328x32xf32> -> vector<328x32xf32>
    %103 = arith.addf %97, %102 : vector<328x32xf32>
    %c311_i32_67 = arith.constant 311 : i32
    %104 = tpu.dynamic_rotate %1 by %c311_i32_67 dim 0 : vector<328x8xf32>, i32 -> vector<328x8xf32>
    %105 = arith.truncf %104 : vector<328x8xf32> to vector<328x8xbf16>
    %c6_68 = arith.constant 6 : index
    %c0_69 = arith.constant 0 : index
    %c0_70 = arith.constant 0 : index
    %106 = vector.load %arg5[%c6_68, %c0_69, %c0_70] : memref<9x8x32xbf16, #tpu.memory_space<vmem>>, vector<1x8x32xbf16>
    %107 = vector.shape_cast %106 : vector<1x8x32xbf16> to vector<8x32xbf16>
    %cst_71 = arith.constant dense<0.000000e+00> : vector<328x32xf32>
    %108 = tpu.matmul %105, %107, %cst_71 {dimension_numbers = #tpu.dot_dimension_numbers<[1], [0], [0], [1], [0, 0, 1, 1], [], []>} : vector<328x8xbf16>, vector<8x32xbf16>, vector<328x32xf32> -> vector<328x32xf32>
    %109 = arith.addf %103, %108 : vector<328x32xf32>
    %c310_i32_72 = arith.constant 310 : i32
    %110 = tpu.dynamic_rotate %1 by %c310_i32_72 dim 0 : vector<328x8xf32>, i32 -> vector<328x8xf32>
    %111 = arith.truncf %110 : vector<328x8xf32> to vector<328x8xbf16>
    %c7_73 = arith.constant 7 : index
    %c0_74 = arith.constant 0 : index
    %c0_75 = arith.constant 0 : index
    %112 = vector.load %arg5[%c7_73, %c0_74, %c0_75] : memref<9x8x32xbf16, #tpu.memory_space<vmem>>, vector<1x8x32xbf16>
    %113 = vector.shape_cast %112 : vector<1x8x32xbf16> to vector<8x32xbf16>
    %cst_76 = arith.constant dense<0.000000e+00> : vector<328x32xf32>
    %114 = tpu.matmul %111, %113, %cst_76 {dimension_numbers = #tpu.dot_dimension_numbers<[1], [0], [0], [1], [0, 0, 1, 1], [], []>} : vector<328x8xbf16>, vector<8x32xbf16>, vector<328x32xf32> -> vector<328x32xf32>
    %115 = arith.addf %109, %114 : vector<328x32xf32>
    %c309_i32_77 = arith.constant 309 : i32
    %116 = tpu.dynamic_rotate %1 by %c309_i32_77 dim 0 : vector<328x8xf32>, i32 -> vector<328x8xf32>
    %117 = arith.truncf %116 : vector<328x8xf32> to vector<328x8xbf16>
    %c8_78 = arith.constant 8 : index
    %c0_79 = arith.constant 0 : index
    %c0_80 = arith.constant 0 : index
    %118 = vector.load %arg5[%c8_78, %c0_79, %c0_80] : memref<9x8x32xbf16, #tpu.memory_space<vmem>>, vector<1x8x32xbf16>
    %119 = vector.shape_cast %118 : vector<1x8x32xbf16> to vector<8x32xbf16>
    %cst_81 = arith.constant dense<0.000000e+00> : vector<328x32xf32>
    %120 = tpu.matmul %117, %119, %cst_81 {dimension_numbers = #tpu.dot_dimension_numbers<[1], [0], [0], [1], [0, 0, 1, 1], [], []>} : vector<328x8xbf16>, vector<8x32xbf16>, vector<328x32xf32> -> vector<328x32xf32>
    %121 = arith.addf %115, %120 : vector<328x32xf32>
    %c0_82 = arith.constant 0 : index
    %c0_83 = arith.constant 0 : index
    %122 = vector.load %arg6[%c0_82, %c0_83] : memref<1x32xf32, #tpu.memory_space<vmem>>, vector<1x32xf32>
    %123 = vector.broadcast %122 : vector<1x32xf32> to vector<328x32xf32>
    %124 = arith.addf %121, %123 : vector<328x32xf32>
    %cst_84 = arith.constant 0.000000e+00 : f32
    %125 = vector.broadcast %cst_84 : f32 to vector<328x32xf32>
    %126 = arith.maximumf %124, %125 : vector<328x32xf32>
    %c0_85 = arith.constant 0 : index
    %c0_86 = arith.constant 0 : index
    %127 = vector.load %arg2[%c0_85, %c0_86] : memref<328x1xf32, #tpu.memory_space<vmem>>, vector<328x1xf32>
    %128 = vector.broadcast %127 : vector<328x1xf32> to vector<328x32xf32>
    %129 = arith.mulf %126, %128 : vector<328x32xf32>
    %cst_87 = arith.constant dense<0.000000e+00> : vector<32xf32>
    %130 = vector.multi_reduction <add>, %129, %cst_87 [0] : vector<328x32xf32> to vector<32xf32>
    %131 = vector.shape_cast %130 : vector<32xf32> to vector<1x32xf32>
    %132 = arith.index_cast %arg0 : i32 to index
    %c0_88 = arith.constant 0 : index
    %133 = vector.load %arg28[%132, %c0_88] : memref<16x32xf32, #tpu.memory_space<vmem>>, vector<1x32xf32>
    tpu.vector_store %arg28[%132, %c0_88], %131 {strides = array<i32>} : memref<16x32xf32, #tpu.memory_space<vmem>>, vector<1x32xf32>,
    %c15_i32 = arith.constant 15 : i32
    %134 = arith.cmpi eq, %arg0, %c15_i32 : i32
    %135 = arith.extui %134 : i1 to i32
    %c0_i32 = arith.constant 0 : i32
    %136 = arith.cmpi ne, %135, %c0_i32 : i32
    scf.if %136 {
      %c0_89 = arith.constant 0 : index
      %c0_90 = arith.constant 0 : index
      %137 = vector.load %arg27[%c0_89, %c0_90] : memref<16x32xf32, #tpu.memory_space<vmem>>, vector<16x32xf32>
      %c0_91 = arith.constant 0 : index
      %c0_92 = arith.constant 0 : index
      %138 = vector.load %arg7[%c0_91, %c0_92] : memref<32x32xbf16, #tpu.memory_space<vmem>>, vector<32x32xbf16>
      %c0_93 = arith.constant 0 : index
      %c0_94 = arith.constant 0 : index
      %139 = vector.load %arg8[%c0_93, %c0_94] : memref<1x32xf32, #tpu.memory_space<vmem>>, vector<1x32xf32>
      %c0_95 = arith.constant 0 : index
      %c0_96 = arith.constant 0 : index
      %140 = vector.load %arg9[%c0_95, %c0_96] : memref<1x32xf32, #tpu.memory_space<vmem>>, vector<1x32xf32>
      %c0_97 = arith.constant 0 : index
      %c0_98 = arith.constant 0 : index
      %141 = vector.load %arg10[%c0_97, %c0_98] : memref<1x32xf32, #tpu.memory_space<vmem>>, vector<1x32xf32>
      %c0_99 = arith.constant 0 : index
      %c0_100 = arith.constant 0 : index
      %142 = vector.load %arg11[%c0_99, %c0_100] : memref<32x128xbf16, #tpu.memory_space<vmem>>, vector<32x128xbf16>
      %c0_101 = arith.constant 0 : index
      %c0_102 = arith.constant 0 : index
      %143 = vector.load %arg12[%c0_101, %c0_102] : memref<1x128xf32, #tpu.memory_space<vmem>>, vector<1x128xf32>
      %144 = arith.truncf %137 : vector<16x32xf32> to vector<16x32xbf16>
      %cst_103 = arith.constant dense<0.000000e+00> : vector<16x32xf32>
      %145 = tpu.matmul %144, %138, %cst_103 {dimension_numbers = #tpu.dot_dimension_numbers<[1], [0], [0], [1], [0, 0, 1, 1], [], []>} : vector<16x32xbf16>, vector<32x32xbf16>, vector<16x32xf32> -> vector<16x32xf32>
      %146 = vector.broadcast %139 : vector<1x32xf32> to vector<16x32xf32>
      %147 = arith.addf %145, %146 : vector<16x32xf32>
      %148 = vector.extract_strided_slice %147 {offsets = [0, 0], sizes = [8, 32], strides = [1, 1]} : vector<16x32xf32> to vector<8x32xf32>
      %cst_104 = arith.constant dense<0.000000e+00> : vector<32xf32>
      %149 = vector.multi_reduction <add>, %148, %cst_104 [0] : vector<8x32xf32> to vector<32xf32>
      %150 = vector.shape_cast %149 : vector<32xf32> to vector<1x32xf32>
      %cst_105 = arith.constant 8.000000e+00 : f32
      %151 = vector.broadcast %cst_105 : f32 to vector<1x32xf32>
      %152 = arith.divf %150, %151 : vector<1x32xf32>
      %153 = vector.broadcast %152 : vector<1x32xf32> to vector<8x32xf32>
      %154 = arith.subf %148, %153 : vector<8x32xf32>
      %155 = arith.mulf %154, %154 : vector<8x32xf32>
      %cst_106 = arith.constant dense<0.000000e+00> : vector<32xf32>
      %156 = vector.multi_reduction <add>, %155, %cst_106 [0] : vector<8x32xf32> to vector<32xf32>
      %157 = vector.shape_cast %156 : vector<32xf32> to vector<1x32xf32>
      %cst_107 = arith.constant 8.000000e+00 : f32
      %158 = vector.broadcast %cst_107 : f32 to vector<1x32xf32>
      %159 = arith.divf %157, %158 : vector<1x32xf32>
      %cst_108 = arith.constant 9.99999974E-6 : f32
      %160 = vector.broadcast %cst_108 : f32 to vector<1x32xf32>
      %161 = arith.addf %159, %160 : vector<1x32xf32>
      %162 = math.rsqrt %161 : vector<1x32xf32>
      %163 = vector.broadcast %162 : vector<1x32xf32> to vector<8x32xf32>
      %164 = arith.mulf %154, %163 : vector<8x32xf32>
      %165 = vector.extract_strided_slice %147 {offsets = [8, 0], sizes = [8, 32], strides = [1, 1]} : vector<16x32xf32> to vector<8x32xf32>
      %cst_109 = arith.constant dense<0.000000e+00> : vector<32xf32>
      %166 = vector.multi_reduction <add>, %165, %cst_109 [0] : vector<8x32xf32> to vector<32xf32>
      %167 = vector.shape_cast %166 : vector<32xf32> to vector<1x32xf32>
      %cst_110 = arith.constant 8.000000e+00 : f32
      %168 = vector.broadcast %cst_110 : f32 to vector<1x32xf32>
      %169 = arith.divf %167, %168 : vector<1x32xf32>
      %170 = vector.broadcast %169 : vector<1x32xf32> to vector<8x32xf32>
      %171 = arith.subf %165, %170 : vector<8x32xf32>
      %172 = arith.mulf %171, %171 : vector<8x32xf32>
      %cst_111 = arith.constant dense<0.000000e+00> : vector<32xf32>
      %173 = vector.multi_reduction <add>, %172, %cst_111 [0] : vector<8x32xf32> to vector<32xf32>
      %174 = vector.shape_cast %173 : vector<32xf32> to vector<1x32xf32>
      %cst_112 = arith.constant 8.000000e+00 : f32
      %175 = vector.broadcast %cst_112 : f32 to vector<1x32xf32>
      %176 = arith.divf %174, %175 : vector<1x32xf32>
      %cst_113 = arith.constant 9.99999974E-6 : f32
      %177 = vector.broadcast %cst_113 : f32 to vector<1x32xf32>
      %178 = arith.addf %176, %177 : vector<1x32xf32>
      %179 = math.rsqrt %178 : vector<1x32xf32>
      %180 = vector.broadcast %179 : vector<1x32xf32> to vector<8x32xf32>
      %181 = arith.mulf %171, %180 : vector<8x32xf32>
      %182 = tpu.concatenate %164, %181 in 0 : vector<8x32xf32>, vector<8x32xf32> -> vector<16x32xf32>
      %183 = vector.broadcast %140 : vector<1x32xf32> to vector<16x32xf32>
      %184 = arith.mulf %182, %183 : vector<16x32xf32>
      %185 = vector.broadcast %141 : vector<1x32xf32> to vector<16x32xf32>
      %186 = arith.addf %184, %185 : vector<16x32xf32>
      %cst_114 = arith.constant 0.000000e+00 : f32
      %187 = vector.broadcast %cst_114 : f32 to vector<16x32xf32>
      %188 = arith.maximumf %186, %187 : vector<16x32xf32>
      %189 = arith.truncf %188 : vector<16x32xf32> to vector<16x32xbf16>
      %cst_115 = arith.constant dense<0.000000e+00> : vector<16x128xf32>
      %190 = tpu.matmul %189, %142, %cst_115 {dimension_numbers = #tpu.dot_dimension_numbers<[1], [0], [0], [1], [0, 0, 1, 1], [], []>} : vector<16x32xbf16>, vector<32x128xbf16>, vector<16x128xf32> -> vector<16x128xf32>
      %191 = vector.broadcast %143 : vector<1x128xf32> to vector<16x128xf32>
      %192 = arith.addf %190, %191 : vector<16x128xf32>
      %c0_116 = arith.constant 0 : index
      %c0_117 = arith.constant 0 : index
      %193 = vector.load %arg28[%c0_116, %c0_117] : memref<16x32xf32, #tpu.memory_space<vmem>>, vector<16x32xf32>
      %c0_118 = arith.constant 0 : index
      %c0_119 = arith.constant 0 : index
      %194 = vector.load %arg13[%c0_118, %c0_119] : memref<32x32xbf16, #tpu.memory_space<vmem>>, vector<32x32xbf16>
      %c0_120 = arith.constant 0 : index
      %c0_121 = arith.constant 0 : index
      %195 = vector.load %arg14[%c0_120, %c0_121] : memref<1x32xf32, #tpu.memory_space<vmem>>, vector<1x32xf32>
      %c0_122 = arith.constant 0 : index
      %c0_123 = arith.constant 0 : index
      %196 = vector.load %arg15[%c0_122, %c0_123] : memref<1x32xf32, #tpu.memory_space<vmem>>, vector<1x32xf32>
      %c0_124 = arith.constant 0 : index
      %c0_125 = arith.constant 0 : index
      %197 = vector.load %arg16[%c0_124, %c0_125] : memref<1x32xf32, #tpu.memory_space<vmem>>, vector<1x32xf32>
      %c0_126 = arith.constant 0 : index
      %c0_127 = arith.constant 0 : index
      %198 = vector.load %arg17[%c0_126, %c0_127] : memref<32x128xbf16, #tpu.memory_space<vmem>>, vector<32x128xbf16>
      %c0_128 = arith.constant 0 : index
      %c0_129 = arith.constant 0 : index
      %199 = vector.load %arg18[%c0_128, %c0_129] : memref<1x128xf32, #tpu.memory_space<vmem>>, vector<1x128xf32>
      %200 = arith.truncf %193 : vector<16x32xf32> to vector<16x32xbf16>
      %cst_130 = arith.constant dense<0.000000e+00> : vector<16x32xf32>
      %201 = tpu.matmul %200, %194, %cst_130 {dimension_numbers = #tpu.dot_dimension_numbers<[1], [0], [0], [1], [0, 0, 1, 1], [], []>} : vector<16x32xbf16>, vector<32x32xbf16>, vector<16x32xf32> -> vector<16x32xf32>
      %202 = vector.broadcast %195 : vector<1x32xf32> to vector<16x32xf32>
      %203 = arith.addf %201, %202 : vector<16x32xf32>
      %204 = vector.extract_strided_slice %203 {offsets = [0, 0], sizes = [8, 32], strides = [1, 1]} : vector<16x32xf32> to vector<8x32xf32>
      %cst_131 = arith.constant dense<0.000000e+00> : vector<32xf32>
      %205 = vector.multi_reduction <add>, %204, %cst_131 [0] : vector<8x32xf32> to vector<32xf32>
      %206 = vector.shape_cast %205 : vector<32xf32> to vector<1x32xf32>
      %cst_132 = arith.constant 8.000000e+00 : f32
      %207 = vector.broadcast %cst_132 : f32 to vector<1x32xf32>
      %208 = arith.divf %206, %207 : vector<1x32xf32>
      %209 = vector.broadcast %208 : vector<1x32xf32> to vector<8x32xf32>
      %210 = arith.subf %204, %209 : vector<8x32xf32>
      %211 = arith.mulf %210, %210 : vector<8x32xf32>
      %cst_133 = arith.constant dense<0.000000e+00> : vector<32xf32>
      %212 = vector.multi_reduction <add>, %211, %cst_133 [0] : vector<8x32xf32> to vector<32xf32>
      %213 = vector.shape_cast %212 : vector<32xf32> to vector<1x32xf32>
      %cst_134 = arith.constant 8.000000e+00 : f32
      %214 = vector.broadcast %cst_134 : f32 to vector<1x32xf32>
      %215 = arith.divf %213, %214 : vector<1x32xf32>
      %cst_135 = arith.constant 9.99999974E-6 : f32
      %216 = vector.broadcast %cst_135 : f32 to vector<1x32xf32>
      %217 = arith.addf %215, %216 : vector<1x32xf32>
      %218 = math.rsqrt %217 : vector<1x32xf32>
      %219 = vector.broadcast %218 : vector<1x32xf32> to vector<8x32xf32>
      %220 = arith.mulf %210, %219 : vector<8x32xf32>
      %221 = vector.extract_strided_slice %203 {offsets = [8, 0], sizes = [8, 32], strides = [1, 1]} : vector<16x32xf32> to vector<8x32xf32>
      %cst_136 = arith.constant dense<0.000000e+00> : vector<32xf32>
      %222 = vector.multi_reduction <add>, %221, %cst_136 [0] : vector<8x32xf32> to vector<32xf32>
      %223 = vector.shape_cast %222 : vector<32xf32> to vector<1x32xf32>
      %cst_137 = arith.constant 8.000000e+00 : f32
      %224 = vector.broadcast %cst_137 : f32 to vector<1x32xf32>
      %225 = arith.divf %223, %224 : vector<1x32xf32>
      %226 = vector.broadcast %225 : vector<1x32xf32> to vector<8x32xf32>
      %227 = arith.subf %221, %226 : vector<8x32xf32>
      %228 = arith.mulf %227, %227 : vector<8x32xf32>
      %cst_138 = arith.constant dense<0.000000e+00> : vector<32xf32>
      %229 = vector.multi_reduction <add>, %228, %cst_138 [0] : vector<8x32xf32> to vector<32xf32>
      %230 = vector.shape_cast %229 : vector<32xf32> to vector<1x32xf32>
      %cst_139 = arith.constant 8.000000e+00 : f32
      %231 = vector.broadcast %cst_139 : f32 to vector<1x32xf32>
      %232 = arith.divf %230, %231 : vector<1x32xf32>
      %cst_140 = arith.constant 9.99999974E-6 : f32
      %233 = vector.broadcast %cst_140 : f32 to vector<1x32xf32>
      %234 = arith.addf %232, %233 : vector<1x32xf32>
      %235 = math.rsqrt %234 : vector<1x32xf32>
      %236 = vector.broadcast %235 : vector<1x32xf32> to vector<8x32xf32>
      %237 = arith.mulf %227, %236 : vector<8x32xf32>
      %238 = tpu.concatenate %220, %237 in 0 : vector<8x32xf32>, vector<8x32xf32> -> vector<16x32xf32>
      %239 = vector.broadcast %196 : vector<1x32xf32> to vector<16x32xf32>
      %240 = arith.mulf %238, %239 : vector<16x32xf32>
      %241 = vector.broadcast %197 : vector<1x32xf32> to vector<16x32xf32>
      %242 = arith.addf %240, %241 : vector<16x32xf32>
      %cst_141 = arith.constant 0.000000e+00 : f32
      %243 = vector.broadcast %cst_141 : f32 to vector<16x32xf32>
      %244 = arith.maximumf %242, %243 : vector<16x32xf32>
      %245 = arith.truncf %244 : vector<16x32xf32> to vector<16x32xbf16>
      %cst_142 = arith.constant dense<0.000000e+00> : vector<16x128xf32>
      %246 = tpu.matmul %245, %198, %cst_142 {dimension_numbers = #tpu.dot_dimension_numbers<[1], [0], [0], [1], [0, 0, 1, 1], [], []>} : vector<16x32xbf16>, vector<32x128xbf16>, vector<16x128xf32> -> vector<16x128xf32>
      %247 = vector.broadcast %199 : vector<1x128xf32> to vector<16x128xf32>
      %248 = arith.addf %246, %247 : vector<16x128xf32>
      %c0_143 = arith.constant 0 : index
      %c0_144 = arith.constant 0 : index
      %249 = vector.load %arg19[%c0_143, %c0_144] : memref<128x32xbf16, #tpu.memory_space<vmem>>, vector<128x32xbf16>
      %c0_145 = arith.constant 0 : index
      %c0_146 = arith.constant 0 : index
      %250 = vector.load %arg20[%c0_145, %c0_146] : memref<1x32xf32, #tpu.memory_space<vmem>>, vector<1x32xf32>
      %c0_147 = arith.constant 0 : index
      %c0_148 = arith.constant 0 : index
      %251 = vector.load %arg21[%c0_147, %c0_148] : memref<1x32xf32, #tpu.memory_space<vmem>>, vector<1x32xf32>
      %c0_149 = arith.constant 0 : index
      %c0_150 = arith.constant 0 : index
      %252 = vector.load %arg22[%c0_149, %c0_150] : memref<1x32xf32, #tpu.memory_space<vmem>>, vector<1x32xf32>
      %c0_151 = arith.constant 0 : index
      %c0_152 = arith.constant 0 : index
      %253 = vector.load %arg23[%c0_151, %c0_152] : memref<32x128xbf16, #tpu.memory_space<vmem>>, vector<32x128xbf16>
      %c0_153 = arith.constant 0 : index
      %c0_154 = arith.constant 0 : index
      %254 = vector.load %arg24[%c0_153, %c0_154] : memref<1x128xf32, #tpu.memory_space<vmem>>, vector<1x128xf32>
      %255 = arith.truncf %192 : vector<16x128xf32> to vector<16x128xbf16>
      %cst_155 = arith.constant dense<0.000000e+00> : vector<16x32xf32>
      %256 = tpu.matmul %255, %249, %cst_155 {dimension_numbers = #tpu.dot_dimension_numbers<[1], [0], [0], [1], [0, 0, 1, 1], [], []>} : vector<16x128xbf16>, vector<128x32xbf16>, vector<16x32xf32> -> vector<16x32xf32>
      %257 = vector.broadcast %250 : vector<1x32xf32> to vector<16x32xf32>
      %258 = arith.addf %256, %257 : vector<16x32xf32>
      %259 = vector.extract_strided_slice %258 {offsets = [0, 0], sizes = [8, 32], strides = [1, 1]} : vector<16x32xf32> to vector<8x32xf32>
      %cst_156 = arith.constant dense<0.000000e+00> : vector<32xf32>
      %260 = vector.multi_reduction <add>, %259, %cst_156 [0] : vector<8x32xf32> to vector<32xf32>
      %261 = vector.shape_cast %260 : vector<32xf32> to vector<1x32xf32>
      %cst_157 = arith.constant 8.000000e+00 : f32
      %262 = vector.broadcast %cst_157 : f32 to vector<1x32xf32>
      %263 = arith.divf %261, %262 : vector<1x32xf32>
      %264 = vector.broadcast %263 : vector<1x32xf32> to vector<8x32xf32>
      %265 = arith.subf %259, %264 : vector<8x32xf32>
      %266 = arith.mulf %265, %265 : vector<8x32xf32>
      %cst_158 = arith.constant dense<0.000000e+00> : vector<32xf32>
      %267 = vector.multi_reduction <add>, %266, %cst_158 [0] : vector<8x32xf32> to vector<32xf32>
      %268 = vector.shape_cast %267 : vector<32xf32> to vector<1x32xf32>
      %cst_159 = arith.constant 8.000000e+00 : f32
      %269 = vector.broadcast %cst_159 : f32 to vector<1x32xf32>
      %270 = arith.divf %268, %269 : vector<1x32xf32>
      %cst_160 = arith.constant 9.99999974E-6 : f32
      %271 = vector.broadcast %cst_160 : f32 to vector<1x32xf32>
      %272 = arith.addf %270, %271 : vector<1x32xf32>
      %273 = math.rsqrt %272 : vector<1x32xf32>
      %274 = vector.broadcast %273 : vector<1x32xf32> to vector<8x32xf32>
      %275 = arith.mulf %265, %274 : vector<8x32xf32>
      %276 = vector.extract_strided_slice %258 {offsets = [8, 0], sizes = [8, 32], strides = [1, 1]} : vector<16x32xf32> to vector<8x32xf32>
      %cst_161 = arith.constant dense<0.000000e+00> : vector<32xf32>
      %277 = vector.multi_reduction <add>, %276, %cst_161 [0] : vector<8x32xf32> to vector<32xf32>
      %278 = vector.shape_cast %277 : vector<32xf32> to vector<1x32xf32>
      %cst_162 = arith.constant 8.000000e+00 : f32
      %279 = vector.broadcast %cst_162 : f32 to vector<1x32xf32>
      %280 = arith.divf %278, %279 : vector<1x32xf32>
      %281 = vector.broadcast %280 : vector<1x32xf32> to vector<8x32xf32>
      %282 = arith.subf %276, %281 : vector<8x32xf32>
      %283 = arith.mulf %282, %282 : vector<8x32xf32>
      %cst_163 = arith.constant dense<0.000000e+00> : vector<32xf32>
      %284 = vector.multi_reduction <add>, %283, %cst_163 [0] : vector<8x32xf32> to vector<32xf32>
      %285 = vector.shape_cast %284 : vector<32xf32> to vector<1x32xf32>
      %cst_164 = arith.constant 8.000000e+00 : f32
      %286 = vector.broadcast %cst_164 : f32 to vector<1x32xf32>
      %287 = arith.divf %285, %286 : vector<1x32xf32>
      %cst_165 = arith.constant 9.99999974E-6 : f32
      %288 = vector.broadcast %cst_165 : f32 to vector<1x32xf32>
      %289 = arith.addf %287, %288 : vector<1x32xf32>
      %290 = math.rsqrt %289 : vector<1x32xf32>
      %291 = vector.broadcast %290 : vector<1x32xf32> to vector<8x32xf32>
      %292 = arith.mulf %282, %291 : vector<8x32xf32>
      %293 = tpu.concatenate %275, %292 in 0 : vector<8x32xf32>, vector<8x32xf32> -> vector<16x32xf32>
      %294 = vector.broadcast %251 : vector<1x32xf32> to vector<16x32xf32>
      %295 = arith.mulf %293, %294 : vector<16x32xf32>
      %296 = vector.broadcast %252 : vector<1x32xf32> to vector<16x32xf32>
      %297 = arith.addf %295, %296 : vector<16x32xf32>
      %cst_166 = arith.constant 0.000000e+00 : f32
      %298 = vector.broadcast %cst_166 : f32 to vector<16x32xf32>
      %299 = arith.maximumf %297, %298 : vector<16x32xf32>
      %300 = arith.truncf %299 : vector<16x32xf32> to vector<16x32xbf16>
      %cst_167 = arith.constant dense<0.000000e+00> : vector<16x128xf32>
      %301 = tpu.matmul %300, %253, %cst_167 {dimension_numbers = #tpu.dot_dimension_numbers<[1], [0], [0], [1], [0, 0, 1, 1], [], []>} : vector<16x32xbf16>, vector<32x128xbf16>, vector<16x128xf32> -> vector<16x128xf32>
      %302 = vector.broadcast %254 : vector<1x128xf32> to vector<16x128xf32>
      %303 = arith.addf %301, %302 : vector<16x128xf32>
      %c0_168 = arith.constant 0 : index
      %c0_169 = arith.constant 0 : index
      %304 = vector.load %arg25[%c0_168, %c0_169] : memref<16x128xf32, #tpu.memory_space<vmem>>, vector<16x128xf32>
      tpu.vector_store %arg25[%c0_168, %c0_169], %303 {strides = array<i32>} : memref<16x128xf32, #tpu.memory_space<vmem>>, vector<16x128xf32>,
      %c0_170 = arith.constant 0 : index
      %c0_171 = arith.constant 0 : index
      %305 = vector.load %arg26[%c0_170, %c0_171] : memref<16x128xf32, #tpu.memory_space<vmem>>, vector<16x128xf32>
      tpu.vector_store %arg26[%c0_170, %c0_171], %248 {strides = array<i32>} : memref<16x128xf32, #tpu.memory_space<vmem>>, vector<16x128xf32>,
    } else {
    }
    return
  }
  func.func @transform_0(%arg0: i32) -> (i32, i32, i32) {
    %c0_i32 = arith.constant 0 : i32
    %c0_i32_0 = arith.constant 0 : i32
    %c0_i32_1 = arith.constant 0 : i32
    return %arg0, %c0_i32, %c0_i32_0 : i32, i32, i32
  }
  func.func @transform_1(%arg0: i32) -> (i32, i32) {
    %c0_i32 = arith.constant 0 : i32
    %c0_i32_0 = arith.constant 0 : i32
    %c0_i32_1 = arith.constant 0 : i32
    return %c0_i32, %c0_i32_0 : i32, i32
  }
  func.func @transform_2(%arg0: i32) -> (i32, i32, i32) {
    %c0_i32 = arith.constant 0 : i32
    %c0_i32_0 = arith.constant 0 : i32
    %c0_i32_1 = arith.constant 0 : i32
    %c0_i32_2 = arith.constant 0 : i32
    return %c0_i32, %c0_i32_0, %c0_i32_1 : i32, i32, i32
  }
  func.func @transform_3(%arg0: i32) -> (i32, i32) {
    %c0_i32 = arith.constant 0 : i32
    %c0_i32_0 = arith.constant 0 : i32
    %c0_i32_1 = arith.constant 0 : i32
    return %c0_i32, %c0_i32_0 : i32, i32
  }
  func.func @transform_4(%arg0: i32) -> (i32, i32, i32) {
    %c0_i32 = arith.constant 0 : i32
    %c0_i32_0 = arith.constant 0 : i32
    %c0_i32_1 = arith.constant 0 : i32
    %c0_i32_2 = arith.constant 0 : i32
    return %c0_i32, %c0_i32_0, %c0_i32_1 : i32, i32, i32
  }
  func.func @transform_5(%arg0: i32) -> (i32, i32) {
    %c0_i32 = arith.constant 0 : i32
    %c0_i32_0 = arith.constant 0 : i32
    %c0_i32_1 = arith.constant 0 : i32
    return %c0_i32, %c0_i32_0 : i32, i32
  }
  func.func @transform_6(%arg0: i32) -> (i32, i32) {
    %c0_i32 = arith.constant 0 : i32
    %c0_i32_0 = arith.constant 0 : i32
    %c0_i32_1 = arith.constant 0 : i32
    return %c0_i32, %c0_i32_0 : i32, i32
  }
  func.func @transform_7(%arg0: i32) -> (i32, i32) {
    %c0_i32 = arith.constant 0 : i32
    %c0_i32_0 = arith.constant 0 : i32
    %c0_i32_1 = arith.constant 0 : i32
    return %c0_i32, %c0_i32_0 : i32, i32
  }
  func.func @transform_8(%arg0: i32) -> (i32, i32) {
    %c0_i32 = arith.constant 0 : i32
    %c0_i32_0 = arith.constant 0 : i32
    %c0_i32_1 = arith.constant 0 : i32
    return %c0_i32, %c0_i32_0 : i32, i32
  }
  func.func @transform_9(%arg0: i32) -> (i32, i32) {
    %c0_i32 = arith.constant 0 : i32
    %c0_i32_0 = arith.constant 0 : i32
    %c0_i32_1 = arith.constant 0 : i32
    return %c0_i32, %c0_i32_0 : i32, i32
  }
  func.func @transform_10(%arg0: i32) -> (i32, i32) {
    %c0_i32 = arith.constant 0 : i32
    %c0_i32_0 = arith.constant 0 : i32
    %c0_i32_1 = arith.constant 0 : i32
    return %c0_i32, %c0_i32_0 : i32, i32
  }
  func.func @transform_11(%arg0: i32) -> (i32, i32) {
    %c0_i32 = arith.constant 0 : i32
    %c0_i32_0 = arith.constant 0 : i32
    %c0_i32_1 = arith.constant 0 : i32
    return %c0_i32, %c0_i32_0 : i32, i32
  }
  func.func @transform_12(%arg0: i32) -> (i32, i32) {
    %c0_i32 = arith.constant 0 : i32
    %c0_i32_0 = arith.constant 0 : i32
    %c0_i32_1 = arith.constant 0 : i32
    return %c0_i32, %c0_i32_0 : i32, i32
  }
  func.func @transform_13(%arg0: i32) -> (i32, i32) {
    %c0_i32 = arith.constant 0 : i32
    %c0_i32_0 = arith.constant 0 : i32
    %c0_i32_1 = arith.constant 0 : i32
    return %c0_i32, %c0_i32_0 : i32, i32
  }
  func.func @transform_14(%arg0: i32) -> (i32, i32) {
    %c0_i32 = arith.constant 0 : i32
    %c0_i32_0 = arith.constant 0 : i32
    %c0_i32_1 = arith.constant 0 : i32
    return %c0_i32, %c0_i32_0 : i32, i32
  }
  func.func @transform_15(%arg0: i32) -> (i32, i32) {
    %c0_i32 = arith.constant 0 : i32
    %c0_i32_0 = arith.constant 0 : i32
    %c0_i32_1 = arith.constant 0 : i32
    return %c0_i32, %c0_i32_0 : i32, i32
  }
  func.func @transform_16(%arg0: i32) -> (i32, i32) {
    %c0_i32 = arith.constant 0 : i32
    %c0_i32_0 = arith.constant 0 : i32
    %c0_i32_1 = arith.constant 0 : i32
    return %c0_i32, %c0_i32_0 : i32, i32
  }
  func.func @transform_17(%arg0: i32) -> (i32, i32) {
    %c0_i32 = arith.constant 0 : i32
    %c0_i32_0 = arith.constant 0 : i32
    %c0_i32_1 = arith.constant 0 : i32
    return %c0_i32, %c0_i32_0 : i32, i32
  }
  func.func @transform_18(%arg0: i32) -> (i32, i32) {
    %c0_i32 = arith.constant 0 : i32
    %c0_i32_0 = arith.constant 0 : i32
    %c0_i32_1 = arith.constant 0 : i32
    return %c0_i32, %c0_i32_0 : i32, i32
  }
  func.func @transform_19(%arg0: i32) -> (i32, i32) {
    %c0_i32 = arith.constant 0 : i32
    %c0_i32_0 = arith.constant 0 : i32
    %c0_i32_1 = arith.constant 0 : i32
    return %c0_i32, %c0_i32_0 : i32, i32
  }
  func.func @transform_20(%arg0: i32) -> (i32, i32) {
    %c0_i32 = arith.constant 0 : i32
    %c0_i32_0 = arith.constant 0 : i32
    %c0_i32_1 = arith.constant 0 : i32
    return %c0_i32, %c0_i32_0 : i32, i32
  }
  func.func @transform_21(%arg0: i32) -> (i32, i32) {
    %c0_i32 = arith.constant 0 : i32
    %c0_i32_0 = arith.constant 0 : i32
    %c0_i32_1 = arith.constant 0 : i32
    return %c0_i32, %c0_i32_0 : i32, i32
  }
  func.func @transform_22(%arg0: i32) -> (i32, i32) {
    %c0_i32 = arith.constant 0 : i32
    %c0_i32_0 = arith.constant 0 : i32
    %c0_i32_1 = arith.constant 0 : i32
    return %c0_i32, %c0_i32_0 : i32, i32
  }
  func.func @transform_23(%arg0: i32) -> (i32, i32) {
    %c0_i32 = arith.constant 0 : i32
    %c0_i32_0 = arith.constant 0 : i32
    %c0_i32_1 = arith.constant 0 : i32
    return %c0_i32, %c0_i32_0 : i32, i32
  }
  func.func @transform_24(%arg0: i32) -> (i32, i32) {
    %c0_i32 = arith.constant 0 : i32
    %c0_i32_0 = arith.constant 0 : i32
    %c0_i32_1 = arith.constant 0 : i32
    return %c0_i32, %c0_i32_0 : i32, i32
  }
  func.func @transform_25(%arg0: i32) -> (i32, i32) {
    %c0_i32 = arith.constant 0 : i32
    %c0_i32_0 = arith.constant 0 : i32
    %c0_i32_1 = arith.constant 0 : i32
    return %c0_i32, %c0_i32_0 : i32, i32
  }
}

</mosaic_0001>

<llo_original>
// kernel: byol_forward.1
$region0: #{byol_forward.1}
  #allocation0 [shape = 'u32[]', space=smem, size = 0x4, offset = 0x4, fixed_abs, tag = 'smem constant byte address 0x4 - core index']
  #allocation1 [shape = 'u32[144,128]{1,0:T(1,128)}', space=vmem, size = 0x12000, scoped, tag = 'internal scratch']
  #allocation2 [shape = 'f32[16,32]{1,0:T(8,128)}', space=vmem, size = 0x2000, scoped, tag = 'scratch operand']
  #allocation3 [shape = 'f32[16,32]{1,0:T(8,128)}', space=vmem, size = 0x2000, scoped, tag = 'scratch operand']
  %s0 = inlined_call_operand.vmem [shape: f32[16,328,8], index: 0, kind: input, shape index: {}]
  %s1 = inlined_call_operand.vmem [shape: f32[328,1], index: 1, kind: input, shape index: {}]
  %s2 = inlined_call_operand.vmem [shape: bf16[9,8,32], index: 2, kind: input, shape index: {}]
  %s3 = inlined_call_operand.vmem [shape: f32[1,32], index: 3, kind: input, shape index: {}]
  %s4 = inlined_call_operand.vmem [shape: bf16[9,8,32], index: 4, kind: input, shape index: {}]
  %s5 = inlined_call_operand.vmem [shape: f32[1,32], index: 5, kind: input, shape index: {}]
  %s6 = inlined_call_operand.vmem [shape: bf16[32,32], index: 6, kind: input, shape index: {}]
  %s7 = inlined_call_operand.vmem [shape: f32[1,32], index: 7, kind: input, shape index: {}]
  %s8 = inlined_call_operand.vmem [shape: f32[1,32], index: 8, kind: input, shape index: {}]
  %s9 = inlined_call_operand.vmem [shape: f32[1,32], index: 9, kind: input, shape index: {}]
  %s10 = inlined_call_operand.vmem [shape: bf16[32,128], index: 10, kind: input, shape index: {}]
  %s11 = inlined_call_operand.vmem [shape: f32[1,128], index: 11, kind: input, shape index: {}]
  %s12 = inlined_call_operand.vmem [shape: bf16[32,32], index: 12, kind: input, shape index: {}]
  %s13 = inlined_call_operand.vmem [shape: f32[1,32], index: 13, kind: input, shape index: {}]
  %s14 = inlined_call_operand.vmem [shape: f32[1,32], index: 14, kind: input, shape index: {}]
  %s15 = inlined_call_operand.vmem [shape: f32[1,32], index: 15, kind: input, shape index: {}]
  %s16 = inlined_call_operand.vmem [shape: bf16[32,128], index: 16, kind: input, shape index: {}]
  %s17 = inlined_call_operand.vmem [shape: f32[1,128], index: 17, kind: input, shape index: {}]
  %s18 = inlined_call_operand.vmem [shape: bf16[128,32], index: 18, kind: input, shape index: {}]
  %s19 = inlined_call_operand.vmem [shape: f32[1,32], index: 19, kind: input, shape index: {}]
  %s20 = inlined_call_operand.vmem [shape: f32[1,32], index: 20, kind: input, shape index: {}]
  %s21 = inlined_call_operand.vmem [shape: f32[1,32], index: 21, kind: input, shape index: {}]
  %s22 = inlined_call_operand.vmem [shape: bf16[32,128], index: 22, kind: input, shape index: {}]
  %s23 = inlined_call_operand.vmem [shape: f32[1,128], index: 23, kind: input, shape index: {}]
  %s24 = inlined_call_operand.vmem [shape: f32[16,128], index: 24, kind: output, shape index: {0}]
  %s25 = inlined_call_operand.vmem [shape: f32[16,128], index: 25, kind: output, shape index: {1}]
  %26 = xla_tuple %s24, %s25
  %s27 = sld [smem:[#allocation0]]
  $region141: #{byol_forward.1} parent=0
    _
  %s29 = ssub.s32 1, %s27
  %s30 = scalar_select 0, %s29, %s27
  loop: start=0, step=1, limit=18
  $region2: #{byol_forward.1} parent=0 // loop_pre_header
    _
  $region3: #{byol_forward.1} parent=0 // loop_header
    %s32 = sphi 0, %s36
    %p33 = scmp.ge.s32.totalorder %s32, 18
    %s42 = sphi 0, %s44
    %s45 = sphi 0, %s42
    %s46 = sphi 0, %s45
    %s62 = sphi 0, %s46
    %s66 = sphi 0, %s66
    %s68 = sphi 0, %s66
    %s69 = sphi 0, %s68
    %s83 = sphi 0, %s69
    %s87 = sphi 0, %s87
    %s89 = sphi 0, %s87
    %s90 = sphi 0, %s89
    %s104 = sphi 0, %s90
    %s108 = sphi 0, %s108
    %s110 = sphi 0, %s108
    %s111 = sphi 0, %s110
    %s125 = sphi 0, %s111
    %s129 = sphi 0, %s129
    %s131 = sphi 0, %s129
    %s132 = sphi 0, %s131
    %s146 = sphi 0, %s132
    %s150 = sphi 0, %s150
    %s152 = sphi 0, %s150
    %s153 = sphi 0, %s152
    %s167 = sphi 0, %s153
    %s171 = sphi 0, %s171
    %s173 = sphi 0, %s171
    %s174 = sphi 0, %s173
    %s188 = sphi 0, %s174
    %s192 = sphi 0, %s192
    %s194 = sphi 0, %s192
    %s195 = sphi 0, %s194
    %s209 = sphi 0, %s195
    %s213 = sphi 0, %s213
    %s215 = sphi 0, %s213
    %s216 = sphi 0, %s215
    %s230 = sphi 0, %s216
    %s234 = sphi 0, %s234
    %s236 = sphi 0, %s234
    %s237 = sphi 0, %s236
    %s251 = sphi 0, %s237
    %s255 = sphi 0, %s255
    %s257 = sphi 0, %s255
    %s258 = sphi 0, %s257
    %s272 = sphi 0, %s258
    %s276 = sphi 0, %s276
    %s278 = sphi 0, %s276
    %s279 = sphi 0, %s278
    %s293 = sphi 0, %s279
    %s297 = sphi 0, %s297
    %s299 = sphi 0, %s297
    %s300 = sphi 0, %s299
    %s314 = sphi 0, %s300
    %s318 = sphi 0, %s318
    %s320 = sphi 0, %s318
    %s321 = sphi 0, %s320
    %s335 = sphi 0, %s321
    %s339 = sphi 0, %s339
    %s341 = sphi 0, %s339
    %s342 = sphi 0, %s341
    %s356 = sphi 0, %s342
    %s360 = sphi 0, %s360
    %s362 = sphi 0, %s360
    %s363 = sphi 0, %s362
    %s377 = sphi 0, %s363
    %s381 = sphi 0, %s381
    %s383 = sphi 0, %s381
    %s384 = sphi 0, %s383
    %s398 = sphi 0, %s384
    %s402 = sphi 0, %s402
    %s404 = sphi 0, %s402
    %s405 = sphi 0, %s404
    %s419 = sphi 0, %s405
    %s423 = sphi 0, %s423
    %s425 = sphi 0, %s423
    %s426 = sphi 0, %s425
    %s440 = sphi 0, %s426
    %s444 = sphi 0, %s444
    %s446 = sphi 0, %s444
    %s447 = sphi 0, %s446
    %s461 = sphi 0, %s447
    %s465 = sphi 0, %s465
    %s467 = sphi 0, %s465
    %s468 = sphi 0, %s467
    %s482 = sphi 0, %s468
    %s486 = sphi 0, %s486
    %s488 = sphi 0, %s486
    %s489 = sphi 0, %s488
    %s503 = sphi 0, %s489
    %s507 = sphi 0, %s507
    %s509 = sphi 0, %s507
    %s510 = sphi 0, %s509
    %s524 = sphi 0, %s510
    %s528 = sphi 0, %s528
    %s530 = sphi 0, %s528
    %s531 = sphi 0, %s530
    %s545 = sphi 0, %s531
    %s549 = sphi 0, %s549
    %s551 = sphi 0, %s549
    %s552 = sphi 0, %s551
    %s566 = sphi 0, %s552
    %s570 = sphi 0, %s570
    %s572 = sphi 0, %s570
    %s573 = sphi 0, %s572
    %s587 = sphi 0, %s573
  $region4: #{byol_forward.1} parent=0 // loop_header_branch
    %35 = sbr.rel (%p33) target = $region8
  $region5: #{byol_forward.1} parent=0 // loop_body
    %s37 = ssub.s32 %s32, 1
    %s38 = ssub.s32 %s32, 2
    %s39 = sadd.s32 %s32, 1
    %s40 = ssub.s32 %s32, %s39
    %p41 = scmp.eq.s32.totalorder %s40, 0
    %s43 = sadd.s32 %s42, 1
    %s44 = scalar_select %p41, %s42, %s43
    %p47 = pneg %p41
    %p48 = scmp.eq.s32.totalorder %s32, 15
    %p49 = por %p47, %p48
    %p50 = scmp.ne.s32.totalorder %s42, %s45
    %p51 = scmp.eq.s32.totalorder %s32, 0
    %p52 = por %p50, %p51
    %p53 = scmp.ne.s32.totalorder %s42, %s45
    %p54 = scmp.eq.s32.totalorder %s37, 15
    %p55 = por %p53, %p54
    %p56 = scmp.ne.s32.totalorder %s45, %s46
    %p57 = scmp.eq.s32.totalorder %s37, 0
    %p58 = por %p56, %p57
    %p59 = scmp.ne.s32.totalorder %s45, %s46
    %p60 = scmp.eq.s32.totalorder %s38, 15
    %p61 = por %p59, %p60
    %p63 = scmp.ne.s32.totalorder %s46, %s62
    %p64 = scmp.eq.s32.totalorder %s38, 0
    %p65 = por %p63, %p64
    %s67 = sadd.s32 %s66, 1
    %p70 = scmp.eq.s32.totalorder %s32, 15
    %p71 = scmp.ne.s32.totalorder %s66, %s68
    %p72 = scmp.eq.s32.totalorder %s32, 0
    %p73 = por %p71, %p72
    %p74 = scmp.ne.s32.totalorder %s66, %s68
    %p75 = scmp.eq.s32.totalorder %s37, 15
    %p76 = por %p74, %p75
    %p77 = scmp.ne.s32.totalorder %s68, %s69
    %p78 = scmp.eq.s32.totalorder %s37, 0
    %p79 = por %p77, %p78
    %p80 = scmp.ne.s32.totalorder %s68, %s69
    %p81 = scmp.eq.s32.totalorder %s38, 15
    %p82 = por %p80, %p81
    %p84 = scmp.ne.s32.totalorder %s69, %s83
    %p85 = scmp.eq.s32.totalorder %s38, 0
    %p86 = por %p84, %p85
    %s88 = sadd.s32 %s87, 1
    %p91 = scmp.eq.s32.totalorder %s32, 15
    %p92 = scmp.ne.s32.totalorder %s87, %s89
    %p93 = scmp.eq.s32.totalorder %s32, 0
    %p94 = por %p92, %p93
    %p95 = scmp.ne.s32.totalorder %s87, %s89
    %p96 = scmp.eq.s32.totalorder %s37, 15
    %p97 = por %p95, %p96
    %p98 = scmp.ne.s32.totalorder %s89, %s90
    %p99 = scmp.eq.s32.totalorder %s37, 0
    %p100 = por %p98, %p99
    %p101 = scmp.ne.s32.totalorder %s89, %s90
    %p102 = scmp.eq.s32.totalorder %s38, 15
    %p103 = por %p101, %p102
    %p105 = scmp.ne.s32.totalorder %s90, %s104
    %p106 = scmp.eq.s32.totalorder %s38, 0
    %p107 = por %p105, %p106
    %s109 = sadd.s32 %s108, 1
    %p112 = scmp.eq.s32.totalorder %s32, 15
    %p113 = scmp.ne.s32.totalorder %s108, %s110
    %p114 = scmp.eq.s32.totalorder %s32, 0
    %p115 = por %p113, %p114
    %p116 = scmp.ne.s32.totalorder %s108, %s110
    %p117 = scmp.eq.s32.totalorder %s37, 15
    %p118 = por %p116, %p117
    %p119 = scmp.ne.s32.totalorder %s110, %s111
    %p120 = scmp.eq.s32.totalorder %s37, 0
    %p121 = por %p119, %p120
    %p122 = scmp.ne.s32.totalorder %s110, %s111
    %p123 = scmp.eq.s32.totalorder %s38, 15
    %p124 = por %p122, %p123
    %p126 = scmp.ne.s32.totalorder %s111, %s125
    %p127 = scmp.eq.s32.totalorder %s38, 0
    %p128 = por %p126, %p127
    %s130 = sadd.s32 %s129, 1
    %p133 = scmp.eq.s32.totalorder %s32, 15
    %p134 = scmp.ne.s32.totalorder %s129, %s131
    %p135 = scmp.eq.s32.totalorder %s32, 0
    %p136 = por %p134, %p135
    %p137 = scmp.ne.s32.totalorder %s129, %s131
    %p138 = scmp.eq.s32.totalorder %s37, 15
    %p139 = por %p137, %p138
    %p140 = scmp.ne.s32.totalorder %s131, %s132
    %p141 = scmp.eq.s32.totalorder %s37, 0
    %p142 = por %p140, %p141
    %p143 = scmp.ne.s32.totalorder %s131, %s132
    %p144 = scmp.eq.s32.totalorder %s38, 15
    %p145 = por %p143, %p144
    %p147 = scmp.ne.s32.totalorder %s132, %s146
    %p148 = scmp.eq.s32.totalorder %s38, 0
    %p149 = por %p147, %p148
    %s151 = sadd.s32 %s150, 1
    %p154 = scmp.eq.s32.totalorder %s32, 15
    %p155 = scmp.ne.s32.totalorder %s150, %s152
    %p156 = scmp.eq.s32.totalorder %s32, 0
    %p157 = por %p155, %p156
    %p158 = scmp.ne.s32.totalorder %s150, %s152
    %p159 = scmp.eq.s32.totalorder %s37, 15
    %p160 = por %p158, %p159
    %p161 = scmp.ne.s32.totalorder %s152, %s153
    %p162 = scmp.eq.s32.totalorder %s37, 0
    %p163 = por %p161, %p162
    %p164 = scmp.ne.s32.totalorder %s152, %s153
    %p165 = scmp.eq.s32.totalorder %s38, 15
    %p166 = por %p164, %p165
    %p168 = scmp.ne.s32.totalorder %s153, %s167
    %p169 = scmp.eq.s32.totalorder %s38, 0
    %p170 = por %p168, %p169
    %s172 = sadd.s32 %s171, 1
    %p175 = scmp.eq.s32.totalorder %s32, 15
    %p176 = scmp.ne.s32.totalorder %s171, %s173
    %p177 = scmp.eq.s32.totalorder %s32, 0
    %p178 = por %p176, %p177
    %p179 = scmp.ne.s32.totalorder %s171, %s173
    %p180 = scmp.eq.s32.totalorder %s37, 15
    %p181 = por %p179, %p180
    %p182 = scmp.ne.s32.totalorder %s173, %s174
    %p183 = scmp.eq.s32.totalorder %s37, 0
    %p184 = por %p182, %p183
    %p185 = scmp.ne.s32.totalorder %s173, %s174
    %p186 = scmp.eq.s32.totalorder %s38, 15
    %p187 = por %p185, %p186
    %p189 = scmp.ne.s32.totalorder %s174, %s188
    %p190 = scmp.eq.s32.totalorder %s38, 0
    %p191 = por %p189, %p190
    %s193 = sadd.s32 %s192, 1
    %p196 = scmp.eq.s32.totalorder %s32, 15
    %p197 = scmp.ne.s32.totalorder %s192, %s194
    %p198 = scmp.eq.s32.totalorder %s32, 0
    %p199 = por %p197, %p198
    %p200 = scmp.ne.s32.totalorder %s192, %s194
    %p201 = scmp.eq.s32.totalorder %s37, 15
    %p202 = por %p200, %p201
    %p203 = scmp.ne.s32.totalorder %s194, %s195
    %p204 = scmp.eq.s32.totalorder %s37, 0
    %p205 = por %p203, %p204
    %p206 = scmp.ne.s32.totalorder %s194, %s195
    %p207 = scmp.eq.s32.totalorder %s38, 15
    %p208 = por %p206, %p207
    %p210 = scmp.ne.s32.totalorder %s195, %s209
    %p211 = scmp.eq.s32.totalorder %s38, 0
    %p212 = por %p210, %p211
    %s214 = sadd.s32 %s213, 1
    %p217 = scmp.eq.s32.totalorder %s32, 15
    %p218 = scmp.ne.s32.totalorder %s213, %s215
    %p219 = scmp.eq.s32.totalorder %s32, 0
    %p220 = por %p218, %p219
    %p221 = scmp.ne.s32.totalorder %s213, %s215
    %p222 = scmp.eq.s32.totalorder %s37, 15
    %p223 = por %p221, %p222
    %p224 = scmp.ne.s32.totalorder %s215, %s216
    %p225 = scmp.eq.s32.totalorder %s37, 0
    %p226 = por %p224, %p225
    %p227 = scmp.ne.s32.totalorder %s215, %s216
    %p228 = scmp.eq.s32.totalorder %s38, 15
    %p229 = por %p227, %p228
    %p231 = scmp.ne.s32.totalorder %s216, %s230
    %p232 = scmp.eq.s32.totalorder %s38, 0
    %p233 = por %p231, %p232
    %s235 = sadd.s32 %s234, 1
    %p238 = scmp.eq.s32.totalorder %s32, 15
    %p239 = scmp.ne.s32.totalorder %s234, %s236
    %p240 = scmp.eq.s32.totalorder %s32, 0
    %p241 = por %p239, %p240
    %p242 = scmp.ne.s32.totalorder %s234, %s236
    %p243 = scmp.eq.s32.totalorder %s37, 15
    %p244 = por %p242, %p243
    %p245 = scmp.ne.s32.totalorder %s236, %s237
    %p246 = scmp.eq.s32.totalorder %s37, 0
    %p247 = por %p245, %p246
    %p248 = scmp.ne.s32.totalorder %s236, %s237
    %p249 = scmp.eq.s32.totalorder %s38, 15
    %p250 = por %p248, %p249
    %p252 = scmp.ne.s32.totalorder %s237, %s251
    %p253 = scmp.eq.s32.totalorder %s38, 0
    %p254 = por %p252, %p253
    %s256 = sadd.s32 %s255, 1
    %p259 = scmp.eq.s32.totalorder %s32, 15
    %p260 = scmp.ne.s32.totalorder %s255, %s257
    %p261 = scmp.eq.s32.totalorder %s32, 0
    %p262 = por %p260, %p261
    %p263 = scmp.ne.s32.totalorder %s255, %s257
    %p264 = scmp.eq.s32.totalorder %s37, 15
    %p265 = por %p263, %p264
    %p266 = scmp.ne.s32.totalorder %s257, %s258
    %p267 = scmp.eq.s32.totalorder %s37, 0
    %p268 = por %p266, %p267
    %p269 = scmp.ne.s32.totalorder %s257, %s258
    %p270 = scmp.eq.s32.totalorder %s38, 15
    %p271 = por %p269, %p270
    %p273 = scmp.ne.s32.totalorder %s258, %s272
    %p274 = scmp.eq.s32.totalorder %s38, 0
    %p275 = por %p273, %p274
    %s277 = sadd.s32 %s276, 1
    %p280 = scmp.eq.s32.totalorder %s32, 15
    %p281 = scmp.ne.s32.totalorder %s276, %s278
    %p282 = scmp.eq.s32.totalorder %s32, 0
    %p283 = por %p281, %p282
    %p284 = scmp.ne.s32.totalorder %s276, %s278
    %p285 = scmp.eq.s32.totalorder %s37, 15
    %p286 = por %p284, %p285
    %p287 = scmp.ne.s32.totalorder %s278, %s279
    %p288 = scmp.eq.s32.totalorder %s37, 0
    %p289 = por %p287, %p288
    %p290 = scmp.ne.s32.totalorder %s278, %s279
    %p291 = scmp.eq.s32.totalorder %s38, 15
    %p292 = por %p290, %p291
    %p294 = scmp.ne.s32.totalorder %s279, %s293
    %p295 = scmp.eq.s32.totalorder %s38, 0
    %p296 = por %p294, %p295
    %s298 = sadd.s32 %s297, 1
    %p301 = scmp.eq.s32.totalorder %s32, 15
    %p302 = scmp.ne.s32.totalorder %s297, %s299
    %p303 = scmp.eq.s32.totalorder %s32, 0
    %p304 = por %p302, %p303
    %p305 = scmp.ne.s32.totalorder %s297, %s299
    %p306 = scmp.eq.s32.totalorder %s37, 15
    %p307 = por %p305, %p306
    %p308 = scmp.ne.s32.totalorder %s299, %s300
    %p309 = scmp.eq.s32.totalorder %s37, 0
    %p310 = por %p308, %p309
    %p311 = scmp.ne.s32.totalorder %s299, %s300
    %p312 = scmp.eq.s32.totalorder %s38, 15
    %p313 = por %p311, %p312
    %p315 = scmp.ne.s32.totalorder %s300, %s314
    %p316 = scmp.eq.s32.totalorder %s38, 0
    %p317 = por %p315, %p316
    %s319 = sadd.s32 %s318, 1
    %p322 = scmp.eq.s32.totalorder %s32, 15
    %p323 = scmp.ne.s32.totalorder %s318, %s320
    %p324 = scmp.eq.s32.totalorder %s32, 0
    %p325 = por %p323, %p324
    %p326 = scmp.ne.s32.totalorder %s318, %s320
    %p327 = scmp.eq.s32.totalorder %s37, 15
    %p328 = por %p326, %p327
    %p329 = scmp.ne.s32.totalorder %s320, %s321
    %p330 = scmp.eq.s32.totalorder %s37, 0
    %p331 = por %p329, %p330
    %p332 = scmp.ne.s32.totalorder %s320, %s321
    %p333 = scmp.eq.s32.totalorder %s38, 15
    %p334 = por %p332, %p333
    %p336 = scmp.ne.s32.totalorder %s321, %s335
    %p337 = scmp.eq.s32.totalorder %s38, 0
    %p338 = por %p336, %p337
    %s340 = sadd.s32 %s339, 1
    %p343 = scmp.eq.s32.totalorder %s32, 15
    %p344 = scmp.ne.s32.totalorder %s339, %s341
    %p345 = scmp.eq.s32.totalorder %s32, 0
    %p346 = por %p344, %p345
    %p347 = scmp.ne.s32.totalorder %s339, %s341
    %p348 = scmp.eq.s32.totalorder %s37, 15
    %p349 = por %p347, %p348
    %p350 = scmp.ne.s32.totalorder %s341, %s342
    %p351 = scmp.eq.s32.totalorder %s37, 0
    %p352 = por %p350, %p351
    %p353 = scmp.ne.s32.totalorder %s341, %s342
    %p354 = scmp.eq.s32.totalorder %s38, 15
    %p355 = por %p353, %p354
    %p357 = scmp.ne.s32.totalorder %s342, %s356
    %p358 = scmp.eq.s32.totalorder %s38, 0
    %p359 = por %p357, %p358
    %s361 = sadd.s32 %s360, 1
    %p364 = scmp.eq.s32.totalorder %s32, 15
    %p365 = scmp.ne.s32.totalorder %s360, %s362
    %p366 = scmp.eq.s32.totalorder %s32, 0
    %p367 = por %p365, %p366
    %p368 = scmp.ne.s32.totalorder %s360, %s362
    %p369 = scmp.eq.s32.totalorder %s37, 15
    %p370 = por %p368, %p369
    %p371 = scmp.ne.s32.totalorder %s362, %s363
    %p372 = scmp.eq.s32.totalorder %s37, 0
    %p373 = por %p371, %p372
    %p374 = scmp.ne.s32.totalorder %s362, %s363
    %p375 = scmp.eq.s32.totalorder %s38, 15
    %p376 = por %p374, %p375
    %p378 = scmp.ne.s32.totalorder %s363, %s377
    %p379 = scmp.eq.s32.totalorder %s38, 0
    %p380 = por %p378, %p379
    %s382 = sadd.s32 %s381, 1
    %p385 = scmp.eq.s32.totalorder %s32, 15
    %p386 = scmp.ne.s32.totalorder %s381, %s383
    %p387 = scmp.eq.s32.totalorder %s32, 0
    %p388 = por %p386, %p387
    %p389 = scmp.ne.s32.totalorder %s381, %s383
    %p390 = scmp.eq.s32.totalorder %s37, 15
    %p391 = por %p389, %p390
    %p392 = scmp.ne.s32.totalorder %s383, %s384
    %p393 = scmp.eq.s32.totalorder %s37, 0
    %p394 = por %p392, %p393
    %p395 = scmp.ne.s32.totalorder %s383, %s384
    %p396 = scmp.eq.s32.totalorder %s38, 15
    %p397 = por %p395, %p396
    %p399 = scmp.ne.s32.totalorder %s384, %s398
    %p400 = scmp.eq.s32.totalorder %s38, 0
    %p401 = por %p399, %p400
    %s403 = sadd.s32 %s402, 1
    %p406 = scmp.eq.s32.totalorder %s32, 15
    %p407 = scmp.ne.s32.totalorder %s402, %s404
    %p408 = scmp.eq.s32.totalorder %s32, 0
    %p409 = por %p407, %p408
    %p410 = scmp.ne.s32.totalorder %s402, %s404
    %p411 = scmp.eq.s32.totalorder %s37, 15
    %p412 = por %p410, %p411
    %p413 = scmp.ne.s32.totalorder %s404, %s405
    %p414 = scmp.eq.s32.totalorder %s37, 0
    %p415 = por %p413, %p414
    %p416 = scmp.ne.s32.totalorder %s404, %s405
    %p417 = scmp.eq.s32.totalorder %s38, 15
    %p418 = por %p416, %p417
    %p420 = scmp.ne.s32.totalorder %s405, %s419
    %p421 = scmp.eq.s32.totalorder %s38, 0
    %p422 = por %p420, %p421
    %s424 = sadd.s32 %s423, 1
    %p427 = scmp.eq.s32.totalorder %s32, 15
    %p428 = scmp.ne.s32.totalorder %s423, %s425
    %p429 = scmp.eq.s32.totalorder %s32, 0
    %p430 = por %p428, %p429
    %p431 = scmp.ne.s32.totalorder %s423, %s425
    %p432 = scmp.eq.s32.totalorder %s37, 15
    %p433 = por %p431, %p432
    %p434 = scmp.ne.s32.totalorder %s425, %s426
    %p435 = scmp.eq.s32.totalorder %s37, 0
    %p436 = por %p434, %p435
    %p437 = scmp.ne.s32.totalorder %s425, %s426
    %p438 = scmp.eq.s32.totalorder %s38, 15
    %p439 = por %p437, %p438
    %p441 = scmp.ne.s32.totalorder %s426, %s440
    %p442 = scmp.eq.s32.totalorder %s38, 0
    %p443 = por %p441, %p442
    %s445 = sadd.s32 %s444, 1
    %p448 = scmp.eq.s32.totalorder %s32, 15
    %p449 = scmp.ne.s32.totalorder %s444, %s446
    %p450 = scmp.eq.s32.totalorder %s32, 0
    %p451 = por %p449, %p450
    %p452 = scmp.ne.s32.totalorder %s444, %s446
    %p453 = scmp.eq.s32.totalorder %s37, 15
    %p454 = por %p452, %p453
    %p455 = scmp.ne.s32.totalorder %s446, %s447
    %p456 = scmp.eq.s32.totalorder %s37, 0
    %p457 = por %p455, %p456
    %p458 = scmp.ne.s32.totalorder %s446, %s447
    %p459 = scmp.eq.s32.totalorder %s38, 15
    %p460 = por %p458, %p459
    %p462 = scmp.ne.s32.totalorder %s447, %s461
    %p463 = scmp.eq.s32.totalorder %s38, 0
    %p464 = por %p462, %p463
    %s466 = sadd.s32 %s465, 1
    %p469 = scmp.eq.s32.totalorder %s32, 15
    %p470 = scmp.ne.s32.totalorder %s465, %s467
    %p471 = scmp.eq.s32.totalorder %s32, 0
    %p472 = por %p470, %p471
    %p473 = scmp.ne.s32.totalorder %s465, %s467
    %p474 = scmp.eq.s32.totalorder %s37, 15
    %p475 = por %p473, %p474
    %p476 = scmp.ne.s32.totalorder %s467, %s468
    %p477 = scmp.eq.s32.totalorder %s37, 0
    %p478 = por %p476, %p477
    %p479 = scmp.ne.s32.totalorder %s467, %s468
    %p480 = scmp.eq.s32.totalorder %s38, 15
    %p481 = por %p479, %p480
    %p483 = scmp.ne.s32.totalorder %s468, %s482
    %p484 = scmp.eq.s32.totalorder %s38, 0
    %p485 = por %p483, %p484
    %s487 = sadd.s32 %s486, 1
    %p490 = scmp.eq.s32.totalorder %s32, 15
    %p491 = scmp.ne.s32.totalorder %s486, %s488
    %p492 = scmp.eq.s32.totalorder %s32, 0
    %p493 = por %p491, %p492
    %p494 = scmp.ne.s32.totalorder %s486, %s488
    %p495 = scmp.eq.s32.totalorder %s37, 15
    %p496 = por %p494, %p495
    %p497 = scmp.ne.s32.totalorder %s488, %s489
    %p498 = scmp.eq.s32.totalorder %s37, 0
    %p499 = por %p497, %p498
    %p500 = scmp.ne.s32.totalorder %s488, %s489
    %p501 = scmp.eq.s32.totalorder %s38, 15
    %p502 = por %p500, %p501
    %p504 = scmp.ne.s32.totalorder %s489, %s503
    %p505 = scmp.eq.s32.totalorder %s38, 0
    %p506 = por %p504, %p505
    %s508 = sadd.s32 %s507, 1
    %p511 = scmp.eq.s32.totalorder %s32, 15
    %p512 = scmp.ne.s32.totalorder %s507, %s509
    %p513 = scmp.eq.s32.totalorder %s32, 0
    %p514 = por %p512, %p513
    %p515 = scmp.ne.s32.totalorder %s507, %s509
    %p516 = scmp.eq.s32.totalorder %s37, 15
    %p517 = por %p515, %p516
    %p518 = scmp.ne.s32.totalorder %s509, %s510
    %p519 = scmp.eq.s32.totalorder %s37, 0
    %p520 = por %p518, %p519
    %p521 = scmp.ne.s32.totalorder %s509, %s510
    %p522 = scmp.eq.s32.totalorder %s38, 15
    %p523 = por %p521, %p522
    %p525 = scmp.ne.s32.totalorder %s510, %s524
    %p526 = scmp.eq.s32.totalorder %s38, 0
    %p527 = por %p525, %p526
    %s529 = sadd.s32 %s528, 1
    %p532 = scmp.eq.s32.totalorder %s32, 15
    %p533 = scmp.ne.s32.totalorder %s528, %s530
    %p534 = scmp.eq.s32.totalorder %s32, 0
    %p535 = por %p533, %p534
    %p536 = scmp.ne.s32.totalorder %s528, %s530
    %p537 = scmp.eq.s32.totalorder %s37, 15
    %p538 = por %p536, %p537
    %p539 = scmp.ne.s32.totalorder %s530, %s531
    %p540 = scmp.eq.s32.totalorder %s37, 0
    %p541 = por %p539, %p540
    %p542 = scmp.ne.s32.totalorder %s530, %s531
    %p543 = scmp.eq.s32.totalorder %s38, 15
    %p544 = por %p542, %p543
    %p546 = scmp.ne.s32.totalorder %s531, %s545
    %p547 = scmp.eq.s32.totalorder %s38, 0
    %p548 = por %p546, %p547
    %s550 = sadd.s32 %s549, 1
    %p553 = scmp.eq.s32.totalorder %s32, 15
    %p554 = scmp.ne.s32.totalorder %s549, %s551
    %p555 = scmp.eq.s32.totalorder %s32, 0
    %p556 = por %p554, %p555
    %p557 = scmp.ne.s32.totalorder %s549, %s551
    %p558 = scmp.eq.s32.totalorder %s37, 15
    %p559 = por %p557, %p558
    %p560 = scmp.ne.s32.totalorder %s551, %s552
    %p561 = scmp.eq.s32.totalorder %s37, 0
    %p562 = por %p560, %p561
    %p563 = scmp.ne.s32.totalorder %s551, %s552
    %p564 = scmp.eq.s32.totalorder %s38, 15
    %p565 = por %p563, %p564
    %p567 = scmp.ne.s32.totalorder %s552, %s566
    %p568 = scmp.eq.s32.totalorder %s38, 0
    %p569 = por %p567, %p568
    %s571 = sadd.s32 %s570, 1
    %p574 = scmp.eq.s32.totalorder %s32, 15
    %p575 = scmp.ne.s32.totalorder %s570, %s572
    %p576 = scmp.eq.s32.totalorder %s32, 0
    %p577 = por %p575, %p576
    %p578 = scmp.ne.s32.totalorder %s570, %s572
    %p579 = scmp.eq.s32.totalorder %s37, 15
    %p580 = por %p578, %p579
    %p581 = scmp.ne.s32.totalorder %s572, %s573
    %p582 = scmp.eq.s32.totalorder %s37, 0
    %p583 = por %p581, %p582
    %p584 = scmp.ne.s32.totalorder %s572, %s573
    %p585 = scmp.eq.s32.totalorder %s38, 15
    %p586 = por %p584, %p585
    %p588 = scmp.ne.s32.totalorder %s573, %s587
    %p589 = scmp.eq.s32.totalorder %s38, 0
    %p590 = por %p588, %p589
    %p591 = scmp.le.s32.totalorder 1, %s32
    %p592 = scmp.lt.s32.totalorder %s32, 17
    %p593 = pnand %p591, %p592
    %p594 = pneg %p593
    // Predicated region
    $region9: #{byol_forward.1} parent=5 // pred_check
      _
    $region10: #{byol_forward.1} parent=5 // pred_check_branch
      %596 = sbr.rel (%p593) target = $region12
    $region11: #{byol_forward.1} parent=5 // pred_region
      %s597 = ssub.s32 %s32, 1
      // Predicated region
      $region13: #{byol_forward.1} parent=11 // pred_check
        %p598 = pneg %p79
      $region14: #{byol_forward.1} parent=11 // pred_check_branch
        %600 = sbr.rel (%p598) target = $region16
      $region15: #{byol_forward.1} parent=11 // pred_region
        _
      $region16: #{byol_forward.1} parent=11 // pred_fallthru
        _
      // Predicated region
      $region17: #{byol_forward.1} parent=11 // pred_check
        %p601 = pneg %p100
      $region18: #{byol_forward.1} parent=11 // pred_check_branch
        %603 = sbr.rel (%p601) target = $region20
      $region19: #{byol_forward.1} parent=11 // pred_region
        _
      $region20: #{byol_forward.1} parent=11 // pred_fallthru
        _
      // Predicated region
      $region21: #{byol_forward.1} parent=11 // pred_check
        %p604 = pneg %p121
      $region22: #{byol_forward.1} parent=11 // pred_check_branch
        %606 = sbr.rel (%p604) target = $region24
      $region23: #{byol_forward.1} parent=11 // pred_region
        _
      $region24: #{byol_forward.1} parent=11 // pred_fallthru
        _
      // Predicated region
      $region25: #{byol_forward.1} parent=11 // pred_check
        %p607 = pneg %p142
      $region26: #{byol_forward.1} parent=11 // pred_check_branch
        %609 = sbr.rel (%p607) target = $region28
      $region27: #{byol_forward.1} parent=11 // pred_region
        _
      $region28: #{byol_forward.1} parent=11 // pred_fallthru
        _
      // Predicated region
      $region29: #{byol_forward.1} parent=11 // pred_check
        %p610 = pneg %p163
      $region30: #{byol_forward.1} parent=11 // pred_check_branch
        %612 = sbr.rel (%p610) target = $region32
      $region31: #{byol_forward.1} parent=11 // pred_region
        _
      $region32: #{byol_forward.1} parent=11 // pred_fallthru
        _
      // Predicated region
      $region33: #{byol_forward.1} parent=11 // pred_check
        %p613 = pneg %p184
      $region34: #{byol_forward.1} parent=11 // pred_check_branch
        %615 = sbr.rel (%p613) target = $region36
      $region35: #{byol_forward.1} parent=11 // pred_region
        _
      $region36: #{byol_forward.1} parent=11 // pred_fallthru
        _
      // Predicated region
      $region37: #{byol_forward.1} parent=11 // pred_check
        %p616 = pneg %p205
      $region38: #{byol_forward.1} parent=11 // pred_check_branch
        %618 = sbr.rel (%p616) target = $region40
      $region39: #{byol_forward.1} parent=11 // pred_region
        _
      $region40: #{byol_forward.1} parent=11 // pred_fallthru
        _
      // Predicated region
      $region41: #{byol_forward.1} parent=11 // pred_check
        %p619 = pneg %p226
      $region42: #{byol_forward.1} parent=11 // pred_check_branch
        %621 = sbr.rel (%p619) target = $region44
      $region43: #{byol_forward.1} parent=11 // pred_region
        _
      $region44: #{byol_forward.1} parent=11 // pred_fallthru
        _
      // Predicated region
      $region45: #{byol_forward.1} parent=11 // pred_check
        %p622 = pneg %p247
      $region46: #{byol_forward.1} parent=11 // pred_check_branch
        %624 = sbr.rel (%p622) target = $region48
      $region47: #{byol_forward.1} parent=11 // pred_region
        _
      $region48: #{byol_forward.1} parent=11 // pred_fallthru
        _
      // Predicated region
      $region49: #{byol_forward.1} parent=11 // pred_check
        %p625 = pneg %p268
      $region50: #{byol_forward.1} parent=11 // pred_check_branch
        %627 = sbr.rel (%p625) target = $region52
      $region51: #{byol_forward.1} parent=11 // pred_region
        _
      $region52: #{byol_forward.1} parent=11 // pred_fallthru
        _
      // Predicated region
      $region53: #{byol_forward.1} parent=11 // pred_check
        %p628 = pneg %p289
      $region54: #{byol_forward.1} parent=11 // pred_check_branch
        %630 = sbr.rel (%p628) target = $region56
      $region55: #{byol_forward.1} parent=11 // pred_region
        _
      $region56: #{byol_forward.1} parent=11 // pred_fallthru
        _
      // Predicated region
      $region57: #{byol_forward.1} parent=11 // pred_check
        %p631 = pneg %p310
      $region58: #{byol_forward.1} parent=11 // pred_check_branch
        %633 = sbr.rel (%p631) target = $region60
      $region59: #{byol_forward.1} parent=11 // pred_region
        _
      $region60: #{byol_forward.1} parent=11 // pred_fallthru
        _
      // Predicated region
      $region61: #{byol_forward.1} parent=11 // pred_check
        %p634 = pneg %p331
      $region62: #{byol_forward.1} parent=11 // pred_check_branch
        %636 = sbr.rel (%p634) target = $region64
      $region63: #{byol_forward.1} parent=11 // pred_region
        _
      $region64: #{byol_forward.1} parent=11 // pred_fallthru
        _
      // Predicated region
      $region65: #{byol_forward.1} parent=11 // pred_check
        %p637 = pneg %p352
      $region66: #{byol_forward.1} parent=11 // pred_check_branch
        %639 = sbr.rel (%p637) target = $region68
      $region67: #{byol_forward.1} parent=11 // pred_region
        _
      $region68: #{byol_forward.1} parent=11 // pred_fallthru
        _
      // Predicated region
      $region69: #{byol_forward.1} parent=11 // pred_check
        %p640 = pneg %p373
      $region70: #{byol_forward.1} parent=11 // pred_check_branch
        %642 = sbr.rel (%p640) target = $region72
      $region71: #{byol_forward.1} parent=11 // pred_region
        _
      $region72: #{byol_forward.1} parent=11 // pred_fallthru
        _
      // Predicated region
      $region73: #{byol_forward.1} parent=11 // pred_check
        %p643 = pneg %p394
      $region74: #{byol_forward.1} parent=11 // pred_check_branch
        %645 = sbr.rel (%p643) target = $region76
      $region75: #{byol_forward.1} parent=11 // pred_region
        _
      $region76: #{byol_forward.1} parent=11 // pred_fallthru
        _
      // Predicated region
      $region77: #{byol_forward.1} parent=11 // pred_check
        %p646 = pneg %p415
      $region78: #{byol_forward.1} parent=11 // pred_check_branch
        %648 = sbr.rel (%p646) target = $region80
      $region79: #{byol_forward.1} parent=11 // pred_region
        _
      $region80: #{byol_forward.1} parent=11 // pred_fallthru
        _
      // Predicated region
      $region81: #{byol_forward.1} parent=11 // pred_check
        %p649 = pneg %p436
      $region82: #{byol_forward.1} parent=11 // pred_check_branch
        %651 = sbr.rel (%p649) target = $region84
      $region83: #{byol_forward.1} parent=11 // pred_region
        _
      $region84: #{byol_forward.1} parent=11 // pred_fallthru
        _
      // Predicated region
      $region85: #{byol_forward.1} parent=11 // pred_check
        %p652 = pneg %p457
      $region86: #{byol_forward.1} parent=11 // pred_check_branch
        %654 = sbr.rel (%p652) target = $region88
      $region87: #{byol_forward.1} parent=11 // pred_region
        _
      $region88: #{byol_forward.1} parent=11 // pred_fallthru
        _
      // Predicated region
      $region89: #{byol_forward.1} parent=11 // pred_check
        %p655 = pneg %p478
      $region90: #{byol_forward.1} parent=11 // pred_check_branch
        %657 = sbr.rel (%p655) target = $region92
      $region91: #{byol_forward.1} parent=11 // pred_region
        _
      $region92: #{byol_forward.1} parent=11 // pred_fallthru
        _
      // Predicated region
      $region93: #{byol_forward.1} parent=11 // pred_check
        %p658 = pneg %p499
      $region94: #{byol_forward.1} parent=11 // pred_check_branch
        %660 = sbr.rel (%p658) target = $region96
      $region95: #{byol_forward.1} parent=11 // pred_region
        _
      $region96: #{byol_forward.1} parent=11 // pred_fallthru
        _
      // Predicated region
      $region97: #{byol_forward.1} parent=11 // pred_check
        %p661 = pneg %p520
      $region98: #{byol_forward.1} parent=11 // pred_check_branch
        %663 = sbr.rel (%p661) target = $region100
      $region99: #{byol_forward.1} parent=11 // pred_region
        _
      $region100: #{byol_forward.1} parent=11 // pred_fallthru
        _
      // Predicated region
      $region101: #{byol_forward.1} parent=11 // pred_check
        %p664 = pneg %p541
      $region102: #{byol_forward.1} parent=11 // pred_check_branch
        %666 = sbr.rel (%p664) target = $region104
      $region103: #{byol_forward.1} parent=11 // pred_region
        _
      $region104: #{byol_forward.1} parent=11 // pred_fallthru
        _
    $region12: #{byol_forward.1} parent=5 // pred_fallthru
      _
    %p667 = scmp.lt.s32.totalorder %s32, 16
    // Predicated region
    $region105: #{byol_forward.1} parent=5 // pred_check
      %p668 = pneg %p667
    $region106: #{byol_forward.1} parent=5 // pred_check_branch
      %670 = sbr.rel (%p668) target = $region108
    $region107: #{byol_forward.1} parent=5 // pred_region
      // Predicated region
      $region109: #{byol_forward.1} parent=107 // pred_check
        %p671 = pneg %p52
      $region110: #{byol_forward.1} parent=107 // pred_check_branch
        %673 = sbr.rel (%p671) target = $region112
      $region111: #{byol_forward.1} parent=107 // pred_region
        %p674 = scmp.lt.s32.totalorder %s32, 15
        %s675 = scalar_select %p674, %s32, 15
        %s676 = smul.addr %s675, 41
        %s677 = smul.addr %s676, 8
        %s678 = scalar_lea.vmem %s0, %s677
      $region112: #{byol_forward.1} parent=107 // pred_fallthru
        _
    $region108: #{byol_forward.1} parent=5 // pred_fallthru
      _
    %p679 = scmp.le.s32.totalorder 1, %s32
    %p680 = scmp.lt.s32.totalorder %s32, 17
    %p681 = pnand %p679, %p680
    %p682 = pneg %p681
    // Predicated region
    $region113: #{byol_forward.1} parent=5 // pred_check
      _
    $region114: #{byol_forward.1} parent=5 // pred_check_branch
      %684 = sbr.rel (%p681) target = $region116
    $region115: #{byol_forward.1} parent=5 // pred_region
      %s685 = ssub.s32 %s32, 1
      %p686 = scmp.lt.s32.totalorder %s37, 15
      %s687 = scalar_select %p686, %s37, 15
      %s688 = smul.addr %s687, 41
      %s689 = smul.addr %s688, 8
      %s690 = scalar_lea.vmem %s0, %s689
      %p691 = pneg %p58
      %p692 = pneg %p55
      %p693 = pneg %p79
      %p694 = pneg %p76
      %p695 = pneg %p100
      %p696 = pneg %p97
      %p697 = pneg %p121
      %p698 = pneg %p118
      %p699 = pneg %p142
      %p700 = pneg %p139
      %p701 = pneg %p163
      %p702 = pneg %p160
      %p703 = pneg %p184
      %p704 = pneg %p181
      %p705 = pneg %p205
      %p706 = pneg %p202
      %p707 = pneg %p226
      %p708 = pneg %p223
      %p709 = pneg %p247
      %p710 = pneg %p244
      %p711 = pneg %p268
      %p712 = pneg %p265
      %p713 = pneg %p289
      %p714 = pneg %p286
      %p715 = pneg %p310
      %p716 = pneg %p307
      %p717 = pneg %p331
      %p718 = pneg %p328
      %p719 = pneg %p352
      %p720 = pneg %p349
      %p721 = pneg %p373
      %p722 = pneg %p370
      %p723 = pneg %p394
      %p724 = pneg %p391
      %p725 = pneg %p415
      %p726 = pneg %p412
      %p727 = pneg %p436
      %p728 = pneg %p433
      %p729 = pneg %p457
      %p730 = pneg %p454
      %p731 = pneg %p478
      %p732 = pneg %p475
      %p733 = pneg %p499
      %p734 = pneg %p496
      %p735 = pneg %p520
      %p736 = pneg %p517
      %p737 = pneg %p541
      %p738 = pneg %p538
      %p739 = pneg %p562
      %p740 = pneg %p559
      %p741 = pneg %p583
      %p742 = pneg %p580
      %p743 = scmp.lt.s32.totalorder %s37, 15
      %s744 = scalar_select %p743, %s37, 15
      %s745 = smul.addr %s744, 41
      %s746 = smul.addr %s745, 8
      %s747 = scalar_lea.vmem %s0, %s746
      %v749 = vld [vmem:[%s747] sm:$0xff]
      %v750 = vld [vmem:[%s747 + $0x8] sm:$0xff]
      %v751 = vld [vmem:[%s747 + $0x10] sm:$0xff]
      %v752 = vld [vmem:[%s747 + $0x18] sm:$0xff]
      %v753 = vld [vmem:[%s747 + $0x20] sm:$0xff]
      %v754 = vld [vmem:[%s747 + $0x28] sm:$0xff]
      %v755 = vld [vmem:[%s747 + $0x30] sm:$0xff]
      %v756 = vld [vmem:[%s747 + $0x38] sm:$0xff]
      %v757 = vld [vmem:[%s747 + $0x40] sm:$0xff]
      %v758 = vld [vmem:[%s747 + $0x48] sm:$0xff]
      %v759 = vld [vmem:[%s747 + $0x50] sm:$0xff]
      %v760 = vld [vmem:[%s747 + $0x58] sm:$0xff]
      %v761 = vld [vmem:[%s747 + $0x60] sm:$0xff]
      %v762 = vld [vmem:[%s747 + $0x68] sm:$0xff]
      %v763 = vld [vmem:[%s747 + $0x70] sm:$0xff]
      %v764 = vld [vmem:[%s747 + $0x78] sm:$0xff]
      %v765 = vld [vmem:[%s747 + $0x80] sm:$0xff]
      %v766 = vld [vmem:[%s747 + $0x88] sm:$0xff]
      %v767 = vld [vmem:[%s747 + $0x90] sm:$0xff]
      %v768 = vld [vmem:[%s747 + $0x98] sm:$0xff]
      %v769 = vld [vmem:[%s747 + $0xa0] sm:$0xff]
      %v770 = vld [vmem:[%s747 + $0xa8] sm:$0xff]
      %v771 = vld [vmem:[%s747 + $0xb0] sm:$0xff]
      %v772 = vld [vmem:[%s747 + $0xb8] sm:$0xff]
      %v773 = vld [vmem:[%s747 + $0xc0] sm:$0xff]
      %v774 = vld [vmem:[%s747 + $0xc8] sm:$0xff]
      %v775 = vld [vmem:[%s747 + $0xd0] sm:$0xff]
      %v776 = vld [vmem:[%s747 + $0xd8] sm:$0xff]
      %v777 = vld [vmem:[%s747 + $0xe0] sm:$0xff]
      %v778 = vld [vmem:[%s747 + $0xe8] sm:$0xff]
      %v779 = vld [vmem:[%s747 + $0xf0] sm:$0xff]
      %v780 = vld [vmem:[%s747 + $0xf8] sm:$0xff]
      %v781 = vld [vmem:[%s747 + $0x100] sm:$0xff]
      %v782 = vld [vmem:[%s747 + $0x108] sm:$0xff]
      %v783 = vld [vmem:[%s747 + $0x110] sm:$0xff]
      %v784 = vld [vmem:[%s747 + $0x118] sm:$0xff]
      %v785 = vld [vmem:[%s747 + $0x120] sm:$0xff]
      %v786 = vld [vmem:[%s747 + $0x128] sm:$0xff]
      %v787 = vld [vmem:[%s747 + $0x130] sm:$0xff]
      %v788 = vld [vmem:[%s747 + $0x138] sm:$0xff]
      %v789 = vld [vmem:[%s747 + $0x140] sm:$0xff]
      %v790 = vrot.slane %v749, 5
      %v791 = vrot.slane %v750, 5
      %v792 = vrot.slane %v751, 5
      %v793 = vrot.slane %v752, 5
      %v794 = vrot.slane %v753, 5
      %v795 = vrot.slane %v754, 5
      %v796 = vrot.slane %v755, 5
      %v797 = vrot.slane %v756, 5
      %v798 = vrot.slane %v757, 5
      %v799 = vrot.slane %v758, 5
      %v800 = vrot.slane %v759, 5
      %v801 = vrot.slane %v760, 5
      %v802 = vrot.slane %v761, 5
      %v803 = vrot.slane %v762, 5
      %v804 = vrot.slane %v763, 5
      %v805 = vrot.slane %v764, 5
      %v806 = vrot.slane %v765, 5
      %v807 = vrot.slane %v766, 5
      %v808 = vrot.slane %v767, 5
      %v809 = vrot.slane %v768, 5
      %v810 = vrot.slane %v769, 5
      %v811 = vrot.slane %v770, 5
      %v812 = vrot.slane %v771, 5
      %v813 = vrot.slane %v772, 5
      %v814 = vrot.slane %v773, 5
      %v815 = vrot.slane %v774, 5
      %v816 = vrot.slane %v775, 5
      %v817 = vrot.slane %v776, 5
      %v818 = vrot.slane %v777, 5
      %v819 = vrot.slane %v778, 5
      %v820 = vrot.slane %v779, 5
      %v821 = vrot.slane %v780, 5
      %v822 = vrot.slane %v781, 5
      %v823 = vrot.slane %v782, 5
      %v824 = vrot.slane %v783, 5
      %v825 = vrot.slane %v784, 5
      %v826 = vrot.slane %v785, 5
      %v827 = vrot.slane %v786, 5
      %v828 = vrot.slane %v787, 5
      %v829 = vrot.slane %v788, 5
      %v830 = vrot.slane %v789, 5
      %v831 = vlaneseq
      %v832 = vshrl.u32 %v831, 7
      %vm833 = vcmp.lt.s32.totalorder %v832, 3
      %v834 = vsel %vm833, %v829, %v830
      %v835 = vsel %vm833, %v828, %v829
      %v836 = vsel %vm833, %v827, %v828
      %v837 = vsel %vm833, %v826, %v827
      %v838 = vsel %vm833, %v825, %v826
      %v839 = vsel %vm833, %v824, %v825
      %v840 = vsel %vm833, %v823, %v824
      %v841 = vsel %vm833, %v822, %v823
      %v842 = vsel %vm833, %v821, %v822
      %v843 = vsel %vm833, %v820, %v821
      %v844 = vsel %vm833, %v819, %v820
      %v845 = vsel %vm833, %v818, %v819
      %v846 = vsel %vm833, %v817, %v818
      %v847 = vsel %vm833, %v816, %v817
      %v848 = vsel %vm833, %v815, %v816
      %v849 = vsel %vm833, %v814, %v815
      %v850 = vsel %vm833, %v813, %v814
      %v851 = vsel %vm833, %v812, %v813
      %v852 = vsel %vm833, %v811, %v812
      %v853 = vsel %vm833, %v810, %v811
      %v854 = vsel %vm833, %v809, %v810
      %v855 = vsel %vm833, %v808, %v809
      %v856 = vsel %vm833, %v807, %v808
      %v857 = vsel %vm833, %v806, %v807
      %v858 = vsel %vm833, %v805, %v806
      %v859 = vsel %vm833, %v804, %v805
      %v860 = vsel %vm833, %v803, %v804
      %v861 = vsel %vm833, %v802, %v803
      %v862 = vsel %vm833, %v801, %v802
      %v863 = vsel %vm833, %v800, %v801
      %v864 = vsel %vm833, %v799, %v800
      %v865 = vsel %vm833, %v798, %v799
      %v866 = vsel %vm833, %v797, %v798
      %v867 = vsel %vm833, %v796, %v797
      %v868 = vsel %vm833, %v795, %v796
      %v869 = vsel %vm833, %v794, %v795
      %v870 = vsel %vm833, %v793, %v794
      %v871 = vsel %vm833, %v792, %v793
      %v872 = vsel %vm833, %v791, %v792
      %v873 = vsel %vm833, %v790, %v791
      %v874 = vsel %vm833, %v830, %v790
      %v875 = vpack.c.bf16 %v834, %v835
      %v876 = vpack.c.bf16 %v873, %v874
      %v877 = vpack.c.bf16 %v871, %v872
      %v878 = vpack.c.bf16 %v869, %v870
      %v879 = vpack.c.bf16 %v867, %v868
      %v880 = vpack.c.bf16 %v865, %v866
      %v881 = vpack.c.bf16 %v863, %v864
      %v882 = vpack.c.bf16 %v861, %v862
      %v883 = vpack.c.bf16 %v859, %v860
      %v884 = vpack.c.bf16 %v857, %v858
      %v885 = vpack.c.bf16 %v855, %v856
      %v886 = vpack.c.bf16 %v853, %v854
      %v887 = vpack.c.bf16 %v851, %v852
      %v888 = vpack.c.bf16 %v849, %v850
      %v889 = vpack.c.bf16 %v847, %v848
      %v890 = vpack.c.bf16 %v845, %v846
      %v891 = vpack.c.bf16 %v843, %v844
      %v892 = vpack.c.bf16 %v841, %v842
      %v893 = vpack.c.bf16 %v839, %v840
      %v894 = vpack.c.bf16 %v837, %v838
      %v895 = vpack.c.bf16 %v836, %v836
      %v896 = vld [vmem:[%s2] sm:$0xf]
      %v897 = vrot.slane %v749, 6
      %v898 = vrot.slane %v750, 6
      %v899 = vrot.slane %v751, 6
      %v900 = vrot.slane %v752, 6
      %v901 = vrot.slane %v753, 6
      %v902 = vrot.slane %v754, 6
      %v903 = vrot.slane %v755, 6
      %v904 = vrot.slane %v756, 6
      %v905 = vrot.slane %v757, 6
      %v906 = vrot.slane %v758, 6
      %v907 = vrot.slane %v759, 6
      %v908 = vrot.slane %v760, 6
      %v909 = vrot.slane %v761, 6
      %v910 = vrot.slane %v762, 6
      %v911 = vrot.slane %v763, 6
      %v912 = vrot.slane %v764, 6
      %v913 = vrot.slane %v765, 6
      %v914 = vrot.slane %v766, 6
      %v915 = vrot.slane %v767, 6
      %v916 = vrot.slane %v768, 6
      %v917 = vrot.slane %v769, 6
      %v918 = vrot.slane %v770, 6
      %v919 = vrot.slane %v771, 6
      %v920 = vrot.slane %v772, 6
      %v921 = vrot.slane %v773, 6
      %v922 = vrot.slane %v774, 6
      %v923 = vrot.slane %v775, 6
      %v924 = vrot.slane %v776, 6
      %v925 = vrot.slane %v777, 6
      %v926 = vrot.slane %v778, 6
      %v927 = vrot.slane %v779, 6
      %v928 = vrot.slane %v780, 6
      %v929 = vrot.slane %v781, 6
      %v930 = vrot.slane %v782, 6
      %v931 = vrot.slane %v783, 6
      %v932 = vrot.slane %v784, 6
      %v933 = vrot.slane %v785, 6
      %v934 = vrot.slane %v786, 6
      %v935 = vrot.slane %v787, 6
      %v936 = vrot.slane %v788, 6
      %v937 = vrot.slane %v789, 6
      %vm938 = vcmp.lt.s32.totalorder %v832, 2
      %v939 = vsel %vm938, %v936, %v937
      %v940 = vsel %vm938, %v935, %v936
      %v941 = vsel %vm938, %v934, %v935
      %v942 = vsel %vm938, %v933, %v934
      %v943 = vsel %vm938, %v932, %v933
      %v944 = vsel %vm938, %v931, %v932
      %v945 = vsel %vm938, %v930, %v931
      %v946 = vsel %vm938, %v929, %v930
      %v947 = vsel %vm938, %v928, %v929
      %v948 = vsel %vm938, %v927, %v928
      %v949 = vsel %vm938, %v926, %v927
      %v950 = vsel %vm938, %v925, %v926
      %v951 = vsel %vm938, %v924, %v925
      %v952 = vsel %vm938, %v923, %v924
      %v953 = vsel %vm938, %v922, %v923
      %v954 = vsel %vm938, %v921, %v922
      %v955 = vsel %vm938, %v920, %v921
      %v956 = vsel %vm938, %v919, %v920
      %v957 = vsel %vm938, %v918, %v919
      %v958 = vsel %vm938, %v917, %v918
      %v959 = vsel %vm938, %v916, %v917
      %v960 = vsel %vm938, %v915, %v916
      %v961 = vsel %vm938, %v914, %v915
      %v962 = vsel %vm938, %v913, %v914
      %v963 = vsel %vm938, %v912, %v913
      %v964 = vsel %vm938, %v911, %v912
      %v965 = vsel %vm938, %v910, %v911
      %v966 = vsel %vm938, %v909, %v910
      %v967 = vsel %vm938, %v908, %v909
      %v968 = vsel %vm938, %v907, %v908
      %v969 = vsel %vm938, %v906, %v907
      %v970 = vsel %vm938, %v905, %v906
      %v971 = vsel %vm938, %v904, %v905
      %v972 = vsel %vm938, %v903, %v904
      %v973 = vsel %vm938, %v902, %v903
      %v974 = vsel %vm938, %v901, %v902
      %v975 = vsel %vm938, %v900, %v901
      %v976 = vsel %vm938, %v899, %v900
      %v977 = vsel %vm938, %v898, %v899
      %v978 = vsel %vm938, %v897, %v898
      %v979 = vsel %vm938, %v937, %v897
      %v980 = vpack.c.bf16 %v939, %v940
      %v981 = vpack.c.bf16 %v978, %v979
      %v982 = vpack.c.bf16 %v976, %v977
      %v983 = vpack.c.bf16 %v974, %v975
      %v984 = vpack.c.bf16 %v972, %v973
      %v985 = vpack.c.bf16 %v970, %v971
      %v986 = vpack.c.bf16 %v968, %v969
      %v987 = vpack.c.bf16 %v966, %v967
      %v988 = vpack.c.bf16 %v964, %v965
      %v989 = vpack.c.bf16 %v962, %v963
      %v990 = vpack.c.bf16 %v960, %v961
      %v991 = vpack.c.bf16 %v958, %v959
      %v992 = vpack.c.bf16 %v956, %v957
      %v993 = vpack.c.bf16 %v954, %v955
      %v994 = vpack.c.bf16 %v952, %v953
      %v995 = vpack.c.bf16 %v950, %v951
      %v996 = vpack.c.bf16 %v948, %v949
      %v997 = vpack.c.bf16 %v946, %v947
      %v998 = vpack.c.bf16 %v944, %v945
      %v999 = vpack.c.bf16 %v942, %v943
      %v1000 = vpack.c.bf16 %v941, %v941
      %s1001 = scalar_lea.vmem %s2, 4
      %v1002 = vld [vmem:[%s1001] sm:$0xf]
      %vm1003 = vcmask 64512
      %v1005 = vsel %vm1003, %v980, 0
      %v1008 = vsel %vm1003, %v981, 0
      %v1011 = vsel %vm1003, %v982, 0
      %v1014 = vsel %vm1003, %v983, 0
      %v1017 = vsel %vm1003, %v984, 0
      %v1020 = vsel %vm1003, %v985, 0
      %v1023 = vsel %vm1003, %v986, 0
      %v1026 = vsel %vm1003, %v987, 0
      %v1029 = vsel %vm1003, %v988, 0
      %v1032 = vsel %vm1003, %v989, 0
      %v1035 = vsel %vm1003, %v990, 0
      %v1038 = vsel %vm1003, %v991, 0
      %v1041 = vsel %vm1003, %v992, 0
      %v1044 = vsel %vm1003, %v993, 0
      %v1047 = vsel %vm1003, %v994, 0
      %v1050 = vsel %vm1003, %v995, 0
      %v1053 = vsel %vm1003, %v996, 0
      %v1056 = vsel %vm1003, %v997, 0
      %v1059 = vsel %vm1003, %v998, 0
      %v1062 = vsel %vm1003, %v999, 0
      %v1065 = vsel %vm1003, %v1000, 0
      %vm1067 = vcmask 1043456
      %v1069 = vsel %vm1067, %v1002, 0
      %1071 = vmatprep.subr.bf16.mxu0 0
      %1072 = vmatpush1.bf16.msra.mxu0 %v1069
      %1073 = vmatprep.subr.bf16.mxu0 0
      %1074 = vmatpush1.bf16.msra.mxu0 0
      %1075 = vmatprep.subr.bf16.mxu0 0
      %1076 = vmatpush1.bf16.msra.mxu0 0
      %1077 = vmatprep.subr.bf16.mxu0 0
      %1078 = vmatpush1.bf16.msra.mxu0 0
      %1079 = vmatprep.subr.bf16.mxu0 0
      %1080 = vmatpush1.bf16.msra.mxu0 0
      %1081 = vmatprep.subr.bf16.mxu0 0
      %1082 = vmatpush1.bf16.msra.mxu0 0
      %1083 = vmatprep.subr.bf16.mxu0 0
      %1084 = vmatpush1.bf16.msra.mxu0 0
      %1085 = vmatprep.subr.bf16.mxu0 0
      %1086 = vmatpush1.bf16.msra.mxu0 0
      %1087 = vmatprep.subr.bf16.mxu0 0
      %1088 = vmatpush1.bf16.msra.mxu0 0
      %1089 = vmatprep.subr.bf16.mxu0 0
      %1090 = vmatpush1.bf16.msra.mxu0 0
      %1091 = vmatprep.subr.bf16.mxu0 0
      %1092 = vmatpush1.bf16.msra.mxu0 0
      %1093 = vmatprep.subr.bf16.mxu0 0
      %1094 = vmatpush1.bf16.msra.mxu0 0
      %1095 = vmatprep.subr.bf16.mxu0 0
      %1096 = vmatpush1.bf16.msra.mxu0 0
      %1097 = vmatprep.subr.bf16.mxu0 0
      %1098 = vmatpush1.bf16.msra.mxu0 0
      %1099 = vmatprep.subr.bf16.mxu0 0
      %1100 = vmatpush1.bf16.msra.mxu0 0
      %1101 = vmatprep.subr.bf16.mxu0 0
      %1102 = vmatpush1.bf16.msra.mxu0 0
      %1103 = vmatprep.mubr.bf16.mxu0 0
      %1104 = vmatmul.mubr.bf16.gmra.mrb[0].mxu0 %v1005
      %v1105 = vpop.f32.mrb[0].mxu0
      %v1106 = vadd.f32 0.0, %v1105
      %v1107 = vpop.f32.mrb[0].mxu0
      %v1108 = vpop.f32.mrb[0].mxu0
      %v1109 = vadd.f32 0.0, %v1108
      %v1110 = vpop.f32.mrb[0].mxu0
      %1111 = vmatprep.mubr.bf16.mxu0 0
      %1112 = vmatmul.mubr.bf16.gmra.mrb[0].mxu0 %v1008
      %v1113 = vpop.f32.mrb[0].mxu0
      %v1114 = vadd.f32 0.0, %v1113
      %v1115 = vpop.f32.mrb[0].mxu0
      %v1116 = vpop.f32.mrb[0].mxu0
      %v1117 = vadd.f32 0.0, %v1116
      %v1118 = vpop.f32.mrb[0].mxu0
      %1119 = vmatprep.mubr.bf16.mxu0 0
      %1120 = vmatmul.mubr.bf16.gmra.mrb[0].mxu0 %v1011
      %v1121 = vpop.f32.mrb[0].mxu0
      %v1122 = vadd.f32 0.0, %v1121
      %v1123 = vpop.f32.mrb[0].mxu0
      %v1124 = vpop.f32.mrb[0].mxu0
      %v1125 = vadd.f32 0.0, %v1124
      %v1126 = vpop.f32.mrb[0].mxu0
      %1127 = vmatprep.mubr.bf16.mxu0 0
      %1128 = vmatmul.mubr.bf16.gmra.mrb[0].mxu0 %v1014
      %v1129 = vpop.f32.mrb[0].mxu0
      %v1130 = vadd.f32 0.0, %v1129
      %v1131 = vpop.f32.mrb[0].mxu0
      %v1132 = vpop.f32.mrb[0].mxu0
      %v1133 = vadd.f32 0.0, %v1132
      %v1134 = vpop.f32.mrb[0].mxu0
      %1135 = vmatprep.mubr.bf16.mxu0 0
      %1136 = vmatmul.mubr.bf16.gmra.mrb[0].mxu0 %v1017
      %v1137 = vpop.f32.mrb[0].mxu0
      %v1138 = vadd.f32 0.0, %v1137
      %v1139 = vpop.f32.mrb[0].mxu0
      %v1140 = vpop.f32.mrb[0].mxu0
      %v1141 = vadd.f32 0.0, %v1140
      %v1142 = vpop.f32.mrb[0].mxu0
      %1143 = vmatprep.mubr.bf16.mxu0 0
      %1144 = vmatmul.mubr.bf16.gmra.mrb[0].mxu0 %v1020
      %v1145 = vpop.f32.mrb[0].mxu0
      %v1146 = vadd.f32 0.0, %v1145
      %v1147 = vpop.f32.mrb[0].mxu0
      %v1148 = vpop.f32.mrb[0].mxu0
      %v1149 = vadd.f32 0.0, %v1148
      %v1150 = vpop.f32.mrb[0].mxu0
      %1151 = vmatprep.mubr.bf16.mxu0 0
      %1152 = vmatmul.mubr.bf16.gmra.mrb[0].mxu0 %v1023
      %v1153 = vpop.f32.mrb[0].mxu0
      %v1154 = vadd.f32 0.0, %v1153
      %v1155 = vpop.f32.mrb[0].mxu0
      %v1156 = vpop.f32.mrb[0].mxu0
      %v1157 = vadd.f32 0.0, %v1156
      %v1158 = vpop.f32.mrb[0].mxu0
      %1159 = vmatprep.mubr.bf16.mxu0 0
      %1160 = vmatmul.mubr.bf16.gmra.mrb[0].mxu0 %v1026
      %v1161 = vpop.f32.mrb[0].mxu0
      %v1162 = vadd.f32 0.0, %v1161
      %v1163 = vpop.f32.mrb[0].mxu0
      %v1164 = vpop.f32.mrb[0].mxu0
      %v1165 = vadd.f32 0.0, %v1164
      %v1166 = vpop.f32.mrb[0].mxu0
      %1167 = vmatprep.mubr.bf16.mxu0 0
      %1168 = vmatmul.mubr.bf16.gmra.mrb[0].mxu0 %v1029
      %v1169 = vpop.f32.mrb[0].mxu0
      %v1170 = vadd.f32 0.0, %v1169
      %v1171 = vpop.f32.mrb[0].mxu0
      %v1172 = vpop.f32.mrb[0].mxu0
      %v1173 = vadd.f32 0.0, %v1172
      %v1174 = vpop.f32.mrb[0].mxu0
      %1175 = vmatprep.mubr.bf16.mxu0 0
      %1176 = vmatmul.mubr.bf16.gmra.mrb[0].mxu0 %v1032
      %v1177 = vpop.f32.mrb[0].mxu0
      %v1178 = vadd.f32 0.0, %v1177
      %v1179 = vpop.f32.mrb[0].mxu0
      %v1180 = vpop.f32.mrb[0].mxu0
      %v1181 = vadd.f32 0.0, %v1180
      %v1182 = vpop.f32.mrb[0].mxu0
      %1183 = vmatprep.mubr.bf16.mxu0 0
      %1184 = vmatmul.mubr.bf16.gmra.mrb[0].mxu0 %v1035
      %v1185 = vpop.f32.mrb[0].mxu0
      %v1186 = vadd.f32 0.0, %v1185
      %v1187 = vpop.f32.mrb[0].mxu0
      %v1188 = vpop.f32.mrb[0].mxu0
      %v1189 = vadd.f32 0.0, %v1188
      %v1190 = vpop.f32.mrb[0].mxu0
      %1191 = vmatprep.mubr.bf16.mxu0 0
      %1192 = vmatmul.mubr.bf16.gmra.mrb[0].mxu0 %v1038
      %v1193 = vpop.f32.mrb[0].mxu0
      %v1194 = vadd.f32 0.0, %v1193
      %v1195 = vpop.f32.mrb[0].mxu0
      %v1196 = vpop.f32.mrb[0].mxu0
      %v1197 = vadd.f32 0.0, %v1196
      %v1198 = vpop.f32.mrb[0].mxu0
      %1199 = vmatprep.mubr.bf16.mxu0 0
      %1200 = vmatmul.mubr.bf16.gmra.mrb[0].mxu0 %v1041
      %v1201 = vpop.f32.mrb[0].mxu0
      %v1202 = vadd.f32 0.0, %v1201
      %v1203 = vpop.f32.mrb[0].mxu0
      %v1204 = vpop.f32.mrb[0].mxu0
      %v1205 = vadd.f32 0.0, %v1204
      %v1206 = vpop.f32.mrb[0].mxu0
      %1207 = vmatprep.mubr.bf16.mxu0 0
      %1208 = vmatmul.mubr.bf16.gmra.mrb[0].mxu0 %v1044
      %v1209 = vpop.f32.mrb[0].mxu0
      %v1210 = vadd.f32 0.0, %v1209
      %v1211 = vpop.f32.mrb[0].mxu0
      %v1212 = vpop.f32.mrb[0].mxu0
      %v1213 = vadd.f32 0.0, %v1212
      %v1214 = vpop.f32.mrb[0].mxu0
      %1215 = vmatprep.mubr.bf16.mxu0 0
      %1216 = vmatmul.mubr.bf16.gmra.mrb[0].mxu0 %v1047
      %v1217 = vpop.f32.mrb[0].mxu0
      %v1218 = vadd.f32 0.0, %v1217
      %v1219 = vpop.f32.mrb[0].mxu0
      %v1220 = vpop.f32.mrb[0].mxu0
      %v1221 = vadd.f32 0.0, %v1220
      %v1222 = vpop.f32.mrb[0].mxu0
      %1223 = vmatprep.mubr.bf16.mxu0 0
      %1224 = vmatmul.mubr.bf16.gmra.mrb[0].mxu0 %v1050
      %v1225 = vpop.f32.mrb[0].mxu0
      %v1226 = vadd.f32 0.0, %v1225
      %v1227 = vpop.f32.mrb[0].mxu0
      %v1228 = vpop.f32.mrb[0].mxu0
      %v1229 = vadd.f32 0.0, %v1228
      %v1230 = vpop.f32.mrb[0].mxu0
      %1231 = vmatprep.mubr.bf16.mxu0 0
      %1232 = vmatmul.mubr.bf16.gmra.mrb[0].mxu0 %v1053
      %v1233 = vpop.f32.mrb[0].mxu0
      %v1234 = vadd.f32 0.0, %v1233
      %v1235 = vpop.f32.mrb[0].mxu0
      %v1236 = vpop.f32.mrb[0].mxu0
      %v1237 = vadd.f32 0.0, %v1236
      %v1238 = vpop.f32.mrb[0].mxu0
      %1239 = vmatprep.mubr.bf16.mxu0 0
      %1240 = vmatmul.mubr.bf16.gmra.mrb[0].mxu0 %v1056
      %v1241 = vpop.f32.mrb[0].mxu0
      %v1242 = vadd.f32 0.0, %v1241
      %v1243 = vpop.f32.mrb[0].mxu0
      %v1244 = vpop.f32.mrb[0].mxu0
      %v1245 = vadd.f32 0.0, %v1244
      %v1246 = vpop.f32.mrb[0].mxu0
      %1247 = vmatprep.mubr.bf16.mxu0 0
      %1248 = vmatmul.mubr.bf16.gmra.mrb[0].mxu0 %v1059
      %v1249 = vpop.f32.mrb[0].mxu0
      %v1250 = vadd.f32 0.0, %v1249
      %v1251 = vpop.f32.mrb[0].mxu0
      %v1252 = vpop.f32.mrb[0].mxu0
      %v1253 = vadd.f32 0.0, %v1252
      %v1254 = vpop.f32.mrb[0].mxu0
      %1255 = vmatprep.mubr.bf16.mxu0 0
      %1256 = vmatmul.mubr.bf16.gmra.mrb[0].mxu0 %v1062
      %v1257 = vpop.f32.mrb[0].mxu0
      %v1258 = vadd.f32 0.0, %v1257
      %v1259 = vpop.f32.mrb[0].mxu0
      %v1260 = vpop.f32.mrb[0].mxu0
      %v1261 = vadd.f32 0.0, %v1260
      %v1262 = vpop.f32.mrb[0].mxu0
      %1263 = vmatprep.mubr.bf16.mxu0 0
      %1264 = vmatmul.mubr.bf16.gmra.mrb[0].mxu0 %v1065
      %v1265 = vpop.f32.mrb[0].mxu0
      %v1266 = vadd.f32 0.0, %v1265
      %v1267 = vpop.f32.mrb[0].mxu0
      %v1268 = vpop.f32.mrb[0].mxu0
      %v1269 = vpop.f32.mrb[0].mxu0
      %1270 = vdwg.mxu0
      %v1272 = vsel %vm1003, %v875, 0
      %v1275 = vsel %vm1003, %v876, 0
      %v1278 = vsel %vm1003, %v877, 0
      %v1281 = vsel %vm1003, %v878, 0
      %v1284 = vsel %vm1003, %v879, 0
      %v1287 = vsel %vm1003, %v880, 0
      %v1290 = vsel %vm1003, %v881, 0
      %v1293 = vsel %vm1003, %v882, 0
      %v1296 = vsel %vm1003, %v883, 0
      %v1299 = vsel %vm1003, %v884, 0
      %v1302 = vsel %vm1003, %v885, 0
      %v1305 = vsel %vm1003, %v886, 0
      %v1308 = vsel %vm1003, %v887, 0
      %v1311 = vsel %vm1003, %v888, 0
      %v1314 = vsel %vm1003, %v889, 0
      %v1317 = vsel %vm1003, %v890, 0
      %v1320 = vsel %vm1003, %v891, 0
      %v1323 = vsel %vm1003, %v892, 0
      %v1326 = vsel %vm1003, %v893, 0
      %v1329 = vsel %vm1003, %v894, 0
      %v1332 = vsel %vm1003, %v895, 0
      %v1335 = vsel %vm1067, %v896, 0
      %1337 = vmatprep.subr.bf16.mxu0 0
      %1338 = vmatpush1.bf16.msra.mxu0 %v1335
      %1339 = vmatprep.subr.bf16.mxu0 0
      %1340 = vmatpush1.bf16.msra.mxu0 0
      %1341 = vmatprep.subr.bf16.mxu0 0
      %1342 = vmatpush1.bf16.msra.mxu0 0
      %1343 = vmatprep.subr.bf16.mxu0 0
      %1344 = vmatpush1.bf16.msra.mxu0 0
      %1345 = vmatprep.subr.bf16.mxu0 0
      %1346 = vmatpush1.bf16.msra.mxu0 0
      %1347 = vmatprep.subr.bf16.mxu0 0
      %1348 = vmatpush1.bf16.msra.mxu0 0
      %1349 = vmatprep.subr.bf16.mxu0 0
      %1350 = vmatpush1.bf16.msra.mxu0 0
      %1351 = vmatprep.subr.bf16.mxu0 0
      %1352 = vmatpush1.bf16.msra.mxu0 0
      %1353 = vmatprep.subr.bf16.mxu0 0
      %1354 = vmatpush1.bf16.msra.mxu0 0
      %1355 = vmatprep.subr.bf16.mxu0 0
      %1356 = vmatpush1.bf16.msra.mxu0 0
      %1357 = vmatprep.subr.bf16.mxu0 0
      %1358 = vmatpush1.bf16.msra.mxu0 0
      %1359 = vmatprep.subr.bf16.mxu0 0
      %1360 = vmatpush1.bf16.msra.mxu0 0
      %1361 = vmatprep.subr.bf16.mxu0 0
      %1362 = vmatpush1.bf16.msra.mxu0 0
      %1363 = vmatprep.subr.bf16.mxu0 0
      %1364 = vmatpush1.bf16.msra.mxu0 0
      %1365 = vmatprep.subr.bf16.mxu0 0
      %1366 = vmatpush1.bf16.msra.mxu0 0
      %1367 = vmatprep.subr.bf16.mxu0 0
      %1368 = vmatpush1.bf16.msra.mxu0 0
      %1369 = vmatprep.mubr.bf16.mxu0 0
      %1370 = vmatmul.mubr.bf16.gmra.mrb[0].mxu0 %v1272
      %v1371 = vpop.f32.mrb[0].mxu0
      %v1372 = vadd.f32 %v1106, %v1371
      %v1373 = vpop.f32.mrb[0].mxu0
      %v1374 = vpop.f32.mrb[0].mxu0
      %v1375 = vadd.f32 %v1109, %v1374
      %v1376 = vpop.f32.mrb[0].mxu0
      %1377 = vmatprep.mubr.bf16.mxu0 0
      %1378 = vmatmul.mubr.bf16.gmra.mrb[0].mxu0 %v1275
      %v1379 = vpop.f32.mrb[0].mxu0
      %v1380 = vadd.f32 %v1114, %v1379
      %v1381 = vpop.f32.mrb[0].mxu0
      %v1382 = vpop.f32.mrb[0].mxu0
      %v1383 = vadd.f32 %v1117, %v1382
      %v1384 = vpop.f32.mrb[0].mxu0
      %1385 = vmatprep.mubr.bf16.mxu0 0
      %1386 = vmatmul.mubr.bf16.gmra.mrb[0].mxu0 %v1278
      %v1387 = vpop.f32.mrb[0].mxu0
      %v1388 = vadd.f32 %v1122, %v1387
      %v1389 = vpop.f32.mrb[0].mxu0
      %v1390 = vpop.f32.mrb[0].mxu0
      %v1391 = vadd.f32 %v1125, %v1390
      %v1392 = vpop.f32.mrb[0].mxu0
      %1393 = vmatprep.mubr.bf16.mxu0 0
      %1394 = vmatmul.mubr.bf16.gmra.mrb[0].mxu0 %v1281
      %v1395 = vpop.f32.mrb[0].mxu0
      %v1396 = vadd.f32 %v1130, %v1395
      %v1397 = vpop.f32.mrb[0].mxu0
      %v1398 = vpop.f32.mrb[0].mxu0
      %v1399 = vadd.f32 %v1133, %v1398
      %v1400 = vpop.f32.mrb[0].mxu0
      %1401 = vmatprep.mubr.bf16.mxu0 0
      %1402 = vmatmul.mubr.bf16.gmra.mrb[0].mxu0 %v1284
      %v1403 = vpop.f32.mrb[0].mxu0
      %v1404 = vadd.f32 %v1138, %v1403
      %v1405 = vpop.f32.mrb[0].mxu0
      %v1406 = vpop.f32.mrb[0].mxu0
      %v1407 = vadd.f32 %v1141, %v1406
      %v1408 = vpop.f32.mrb[0].mxu0
      %1409 = vmatprep.mubr.bf16.mxu0 0
      %1410 = vmatmul.mubr.bf16.gmra.mrb[0].mxu0 %v1287
      %v1411 = vpop.f32.mrb[0].mxu0
      %v1412 = vadd.f32 %v1146, %v1411
      %v1413 = vpop.f32.mrb[0].mxu0
      %v1414 = vpop.f32.mrb[0].mxu0
      %v1415 = vadd.f32 %v1149, %v1414
      %v1416 = vpop.f32.mrb[0].mxu0
      %1417 = vmatprep.mubr.bf16.mxu0 0
      %1418 = vmatmul.mubr.bf16.gmra.mrb[0].mxu0 %v1290
      %v1419 = vpop.f32.mrb[0].mxu0
      %v1420 = vadd.f32 %v1154, %v1419
      %v1421 = vpop.f32.mrb[0].mxu0
      %v1422 = vpop.f32.mrb[0].mxu0
      %v1423 = vadd.f32 %v1157, %v1422
      %v1424 = vpop.f32.mrb[0].mxu0
      %1425 = vmatprep.mubr.bf16.mxu0 0
      %1426 = vmatmul.mubr.bf16.gmra.mrb[0].mxu0 %v1293
      %v1427 = vpop.f32.mrb[0].mxu0
      %v1428 = vadd.f32 %v1162, %v1427
      %v1429 = vpop.f32.mrb[0].mxu0
      %v1430 = vpop.f32.mrb[0].mxu0
      %v1431 = vadd.f32 %v1165, %v1430
      %v1432 = vpop.f32.mrb[0].mxu0
      %1433 = vmatprep.mubr.bf16.mxu0 0
      %1434 = vmatmul.mubr.bf16.gmra.mrb[0].mxu0 %v1296
      %v1435 = vpop.f32.mrb[0].mxu0
      %v1436 = vadd.f32 %v1170, %v1435
      %v1437 = vpop.f32.mrb[0].mxu0
      %v1438 = vpop.f32.mrb[0].mxu0
      %v1439 = vadd.f32 %v1173, %v1438
      %v1440 = vpop.f32.mrb[0].mxu0
      %1441 = vmatprep.mubr.bf16.mxu0 0
      %1442 = vmatmul.mubr.bf16.gmra.mrb[0].mxu0 %v1299
      %v1443 = vpop.f32.mrb[0].mxu0
      %v1444 = vadd.f32 %v1178, %v1443
      %v1445 = vpop.f32.mrb[0].mxu0
      %v1446 = vpop.f32.mrb[0].mxu0
      %v1447 = vadd.f32 %v1181, %v1446
      %v1448 = vpop.f32.mrb[0].mxu0
      %1449 = vmatprep.mubr.bf16.mxu0 0
      %1450 = vmatmul.mubr.bf16.gmra.mrb[0].mxu0 %v1302
      %v1451 = vpop.f32.mrb[0].mxu0
      %v1452 = vadd.f32 %v1186, %v1451
      %v1453 = vpop.f32.mrb[0].mxu0
      %v1454 = vpop.f32.mrb[0].mxu0
      %v1455 = vadd.f32 %v1189, %v1454
      %v1456 = vpop.f32.mrb[0].mxu0
      %1457 = vmatprep.mubr.bf16.mxu0 0
      %1458 = vmatmul.mubr.bf16.gmra.mrb[0].mxu0 %v1305
      %v1459 = vpop.f32.mrb[0].mxu0
      %v1460 = vadd.f32 %v1194, %v1459
      %v1461 = vpop.f32.mrb[0].mxu0
      %v1462 = vpop.f32.mrb[0].mxu0
      %v1463 = vadd.f32 %v1197, %v1462
      %v1464 = vpop.f32.mrb[0].mxu0
      %1465 = vmatprep.mubr.bf16.mxu0 0
      %1466 = vmatmul.mubr.bf16.gmra.mrb[0].mxu0 %v1308
      %v1467 = vpop.f32.mrb[0].mxu0
      %v1468 = vadd.f32 %v1202, %v1467
      %v1469 = vpop.f32.mrb[0].mxu0
      %v1470 = vpop.f32.mrb[0].mxu0
      %v1471 = vadd.f32 %v1205, %v1470
      %v1472 = vpop.f32.mrb[0].mxu0
      %1473 = vmatprep.mubr.bf16.mxu0 0
      %1474 = vmatmul.mubr.bf16.gmra.mrb[0].mxu0 %v1311
      %v1475 = vpop.f32.mrb[0].mxu0
      %v1476 = vadd.f32 %v1210, %v1475
      %v1477 = vpop.f32.mrb[0].mxu0
      %v1478 = vpop.f32.mrb[0].mxu0
      %v1479 = vadd.f32 %v1213, %v1478
      %v1480 = vpop.f32.mrb[0].mxu0
      %1481 = vmatprep.mubr.bf16.mxu0 0
      %1482 = vmatmul.mubr.bf16.gmra.mrb[0].mxu0 %v1314
      %v1483 = vpop.f32.mrb[0].mxu0
      %v1484 = vadd.f32 %v1218, %v1483
      %v1485 = vpop.f32.mrb[0].mxu0
      %v1486 = vpop.f32.mrb[0].mxu0
      %v1487 = vadd.f32 %v1221, %v1486
      %v1488 = vpop.f32.mrb[0].mxu0
      %1489 = vmatprep.mubr.bf16.mxu0 0
      %1490 = vmatmul.mubr.bf16.gmra.mrb[0].mxu0 %v1317
      %v1491 = vpop.f32.mrb[0].mxu0
      %v1492 = vadd.f32 %v1226, %v1491
      %v1493 = vpop.f32.mrb[0].mxu0
      %v1494 = vpop.f32.mrb[0].mxu0
      %v1495 = vadd.f32 %v1229, %v1494
      %v1496 = vpop.f32.mrb[0].mxu0
      %1497 = vmatprep.mubr.bf16.mxu0 0
      %1498 = vmatmul.mubr.bf16.gmra.mrb[0].mxu0 %v1320
      %v1499 = vpop.f32.mrb[0].mxu0
      %v1500 = vadd.f32 %v1234, %v1499
      %v1501 = vpop.f32.mrb[0].mxu0
      %v1502 = vpop.f32.mrb[0].mxu0
      %v1503 = vadd.f32 %v1237, %v1502
      %v1504 = vpop.f32.mrb[0].mxu0
      %1505 = vmatprep.mubr.bf16.mxu0 0
      %1506 = vmatmul.mubr.bf16.gmra.mrb[0].mxu0 %v1323
      %v1507 = vpop.f32.mrb[0].mxu0
      %v1508 = vadd.f32 %v1242, %v1507
      %v1509 = vpop.f32.mrb[0].mxu0
      %v1510 = vpop.f32.mrb[0].mxu0
      %v1511 = vadd.f32 %v1245, %v1510
      %v1512 = vpop.f32.mrb[0].mxu0
      %1513 = vmatprep.mubr.bf16.mxu0 0
      %1514 = vmatmul.mubr.bf16.gmra.mrb[0].mxu0 %v1326
      %v1515 = vpop.f32.mrb[0].mxu0
      %v1516 = vadd.f32 %v1250, %v1515
      %v1517 = vpop.f32.mrb[0].mxu0
      %v1518 = vpop.f32.mrb[0].mxu0
      %v1519 = vadd.f32 %v1253, %v1518
      %v1520 = vpop.f32.mrb[0].mxu0
      %1521 = vmatprep.mubr.bf16.mxu0 0
      %1522 = vmatmul.mubr.bf16.gmra.mrb[0].mxu0 %v1329
      %v1523 = vpop.f32.mrb[0].mxu0
      %v1524 = vadd.f32 %v1258, %v1523
      %v1525 = vpop.f32.mrb[0].mxu0
      %v1526 = vpop.f32.mrb[0].mxu0
      %v1527 = vadd.f32 %v1261, %v1526
      %v1528 = vpop.f32.mrb[0].mxu0
      %1529 = vmatprep.mubr.bf16.mxu0 0
      %1530 = vmatmul.mubr.bf16.gmra.mrb[0].mxu0 %v1332
      %v1531 = vpop.f32.mrb[0].mxu0
      %v1532 = vadd.f32 %v1266, %v1531
      %v1533 = vpop.f32.mrb[0].mxu0
      %v1534 = vpop.f32.mrb[0].mxu0
      %v1535 = vpop.f32.mrb[0].mxu0
      %1536 = vdwg.mxu0
      %v1537 = vrot.slane %v749, 7
      %v1538 = vrot.slane %v750, 7
      %v1539 = vrot.slane %v751, 7
      %v1540 = vrot.slane %v752, 7
      %v1541 = vrot.slane %v753, 7
      %v1542 = vrot.slane %v754, 7
      %v1543 = vrot.slane %v755, 7
      %v1544 = vrot.slane %v756, 7
      %v1545 = vrot.slane %v757, 7
      %v1546 = vrot.slane %v758, 7
      %v1547 = vrot.slane %v759, 7
      %v1548 = vrot.slane %v760, 7
      %v1549 = vrot.slane %v761, 7
      %v1550 = vrot.slane %v762, 7
      %v1551 = vrot.slane %v763, 7
      %v1552 = vrot.slane %v764, 7
      %v1553 = vrot.slane %v765, 7
      %v1554 = vrot.slane %v766, 7
      %v1555 = vrot.slane %v767, 7
      %v1556 = vrot.slane %v768, 7
      %v1557 = vrot.slane %v769, 7
      %v1558 = vrot.slane %v770, 7
      %v1559 = vrot.slane %v771, 7
      %v1560 = vrot.slane %v772, 7
      %v1561 = vrot.slane %v773, 7
      %v1562 = vrot.slane %v774, 7
      %v1563 = vrot.slane %v775, 7
      %v1564 = vrot.slane %v776, 7
      %v1565 = vrot.slane %v777, 7
      %v1566 = vrot.slane %v778, 7
      %v1567 = vrot.slane %v779, 7
      %v1568 = vrot.slane %v780, 7
      %v1569 = vrot.slane %v781, 7
      %v1570 = vrot.slane %v782, 7
      %v1571 = vrot.slane %v783, 7
      %v1572 = vrot.slane %v784, 7
      %v1573 = vrot.slane %v785, 7
      %v1574 = vrot.slane %v786, 7
      %v1575 = vrot.slane %v787, 7
      %v1576 = vrot.slane %v788, 7
      %v1577 = vrot.slane %v789, 7
      %vm1578 = vcmp.lt.s32.totalorder %v832, 1
      %v1579 = vsel %vm1578, %v1576, %v1577
      %v1580 = vsel %vm1578, %v1575, %v1576
      %v1581 = vsel %vm1578, %v1574, %v1575
      %v1582 = vsel %vm1578, %v1573, %v1574
      %v1583 = vsel %vm1578, %v1572, %v1573
      %v1584 = vsel %vm1578, %v1571, %v1572
      %v1585 = vsel %vm1578, %v1570, %v1571
      %v1586 = vsel %vm1578, %v1569, %v1570
      %v1587 = vsel %vm1578, %v1568, %v1569
      %v1588 = vsel %vm1578, %v1567, %v1568
      %v1589 = vsel %vm1578, %v1566, %v1567
      %v1590 = vsel %vm1578, %v1565, %v1566
      %v1591 = vsel %vm1578, %v1564, %v1565
      %v1592 = vsel %vm1578, %v1563, %v1564
      %v1593 = vsel %vm1578, %v1562, %v1563
      %v1594 = vsel %vm1578, %v1561, %v1562
      %v1595 = vsel %vm1578, %v1560, %v1561
      %v1596 = vsel %vm1578, %v1559, %v1560
      %v1597 = vsel %vm1578, %v1558, %v1559
      %v1598 = vsel %vm1578, %v1557, %v1558
      %v1599 = vsel %vm1578, %v1556, %v1557
      %v1600 = vsel %vm1578, %v1555, %v1556
      %v1601 = vsel %vm1578, %v1554, %v1555
      %v1602 = vsel %vm1578, %v1553, %v1554
      %v1603 = vsel %vm1578, %v1552, %v1553
      %v1604 = vsel %vm1578, %v1551, %v1552
      %v1605 = vsel %vm1578, %v1550, %v1551
      %v1606 = vsel %vm1578, %v1549, %v1550
      %v1607 = vsel %vm1578, %v1548, %v1549
      %v1608 = vsel %vm1578, %v1547, %v1548
      %v1609 = vsel %vm1578, %v1546, %v1547
      %v1610 = vsel %vm1578, %v1545, %v1546
      %v1611 = vsel %vm1578, %v1544, %v1545
      %v1612 = vsel %vm1578, %v1543, %v1544
      %v1613 = vsel %vm1578, %v1542, %v1543
      %v1614 = vsel %vm1578, %v1541, %v1542
      %v1615 = vsel %vm1578, %v1540, %v1541
      %v1616 = vsel %vm1578, %v1539, %v1540
      %v1617 = vsel %vm1578, %v1538, %v1539
      %v1618 = vsel %vm1578, %v1537, %v1538
      %v1619 = vsel %vm1578, %v1577, %v1537
      %v1620 = vpack.c.bf16 %v1579, %v1580
      %v1621 = vpack.c.bf16 %v1618, %v1619
      %v1622 = vpack.c.bf16 %v1616, %v1617
      %v1623 = vpack.c.bf16 %v1614, %v1615
      %v1624 = vpack.c.bf16 %v1612, %v1613
      %v1625 = vpack.c.bf16 %v1610, %v1611
      %v1626 = vpack.c.bf16 %v1608, %v1609
      %v1627 = vpack.c.bf16 %v1606, %v1607
      %v1628 = vpack.c.bf16 %v1604, %v1605
      %v1629 = vpack.c.bf16 %v1602, %v1603
      %v1630 = vpack.c.bf16 %v1600, %v1601
      %v1631 = vpack.c.bf16 %v1598, %v1599
      %v1632 = vpack.c.bf16 %v1596, %v1597
      %v1633 = vpack.c.bf16 %v1594, %v1595
      %v1634 = vpack.c.bf16 %v1592, %v1593
      %v1635 = vpack.c.bf16 %v1590, %v1591
      %v1636 = vpack.c.bf16 %v1588, %v1589
      %v1637 = vpack.c.bf16 %v1586, %v1587
      %v1638 = vpack.c.bf16 %v1584, %v1585
      %v1639 = vpack.c.bf16 %v1582, %v1583
      %v1640 = vpack.c.bf16 %v1581, %v1581
      %s1641 = scalar_lea.vmem %s2, 8
      %v1642 = vld [vmem:[%s1641] sm:$0xf]
      %v1644 = vsel %vm1003, %v1620, 0
      %v1647 = vsel %vm1003, %v1621, 0
      %v1650 = vsel %vm1003, %v1622, 0
      %v1653 = vsel %vm1003, %v1623, 0
      %v1656 = vsel %vm1003, %v1624, 0
      %v1659 = vsel %vm1003, %v1625, 0
      %v1662 = vsel %vm1003, %v1626, 0
      %v1665 = vsel %vm1003, %v1627, 0
      %v1668 = vsel %vm1003, %v1628, 0
      %v1671 = vsel %vm1003, %v1629, 0
      %v1674 = vsel %vm1003, %v1630, 0
      %v1677 = vsel %vm1003, %v1631, 0
      %v1680 = vsel %vm1003, %v1632, 0
      %v1683 = vsel %vm1003, %v1633, 0
      %v1686 = vsel %vm1003, %v1634, 0
      %v1689 = vsel %vm1003, %v1635, 0
      %v1692 = vsel %vm1003, %v1636, 0
      %v1695 = vsel %vm1003, %v1637, 0
      %v1698 = vsel %vm1003, %v1638, 0
      %v1701 = vsel %vm1003, %v1639, 0
      %v1704 = vsel %vm1003, %v1640, 0
      %v1707 = vsel %vm1067, %v1642, 0
      %1709 = vmatprep.subr.bf16.mxu0 0
      %1710 = vmatpush1.bf16.msra.mxu0 %v1707
      %1711 = vmatprep.subr.bf16.mxu0 0
      %1712 = vmatpush1.bf16.msra.mxu0 0
      %1713 = vmatprep.subr.bf16.mxu0 0
      %1714 = vmatpush1.bf16.msra.mxu0 0
      %1715 = vmatprep.subr.bf16.mxu0 0
      %1716 = vmatpush1.bf16.msra.mxu0 0
      %1717 = vmatprep.subr.bf16.mxu0 0
      %1718 = vmatpush1.bf16.msra.mxu0 0
      %1719 = vmatprep.subr.bf16.mxu0 0
      %1720 = vmatpush1.bf16.msra.mxu0 0
      %1721 = vmatprep.subr.bf16.mxu0 0
      %1722 = vmatpush1.bf16.msra.mxu0 0
      %1723 = vmatprep.subr.bf16.mxu0 0
      %1724 = vmatpush1.bf16.msra.mxu0 0
      %1725 = vmatprep.subr.bf16.mxu0 0
      %1726 = vmatpush1.bf16.msra.mxu0 0
      %1727 = vmatprep.subr.bf16.mxu0 0
      %1728 = vmatpush1.bf16.msra.mxu0 0
      %1729 = vmatprep.subr.bf16.mxu0 0
      %1730 = vmatpush1.bf16.msra.mxu0 0
      %1731 = vmatprep.subr.bf16.mxu0 0
      %1732 = vmatpush1.bf16.msra.mxu0 0
      %1733 = vmatprep.subr.bf16.mxu0 0
      %1734 = vmatpush1.bf16.msra.mxu0 0
      %1735 = vmatprep.subr.bf16.mxu0 0
      %1736 = vmatpush1.bf16.msra.mxu0 0
      %1737 = vmatprep.subr.bf16.mxu0 0
      %1738 = vmatpush1.bf16.msra.mxu0 0
      %1739 = vmatprep.subr.bf16.mxu0 0
      %1740 = vmatpush1.bf16.msra.mxu0 0
      %1741 = vmatprep.mubr.bf16.mxu0 0
      %1742 = vmatmul.mubr.bf16.gmra.mrb[0].mxu0 %v1644
      %v1743 = vpop.f32.mrb[0].mxu0
      %v1744 = vadd.f32 0.0, %v1743
      %v1745 = vpop.f32.mrb[0].mxu0
      %v1746 = vpop.f32.mrb[0].mxu0
      %v1747 = vadd.f32 0.0, %v1746
      %v1748 = vpop.f32.mrb[0].mxu0
      %1749 = vmatprep.mubr.bf16.mxu0 0
      %1750 = vmatmul.mubr.bf16.gmra.mrb[0].mxu0 %v1647
      %v1751 = vpop.f32.mrb[0].mxu0
      %v1752 = vadd.f32 0.0, %v1751
      %v1753 = vpop.f32.mrb[0].mxu0
      %v1754 = vpop.f32.mrb[0].mxu0
      %v1755 = vadd.f32 0.0, %v1754
      %v1756 = vpop.f32.mrb[0].mxu0
      %1757 = vmatprep.mubr.bf16.mxu0 0
      %1758 = vmatmul.mubr.bf16.gmra.mrb[0].mxu0 %v1650
      %v1759 = vpop.f32.mrb[0].mxu0
      %v1760 = vadd.f32 0.0, %v1759
      %v1761 = vpop.f32.mrb[0].mxu0
      %v1762 = vpop.f32.mrb[0].mxu0
      %v1763 = vadd.f32 0.0, %v1762
      %v1764 = vpop.f32.mrb[0].mxu0
      %1765 = vmatprep.mubr.bf16.mxu0 0
      %1766 = vmatmul.mubr.bf16.gmra.mrb[0].mxu0 %v1653
      %v1767 = vpop.f32.mrb[0].mxu0
      %v1768 = vadd.f32 0.0, %v1767
      %v1769 = vpop.f32.mrb[0].mxu0
      %v1770 = vpop.f32.mrb[0].mxu0
      %v1771 = vadd.f32 0.0, %v1770
      %v1772 = vpop.f32.mrb[0].mxu0
      %1773 = vmatprep.mubr.bf16.mxu0 0
      %1774 = vmatmul.mubr.bf16.gmra.mrb[0].mxu0 %v1656
      %v1775 = vpop.f32.mrb[0].mxu0
      %v1776 = vadd.f32 0.0, %v1775
      %v1777 = vpop.f32.mrb[0].mxu0
      %v1778 = vpop.f32.mrb[0].mxu0
      %v1779 = vadd.f32 0.0, %v1778
      %v1780 = vpop.f32.mrb[0].mxu0
      %1781 = vmatprep.mubr.bf16.mxu0 0
      %1782 = vmatmul.mubr.bf16.gmra.mrb[0].mxu0 %v1659
      %v1783 = vpop.f32.mrb[0].mxu0
      %v1784 = vadd.f32 0.0, %v1783
      %v1785 = vpop.f32.mrb[0].mxu0
      %v1786 = vpop.f32.mrb[0].mxu0
      %v1787 = vadd.f32 0.0, %v1786
      %v1788 = vpop.f32.mrb[0].mxu0
      %1789 = vmatprep.mubr.bf16.mxu0 0
      %1790 = vmatmul.mubr.bf16.gmra.mrb[0].mxu0 %v1662
      %v1791 = vpop.f32.mrb[0].mxu0
      %v1792 = vadd.f32 0.0, %v1791
      %v1793 = vpop.f32.mrb[0].mxu0
      %v1794 = vpop.f32.mrb[0].mxu0
      %v1795 = vadd.f32 0.0, %v1794
      %v1796 = vpop.f32.mrb[0].mxu0
      %1797 = vmatprep.mubr.bf16.mxu0 0
      %1798 = vmatmul.mubr.bf16.gmra.mrb[0].mxu0 %v1665
      %v1799 = vpop.f32.mrb[0].mxu0
      %v1800 = vadd.f32 0.0, %v1799
      %v1801 = vpop.f32.mrb[0].mxu0
      %v1802 = vpop.f32.mrb[0].mxu0
      %v1803 = vadd.f32 0.0, %v1802
      %v1804 = vpop.f32.mrb[0].mxu0
      %1805 = vmatprep.mubr.bf16.mxu0 0
      %1806 = vmatmul.mubr.bf16.gmra.mrb[0].mxu0 %v1668
      %v1807 = vpop.f32.mrb[0].mxu0
      %v1808 = vadd.f32 0.0, %v1807
      %v1809 = vpop.f32.mrb[0].mxu0
      %v1810 = vpop.f32.mrb[0].mxu0
      %v1811 = vadd.f32 0.0, %v1810
      %v1812 = vpop.f32.mrb[0].mxu0
      %1813 = vmatprep.mubr.bf16.mxu0 0
      %1814 = vmatmul.mubr.bf16.gmra.mrb[0].mxu0 %v1671
      %v1815 = vpop.f32.mrb[0].mxu0
      %v1816 = vadd.f32 0.0, %v1815
      %v1817 = vpop.f32.mrb[0].mxu0
      %v1818 = vpop.f32.mrb[0].mxu0
      %v1819 = vadd.f32 0.0, %v1818
      %v1820 = vpop.f32.mrb[0].mxu0
      %1821 = vmatprep.mubr.bf16.mxu0 0
      %1822 = vmatmul.mubr.bf16.gmra.mrb[0].mxu0 %v1674
      %v1823 = vpop.f32.mrb[0].mxu0
      %v1824 = vadd.f32 0.0, %v1823
      %v1825 = vpop.f32.mrb[0].mxu0
      %v1826 = vpop.f32.mrb[0].mxu0
      %v1827 = vadd.f32 0.0, %v1826
      %v1828 = vpop.f32.mrb[0].mxu0
      %1829 = vmatprep.mubr.bf16.mxu0 0
      %1830 = vmatmul.mubr.bf16.gmra.mrb[0].mxu0 %v1677
      %v1831 = vpop.f32.mrb[0].mxu0
      %v1832 = vadd.f32 0.0, %v1831
      %v1833 = vpop.f32.mrb[0].mxu0
      %v1834 = vpop.f32.mrb[0].mxu0
      %v1835 = vadd.f32 0.0, %v1834
      %v1836 = vpop.f32.mrb[0].mxu0
      %1837 = vmatprep.mubr.bf16.mxu0 0
      %1838 = vmatmul.mubr.bf16.gmra.mrb[0].mxu0 %v1680
      %v1839 = vpop.f32.mrb[0].mxu0
      %v1840 = vadd.f32 0.0, %v1839
      %v1841 = vpop.f32.mrb[0].mxu0
      %v1842 = vpop.f32.mrb[0].mxu0
      %v1843 = vadd.f32 0.0, %v1842
      %v1844 = vpop.f32.mrb[0].mxu0
      %1845 = vmatprep.mubr.bf16.mxu0 0
      %1846 = vmatmul.mubr.bf16.gmra.mrb[0].mxu0 %v1683
      %v1847 = vpop.f32.mrb[0].mxu0
      %v1848 = vadd.f32 0.0, %v1847
      %v1849 = vpop.f32.mrb[0].mxu0
      %v1850 = vpop.f32.mrb[0].mxu0
      %v1851 = vadd.f32 0.0, %v1850
      %v1852 = vpop.f32.mrb[0].mxu0
      %1853 = vmatprep.mubr.bf16.mxu0 0
      %1854 = vmatmul.mubr.bf16.gmra.mrb[0].mxu0 %v1686
      %v1855 = vpop.f32.mrb[0].mxu0
      %v1856 = vadd.f32 0.0, %v1855
      %v1857 = vpop.f32.mrb[0].mxu0
      %v1858 = vpop.f32.mrb[0].mxu0
      %v1859 = vadd.f32 0.0, %v1858
      %v1860 = vpop.f32.mrb[0].mxu0
      %1861 = vmatprep.mubr.bf16.mxu0 0
      %1862 = vmatmul.mubr.bf16.gmra.mrb[0].mxu0 %v1689
      %v1863 = vpop.f32.mrb[0].mxu0
      %v1864 = vadd.f32 0.0, %v1863
      %v1865 = vpop.f32.mrb[0].mxu0
      %v1866 = vpop.f32.mrb[0].mxu0
      %v1867 = vadd.f32 0.0, %v1866
      %v1868 = vpop.f32.mrb[0].mxu0
      %1869 = vmatprep.mubr.bf16.mxu0 0
      %1870 = vmatmul.mubr.bf16.gmra.mrb[0].mxu0 %v1692
      %v1871 = vpop.f32.mrb[0].mxu0
      %v1872 = vadd.f32 0.0, %v1871
      %v1873 = vpop.f32.mrb[0].mxu0
      %v1874 = vpop.f32.mrb[0].mxu0
      %v1875 = vadd.f32 0.0, %v1874
      %v1876 = vpop.f32.mrb[0].mxu0
      %1877 = vmatprep.mubr.bf16.mxu0 0
      %1878 = vmatmul.mubr.bf16.gmra.mrb[0].mxu0 %v1695
      %v1879 = vpop.f32.mrb[0].mxu0
      %v1880 = vadd.f32 0.0, %v1879
      %v1881 = vpop.f32.mrb[0].mxu0
      %v1882 = vpop.f32.mrb[0].mxu0
      %v1883 = vadd.f32 0.0, %v1882
      %v1884 = vpop.f32.mrb[0].mxu0
      %1885 = vmatprep.mubr.bf16.mxu0 0
      %1886 = vmatmul.mubr.bf16.gmra.mrb[0].mxu0 %v1698
      %v1887 = vpop.f32.mrb[0].mxu0
      %v1888 = vadd.f32 0.0, %v1887
      %v1889 = vpop.f32.mrb[0].mxu0
      %v1890 = vpop.f32.mrb[0].mxu0
      %v1891 = vadd.f32 0.0, %v1890
      %v1892 = vpop.f32.mrb[0].mxu0
      %1893 = vmatprep.mubr.bf16.mxu0 0
      %1894 = vmatmul.mubr.bf16.gmra.mrb[0].mxu0 %v1701
      %v1895 = vpop.f32.mrb[0].mxu0
      %v1896 = vadd.f32 0.0, %v1895
      %v1897 = vpop.f32.mrb[0].mxu0
      %v1898 = vpop.f32.mrb[0].mxu0
      %v1899 = vadd.f32 0.0, %v1898
      %v1900 = vpop.f32.mrb[0].mxu0
      %1901 = vmatprep.mubr.bf16.mxu0 0
      %1902 = vmatmul.mubr.bf16.gmra.mrb[0].mxu0 %v1704
      %v1903 = vpop.f32.mrb[0].mxu0
      %v1904 = vadd.f32 0.0, %v1903
      %v1905 = vpop.f32.mrb[0].mxu0
      %v1906 = vpop.f32.mrb[0].mxu0
      %v1907 = vpop.f32.mrb[0].mxu0
      %1908 = vdwg.mxu0
      %v1909 = vadd.f32 %v1372, %v1744
      %v1910 = vadd.f32 %v1375, %v1747
      %v1911 = vadd.f32 %v1380, %v1752
      %v1912 = vadd.f32 %v1383, %v1755
      %v1913 = vadd.f32 %v1388, %v1760
      %v1914 = vadd.f32 %v1391, %v1763
      %v1915 = vadd.f32 %v1396, %v1768
      %v1916 = vadd.f32 %v1399, %v1771
      %v1917 = vadd.f32 %v1404, %v1776
      %v1918 = vadd.f32 %v1407, %v1779
      %v1919 = vadd.f32 %v1412, %v1784
      %v1920 = vadd.f32 %v1415, %v1787
      %v1921 = vadd.f32 %v1420, %v1792
      %v1922 = vadd.f32 %v1423, %v1795
      %v1923 = vadd.f32 %v1428, %v1800
      %v1924 = vadd.f32 %v1431, %v1803
      %v1925 = vadd.f32 %v1436, %v1808
      %v1926 = vadd.f32 %v1439, %v1811
      %v1927 = vadd.f32 %v1444, %v1816
      %v1928 = vadd.f32 %v1447, %v1819
      %v1929 = vadd.f32 %v1452, %v1824
      %v1930 = vadd.f32 %v1455, %v1827
      %v1931 = vadd.f32 %v1460, %v1832
      %v1932 = vadd.f32 %v1463, %v1835
      %v1933 = vadd.f32 %v1468, %v1840
      %v1934 = vadd.f32 %v1471, %v1843
      %v1935 = vadd.f32 %v1476, %v1848
      %v1936 = vadd.f32 %v1479, %v1851
      %v1937 = vadd.f32 %v1484, %v1856
      %v1938 = vadd.f32 %v1487, %v1859
      %v1939 = vadd.f32 %v1492, %v1864
      %v1940 = vadd.f32 %v1495, %v1867
      %v1941 = vadd.f32 %v1500, %v1872
      %v1942 = vadd.f32 %v1503, %v1875
      %v1943 = vadd.f32 %v1508, %v1880
      %v1944 = vadd.f32 %v1511, %v1883
      %v1945 = vadd.f32 %v1516, %v1888
      %v1946 = vadd.f32 %v1519, %v1891
      %v1947 = vadd.f32 %v1524, %v1896
      %v1948 = vadd.f32 %v1527, %v1899
      %v1949 = vadd.f32 %v1532, %v1904
      %v1950 = vpack.c.bf16 %v1580, %v1581
      %v1951 = vpack.c.bf16 %v1579, %v1579
      %s1952 = scalar_lea.vmem %s2, 12
      %v1953 = vld [vmem:[%s1952] sm:$0xf]
      %v1955 = vsel %vm1003, %v1950, 0
      %v1958 = vsel %vm1003, %v1951, 0
      %v1961 = vsel %vm1067, %v1953, 0
      %1963 = vmatprep.subr.bf16.mxu0 0
      %1964 = vmatpush1.bf16.msra.mxu0 %v1961
      %1965 = vmatprep.subr.bf16.mxu0 0
      %1966 = vmatpush1.bf16.msra.mxu0 0
      %1967 = vmatprep.subr.bf16.mxu0 0
      %1968 = vmatpush1.bf16.msra.mxu0 0
      %1969 = vmatprep.subr.bf16.mxu0 0
      %1970 = vmatpush1.bf16.msra.mxu0 0
      %1971 = vmatprep.subr.bf16.mxu0 0
      %1972 = vmatpush1.bf16.msra.mxu0 0
      %1973 = vmatprep.subr.bf16.mxu0 0
      %1974 = vmatpush1.bf16.msra.mxu0 0
      %1975 = vmatprep.subr.bf16.mxu0 0
      %1976 = vmatpush1.bf16.msra.mxu0 0
      %1977 = vmatprep.subr.bf16.mxu0 0
      %1978 = vmatpush1.bf16.msra.mxu0 0
      %1979 = vmatprep.subr.bf16.mxu0 0
      %1980 = vmatpush1.bf16.msra.mxu0 0
      %1981 = vmatprep.subr.bf16.mxu0 0
      %1982 = vmatpush1.bf16.msra.mxu0 0
      %1983 = vmatprep.subr.bf16.mxu0 0
      %1984 = vmatpush1.bf16.msra.mxu0 0
      %1985 = vmatprep.subr.bf16.mxu0 0
      %1986 = vmatpush1.bf16.msra.mxu0 0
      %1987 = vmatprep.subr.bf16.mxu0 0
      %1988 = vmatpush1.bf16.msra.mxu0 0
      %1989 = vmatprep.subr.bf16.mxu0 0
      %1990 = vmatpush1.bf16.msra.mxu0 0
      %1991 = vmatprep.subr.bf16.mxu0 0
      %1992 = vmatpush1.bf16.msra.mxu0 0
      %1993 = vmatprep.subr.bf16.mxu0 0
      %1994 = vmatpush1.bf16.msra.mxu0 0
      %1995 = vmatprep.mubr.bf16.mxu0 0
      %1996 = vmatmul.mubr.bf16.gmra.mrb[0].mxu0 %v1647
      %v1997 = vpop.f32.mrb[0].mxu0
      %v1998 = vadd.f32 0.0, %v1997
      %v1999 = vpop.f32.mrb[0].mxu0
      %v2000 = vpop.f32.mrb[0].mxu0
      %v2001 = vadd.f32 0.0, %v2000
      %v2002 = vpop.f32.mrb[0].mxu0
      %2003 = vmatprep.mubr.bf16.mxu0 0
      %2004 = vmatmul.mubr.bf16.gmra.mrb[0].mxu0 %v1650
      %v2005 = vpop.f32.mrb[0].mxu0
      %v2006 = vadd.f32 0.0, %v2005
      %v2007 = vpop.f32.mrb[0].mxu0
      %v2008 = vpop.f32.mrb[0].mxu0
      %v2009 = vadd.f32 0.0, %v2008
      %v2010 = vpop.f32.mrb[0].mxu0
      %2011 = vmatprep.mubr.bf16.mxu0 0
      %2012 = vmatmul.mubr.bf16.gmra.mrb[0].mxu0 %v1653
      %v2013 = vpop.f32.mrb[0].mxu0
      %v2014 = vadd.f32 0.0, %v2013
      %v2015 = vpop.f32.mrb[0].mxu0
      %v2016 = vpop.f32.mrb[0].mxu0
      %v2017 = vadd.f32 0.0, %v2016
      %v2018 = vpop.f32.mrb[0].mxu0
      %2019 = vmatprep.mubr.bf16.mxu0 0
      %2020 = vmatmul.mubr.bf16.gmra.mrb[0].mxu0 %v1656
      %v2021 = vpop.f32.mrb[0].mxu0
      %v2022 = vadd.f32 0.0, %v2021
      %v2023 = vpop.f32.mrb[0].mxu0
      %v2024 = vpop.f32.mrb[0].mxu0
      %v2025 = vadd.f32 0.0, %v2024
      %v2026 = vpop.f32.mrb[0].mxu0
      %2027 = vmatprep.mubr.bf16.mxu0 0
      %2028 = vmatmul.mubr.bf16.gmra.mrb[0].mxu0 %v1659
      %v2029 = vpop.f32.mrb[0].mxu0
      %v2030 = vadd.f32 0.0, %v2029
      %v2031 = vpop.f32.mrb[0].mxu0
      %v2032 = vpop.f32.mrb[0].mxu0
      %v2033 = vadd.f32 0.0, %v2032
      %v2034 = vpop.f32.mrb[0].mxu0
      %2035 = vmatprep.mubr.bf16.mxu0 0
      %2036 = vmatmul.mubr.bf16.gmra.mrb[0].mxu0 %v1662
      %v2037 = vpop.f32.mrb[0].mxu0
      %v2038 = vadd.f32 0.0, %v2037
      %v2039 = vpop.f32.mrb[0].mxu0
      %v2040 = vpop.f32.mrb[0].mxu0
      %v2041 = vadd.f32 0.0, %v2040
      %v2042 = vpop.f32.mrb[0].mxu0
      %2043 = vmatprep.mubr.bf16.mxu0 0
      %2044 = vmatmul.mubr.bf16.gmra.mrb[0].mxu0 %v1665
      %v2045 = vpop.f32.mrb[0].mxu0
      %v2046 = vadd.f32 0.0, %v2045
      %v2047 = vpop.f32.mrb[0].mxu0
      %v2048 = vpop.f32.mrb[0].mxu0
      %v2049 = vadd.f32 0.0, %v2048
      %v2050 = vpop.f32.mrb[0].mxu0
      %2051 = vmatprep.mubr.bf16.mxu0 0
      %2052 = vmatmul.mubr.bf16.gmra.mrb[0].mxu0 %v1668
      %v2053 = vpop.f32.mrb[0].mxu0
      %v2054 = vadd.f32 0.0, %v2053
      %v2055 = vpop.f32.mrb[0].mxu0
      %v2056 = vpop.f32.mrb[0].mxu0
      %v2057 = vadd.f32 0.0, %v2056
      %v2058 = vpop.f32.mrb[0].mxu0
      %2059 = vmatprep.mubr.bf16.mxu0 0
      %2060 = vmatmul.mubr.bf16.gmra.mrb[0].mxu0 %v1671
      %v2061 = vpop.f32.mrb[0].mxu0
      %v2062 = vadd.f32 0.0, %v2061
      %v2063 = vpop.f32.mrb[0].mxu0
      %v2064 = vpop.f32.mrb[0].mxu0
      %v2065 = vadd.f32 0.0, %v2064
      %v2066 = vpop.f32.mrb[0].mxu0
      %2067 = vmatprep.mubr.bf16.mxu0 0
      %2068 = vmatmul.mubr.bf16.gmra.mrb[0].mxu0 %v1674
      %v2069 = vpop.f32.mrb[0].mxu0
      %v2070 = vadd.f32 0.0, %v2069
      %v2071 = vpop.f32.mrb[0].mxu0
      %v2072 = vpop.f32.mrb[0].mxu0
      %v2073 = vadd.f32 0.0, %v2072
      %v2074 = vpop.f32.mrb[0].mxu0
      %2075 = vmatprep.mubr.bf16.mxu0 0
      %2076 = vmatmul.mubr.bf16.gmra.mrb[0].mxu0 %v1677
      %v2077 = vpop.f32.mrb[0].mxu0
      %v2078 = vadd.f32 0.0, %v2077
      %v2079 = vpop.f32.mrb[0].mxu0
      %v2080 = vpop.f32.mrb[0].mxu0
      %v2081 = vadd.f32 0.0, %v2080
      %v2082 = vpop.f32.mrb[0].mxu0
      %2083 = vmatprep.mubr.bf16.mxu0 0
      %2084 = vmatmul.mubr.bf16.gmra.mrb[0].mxu0 %v1680
      %v2085 = vpop.f32.mrb[0].mxu0
      %v2086 = vadd.f32 0.0, %v2085
      %v2087 = vpop.f32.mrb[0].mxu0
      %v2088 = vpop.f32.mrb[0].mxu0
      %v2089 = vadd.f32 0.0, %v2088
      %v2090 = vpop.f32.mrb[0].mxu0
      %2091 = vmatprep.mubr.bf16.mxu0 0
      %2092 = vmatmul.mubr.bf16.gmra.mrb[0].mxu0 %v1683
      %v2093 = vpop.f32.mrb[0].mxu0
      %v2094 = vadd.f32 0.0, %v2093
      %v2095 = vpop.f32.mrb[0].mxu0
      %v2096 = vpop.f32.mrb[0].mxu0
      %v2097 = vadd.f32 0.0, %v2096
      %v2098 = vpop.f32.mrb[0].mxu0
      %2099 = vmatprep.mubr.bf16.mxu0 0
      %2100 = vmatmul.mubr.bf16.gmra.mrb[0].mxu0 %v1686
      %v2101 = vpop.f32.mrb[0].mxu0
      %v2102 = vadd.f32 0.0, %v2101
      %v2103 = vpop.f32.mrb[0].mxu0
      %v2104 = vpop.f32.mrb[0].mxu0
      %v2105 = vadd.f32 0.0, %v2104
      %v2106 = vpop.f32.mrb[0].mxu0
      %2107 = vmatprep.mubr.bf16.mxu0 0
      %2108 = vmatmul.mubr.bf16.gmra.mrb[0].mxu0 %v1689
      %v2109 = vpop.f32.mrb[0].mxu0
      %v2110 = vadd.f32 0.0, %v2109
      %v2111 = vpop.f32.mrb[0].mxu0
      %v2112 = vpop.f32.mrb[0].mxu0
      %v2113 = vadd.f32 0.0, %v2112
      %v2114 = vpop.f32.mrb[0].mxu0
      %2115 = vmatprep.mubr.bf16.mxu0 0
      %2116 = vmatmul.mubr.bf16.gmra.mrb[0].mxu0 %v1692
      %v2117 = vpop.f32.mrb[0].mxu0
      %v2118 = vadd.f32 0.0, %v2117
      %v2119 = vpop.f32.mrb[0].mxu0
      %v2120 = vpop.f32.mrb[0].mxu0
      %v2121 = vadd.f32 0.0, %v2120
      %v2122 = vpop.f32.mrb[0].mxu0
      %2123 = vmatprep.mubr.bf16.mxu0 0
      %2124 = vmatmul.mubr.bf16.gmra.mrb[0].mxu0 %v1695
      %v2125 = vpop.f32.mrb[0].mxu0
      %v2126 = vadd.f32 0.0, %v2125
      %v2127 = vpop.f32.mrb[0].mxu0
      %v2128 = vpop.f32.mrb[0].mxu0
      %v2129 = vadd.f32 0.0, %v2128
      %v2130 = vpop.f32.mrb[0].mxu0
      %2131 = vmatprep.mubr.bf16.mxu0 0
      %2132 = vmatmul.mubr.bf16.gmra.mrb[0].mxu0 %v1698
      %v2133 = vpop.f32.mrb[0].mxu0
      %v2134 = vadd.f32 0.0, %v2133
      %v2135 = vpop.f32.mrb[0].mxu0
      %v2136 = vpop.f32.mrb[0].mxu0
      %v2137 = vadd.f32 0.0, %v2136
      %v2138 = vpop.f32.mrb[0].mxu0
      %2139 = vmatprep.mubr.bf16.mxu0 0
      %2140 = vmatmul.mubr.bf16.gmra.mrb[0].mxu0 %v1701
      %v2141 = vpop.f32.mrb[0].mxu0
      %v2142 = vadd.f32 0.0, %v2141
      %v2143 = vpop.f32.mrb[0].mxu0
      %v2144 = vpop.f32.mrb[0].mxu0
      %v2145 = vadd.f32 0.0, %v2144
      %v2146 = vpop.f32.mrb[0].mxu0
      %2147 = vmatprep.mubr.bf16.mxu0 0
      %2148 = vmatmul.mubr.bf16.gmra.mrb[0].mxu0 %v1955
      %v2149 = vpop.f32.mrb[0].mxu0
      %v2150 = vadd.f32 0.0, %v2149
      %v2151 = vpop.f32.mrb[0].mxu0
      %v2152 = vpop.f32.mrb[0].mxu0
      %v2153 = vadd.f32 0.0, %v2152
      %v2154 = vpop.f32.mrb[0].mxu0
      %2155 = vmatprep.mubr.bf16.mxu0 0
      %2156 = vmatmul.mubr.bf16.gmra.mrb[0].mxu0 %v1958
      %v2157 = vpop.f32.mrb[0].mxu0
      %v2158 = vadd.f32 0.0, %v2157
      %v2159 = vpop.f32.mrb[0].mxu0
      %v2160 = vpop.f32.mrb[0].mxu0
      %v2161 = vpop.f32.mrb[0].mxu0
      %2162 = vdwg.mxu0
      %v2163 = vadd.f32 %v1909, %v1998
      %v2164 = vadd.f32 %v1910, %v2001
      %v2165 = vadd.f32 %v1911, %v2006
      %v2166 = vadd.f32 %v1912, %v2009
      %v2167 = vadd.f32 %v1913, %v2014
      %v2168 = vadd.f32 %v1914, %v2017
      %v2169 = vadd.f32 %v1915, %v2022
      %v2170 = vadd.f32 %v1916, %v2025
      %v2171 = vadd.f32 %v1917, %v2030
      %v2172 = vadd.f32 %v1918, %v2033
      %v2173 = vadd.f32 %v1919, %v2038
      %v2174 = vadd.f32 %v1920, %v2041
      %v2175 = vadd.f32 %v1921, %v2046
      %v2176 = vadd.f32 %v1922, %v2049
      %v2177 = vadd.f32 %v1923, %v2054
      %v2178 = vadd.f32 %v1924, %v2057
      %v2179 = vadd.f32 %v1925, %v2062
      %v2180 = vadd.f32 %v1926, %v2065
      %v2181 = vadd.f32 %v1927, %v2070
      %v2182 = vadd.f32 %v1928, %v2073
      %v2183 = vadd.f32 %v1929, %v2078
      %v2184 = vadd.f32 %v1930, %v2081
      %v2185 = vadd.f32 %v1931, %v2086
      %v2186 = vadd.f32 %v1932, %v2089
      %v2187 = vadd.f32 %v1933, %v2094
      %v2188 = vadd.f32 %v1934, %v2097
      %v2189 = vadd.f32 %v1935, %v2102
      %v2190 = vadd.f32 %v1936, %v2105
      %v2191 = vadd.f32 %v1937, %v2110
      %v2192 = vadd.f32 %v1938, %v2113
      %v2193 = vadd.f32 %v1939, %v2118
      %v2194 = vadd.f32 %v1940, %v2121
      %v2195 = vadd.f32 %v1941, %v2126
      %v2196 = vadd.f32 %v1942, %v2129
      %v2197 = vadd.f32 %v1943, %v2134
      %v2198 = vadd.f32 %v1944, %v2137
      %v2199 = vadd.f32 %v1945, %v2142
      %v2200 = vadd.f32 %v1946, %v2145
      %v2201 = vadd.f32 %v1947, %v2150
      %v2202 = vadd.f32 %v1948, %v2153
      %v2203 = vadd.f32 %v1949, %v2158
      %v2204 = vpack.c.bf16 %v750, %v749
      %v2205 = vpack.c.bf16 %v752, %v751
      %v2206 = vpack.c.bf16 %v754, %v753
      %v2207 = vpack.c.bf16 %v756, %v755
      %v2208 = vpack.c.bf16 %v758, %v757
      %v2209 = vpack.c.bf16 %v760, %v759
      %v2210 = vpack.c.bf16 %v762, %v761
      %v2211 = vpack.c.bf16 %v764, %v763
      %v2212 = vpack.c.bf16 %v766, %v765
      %v2213 = vpack.c.bf16 %v768, %v767
      %v2214 = vpack.c.bf16 %v770, %v769
      %v2215 = vpack.c.bf16 %v772, %v771
      %v2216 = vpack.c.bf16 %v774, %v773
      %v2217 = vpack.c.bf16 %v776, %v775
      %v2218 = vpack.c.bf16 %v778, %v777
      %v2219 = vpack.c.bf16 %v780, %v779
      %v2220 = vpack.c.bf16 %v782, %v781
      %v2221 = vpack.c.bf16 %v784, %v783
      %v2222 = vpack.c.bf16 %v786, %v785
      %v2223 = vpack.c.bf16 %v788, %v787
      %v2224 = vpack.c.bf16 %v789, %v789
      %s2225 = scalar_lea.vmem %s2, 16
      %v2226 = vld [vmem:[%s2225] sm:$0xf]
      %v2228 = vsel %vm1003, %v2204, 0
      %v2231 = vsel %vm1003, %v2205, 0
      %v2234 = vsel %vm1003, %v2206, 0
      %v2237 = vsel %vm1003, %v2207, 0
      %v2240 = vsel %vm1003, %v2208, 0
      %v2243 = vsel %vm1003, %v2209, 0
      %v2246 = vsel %vm1003, %v2210, 0
      %v2249 = vsel %vm1003, %v2211, 0
      %v2252 = vsel %vm1003, %v2212, 0
      %v2255 = vsel %vm1003, %v2213, 0
      %v2258 = vsel %vm1003, %v2214, 0
      %v2261 = vsel %vm1003, %v2215, 0
      %v2264 = vsel %vm1003, %v2216, 0
      %v2267 = vsel %vm1003, %v2217, 0
      %v2270 = vsel %vm1003, %v2218, 0
      %v2273 = vsel %vm1003, %v2219, 0
      %v2276 = vsel %vm1003, %v2220, 0
      %v2279 = vsel %vm1003, %v2221, 0
      %v2282 = vsel %vm1003, %v2222, 0
      %v2285 = vsel %vm1003, %v2223, 0
      %v2288 = vsel %vm1003, %v2224, 0
      %v2291 = vsel %vm1067, %v2226, 0
      %2293 = vmatprep.subr.bf16.mxu0 0
      %2294 = vmatpush1.bf16.msra.mxu0 %v2291
      %2295 = vmatprep.subr.bf16.mxu0 0
      %2296 = vmatpush1.bf16.msra.mxu0 0
      %2297 = vmatprep.subr.bf16.mxu0 0
      %2298 = vmatpush1.bf16.msra.mxu0 0
      %2299 = vmatprep.subr.bf16.mxu0 0
      %2300 = vmatpush1.bf16.msra.mxu0 0
      %2301 = vmatprep.subr.bf16.mxu0 0
      %2302 = vmatpush1.bf16.msra.mxu0 0
      %2303 = vmatprep.subr.bf16.mxu0 0
      %2304 = vmatpush1.bf16.msra.mxu0 0
      %2305 = vmatprep.subr.bf16.mxu0 0
      %2306 = vmatpush1.bf16.msra.mxu0 0
      %2307 = vmatprep.subr.bf16.mxu0 0
      %2308 = vmatpush1.bf16.msra.mxu0 0
      %2309 = vmatprep.subr.bf16.mxu0 0
      %2310 = vmatpush1.bf16.msra.mxu0 0
      %2311 = vmatprep.subr.bf16.mxu0 0
      %2312 = vmatpush1.bf16.msra.mxu0 0
      %2313 = vmatprep.subr.bf16.mxu0 0
      %2314 = vmatpush1.bf16.msra.mxu0 0
      %2315 = vmatprep.subr.bf16.mxu0 0
      %2316 = vmatpush1.bf16.msra.mxu0 0
      %2317 = vmatprep.subr.bf16.mxu0 0
      %2318 = vmatpush1.bf16.msra.mxu0 0
      %2319 = vmatprep.subr.bf16.mxu0 0
      %2320 = vmatpush1.bf16.msra.mxu0 0
      %2321 = vmatprep.subr.bf16.mxu0 0
      %2322 = vmatpush1.bf16.msra.mxu0 0
      %2323 = vmatprep.subr.bf16.mxu0 0
      %2324 = vmatpush1.bf16.msra.mxu0 0
      %2325 = vmatprep.mubr.bf16.mxu0 0
      %2326 = vmatmul.mubr.bf16.gmra.mrb[0].mxu0 %v2228
      %v2327 = vpop.f32.mrb[0].mxu0
      %v2328 = vadd.f32 0.0, %v2327
      %v2329 = vpop.f32.mrb[0].mxu0
      %v2330 = vpop.f32.mrb[0].mxu0
      %v2331 = vadd.f32 0.0, %v2330
      %v2332 = vpop.f32.mrb[0].mxu0
      %2333 = vmatprep.mubr.bf16.mxu0 0
      %2334 = vmatmul.mubr.bf16.gmra.mrb[0].mxu0 %v2231
      %v2335 = vpop.f32.mrb[0].mxu0
      %v2336 = vadd.f32 0.0, %v2335
      %v2337 = vpop.f32.mrb[0].mxu0
      %v2338 = vpop.f32.mrb[0].mxu0
      %v2339 = vadd.f32 0.0, %v2338
      %v2340 = vpop.f32.mrb[0].mxu0
      %2341 = vmatprep.mubr.bf16.mxu0 0
      %2342 = vmatmul.mubr.bf16.gmra.mrb[0].mxu0 %v2234
      %v2343 = vpop.f32.mrb[0].mxu0
      %v2344 = vadd.f32 0.0, %v2343
      %v2345 = vpop.f32.mrb[0].mxu0
      %v2346 = vpop.f32.mrb[0].mxu0
      %v2347 = vadd.f32 0.0, %v2346
      %v2348 = vpop.f32.mrb[0].mxu0
      %2349 = vmatprep.mubr.bf16.mxu0 0
      %2350 = vmatmul.mubr.bf16.gmra.mrb[0].mxu0 %v2237
      %v2351 = vpop.f32.mrb[0].mxu0
      %v2352 = vadd.f32 0.0, %v2351
      %v2353 = vpop.f32.mrb[0].mxu0
      %v2354 = vpop.f32.mrb[0].mxu0
      %v2355 = vadd.f32 0.0, %v2354
      %v2356 = vpop.f32.mrb[0].mxu0
      %2357 = vmatprep.mubr.bf16.mxu0 0
      %2358 = vmatmul.mubr.bf16.gmra.mrb[0].mxu0 %v2240
      %v2359 = vpop.f32.mrb[0].mxu0
      %v2360 = vadd.f32 0.0, %v2359
      %v2361 = vpop.f32.mrb[0].mxu0
      %v2362 = vpop.f32.mrb[0].mxu0
      %v2363 = vadd.f32 0.0, %v2362
      %v2364 = vpop.f32.mrb[0].mxu0
      %2365 = vmatprep.mubr.bf16.mxu0 0
      %2366 = vmatmul.mubr.bf16.gmra.mrb[0].mxu0 %v2243
      %v2367 = vpop.f32.mrb[0].mxu0
      %v2368 = vadd.f32 0.0, %v2367
      %v2369 = vpop.f32.mrb[0].mxu0
      %v2370 = vpop.f32.mrb[0].mxu0
      %v2371 = vadd.f32 0.0, %v2370
      %v2372 = vpop.f32.mrb[0].mxu0
      %2373 = vmatprep.mubr.bf16.mxu0 0
      %2374 = vmatmul.mubr.bf16.gmra.mrb[0].mxu0 %v2246
      %v2375 = vpop.f32.mrb[0].mxu0
      %v2376 = vadd.f32 0.0, %v2375
      %v2377 = vpop.f32.mrb[0].mxu0
      %v2378 = vpop.f32.mrb[0].mxu0
      %v2379 = vadd.f32 0.0, %v2378
      %v2380 = vpop.f32.mrb[0].mxu0
      %2381 = vmatprep.mubr.bf16.mxu0 0
      %2382 = vmatmul.mubr.bf16.gmra.mrb[0].mxu0 %v2249
      %v2383 = vpop.f32.mrb[0].mxu0
      %v2384 = vadd.f32 0.0, %v2383
      %v2385 = vpop.f32.mrb[0].mxu0
      %v2386 = vpop.f32.mrb[0].mxu0
      %v2387 = vadd.f32 0.0, %v2386
      %v2388 = vpop.f32.mrb[0].mxu0
      %2389 = vmatprep.mubr.bf16.mxu0 0
      %2390 = vmatmul.mubr.bf16.gmra.mrb[0].mxu0 %v2252
      %v2391 = vpop.f32.mrb[0].mxu0
      %v2392 = vadd.f32 0.0, %v2391
      %v2393 = vpop.f32.mrb[0].mxu0
      %v2394 = vpop.f32.mrb[0].mxu0
      %v2395 = vadd.f32 0.0, %v2394
      %v2396 = vpop.f32.mrb[0].mxu0
      %2397 = vmatprep.mubr.bf16.mxu0 0
      %2398 = vmatmul.mubr.bf16.gmra.mrb[0].mxu0 %v2255
      %v2399 = vpop.f32.mrb[0].mxu0
      %v2400 = vadd.f32 0.0, %v2399
      %v2401 = vpop.f32.mrb[0].mxu0
      %v2402 = vpop.f32.mrb[0].mxu0
      %v2403 = vadd.f32 0.0, %v2402
      %v2404 = vpop.f32.mrb[0].mxu0
      %2405 = vmatprep.mubr.bf16.mxu0 0
      %2406 = vmatmul.mubr.bf16.gmra.mrb[0].mxu0 %v2258
      %v2407 = vpop.f32.mrb[0].mxu0
      %v2408 = vadd.f32 0.0, %v2407
      %v2409 = vpop.f32.mrb[0].mxu0
      %v2410 = vpop.f32.mrb[0].mxu0
      %v2411 = vadd.f32 0.0, %v2410
      %v2412 = vpop.f32.mrb[0].mxu0
      %2413 = vmatprep.mubr.bf16.mxu0 0
      %2414 = vmatmul.mubr.bf16.gmra.mrb[0].mxu0 %v2261
      %v2415 = vpop.f32.mrb[0].mxu0
      %v2416 = vadd.f32 0.0, %v2415
      %v2417 = vpop.f32.mrb[0].mxu0
      %v2418 = vpop.f32.mrb[0].mxu0
      %v2419 = vadd.f32 0.0, %v2418
      %v2420 = vpop.f32.mrb[0].mxu0
      %2421 = vmatprep.mubr.bf16.mxu0 0
      %2422 = vmatmul.mubr.bf16.gmra.mrb[0].mxu0 %v2264
      %v2423 = vpop.f32.mrb[0].mxu0
      %v2424 = vadd.f32 0.0, %v2423
      %v2425 = vpop.f32.mrb[0].mxu0
      %v2426 = vpop.f32.mrb[0].mxu0
      %v2427 = vadd.f32 0.0, %v2426
      %v2428 = vpop.f32.mrb[0].mxu0
      %2429 = vmatprep.mubr.bf16.mxu0 0
      %2430 = vmatmul.mubr.bf16.gmra.mrb[0].mxu0 %v2267
      %v2431 = vpop.f32.mrb[0].mxu0
      %v2432 = vadd.f32 0.0, %v2431
      %v2433 = vpop.f32.mrb[0].mxu0
      %v2434 = vpop.f32.mrb[0].mxu0
      %v2435 = vadd.f32 0.0, %v2434
      %v2436 = vpop.f32.mrb[0].mxu0
      %2437 = vmatprep.mubr.bf16.mxu0 0
      %2438 = vmatmul.mubr.bf16.gmra.mrb[0].mxu0 %v2270
      %v2439 = vpop.f32.mrb[0].mxu0
      %v2440 = vadd.f32 0.0, %v2439
      %v2441 = vpop.f32.mrb[0].mxu0
      %v2442 = vpop.f32.mrb[0].mxu0
      %v2443 = vadd.f32 0.0, %v2442
      %v2444 = vpop.f32.mrb[0].mxu0
      %2445 = vmatprep.mubr.bf16.mxu0 0
      %2446 = vmatmul.mubr.bf16.gmra.mrb[0].mxu0 %v2273
      %v2447 = vpop.f32.mrb[0].mxu0
      %v2448 = vadd.f32 0.0, %v2447
      %v2449 = vpop.f32.mrb[0].mxu0
      %v2450 = vpop.f32.mrb[0].mxu0
      %v2451 = vadd.f32 0.0, %v2450
      %v2452 = vpop.f32.mrb[0].mxu0
      %2453 = vmatprep.mubr.bf16.mxu0 0
      %2454 = vmatmul.mubr.bf16.gmra.mrb[0].mxu0 %v2276
      %v2455 = vpop.f32.mrb[0].mxu0
      %v2456 = vadd.f32 0.0, %v2455
      %v2457 = vpop.f32.mrb[0].mxu0
      %v2458 = vpop.f32.mrb[0].mxu0
      %v2459 = vadd.f32 0.0, %v2458
      %v2460 = vpop.f32.mrb[0].mxu0
      %2461 = vmatprep.mubr.bf16.mxu0 0
      %2462 = vmatmul.mubr.bf16.gmra.mrb[0].mxu0 %v2279
      %v2463 = vpop.f32.mrb[0].mxu0
      %v2464 = vadd.f32 0.0, %v2463
      %v2465 = vpop.f32.mrb[0].mxu0
      %v2466 = vpop.f32.mrb[0].mxu0
      %v2467 = vadd.f32 0.0, %v2466
      %v2468 = vpop.f32.mrb[0].mxu0
      %2469 = vmatprep.mubr.bf16.mxu0 0
      %2470 = vmatmul.mubr.bf16.gmra.mrb[0].mxu0 %v2282
      %v2471 = vpop.f32.mrb[0].mxu0
      %v2472 = vadd.f32 0.0, %v2471
      %v2473 = vpop.f32.mrb[0].mxu0
      %v2474 = vpop.f32.mrb[0].mxu0
      %v2475 = vadd.f32 0.0, %v2474
      %v2476 = vpop.f32.mrb[0].mxu0
      %2477 = vmatprep.mubr.bf16.mxu0 0
      %2478 = vmatmul.mubr.bf16.gmra.mrb[0].mxu0 %v2285
      %v2479 = vpop.f32.mrb[0].mxu0
      %v2480 = vadd.f32 0.0, %v2479
      %v2481 = vpop.f32.mrb[0].mxu0
      %v2482 = vpop.f32.mrb[0].mxu0
      %v2483 = vadd.f32 0.0, %v2482
      %v2484 = vpop.f32.mrb[0].mxu0
      %2485 = vmatprep.mubr.bf16.mxu0 0
      %2486 = vmatmul.mubr.bf16.gmra.mrb[0].mxu0 %v2288
      %v2487 = vpop.f32.mrb[0].mxu0
      %v2488 = vadd.f32 0.0, %v2487
      %v2489 = vpop.f32.mrb[0].mxu0
      %v2490 = vpop.f32.mrb[0].mxu0
      %v2491 = vpop.f32.mrb[0].mxu0
      %2492 = vdwg.mxu0
      %v2493 = vadd.f32 %v2163, %v2328
      %v2494 = vadd.f32 %v2164, %v2331
      %v2495 = vadd.f32 %v2165, %v2336
      %v2496 = vadd.f32 %v2166, %v2339
      %v2497 = vadd.f32 %v2167, %v2344
      %v2498 = vadd.f32 %v2168, %v2347
      %v2499 = vadd.f32 %v2169, %v2352
      %v2500 = vadd.f32 %v2170, %v2355
      %v2501 = vadd.f32 %v2171, %v2360
      %v2502 = vadd.f32 %v2172, %v2363
      %v2503 = vadd.f32 %v2173, %v2368
      %v2504 = vadd.f32 %v2174, %v2371
      %v2505 = vadd.f32 %v2175, %v2376
      %v2506 = vadd.f32 %v2176, %v2379
      %v2507 = vadd.f32 %v2177, %v2384
      %v2508 = vadd.f32 %v2178, %v2387
      %v2509 = vadd.f32 %v2179, %v2392
      %v2510 = vadd.f32 %v2180, %v2395
      %v2511 = vadd.f32 %v2181, %v2400
      %v2512 = vadd.f32 %v2182, %v2403
      %v2513 = vadd.f32 %v2183, %v2408
      %v2514 = vadd.f32 %v2184, %v2411
      %v2515 = vadd.f32 %v2185, %v2416
      %v2516 = vadd.f32 %v2186, %v2419
      %v2517 = vadd.f32 %v2187, %v2424
      %v2518 = vadd.f32 %v2188, %v2427
      %v2519 = vadd.f32 %v2189, %v2432
      %v2520 = vadd.f32 %v2190, %v2435
      %v2521 = vadd.f32 %v2191, %v2440
      %v2522 = vadd.f32 %v2192, %v2443
      %v2523 = vadd.f32 %v2193, %v2448
      %v2524 = vadd.f32 %v2194, %v2451
      %v2525 = vadd.f32 %v2195, %v2456
      %v2526 = vadd.f32 %v2196, %v2459
      %v2527 = vadd.f32 %v2197, %v2464
      %v2528 = vadd.f32 %v2198, %v2467
      %v2529 = vadd.f32 %v2199, %v2472
      %v2530 = vadd.f32 %v2200, %v2475
      %v2531 = vadd.f32 %v2201, %v2480
      %v2532 = vadd.f32 %v2202, %v2483
      %v2533 = vadd.f32 %v2203, %v2488
      %v2534 = vrot.slane %v749, 1
      %v2535 = vrot.slane %v750, 1
      %v2536 = vrot.slane %v751, 1
      %v2537 = vrot.slane %v752, 1
      %v2538 = vrot.slane %v753, 1
      %v2539 = vrot.slane %v754, 1
      %v2540 = vrot.slane %v755, 1
      %v2541 = vrot.slane %v756, 1
      %v2542 = vrot.slane %v757, 1
      %v2543 = vrot.slane %v758, 1
      %v2544 = vrot.slane %v759, 1
      %v2545 = vrot.slane %v760, 1
      %v2546 = vrot.slane %v761, 1
      %v2547 = vrot.slane %v762, 1
      %v2548 = vrot.slane %v763, 1
      %v2549 = vrot.slane %v764, 1
      %v2550 = vrot.slane %v765, 1
      %v2551 = vrot.slane %v766, 1
      %v2552 = vrot.slane %v767, 1
      %v2553 = vrot.slane %v768, 1
      %v2554 = vrot.slane %v769, 1
      %v2555 = vrot.slane %v770, 1
      %v2556 = vrot.slane %v771, 1
      %v2557 = vrot.slane %v772, 1
      %v2558 = vrot.slane %v773, 1
      %v2559 = vrot.slane %v774, 1
      %v2560 = vrot.slane %v775, 1
      %v2561 = vrot.slane %v776, 1
      %v2562 = vrot.slane %v777, 1
      %v2563 = vrot.slane %v778, 1
      %v2564 = vrot.slane %v779, 1
      %v2565 = vrot.slane %v780, 1
      %v2566 = vrot.slane %v781, 1
      %v2567 = vrot.slane %v782, 1
      %v2568 = vrot.slane %v783, 1
      %v2569 = vrot.slane %v784, 1
      %v2570 = vrot.slane %v785, 1
      %v2571 = vrot.slane %v786, 1
      %v2572 = vrot.slane %v787, 1
      %v2573 = vrot.slane %v788, 1
      %v2574 = vrot.slane %v789, 1
      %vm2575 = vcmp.lt.s32.totalorder %v832, 7
      %v2576 = vsel %vm2575, %v2573, %v2574
      %v2577 = vsel %vm2575, %v2572, %v2573
      %v2578 = vsel %vm2575, %v2571, %v2572
      %v2579 = vsel %vm2575, %v2570, %v2571
      %v2580 = vsel %vm2575, %v2569, %v2570
      %v2581 = vsel %vm2575, %v2568, %v2569
      %v2582 = vsel %vm2575, %v2567, %v2568
      %v2583 = vsel %vm2575, %v2566, %v2567
      %v2584 = vsel %vm2575, %v2565, %v2566
      %v2585 = vsel %vm2575, %v2564, %v2565
      %v2586 = vsel %vm2575, %v2563, %v2564
      %v2587 = vsel %vm2575, %v2562, %v2563
      %v2588 = vsel %vm2575, %v2561, %v2562
      %v2589 = vsel %vm2575, %v2560, %v2561
      %v2590 = vsel %vm2575, %v2559, %v2560
      %v2591 = vsel %vm2575, %v2558, %v2559
      %v2592 = vsel %vm2575, %v2557, %v2558
      %v2593 = vsel %vm2575, %v2556, %v2557
      %v2594 = vsel %vm2575, %v2555, %v2556
      %v2595 = vsel %vm2575, %v2554, %v2555
      %v2596 = vsel %vm2575, %v2553, %v2554
      %v2597 = vsel %vm2575, %v2552, %v2553
      %v2598 = vsel %vm2575, %v2551, %v2552
      %v2599 = vsel %vm2575, %v2550, %v2551
      %v2600 = vsel %vm2575, %v2549, %v2550
      %v2601 = vsel %vm2575, %v2548, %v2549
      %v2602 = vsel %vm2575, %v2547, %v2548
      %v2603 = vsel %vm2575, %v2546, %v2547
      %v2604 = vsel %vm2575, %v2545, %v2546
      %v2605 = vsel %vm2575, %v2544, %v2545
      %v2606 = vsel %vm2575, %v2543, %v2544
      %v2607 = vsel %vm2575, %v2542, %v2543
      %v2608 = vsel %vm2575, %v2541, %v2542
      %v2609 = vsel %vm2575, %v2540, %v2541
      %v2610 = vsel %vm2575, %v2539, %v2540
      %v2611 = vsel %vm2575, %v2538, %v2539
      %v2612 = vsel %vm2575, %v2537, %v2538
      %v2613 = vsel %vm2575, %v2536, %v2537
      %v2614 = vsel %vm2575, %v2535, %v2536
      %v2615 = vsel %vm2575, %v2534, %v2535
      %v2616 = vsel %vm2575, %v2574, %v2534
      %v2617 = vpack.c.bf16 %v2614, %v2615
      %v2618 = vpack.c.bf16 %v2612, %v2613
      %v2619 = vpack.c.bf16 %v2610, %v2611
      %v2620 = vpack.c.bf16 %v2608, %v2609
      %v2621 = vpack.c.bf16 %v2606, %v2607
      %v2622 = vpack.c.bf16 %v2604, %v2605
      %v2623 = vpack.c.bf16 %v2602, %v2603
      %v2624 = vpack.c.bf16 %v2600, %v2601
      %v2625 = vpack.c.bf16 %v2598, %v2599
      %v2626 = vpack.c.bf16 %v2596, %v2597
      %v2627 = vpack.c.bf16 %v2594, %v2595
      %v2628 = vpack.c.bf16 %v2592, %v2593
      %v2629 = vpack.c.bf16 %v2590, %v2591
      %v2630 = vpack.c.bf16 %v2588, %v2589
      %v2631 = vpack.c.bf16 %v2586, %v2587
      %v2632 = vpack.c.bf16 %v2584, %v2585
      %v2633 = vpack.c.bf16 %v2582, %v2583
      %v2634 = vpack.c.bf16 %v2580, %v2581
      %v2635 = vpack.c.bf16 %v2578, %v2579
      %v2636 = vpack.c.bf16 %v2576, %v2577
      %v2637 = vpack.c.bf16 %v2616, %v2616
      %s2638 = scalar_lea.vmem %s2, 20
      %v2639 = vld [vmem:[%s2638] sm:$0xf]
      %v2641 = vsel %vm1003, %v2617, 0
      %v2644 = vsel %vm1003, %v2618, 0
      %v2647 = vsel %vm1003, %v2619, 0
      %v2650 = vsel %vm1003, %v2620, 0
      %v2653 = vsel %vm1003, %v2621, 0
      %v2656 = vsel %vm1003, %v2622, 0
      %v2659 = vsel %vm1003, %v2623, 0
      %v2662 = vsel %vm1003, %v2624, 0
      %v2665 = vsel %vm1003, %v2625, 0
      %v2668 = vsel %vm1003, %v2626, 0
      %v2671 = vsel %vm1003, %v2627, 0
      %v2674 = vsel %vm1003, %v2628, 0
      %v2677 = vsel %vm1003, %v2629, 0
      %v2680 = vsel %vm1003, %v2630, 0
      %v2683 = vsel %vm1003, %v2631, 0
      %v2686 = vsel %vm1003, %v2632, 0
      %v2689 = vsel %vm1003, %v2633, 0
      %v2692 = vsel %vm1003, %v2634, 0
      %v2695 = vsel %vm1003, %v2635, 0
      %v2698 = vsel %vm1003, %v2636, 0
      %v2701 = vsel %vm1003, %v2637, 0
      %v2704 = vsel %vm1067, %v2639, 0
      %2706 = vmatprep.subr.bf16.mxu0 0
      %2707 = vmatpush1.bf16.msra.mxu0 %v2704
      %2708 = vmatprep.subr.bf16.mxu0 0
      %2709 = vmatpush1.bf16.msra.mxu0 0
      %2710 = vmatprep.subr.bf16.mxu0 0
      %2711 = vmatpush1.bf16.msra.mxu0 0
      %2712 = vmatprep.subr.bf16.mxu0 0
      %2713 = vmatpush1.bf16.msra.mxu0 0
      %2714 = vmatprep.subr.bf16.mxu0 0
      %2715 = vmatpush1.bf16.msra.mxu0 0
      %2716 = vmatprep.subr.bf16.mxu0 0
      %2717 = vmatpush1.bf16.msra.mxu0 0
      %2718 = vmatprep.subr.bf16.mxu0 0
      %2719 = vmatpush1.bf16.msra.mxu0 0
      %2720 = vmatprep.subr.bf16.mxu0 0
      %2721 = vmatpush1.bf16.msra.mxu0 0
      %2722 = vmatprep.subr.bf16.mxu0 0
      %2723 = vmatpush1.bf16.msra.mxu0 0
      %2724 = vmatprep.subr.bf16.mxu0 0
      %2725 = vmatpush1.bf16.msra.mxu0 0
      %2726 = vmatprep.subr.bf16.mxu0 0
      %2727 = vmatpush1.bf16.msra.mxu0 0
      %2728 = vmatprep.subr.bf16.mxu0 0
      %2729 = vmatpush1.bf16.msra.mxu0 0
      %2730 = vmatprep.subr.bf16.mxu0 0
      %2731 = vmatpush1.bf16.msra.mxu0 0
      %2732 = vmatprep.subr.bf16.mxu0 0
      %2733 = vmatpush1.bf16.msra.mxu0 0
      %2734 = vmatprep.subr.bf16.mxu0 0
      %2735 = vmatpush1.bf16.msra.mxu0 0
      %2736 = vmatprep.subr.bf16.mxu0 0
      %2737 = vmatpush1.bf16.msra.mxu0 0
      %2738 = vmatprep.mubr.bf16.mxu0 0
      %2739 = vmatmul.mubr.bf16.gmra.mrb[0].mxu0 %v2641
      %v2740 = vpop.f32.mrb[0].mxu0
      %v2741 = vadd.f32 0.0, %v2740
      %v2742 = vpop.f32.mrb[0].mxu0
      %v2743 = vpop.f32.mrb[0].mxu0
      %v2744 = vadd.f32 0.0, %v2743
      %v2745 = vpop.f32.mrb[0].mxu0
      %2746 = vmatprep.mubr.bf16.mxu0 0
      %2747 = vmatmul.mubr.bf16.gmra.mrb[0].mxu0 %v2644
      %v2748 = vpop.f32.mrb[0].mxu0
      %v2749 = vadd.f32 0.0, %v2748
      %v2750 = vpop.f32.mrb[0].mxu0
      %v2751 = vpop.f32.mrb[0].mxu0
      %v2752 = vadd.f32 0.0, %v2751
      %v2753 = vpop.f32.mrb[0].mxu0
      %2754 = vmatprep.mubr.bf16.mxu0 0
      %2755 = vmatmul.mubr.bf16.gmra.mrb[0].mxu0 %v2647
      %v2756 = vpop.f32.mrb[0].mxu0
      %v2757 = vadd.f32 0.0, %v2756
      %v2758 = vpop.f32.mrb[0].mxu0
      %v2759 = vpop.f32.mrb[0].mxu0
      %v2760 = vadd.f32 0.0, %v2759
      %v2761 = vpop.f32.mrb[0].mxu0
      %2762 = vmatprep.mubr.bf16.mxu0 0
      %2763 = vmatmul.mubr.bf16.gmra.mrb[0].mxu0 %v2650
      %v2764 = vpop.f32.mrb[0].mxu0
      %v2765 = vadd.f32 0.0, %v2764
      %v2766 = vpop.f32.mrb[0].mxu0
      %v2767 = vpop.f32.mrb[0].mxu0
      %v2768 = vadd.f32 0.0, %v2767
      %v2769 = vpop.f32.mrb[0].mxu0
      %2770 = vmatprep.mubr.bf16.mxu0 0
      %2771 = vmatmul.mubr.bf16.gmra.mrb[0].mxu0 %v2653
      %v2772 = vpop.f32.mrb[0].mxu0
      %v2773 = vadd.f32 0.0, %v2772
      %v2774 = vpop.f32.mrb[0].mxu0
      %v2775 = vpop.f32.mrb[0].mxu0
      %v2776 = vadd.f32 0.0, %v2775
      %v2777 = vpop.f32.mrb[0].mxu0
      %2778 = vmatprep.mubr.bf16.mxu0 0
      %2779 = vmatmul.mubr.bf16.gmra.mrb[0].mxu0 %v2656
      %v2780 = vpop.f32.mrb[0].mxu0
      %v2781 = vadd.f32 0.0, %v2780
      %v2782 = vpop.f32.mrb[0].mxu0
      %v2783 = vpop.f32.mrb[0].mxu0
      %v2784 = vadd.f32 0.0, %v2783
      %v2785 = vpop.f32.mrb[0].mxu0
      %2786 = vmatprep.mubr.bf16.mxu0 0
      %2787 = vmatmul.mubr.bf16.gmra.mrb[0].mxu0 %v2659
      %v2788 = vpop.f32.mrb[0].mxu0
      %v2789 = vadd.f32 0.0, %v2788
      %v2790 = vpop.f32.mrb[0].mxu0
      %v2791 = vpop.f32.mrb[0].mxu0
      %v2792 = vadd.f32 0.0, %v2791
      %v2793 = vpop.f32.mrb[0].mxu0
      %2794 = vmatprep.mubr.bf16.mxu0 0
      %2795 = vmatmul.mubr.bf16.gmra.mrb[0].mxu0 %v2662
      %v2796 = vpop.f32.mrb[0].mxu0
      %v2797 = vadd.f32 0.0, %v2796
      %v2798 = vpop.f32.mrb[0].mxu0
      %v2799 = vpop.f32.mrb[0].mxu0
      %v2800 = vadd.f32 0.0, %v2799
      %v2801 = vpop.f32.mrb[0].mxu0
      %2802 = vmatprep.mubr.bf16.mxu0 0
      %2803 = vmatmul.mubr.bf16.gmra.mrb[0].mxu0 %v2665
      %v2804 = vpop.f32.mrb[0].mxu0
      %v2805 = vadd.f32 0.0, %v2804
      %v2806 = vpop.f32.mrb[0].mxu0
      %v2807 = vpop.f32.mrb[0].mxu0
      %v2808 = vadd.f32 0.0, %v2807
      %v2809 = vpop.f32.mrb[0].mxu0
      %2810 = vmatprep.mubr.bf16.mxu0 0
      %2811 = vmatmul.mubr.bf16.gmra.mrb[0].mxu0 %v2668
      %v2812 = vpop.f32.mrb[0].mxu0
      %v2813 = vadd.f32 0.0, %v2812
      %v2814 = vpop.f32.mrb[0].mxu0
      %v2815 = vpop.f32.mrb[0].mxu0
      %v2816 = vadd.f32 0.0, %v2815
      %v2817 = vpop.f32.mrb[0].mxu0
      %2818 = vmatprep.mubr.bf16.mxu0 0
      %2819 = vmatmul.mubr.bf16.gmra.mrb[0].mxu0 %v2671
      %v2820 = vpop.f32.mrb[0].mxu0
      %v2821 = vadd.f32 0.0, %v2820
      %v2822 = vpop.f32.mrb[0].mxu0
      %v2823 = vpop.f32.mrb[0].mxu0
      %v2824 = vadd.f32 0.0, %v2823
      %v2825 = vpop.f32.mrb[0].mxu0
      %2826 = vmatprep.mubr.bf16.mxu0 0
      %2827 = vmatmul.mubr.bf16.gmra.mrb[0].mxu0 %v2674
      %v2828 = vpop.f32.mrb[0].mxu0
      %v2829 = vadd.f32 0.0, %v2828
      %v2830 = vpop.f32.mrb[0].mxu0
      %v2831 = vpop.f32.mrb[0].mxu0
      %v2832 = vadd.f32 0.0, %v2831
      %v2833 = vpop.f32.mrb[0].mxu0
      %2834 = vmatprep.mubr.bf16.mxu0 0
      %2835 = vmatmul.mubr.bf16.gmra.mrb[0].mxu0 %v2677
      %v2836 = vpop.f32.mrb[0].mxu0
      %v2837 = vadd.f32 0.0, %v2836
      %v2838 = vpop.f32.mrb[0].mxu0
      %v2839 = vpop.f32.mrb[0].mxu0
      %v2840 = vadd.f32 0.0, %v2839
      %v2841 = vpop.f32.mrb[0].mxu0
      %2842 = vmatprep.mubr.bf16.mxu0 0
      %2843 = vmatmul.mubr.bf16.gmra.mrb[0].mxu0 %v2680
      %v2844 = vpop.f32.mrb[0].mxu0
      %v2845 = vadd.f32 0.0, %v2844
      %v2846 = vpop.f32.mrb[0].mxu0
      %v2847 = vpop.f32.mrb[0].mxu0
      %v2848 = vadd.f32 0.0, %v2847
      %v2849 = vpop.f32.mrb[0].mxu0
      %2850 = vmatprep.mubr.bf16.mxu0 0
      %2851 = vmatmul.mubr.bf16.gmra.mrb[0].mxu0 %v2683
      %v2852 = vpop.f32.mrb[0].mxu0
      %v2853 = vadd.f32 0.0, %v2852
      %v2854 = vpop.f32.mrb[0].mxu0
      %v2855 = vpop.f32.mrb[0].mxu0
      %v2856 = vadd.f32 0.0, %v2855
      %v2857 = vpop.f32.mrb[0].mxu0
      %2858 = vmatprep.mubr.bf16.mxu0 0
      %2859 = vmatmul.mubr.bf16.gmra.mrb[0].mxu0 %v2686
      %v2860 = vpop.f32.mrb[0].mxu0
      %v2861 = vadd.f32 0.0, %v2860
      %v2862 = vpop.f32.mrb[0].mxu0
      %v2863 = vpop.f32.mrb[0].mxu0
      %v2864 = vadd.f32 0.0, %v2863
      %v2865 = vpop.f32.mrb[0].mxu0
      %2866 = vmatprep.mubr.bf16.mxu0 0
      %2867 = vmatmul.mubr.bf16.gmra.mrb[0].mxu0 %v2689
      %v2868 = vpop.f32.mrb[0].mxu0
      %v2869 = vadd.f32 0.0, %v2868
      %v2870 = vpop.f32.mrb[0].mxu0
      %v2871 = vpop.f32.mrb[0].mxu0
      %v2872 = vadd.f32 0.0, %v2871
      %v2873 = vpop.f32.mrb[0].mxu0
      %2874 = vmatprep.mubr.bf16.mxu0 0
      %2875 = vmatmul.mubr.bf16.gmra.mrb[0].mxu0 %v2692
      %v2876 = vpop.f32.mrb[0].mxu0
      %v2877 = vadd.f32 0.0, %v2876
      %v2878 = vpop.f32.mrb[0].mxu0
      %v2879 = vpop.f32.mrb[0].mxu0
      %v2880 = vadd.f32 0.0, %v2879
      %v2881 = vpop.f32.mrb[0].mxu0
      %2882 = vmatprep.mubr.bf16.mxu0 0
      %2883 = vmatmul.mubr.bf16.gmra.mrb[0].mxu0 %v2695
      %v2884 = vpop.f32.mrb[0].mxu0
      %v2885 = vadd.f32 0.0, %v2884
      %v2886 = vpop.f32.mrb[0].mxu0
      %v2887 = vpop.f32.mrb[0].mxu0
      %v2888 = vadd.f32 0.0, %v2887
      %v2889 = vpop.f32.mrb[0].mxu0
      %2890 = vmatprep.mubr.bf16.mxu0 0
      %2891 = vmatmul.mubr.bf16.gmra.mrb[0].mxu0 %v2698
      %v2892 = vpop.f32.mrb[0].mxu0
      %v2893 = vadd.f32 0.0, %v2892
      %v2894 = vpop.f32.mrb[0].mxu0
      %v2895 = vpop.f32.mrb[0].mxu0
      %v2896 = vadd.f32 0.0, %v2895
      %v2897 = vpop.f32.mrb[0].mxu0
      %2898 = vmatprep.mubr.bf16.mxu0 0
      %2899 = vmatmul.mubr.bf16.gmra.mrb[0].mxu0 %v2701
      %v2900 = vpop.f32.mrb[0].mxu0
      %v2901 = vadd.f32 0.0, %v2900
      %v2902 = vpop.f32.mrb[0].mxu0
      %v2903 = vpop.f32.mrb[0].mxu0
      %v2904 = vpop.f32.mrb[0].mxu0
      %2905 = vdwg.mxu0
      %v2906 = vadd.f32 %v2493, %v2741
      %v2907 = vadd.f32 %v2494, %v2744
      %v2908 = vadd.f32 %v2495, %v2749
      %v2909 = vadd.f32 %v2496, %v2752
      %v2910 = vadd.f32 %v2497, %v2757
      %v2911 = vadd.f32 %v2498, %v2760
      %v2912 = vadd.f32 %v2499, %v2765
      %v2913 = vadd.f32 %v2500, %v2768
      %v2914 = vadd.f32 %v2501, %v2773
      %v2915 = vadd.f32 %v2502, %v2776
      %v2916 = vadd.f32 %v2503, %v2781
      %v2917 = vadd.f32 %v2504, %v2784
      %v2918 = vadd.f32 %v2505, %v2789
      %v2919 = vadd.f32 %v2506, %v2792
      %v2920 = vadd.f32 %v2507, %v2797
      %v2921 = vadd.f32 %v2508, %v2800
      %v2922 = vadd.f32 %v2509, %v2805
      %v2923 = vadd.f32 %v2510, %v2808
      %v2924 = vadd.f32 %v2511, %v2813
      %v2925 = vadd.f32 %v2512, %v2816
      %v2926 = vadd.f32 %v2513, %v2821
      %v2927 = vadd.f32 %v2514, %v2824
      %v2928 = vadd.f32 %v2515, %v2829
      %v2929 = vadd.f32 %v2516, %v2832
      %v2930 = vadd.f32 %v2517, %v2837
      %v2931 = vadd.f32 %v2518, %v2840
      %v2932 = vadd.f32 %v2519, %v2845
      %v2933 = vadd.f32 %v2520, %v2848
      %v2934 = vadd.f32 %v2521, %v2853
      %v2935 = vadd.f32 %v2522, %v2856
      %v2936 = vadd.f32 %v2523, %v2861
      %v2937 = vadd.f32 %v2524, %v2864
      %v2938 = vadd.f32 %v2525, %v2869
      %v2939 = vadd.f32 %v2526, %v2872
      %v2940 = vadd.f32 %v2527, %v2877
      %v2941 = vadd.f32 %v2528, %v2880
      %v2942 = vadd.f32 %v2529, %v2885
      %v2943 = vadd.f32 %v2530, %v2888
      %v2944 = vadd.f32 %v2531, %v2893
      %v2945 = vadd.f32 %v2532, %v2896
      %v2946 = vadd.f32 %v2533, %v2901
      %v2947 = vpack.c.bf16 %v2615, %v2616
      %v2948 = vpack.c.bf16 %v2614, %v2614
      %s2949 = scalar_lea.vmem %s2, 24
      %v2950 = vld [vmem:[%s2949] sm:$0xf]
      %v2952 = vsel %vm1003, %v2947, 0
      %v2955 = vsel %vm1003, %v2948, 0
      %v2958 = vsel %vm1067, %v2950, 0
      %2960 = vmatprep.subr.bf16.mxu0 0
      %2961 = vmatpush1.bf16.msra.mxu0 %v2958
      %2962 = vmatprep.subr.bf16.mxu0 0
      %2963 = vmatpush1.bf16.msra.mxu0 0
      %2964 = vmatprep.subr.bf16.mxu0 0
      %2965 = vmatpush1.bf16.msra.mxu0 0
      %2966 = vmatprep.subr.bf16.mxu0 0
      %2967 = vmatpush1.bf16.msra.mxu0 0
      %2968 = vmatprep.subr.bf16.mxu0 0
      %2969 = vmatpush1.bf16.msra.mxu0 0
      %2970 = vmatprep.subr.bf16.mxu0 0
      %2971 = vmatpush1.bf16.msra.mxu0 0
      %2972 = vmatprep.subr.bf16.mxu0 0
      %2973 = vmatpush1.bf16.msra.mxu0 0
      %2974 = vmatprep.subr.bf16.mxu0 0
      %2975 = vmatpush1.bf16.msra.mxu0 0
      %2976 = vmatprep.subr.bf16.mxu0 0
      %2977 = vmatpush1.bf16.msra.mxu0 0
      %2978 = vmatprep.subr.bf16.mxu0 0
      %2979 = vmatpush1.bf16.msra.mxu0 0
      %2980 = vmatprep.subr.bf16.mxu0 0
      %2981 = vmatpush1.bf16.msra.mxu0 0
      %2982 = vmatprep.subr.bf16.mxu0 0
      %2983 = vmatpush1.bf16.msra.mxu0 0
      %2984 = vmatprep.subr.bf16.mxu0 0
      %2985 = vmatpush1.bf16.msra.mxu0 0
      %2986 = vmatprep.subr.bf16.mxu0 0
      %2987 = vmatpush1.bf16.msra.mxu0 0
      %2988 = vmatprep.subr.bf16.mxu0 0
      %2989 = vmatpush1.bf16.msra.mxu0 0
      %2990 = vmatprep.subr.bf16.mxu0 0
      %2991 = vmatpush1.bf16.msra.mxu0 0
      %2992 = vmatprep.mubr.bf16.mxu0 0
      %2993 = vmatmul.mubr.bf16.gmra.mrb[0].mxu0 %v2644
      %v2994 = vpop.f32.mrb[0].mxu0
      %v2995 = vadd.f32 0.0, %v2994
      %v2996 = vpop.f32.mrb[0].mxu0
      %v2997 = vpop.f32.mrb[0].mxu0
      %v2998 = vadd.f32 0.0, %v2997
      %v2999 = vpop.f32.mrb[0].mxu0
      %3000 = vmatprep.mubr.bf16.mxu0 0
      %3001 = vmatmul.mubr.bf16.gmra.mrb[0].mxu0 %v2647
      %v3002 = vpop.f32.mrb[0].mxu0
      %v3003 = vadd.f32 0.0, %v3002
      %v3004 = vpop.f32.mrb[0].mxu0
      %v3005 = vpop.f32.mrb[0].mxu0
      %v3006 = vadd.f32 0.0, %v3005
      %v3007 = vpop.f32.mrb[0].mxu0
      %3008 = vmatprep.mubr.bf16.mxu0 0
      %3009 = vmatmul.mubr.bf16.gmra.mrb[0].mxu0 %v2650
      %v3010 = vpop.f32.mrb[0].mxu0
      %v3011 = vadd.f32 0.0, %v3010
      %v3012 = vpop.f32.mrb[0].mxu0
      %v3013 = vpop.f32.mrb[0].mxu0
      %v3014 = vadd.f32 0.0, %v3013
      %v3015 = vpop.f32.mrb[0].mxu0
      %3016 = vmatprep.mubr.bf16.mxu0 0
      %3017 = vmatmul.mubr.bf16.gmra.mrb[0].mxu0 %v2653
      %v3018 = vpop.f32.mrb[0].mxu0
      %v3019 = vadd.f32 0.0, %v3018
      %v3020 = vpop.f32.mrb[0].mxu0
      %v3021 = vpop.f32.mrb[0].mxu0
      %v3022 = vadd.f32 0.0, %v3021
      %v3023 = vpop.f32.mrb[0].mxu0
      %3024 = vmatprep.mubr.bf16.mxu0 0
      %3025 = vmatmul.mubr.bf16.gmra.mrb[0].mxu0 %v2656
      %v3026 = vpop.f32.mrb[0].mxu0
      %v3027 = vadd.f32 0.0, %v3026
      %v3028 = vpop.f32.mrb[0].mxu0
      %v3029 = vpop.f32.mrb[0].mxu0
      %v3030 = vadd.f32 0.0, %v3029
      %v3031 = vpop.f32.mrb[0].mxu0
      %3032 = vmatprep.mubr.bf16.mxu0 0
      %3033 = vmatmul.mubr.bf16.gmra.mrb[0].mxu0 %v2659
      %v3034 = vpop.f32.mrb[0].mxu0
      %v3035 = vadd.f32 0.0, %v3034
      %v3036 = vpop.f32.mrb[0].mxu0
      %v3037 = vpop.f32.mrb[0].mxu0
      %v3038 = vadd.f32 0.0, %v3037
      %v3039 = vpop.f32.mrb[0].mxu0
      %3040 = vmatprep.mubr.bf16.mxu0 0
      %3041 = vmatmul.mubr.bf16.gmra.mrb[0].mxu0 %v2662
      %v3042 = vpop.f32.mrb[0].mxu0
      %v3043 = vadd.f32 0.0, %v3042
      %v3044 = vpop.f32.mrb[0].mxu0
      %v3045 = vpop.f32.mrb[0].mxu0
      %v3046 = vadd.f32 0.0, %v3045
      %v3047 = vpop.f32.mrb[0].mxu0
      %3048 = vmatprep.mubr.bf16.mxu0 0
      %3049 = vmatmul.mubr.bf16.gmra.mrb[0].mxu0 %v2665
      %v3050 = vpop.f32.mrb[0].mxu0
      %v3051 = vadd.f32 0.0, %v3050
      %v3052 = vpop.f32.mrb[0].mxu0
      %v3053 = vpop.f32.mrb[0].mxu0
      %v3054 = vadd.f32 0.0, %v3053
      %v3055 = vpop.f32.mrb[0].mxu0
      %3056 = vmatprep.mubr.bf16.mxu0 0
      %3057 = vmatmul.mubr.bf16.gmra.mrb[0].mxu0 %v2668
      %v3058 = vpop.f32.mrb[0].mxu0
      %v3059 = vadd.f32 0.0, %v3058
      %v3060 = vpop.f32.mrb[0].mxu0
      %v3061 = vpop.f32.mrb[0].mxu0
      %v3062 = vadd.f32 0.0, %v3061
      %v3063 = vpop.f32.mrb[0].mxu0
      %3064 = vmatprep.mubr.bf16.mxu0 0
      %3065 = vmatmul.mubr.bf16.gmra.mrb[0].mxu0 %v2671
      %v3066 = vpop.f32.mrb[0].mxu0
      %v3067 = vadd.f32 0.0, %v3066
      %v3068 = vpop.f32.mrb[0].mxu0
      %v3069 = vpop.f32.mrb[0].mxu0
      %v3070 = vadd.f32 0.0, %v3069
      %v3071 = vpop.f32.mrb[0].mxu0
      %3072 = vmatprep.mubr.bf16.mxu0 0
      %3073 = vmatmul.mubr.bf16.gmra.mrb[0].mxu0 %v2674
      %v3074 = vpop.f32.mrb[0].mxu0
      %v3075 = vadd.f32 0.0, %v3074
      %v3076 = vpop.f32.mrb[0].mxu0
      %v3077 = vpop.f32.mrb[0].mxu0
      %v3078 = vadd.f32 0.0, %v3077
      %v3079 = vpop.f32.mrb[0].mxu0
      %3080 = vmatprep.mubr.bf16.mxu0 0
      %3081 = vmatmul.mubr.bf16.gmra.mrb[0].mxu0 %v2677
      %v3082 = vpop.f32.mrb[0].mxu0
      %v3083 = vadd.f32 0.0, %v3082
      %v3084 = vpop.f32.mrb[0].mxu0
      %v3085 = vpop.f32.mrb[0].mxu0
      %v3086 = vadd.f32 0.0, %v3085
      %v3087 = vpop.f32.mrb[0].mxu0
      %3088 = vmatprep.mubr.bf16.mxu0 0
      %3089 = vmatmul.mubr.bf16.gmra.mrb[0].mxu0 %v2680
      %v3090 = vpop.f32.mrb[0].mxu0
      %v3091 = vadd.f32 0.0, %v3090
      %v3092 = vpop.f32.mrb[0].mxu0
      %v3093 = vpop.f32.mrb[0].mxu0
      %v3094 = vadd.f32 0.0, %v3093
      %v3095 = vpop.f32.mrb[0].mxu0
      %3096 = vmatprep.mubr.bf16.mxu0 0
      %3097 = vmatmul.mubr.bf16.gmra.mrb[0].mxu0 %v2683
      %v3098 = vpop.f32.mrb[0].mxu0
      %v3099 = vadd.f32 0.0, %v3098
      %v3100 = vpop.f32.mrb[0].mxu0
      %v3101 = vpop.f32.mrb[0].mxu0
      %v3102 = vadd.f32 0.0, %v3101
      %v3103 = vpop.f32.mrb[0].mxu0
      %3104 = vmatprep.mubr.bf16.mxu0 0
      %3105 = vmatmul.mubr.bf16.gmra.mrb[0].mxu0 %v2686
      %v3106 = vpop.f32.mrb[0].mxu0
      %v3107 = vadd.f32 0.0, %v3106
      %v3108 = vpop.f32.mrb[0].mxu0
      %v3109 = vpop.f32.mrb[0].mxu0
      %v3110 = vadd.f32 0.0, %v3109
      %v3111 = vpop.f32.mrb[0].mxu0
      %3112 = vmatprep.mubr.bf16.mxu0 0
      %3113 = vmatmul.mubr.bf16.gmra.mrb[0].mxu0 %v2689
      %v3114 = vpop.f32.mrb[0].mxu0
      %v3115 = vadd.f32 0.0, %v3114
      %v3116 = vpop.f32.mrb[0].mxu0
      %v3117 = vpop.f32.mrb[0].mxu0
      %v3118 = vadd.f32 0.0, %v3117
      %v3119 = vpop.f32.mrb[0].mxu0
      %3120 = vmatprep.mubr.bf16.mxu0 0
      %3121 = vmatmul.mubr.bf16.gmra.mrb[0].mxu0 %v2692
      %v3122 = vpop.f32.mrb[0].mxu0
      %v3123 = vadd.f32 0.0, %v3122
      %v3124 = vpop.f32.mrb[0].mxu0
      %v3125 = vpop.f32.mrb[0].mxu0
      %v3126 = vadd.f32 0.0, %v3125
      %v3127 = vpop.f32.mrb[0].mxu0
      %3128 = vmatprep.mubr.bf16.mxu0 0
      %3129 = vmatmul.mubr.bf16.gmra.mrb[0].mxu0 %v2695
      %v3130 = vpop.f32.mrb[0].mxu0
      %v3131 = vadd.f32 0.0, %v3130
      %v3132 = vpop.f32.mrb[0].mxu0
      %v3133 = vpop.f32.mrb[0].mxu0
      %v3134 = vadd.f32 0.0, %v3133
      %v3135 = vpop.f32.mrb[0].mxu0
      %3136 = vmatprep.mubr.bf16.mxu0 0
      %3137 = vmatmul.mubr.bf16.gmra.mrb[0].mxu0 %v2698
      %v3138 = vpop.f32.mrb[0].mxu0
      %v3139 = vadd.f32 0.0, %v3138
      %v3140 = vpop.f32.mrb[0].mxu0
      %v3141 = vpop.f32.mrb[0].mxu0
      %v3142 = vadd.f32 0.0, %v3141
      %v3143 = vpop.f32.mrb[0].mxu0
      %3144 = vmatprep.mubr.bf16.mxu0 0
      %3145 = vmatmul.mubr.bf16.gmra.mrb[0].mxu0 %v2952
      %v3146 = vpop.f32.mrb[0].mxu0
      %v3147 = vadd.f32 0.0, %v3146
      %v3148 = vpop.f32.mrb[0].mxu0
      %v3149 = vpop.f32.mrb[0].mxu0
      %v3150 = vadd.f32 0.0, %v3149
      %v3151 = vpop.f32.mrb[0].mxu0
      %3152 = vmatprep.mubr.bf16.mxu0 0
      %3153 = vmatmul.mubr.bf16.gmra.mrb[0].mxu0 %v2955
      %v3154 = vpop.f32.mrb[0].mxu0
      %v3155 = vadd.f32 0.0, %v3154
      %v3156 = vpop.f32.mrb[0].mxu0
      %v3157 = vpop.f32.mrb[0].mxu0
      %v3158 = vpop.f32.mrb[0].mxu0
      %3159 = vdwg.mxu0
      %v3160 = vadd.f32 %v2906, %v2995
      %v3161 = vadd.f32 %v2907, %v2998
      %v3162 = vadd.f32 %v2908, %v3003
      %v3163 = vadd.f32 %v2909, %v3006
      %v3164 = vadd.f32 %v2910, %v3011
      %v3165 = vadd.f32 %v2911, %v3014
      %v3166 = vadd.f32 %v2912, %v3019
      %v3167 = vadd.f32 %v2913, %v3022
      %v3168 = vadd.f32 %v2914, %v3027
      %v3169 = vadd.f32 %v2915, %v3030
      %v3170 = vadd.f32 %v2916, %v3035
      %v3171 = vadd.f32 %v2917, %v3038
      %v3172 = vadd.f32 %v2918, %v3043
      %v3173 = vadd.f32 %v2919, %v3046
      %v3174 = vadd.f32 %v2920, %v3051
      %v3175 = vadd.f32 %v2921, %v3054
      %v3176 = vadd.f32 %v2922, %v3059
      %v3177 = vadd.f32 %v2923, %v3062
      %v3178 = vadd.f32 %v2924, %v3067
      %v3179 = vadd.f32 %v2925, %v3070
      %v3180 = vadd.f32 %v2926, %v3075
      %v3181 = vadd.f32 %v2927, %v3078
      %v3182 = vadd.f32 %v2928, %v3083
      %v3183 = vadd.f32 %v2929, %v3086
      %v3184 = vadd.f32 %v2930, %v3091
      %v3185 = vadd.f32 %v2931, %v3094
      %v3186 = vadd.f32 %v2932, %v3099
      %v3187 = vadd.f32 %v2933, %v3102
      %v3188 = vadd.f32 %v2934, %v3107
      %v3189 = vadd.f32 %v2935, %v3110
      %v3190 = vadd.f32 %v2936, %v3115
      %v3191 = vadd.f32 %v2937, %v3118
      %v3192 = vadd.f32 %v2938, %v3123
      %v3193 = vadd.f32 %v2939, %v3126
      %v3194 = vadd.f32 %v2940, %v3131
      %v3195 = vadd.f32 %v2941, %v3134
      %v3196 = vadd.f32 %v2942, %v3139
      %v3197 = vadd.f32 %v2943, %v3142
      %v3198 = vadd.f32 %v2944, %v3147
      %v3199 = vadd.f32 %v2945, %v3150
      %v3200 = vadd.f32 %v2946, %v3155
      %v3201 = vrot.slane %v749, 2
      %v3202 = vrot.slane %v750, 2
      %v3203 = vrot.slane %v751, 2
      %v3204 = vrot.slane %v752, 2
      %v3205 = vrot.slane %v753, 2
      %v3206 = vrot.slane %v754, 2
      %v3207 = vrot.slane %v755, 2
      %v3208 = vrot.slane %v756, 2
      %v3209 = vrot.slane %v757, 2
      %v3210 = vrot.slane %v758, 2
      %v3211 = vrot.slane %v759, 2
      %v3212 = vrot.slane %v760, 2
      %v3213 = vrot.slane %v761, 2
      %v3214 = vrot.slane %v762, 2
      %v3215 = vrot.slane %v763, 2
      %v3216 = vrot.slane %v764, 2
      %v3217 = vrot.slane %v765, 2
      %v3218 = vrot.slane %v766, 2
      %v3219 = vrot.slane %v767, 2
      %v3220 = vrot.slane %v768, 2
      %v3221 = vrot.slane %v769, 2
      %v3222 = vrot.slane %v770, 2
      %v3223 = vrot.slane %v771, 2
      %v3224 = vrot.slane %v772, 2
      %v3225 = vrot.slane %v773, 2
      %v3226 = vrot.slane %v774, 2
      %v3227 = vrot.slane %v775, 2
      %v3228 = vrot.slane %v776, 2
      %v3229 = vrot.slane %v777, 2
      %v3230 = vrot.slane %v778, 2
      %v3231 = vrot.slane %v779, 2
      %v3232 = vrot.slane %v780, 2
      %v3233 = vrot.slane %v781, 2
      %v3234 = vrot.slane %v782, 2
      %v3235 = vrot.slane %v783, 2
      %v3236 = vrot.slane %v784, 2
      %v3237 = vrot.slane %v785, 2
      %v3238 = vrot.slane %v786, 2
      %v3239 = vrot.slane %v787, 2
      %v3240 = vrot.slane %v788, 2
      %v3241 = vrot.slane %v789, 2
      %vm3242 = vcmp.lt.s32.totalorder %v832, 6
      %v3243 = vsel %vm3242, %v3240, %v3241
      %v3244 = vsel %vm3242, %v3239, %v3240
      %v3245 = vsel %vm3242, %v3238, %v3239
      %v3246 = vsel %vm3242, %v3237, %v3238
      %v3247 = vsel %vm3242, %v3236, %v3237
      %v3248 = vsel %vm3242, %v3235, %v3236
      %v3249 = vsel %vm3242, %v3234, %v3235
      %v3250 = vsel %vm3242, %v3233, %v3234
      %v3251 = vsel %vm3242, %v3232, %v3233
      %v3252 = vsel %vm3242, %v3231, %v3232
      %v3253 = vsel %vm3242, %v3230, %v3231
      %v3254 = vsel %vm3242, %v3229, %v3230
      %v3255 = vsel %vm3242, %v3228, %v3229
      %v3256 = vsel %vm3242, %v3227, %v3228
      %v3257 = vsel %vm3242, %v3226, %v3227
      %v3258 = vsel %vm3242, %v3225, %v3226
      %v3259 = vsel %vm3242, %v3224, %v3225
      %v3260 = vsel %vm3242, %v3223, %v3224
      %v3261 = vsel %vm3242, %v3222, %v3223
      %v3262 = vsel %vm3242, %v3221, %v3222
      %v3263 = vsel %vm3242, %v3220, %v3221
      %v3264 = vsel %vm3242, %v3219, %v3220
      %v3265 = vsel %vm3242, %v3218, %v3219
      %v3266 = vsel %vm3242, %v3217, %v3218
      %v3267 = vsel %vm3242, %v3216, %v3217
      %v3268 = vsel %vm3242, %v3215, %v3216
      %v3269 = vsel %vm3242, %v3214, %v3215
      %v3270 = vsel %vm3242, %v3213, %v3214
      %v3271 = vsel %vm3242, %v3212, %v3213
      %v3272 = vsel %vm3242, %v3211, %v3212
      %v3273 = vsel %vm3242, %v3210, %v3211
      %v3274 = vsel %vm3242, %v3209, %v3210
      %v3275 = vsel %vm3242, %v3208, %v3209
      %v3276 = vsel %vm3242, %v3207, %v3208
      %v3277 = vsel %vm3242, %v3206, %v3207
      %v3278 = vsel %vm3242, %v3205, %v3206
      %v3279 = vsel %vm3242, %v3204, %v3205
      %v3280 = vsel %vm3242, %v3203, %v3204
      %v3281 = vsel %vm3242, %v3202, %v3203
      %v3282 = vsel %vm3242, %v3201, %v3202
      %v3283 = vsel %vm3242, %v3241, %v3201
      %v3284 = vpack.c.bf16 %v3279, %v3280
      %v3285 = vpack.c.bf16 %v3277, %v3278
      %v3286 = vpack.c.bf16 %v3275, %v3276
      %v3287 = vpack.c.bf16 %v3273, %v3274
      %v3288 = vpack.c.bf16 %v3271, %v3272
      %v3289 = vpack.c.bf16 %v3269, %v3270
      %v3290 = vpack.c.bf16 %v3267, %v3268
      %v3291 = vpack.c.bf16 %v3265, %v3266
      %v3292 = vpack.c.bf16 %v3263, %v3264
      %v3293 = vpack.c.bf16 %v3261, %v3262
      %v3294 = vpack.c.bf16 %v3259, %v3260
      %v3295 = vpack.c.bf16 %v3257, %v3258
      %v3296 = vpack.c.bf16 %v3255, %v3256
      %v3297 = vpack.c.bf16 %v3253, %v3254
      %v3298 = vpack.c.bf16 %v3251, %v3252
      %v3299 = vpack.c.bf16 %v3249, %v3250
      %v3300 = vpack.c.bf16 %v3247, %v3248
      %v3301 = vpack.c.bf16 %v3245, %v3246
      %v3302 = vpack.c.bf16 %v3243, %v3244
      %v3303 = vpack.c.bf16 %v3282, %v3283
      %v3304 = vpack.c.bf16 %v3281, %v3281
      %s3305 = scalar_lea.vmem %s2, 28
      %v3306 = vld [vmem:[%s3305] sm:$0xf]
      %v3308 = vsel %vm1003, %v3284, 0
      %v3311 = vsel %vm1003, %v3285, 0
      %v3314 = vsel %vm1003, %v3286, 0
      %v3317 = vsel %vm1003, %v3287, 0
      %v3320 = vsel %vm1003, %v3288, 0
      %v3323 = vsel %vm1003, %v3289, 0
      %v3326 = vsel %vm1003, %v3290, 0
      %v3329 = vsel %vm1003, %v3291, 0
      %v3332 = vsel %vm1003, %v3292, 0
      %v3335 = vsel %vm1003, %v3293, 0
      %v3338 = vsel %vm1003, %v3294, 0
      %v3341 = vsel %vm1003, %v3295, 0
      %v3344 = vsel %vm1003, %v3296, 0
      %v3347 = vsel %vm1003, %v3297, 0
      %v3350 = vsel %vm1003, %v3298, 0
      %v3353 = vsel %vm1003, %v3299, 0
      %v3356 = vsel %vm1003, %v3300, 0
      %v3359 = vsel %vm1003, %v3301, 0
      %v3362 = vsel %vm1003, %v3302, 0
      %v3365 = vsel %vm1003, %v3303, 0
      %v3368 = vsel %vm1003, %v3304, 0
      %v3371 = vsel %vm1067, %v3306, 0
      %3373 = vmatprep.subr.bf16.mxu0 0
      %3374 = vmatpush1.bf16.msra.mxu0 %v3371
      %3375 = vmatprep.subr.bf16.mxu0 0
      %3376 = vmatpush1.bf16.msra.mxu0 0
      %3377 = vmatprep.subr.bf16.mxu0 0
      %3378 = vmatpush1.bf16.msra.mxu0 0
      %3379 = vmatprep.subr.bf16.mxu0 0
      %3380 = vmatpush1.bf16.msra.mxu0 0
      %3381 = vmatprep.subr.bf16.mxu0 0
      %3382 = vmatpush1.bf16.msra.mxu0 0
      %3383 = vmatprep.subr.bf16.mxu0 0
      %3384 = vmatpush1.bf16.msra.mxu0 0
      %3385 = vmatprep.subr.bf16.mxu0 0
      %3386 = vmatpush1.bf16.msra.mxu0 0
      %3387 = vmatprep.subr.bf16.mxu0 0
      %3388 = vmatpush1.bf16.msra.mxu0 0
      %3389 = vmatprep.subr.bf16.mxu0 0
      %3390 = vmatpush1.bf16.msra.mxu0 0
      %3391 = vmatprep.subr.bf16.mxu0 0
      %3392 = vmatpush1.bf16.msra.mxu0 0
      %3393 = vmatprep.subr.bf16.mxu0 0
      %3394 = vmatpush1.bf16.msra.mxu0 0
      %3395 = vmatprep.subr.bf16.mxu0 0
      %3396 = vmatpush1.bf16.msra.mxu0 0
      %3397 = vmatprep.subr.bf16.mxu0 0
      %3398 = vmatpush1.bf16.msra.mxu0 0
      %3399 = vmatprep.subr.bf16.mxu0 0
      %3400 = vmatpush1.bf16.msra.mxu0 0
      %3401 = vmatprep.subr.bf16.mxu0 0
      %3402 = vmatpush1.bf16.msra.mxu0 0
      %3403 = vmatprep.subr.bf16.mxu0 0
      %3404 = vmatpush1.bf16.msra.mxu0 0
      %3405 = vmatprep.mubr.bf16.mxu0 0
      %3406 = vmatmul.mubr.bf16.gmra.mrb[0].mxu0 %v3308
      %v3407 = vpop.f32.mrb[0].mxu0
      %v3408 = vadd.f32 0.0, %v3407
      %v3409 = vpop.f32.mrb[0].mxu0
      %v3410 = vpop.f32.mrb[0].mxu0
      %v3411 = vadd.f32 0.0, %v3410
      %v3412 = vpop.f32.mrb[0].mxu0
      %3413 = vmatprep.mubr.bf16.mxu0 0
      %3414 = vmatmul.mubr.bf16.gmra.mrb[0].mxu0 %v3311
      %v3415 = vpop.f32.mrb[0].mxu0
      %v3416 = vadd.f32 0.0, %v3415
      %v3417 = vpop.f32.mrb[0].mxu0
      %v3418 = vpop.f32.mrb[0].mxu0
      %v3419 = vadd.f32 0.0, %v3418
      %v3420 = vpop.f32.mrb[0].mxu0
      %3421 = vmatprep.mubr.bf16.mxu0 0
      %3422 = vmatmul.mubr.bf16.gmra.mrb[0].mxu0 %v3314
      %v3423 = vpop.f32.mrb[0].mxu0
      %v3424 = vadd.f32 0.0, %v3423
      %v3425 = vpop.f32.mrb[0].mxu0
      %v3426 = vpop.f32.mrb[0].mxu0
      %v3427 = vadd.f32 0.0, %v3426
      %v3428 = vpop.f32.mrb[0].mxu0
      %3429 = vmatprep.mubr.bf16.mxu0 0
      %3430 = vmatmul.mubr.bf16.gmra.mrb[0].mxu0 %v3317
      %v3431 = vpop.f32.mrb[0].mxu0
      %v3432 = vadd.f32 0.0, %v3431
      %v3433 = vpop.f32.mrb[0].mxu0
      %v3434 = vpop.f32.mrb[0].mxu0
      %v3435 = vadd.f32 0.0, %v3434
      %v3436 = vpop.f32.mrb[0].mxu0
      %3437 = vmatprep.mubr.bf16.mxu0 0
      %3438 = vmatmul.mubr.bf16.gmra.mrb[0].mxu0 %v3320
      %v3439 = vpop.f32.mrb[0].mxu0
      %v3440 = vadd.f32 0.0, %v3439
      %v3441 = vpop.f32.mrb[0].mxu0
      %v3442 = vpop.f32.mrb[0].mxu0
      %v3443 = vadd.f32 0.0, %v3442
      %v3444 = vpop.f32.mrb[0].mxu0
      %3445 = vmatprep.mubr.bf16.mxu0 0
      %3446 = vmatmul.mubr.bf16.gmra.mrb[0].mxu0 %v3323
      %v3447 = vpop.f32.mrb[0].mxu0
      %v3448 = vadd.f32 0.0, %v3447
      %v3449 = vpop.f32.mrb[0].mxu0
      %v3450 = vpop.f32.mrb[0].mxu0
      %v3451 = vadd.f32 0.0, %v3450
      %v3452 = vpop.f32.mrb[0].mxu0
      %3453 = vmatprep.mubr.bf16.mxu0 0
      %3454 = vmatmul.mubr.bf16.gmra.mrb[0].mxu0 %v3326
      %v3455 = vpop.f32.mrb[0].mxu0
      %v3456 = vadd.f32 0.0, %v3455
      %v3457 = vpop.f32.mrb[0].mxu0
      %v3458 = vpop.f32.mrb[0].mxu0
      %v3459 = vadd.f32 0.0, %v3458
      %v3460 = vpop.f32.mrb[0].mxu0
      %3461 = vmatprep.mubr.bf16.mxu0 0
      %3462 = vmatmul.mubr.bf16.gmra.mrb[0].mxu0 %v3329
      %v3463 = vpop.f32.mrb[0].mxu0
      %v3464 = vadd.f32 0.0, %v3463
      %v3465 = vpop.f32.mrb[0].mxu0
      %v3466 = vpop.f32.mrb[0].mxu0
      %v3467 = vadd.f32 0.0, %v3466
      %v3468 = vpop.f32.mrb[0].mxu0
      %3469 = vmatprep.mubr.bf16.mxu0 0
      %3470 = vmatmul.mubr.bf16.gmra.mrb[0].mxu0 %v3332
      %v3471 = vpop.f32.mrb[0].mxu0
      %v3472 = vadd.f32 0.0, %v3471
      %v3473 = vpop.f32.mrb[0].mxu0
      %v3474 = vpop.f32.mrb[0].mxu0
      %v3475 = vadd.f32 0.0, %v3474
      %v3476 = vpop.f32.mrb[0].mxu0
      %3477 = vmatprep.mubr.bf16.mxu0 0
      %3478 = vmatmul.mubr.bf16.gmra.mrb[0].mxu0 %v3335
      %v3479 = vpop.f32.mrb[0].mxu0
      %v3480 = vadd.f32 0.0, %v3479
      %v3481 = vpop.f32.mrb[0].mxu0
      %v3482 = vpop.f32.mrb[0].mxu0
      %v3483 = vadd.f32 0.0, %v3482
      %v3484 = vpop.f32.mrb[0].mxu0
      %3485 = vmatprep.mubr.bf16.mxu0 0
      %3486 = vmatmul.mubr.bf16.gmra.mrb[0].mxu0 %v3338
      %v3487 = vpop.f32.mrb[0].mxu0
      %v3488 = vadd.f32 0.0, %v3487
      %v3489 = vpop.f32.mrb[0].mxu0
      %v3490 = vpop.f32.mrb[0].mxu0
      %v3491 = vadd.f32 0.0, %v3490
      %v3492 = vpop.f32.mrb[0].mxu0
      %3493 = vmatprep.mubr.bf16.mxu0 0
      %3494 = vmatmul.mubr.bf16.gmra.mrb[0].mxu0 %v3341
      %v3495 = vpop.f32.mrb[0].mxu0
      %v3496 = vadd.f32 0.0, %v3495
      %v3497 = vpop.f32.mrb[0].mxu0
      %v3498 = vpop.f32.mrb[0].mxu0
      %v3499 = vadd.f32 0.0, %v3498
      %v3500 = vpop.f32.mrb[0].mxu0
      %3501 = vmatprep.mubr.bf16.mxu0 0
      %3502 = vmatmul.mubr.bf16.gmra.mrb[0].mxu0 %v3344
      %v3503 = vpop.f32.mrb[0].mxu0
      %v3504 = vadd.f32 0.0, %v3503
      %v3505 = vpop.f32.mrb[0].mxu0
      %v3506 = vpop.f32.mrb[0].mxu0
      %v3507 = vadd.f32 0.0, %v3506
      %v3508 = vpop.f32.mrb[0].mxu0
      %3509 = vmatprep.mubr.bf16.mxu0 0
      %3510 = vmatmul.mubr.bf16.gmra.mrb[0].mxu0 %v3347
      %v3511 = vpop.f32.mrb[0].mxu0
      %v3512 = vadd.f32 0.0, %v3511
      %v3513 = vpop.f32.mrb[0].mxu0
      %v3514 = vpop.f32.mrb[0].mxu0
      %v3515 = vadd.f32 0.0, %v3514
      %v3516 = vpop.f32.mrb[0].mxu0
      %3517 = vmatprep.mubr.bf16.mxu0 0
      %3518 = vmatmul.mubr.bf16.gmra.mrb[0].mxu0 %v3350
      %v3519 = vpop.f32.mrb[0].mxu0
      %v3520 = vadd.f32 0.0, %v3519
      %v3521 = vpop.f32.mrb[0].mxu0
      %v3522 = vpop.f32.mrb[0].mxu0
      %v3523 = vadd.f32 0.0, %v3522
      %v3524 = vpop.f32.mrb[0].mxu0
      %3525 = vmatprep.mubr.bf16.mxu0 0
      %3526 = vmatmul.mubr.bf16.gmra.mrb[0].mxu0 %v3353
      %v3527 = vpop.f32.mrb[0].mxu0
      %v3528 = vadd.f32 0.0, %v3527
      %v3529 = vpop.f32.mrb[0].mxu0
      %v3530 = vpop.f32.mrb[0].mxu0
      %v3531 = vadd.f32 0.0, %v3530
      %v3532 = vpop.f32.mrb[0].mxu0
      %3533 = vmatprep.mubr.bf16.mxu0 0
      %3534 = vmatmul.mubr.bf16.gmra.mrb[0].mxu0 %v3356
      %v3535 = vpop.f32.mrb[0].mxu0
      %v3536 = vadd.f32 0.0, %v3535
      %v3537 = vpop.f32.mrb[0].mxu0
      %v3538 = vpop.f32.mrb[0].mxu0
      %v3539 = vadd.f32 0.0, %v3538
      %v3540 = vpop.f32.mrb[0].mxu0
      %3541 = vmatprep.mubr.bf16.mxu0 0
      %3542 = vmatmul.mubr.bf16.gmra.mrb[0].mxu0 %v3359
      %v3543 = vpop.f32.mrb[0].mxu0
      %v3544 = vadd.f32 0.0, %v3543
      %v3545 = vpop.f32.mrb[0].mxu0
      %v3546 = vpop.f32.mrb[0].mxu0
      %v3547 = vadd.f32 0.0, %v3546
      %v3548 = vpop.f32.mrb[0].mxu0
      %3549 = vmatprep.mubr.bf16.mxu0 0
      %3550 = vmatmul.mubr.bf16.gmra.mrb[0].mxu0 %v3362
      %v3551 = vpop.f32.mrb[0].mxu0
      %v3552 = vadd.f32 0.0, %v3551
      %v3553 = vpop.f32.mrb[0].mxu0
      %v3554 = vpop.f32.mrb[0].mxu0
      %v3555 = vadd.f32 0.0, %v3554
      %v3556 = vpop.f32.mrb[0].mxu0
      %3557 = vmatprep.mubr.bf16.mxu0 0
      %3558 = vmatmul.mubr.bf16.gmra.mrb[0].mxu0 %v3365
      %v3559 = vpop.f32.mrb[0].mxu0
      %v3560 = vadd.f32 0.0, %v3559
      %v3561 = vpop.f32.mrb[0].mxu0
      %v3562 = vpop.f32.mrb[0].mxu0
      %v3563 = vadd.f32 0.0, %v3562
      %v3564 = vpop.f32.mrb[0].mxu0
      %3565 = vmatprep.mubr.bf16.mxu0 0
      %3566 = vmatmul.mubr.bf16.gmra.mrb[0].mxu0 %v3368
      %v3567 = vpop.f32.mrb[0].mxu0
      %v3568 = vadd.f32 0.0, %v3567
      %v3569 = vpop.f32.mrb[0].mxu0
      %v3570 = vpop.f32.mrb[0].mxu0
      %v3571 = vpop.f32.mrb[0].mxu0
      %3572 = vdwg.mxu0
      %v3573 = vadd.f32 %v3160, %v3408
      %v3574 = vadd.f32 %v3161, %v3411
      %v3575 = vadd.f32 %v3162, %v3416
      %v3576 = vadd.f32 %v3163, %v3419
      %v3577 = vadd.f32 %v3164, %v3424
      %v3578 = vadd.f32 %v3165, %v3427
      %v3579 = vadd.f32 %v3166, %v3432
      %v3580 = vadd.f32 %v3167, %v3435
      %v3581 = vadd.f32 %v3168, %v3440
      %v3582 = vadd.f32 %v3169, %v3443
      %v3583 = vadd.f32 %v3170, %v3448
      %v3584 = vadd.f32 %v3171, %v3451
      %v3585 = vadd.f32 %v3172, %v3456
      %v3586 = vadd.f32 %v3173, %v3459
      %v3587 = vadd.f32 %v3174, %v3464
      %v3588 = vadd.f32 %v3175, %v3467
      %v3589 = vadd.f32 %v3176, %v3472
      %v3590 = vadd.f32 %v3177, %v3475
      %v3591 = vadd.f32 %v3178, %v3480
      %v3592 = vadd.f32 %v3179, %v3483
      %v3593 = vadd.f32 %v3180, %v3488
      %v3594 = vadd.f32 %v3181, %v3491
      %v3595 = vadd.f32 %v3182, %v3496
      %v3596 = vadd.f32 %v3183, %v3499
      %v3597 = vadd.f32 %v3184, %v3504
      %v3598 = vadd.f32 %v3185, %v3507
      %v3599 = vadd.f32 %v3186, %v3512
      %v3600 = vadd.f32 %v3187, %v3515
      %v3601 = vadd.f32 %v3188, %v3520
      %v3602 = vadd.f32 %v3189, %v3523
      %v3603 = vadd.f32 %v3190, %v3528
      %v3604 = vadd.f32 %v3191, %v3531
      %v3605 = vadd.f32 %v3192, %v3536
      %v3606 = vadd.f32 %v3193, %v3539
      %v3607 = vadd.f32 %v3194, %v3544
      %v3608 = vadd.f32 %v3195, %v3547
      %v3609 = vadd.f32 %v3196, %v3552
      %v3610 = vadd.f32 %v3197, %v3555
      %v3611 = vadd.f32 %v3198, %v3560
      %v3612 = vadd.f32 %v3199, %v3563
      %v3613 = vadd.f32 %v3200, %v3568
      %v3614 = vrot.slane %v749, 3
      %v3615 = vrot.slane %v750, 3
      %v3616 = vrot.slane %v751, 3
      %v3617 = vrot.slane %v752, 3
      %v3618 = vrot.slane %v753, 3
      %v3619 = vrot.slane %v754, 3
      %v3620 = vrot.slane %v755, 3
      %v3621 = vrot.slane %v756, 3
      %v3622 = vrot.slane %v757, 3
      %v3623 = vrot.slane %v758, 3
      %v3624 = vrot.slane %v759, 3
      %v3625 = vrot.slane %v760, 3
      %v3626 = vrot.slane %v761, 3
      %v3627 = vrot.slane %v762, 3
      %v3628 = vrot.slane %v763, 3
      %v3629 = vrot.slane %v764, 3
      %v3630 = vrot.slane %v765, 3
      %v3631 = vrot.slane %v766, 3
      %v3632 = vrot.slane %v767, 3
      %v3633 = vrot.slane %v768, 3
      %v3634 = vrot.slane %v769, 3
      %v3635 = vrot.slane %v770, 3
      %v3636 = vrot.slane %v771, 3
      %v3637 = vrot.slane %v772, 3
      %v3638 = vrot.slane %v773, 3
      %v3639 = vrot.slane %v774, 3
      %v3640 = vrot.slane %v775, 3
      %v3641 = vrot.slane %v776, 3
      %v3642 = vrot.slane %v777, 3
      %v3643 = vrot.slane %v778, 3
      %v3644 = vrot.slane %v779, 3
      %v3645 = vrot.slane %v780, 3
      %v3646 = vrot.slane %v781, 3
      %v3647 = vrot.slane %v782, 3
      %v3648 = vrot.slane %v783, 3
      %v3649 = vrot.slane %v784, 3
      %v3650 = vrot.slane %v785, 3
      %v3651 = vrot.slane %v786, 3
      %v3652 = vrot.slane %v787, 3
      %v3653 = vrot.slane %v788, 3
      %v3654 = vrot.slane %v789, 3
      %vm3655 = vcmp.lt.s32.totalorder %v832, 5
      %v3656 = vsel %vm3655, %v3653, %v3654
      %v3657 = vsel %vm3655, %v3652, %v3653
      %v3658 = vsel %vm3655, %v3651, %v3652
      %v3659 = vsel %vm3655, %v3650, %v3651
      %v3660 = vsel %vm3655, %v3649, %v3650
      %v3661 = vsel %vm3655, %v3648, %v3649
      %v3662 = vsel %vm3655, %v3647, %v3648
      %v3663 = vsel %vm3655, %v3646, %v3647
      %v3664 = vsel %vm3655, %v3645, %v3646
      %v3665 = vsel %vm3655, %v3644, %v3645
      %v3666 = vsel %vm3655, %v3643, %v3644
      %v3667 = vsel %vm3655, %v3642, %v3643
      %v3668 = vsel %vm3655, %v3641, %v3642
      %v3669 = vsel %vm3655, %v3640, %v3641
      %v3670 = vsel %vm3655, %v3639, %v3640
      %v3671 = vsel %vm3655, %v3638, %v3639
      %v3672 = vsel %vm3655, %v3637, %v3638
      %v3673 = vsel %vm3655, %v3636, %v3637
      %v3674 = vsel %vm3655, %v3635, %v3636
      %v3675 = vsel %vm3655, %v3634, %v3635
      %v3676 = vsel %vm3655, %v3633, %v3634
      %v3677 = vsel %vm3655, %v3632, %v3633
      %v3678 = vsel %vm3655, %v3631, %v3632
      %v3679 = vsel %vm3655, %v3630, %v3631
      %v3680 = vsel %vm3655, %v3629, %v3630
      %v3681 = vsel %vm3655, %v3628, %v3629
      %v3682 = vsel %vm3655, %v3627, %v3628
      %v3683 = vsel %vm3655, %v3626, %v3627
      %v3684 = vsel %vm3655, %v3625, %v3626
      %v3685 = vsel %vm3655, %v3624, %v3625
      %v3686 = vsel %vm3655, %v3623, %v3624
      %v3687 = vsel %vm3655, %v3622, %v3623
      %v3688 = vsel %vm3655, %v3621, %v3622
      %v3689 = vsel %vm3655, %v3620, %v3621
      %v3690 = vsel %vm3655, %v3619, %v3620
      %v3691 = vsel %vm3655, %v3618, %v3619
      %v3692 = vsel %vm3655, %v3617, %v3618
      %v3693 = vsel %vm3655, %v3616, %v3617
      %v3694 = vsel %vm3655, %v3615, %v3616
      %v3695 = vsel %vm3655, %v3614, %v3615
      %v3696 = vsel %vm3655, %v3654, %v3614
      %v3697 = vpack.c.bf16 %v3692, %v3693
      %v3698 = vpack.c.bf16 %v3690, %v3691
      %v3699 = vpack.c.bf16 %v3688, %v3689
      %v3700 = vpack.c.bf16 %v3686, %v3687
      %v3701 = vpack.c.bf16 %v3684, %v3685
      %v3702 = vpack.c.bf16 %v3682, %v3683
      %v3703 = vpack.c.bf16 %v3680, %v3681
      %v3704 = vpack.c.bf16 %v3678, %v3679
      %v3705 = vpack.c.bf16 %v3676, %v3677
      %v3706 = vpack.c.bf16 %v3674, %v3675
      %v3707 = vpack.c.bf16 %v3672, %v3673
      %v3708 = vpack.c.bf16 %v3670, %v3671
      %v3709 = vpack.c.bf16 %v3668, %v3669
      %v3710 = vpack.c.bf16 %v3666, %v3667
      %v3711 = vpack.c.bf16 %v3664, %v3665
      %v3712 = vpack.c.bf16 %v3662, %v3663
      %v3713 = vpack.c.bf16 %v3660, %v3661
      %v3714 = vpack.c.bf16 %v3658, %v3659
      %v3715 = vpack.c.bf16 %v3656, %v3657
      %v3716 = vpack.c.bf16 %v3695, %v3696
      %v3717 = vpack.c.bf16 %v3694, %v3694
      %s3718 = scalar_lea.vmem %s2, 32
      %v3719 = vld [vmem:[%s3718] sm:$0xf]
      %v3721 = vsel %vm1003, %v3697, 0
      %v3724 = vsel %vm1003, %v3698, 0
      %v3727 = vsel %vm1003, %v3699, 0
      %v3730 = vsel %vm1003, %v3700, 0
      %v3733 = vsel %vm1003, %v3701, 0
      %v3736 = vsel %vm1003, %v3702, 0
      %v3739 = vsel %vm1003, %v3703, 0
      %v3742 = vsel %vm1003, %v3704, 0
      %v3745 = vsel %vm1003, %v3705, 0
      %v3748 = vsel %vm1003, %v3706, 0
      %v3751 = vsel %vm1003, %v3707, 0
      %v3754 = vsel %vm1003, %v3708, 0
      %v3757 = vsel %vm1003, %v3709, 0
      %v3760 = vsel %vm1003, %v3710, 0
      %v3763 = vsel %vm1003, %v3711, 0
      %v3766 = vsel %vm1003, %v3712, 0
      %v3769 = vsel %vm1003, %v3713, 0
      %v3772 = vsel %vm1003, %v3714, 0
      %v3775 = vsel %vm1003, %v3715, 0
      %v3778 = vsel %vm1003, %v3716, 0
      %v3781 = vsel %vm1003, %v3717, 0
      %v3784 = vsel %vm1067, %v3719, 0
      %3786 = vmatprep.subr.bf16.mxu0 0
      %3787 = vmatpush1.bf16.msra.mxu0 %v3784
      %3788 = vmatprep.subr.bf16.mxu0 0
      %3789 = vmatpush1.bf16.msra.mxu0 0
      %3790 = vmatprep.subr.bf16.mxu0 0
      %3791 = vmatpush1.bf16.msra.mxu0 0
      %3792 = vmatprep.subr.bf16.mxu0 0
      %3793 = vmatpush1.bf16.msra.mxu0 0
      %3794 = vmatprep.subr.bf16.mxu0 0
      %3795 = vmatpush1.bf16.msra.mxu0 0
      %3796 = vmatprep.subr.bf16.mxu0 0
      %3797 = vmatpush1.bf16.msra.mxu0 0
      %3798 = vmatprep.subr.bf16.mxu0 0
      %3799 = vmatpush1.bf16.msra.mxu0 0
      %3800 = vmatprep.subr.bf16.mxu0 0
      %3801 = vmatpush1.bf16.msra.mxu0 0
      %3802 = vmatprep.subr.bf16.mxu0 0
      %3803 = vmatpush1.bf16.msra.mxu0 0
      %3804 = vmatprep.subr.bf16.mxu0 0
      %3805 = vmatpush1.bf16.msra.mxu0 0
      %3806 = vmatprep.subr.bf16.mxu0 0
      %3807 = vmatpush1.bf16.msra.mxu0 0
      %3808 = vmatprep.subr.bf16.mxu0 0
      %3809 = vmatpush1.bf16.msra.mxu0 0
      %3810 = vmatprep.subr.bf16.mxu0 0
      %3811 = vmatpush1.bf16.msra.mxu0 0
      %3812 = vmatprep.subr.bf16.mxu0 0
      %3813 = vmatpush1.bf16.msra.mxu0 0
      %3814 = vmatprep.subr.bf16.mxu0 0
      %3815 = vmatpush1.bf16.msra.mxu0 0
      %3816 = vmatprep.subr.bf16.mxu0 0
      %3817 = vmatpush1.bf16.msra.mxu0 0
      %3818 = vmatprep.mubr.bf16.mxu0 0
      %3819 = vmatmul.mubr.bf16.gmra.mrb[0].mxu0 %v3721
      %v3820 = vpop.f32.mrb[0].mxu0
      %v3821 = vadd.f32 0.0, %v3820
      %v3822 = vpop.f32.mrb[0].mxu0
      %v3823 = vpop.f32.mrb[0].mxu0
      %v3824 = vadd.f32 0.0, %v3823
      %v3825 = vpop.f32.mrb[0].mxu0
      %3826 = vmatprep.mubr.bf16.mxu0 0
      %3827 = vmatmul.mubr.bf16.gmra.mrb[0].mxu0 %v3724
      %v3828 = vpop.f32.mrb[0].mxu0
      %v3829 = vadd.f32 0.0, %v3828
      %v3830 = vpop.f32.mrb[0].mxu0
      %v3831 = vpop.f32.mrb[0].mxu0
      %v3832 = vadd.f32 0.0, %v3831
      %v3833 = vpop.f32.mrb[0].mxu0
      %3834 = vmatprep.mubr.bf16.mxu0 0
      %3835 = vmatmul.mubr.bf16.gmra.mrb[0].mxu0 %v3727
      %v3836 = vpop.f32.mrb[0].mxu0
      %v3837 = vadd.f32 0.0, %v3836
      %v3838 = vpop.f32.mrb[0].mxu0
      %v3839 = vpop.f32.mrb[0].mxu0
      %v3840 = vadd.f32 0.0, %v3839
      %v3841 = vpop.f32.mrb[0].mxu0
      %3842 = vmatprep.mubr.bf16.mxu0 0
      %3843 = vmatmul.mubr.bf16.gmra.mrb[0].mxu0 %v3730
      %v3844 = vpop.f32.mrb[0].mxu0
      %v3845 = vadd.f32 0.0, %v3844
      %v3846 = vpop.f32.mrb[0].mxu0
      %v3847 = vpop.f32.mrb[0].mxu0
      %v3848 = vadd.f32 0.0, %v3847
      %v3849 = vpop.f32.mrb[0].mxu0
      %3850 = vmatprep.mubr.bf16.mxu0 0
      %3851 = vmatmul.mubr.bf16.gmra.mrb[0].mxu0 %v3733
      %v3852 = vpop.f32.mrb[0].mxu0
      %v3853 = vadd.f32 0.0, %v3852
      %v3854 = vpop.f32.mrb[0].mxu0
      %v3855 = vpop.f32.mrb[0].mxu0
      %v3856 = vadd.f32 0.0, %v3855
      %v3857 = vpop.f32.mrb[0].mxu0
      %3858 = vmatprep.mubr.bf16.mxu0 0
      %3859 = vmatmul.mubr.bf16.gmra.mrb[0].mxu0 %v3736
      %v3860 = vpop.f32.mrb[0].mxu0
      %v3861 = vadd.f32 0.0, %v3860
      %v3862 = vpop.f32.mrb[0].mxu0
      %v3863 = vpop.f32.mrb[0].mxu0
      %v3864 = vadd.f32 0.0, %v3863
      %v3865 = vpop.f32.mrb[0].mxu0
      %3866 = vmatprep.mubr.bf16.mxu0 0
      %3867 = vmatmul.mubr.bf16.gmra.mrb[0].mxu0 %v3739
      %v3868 = vpop.f32.mrb[0].mxu0
      %v3869 = vadd.f32 0.0, %v3868
      %v3870 = vpop.f32.mrb[0].mxu0
      %v3871 = vpop.f32.mrb[0].mxu0
      %v3872 = vadd.f32 0.0, %v3871
      %v3873 = vpop.f32.mrb[0].mxu0
      %3874 = vmatprep.mubr.bf16.mxu0 0
      %3875 = vmatmul.mubr.bf16.gmra.mrb[0].mxu0 %v3742
      %v3876 = vpop.f32.mrb[0].mxu0
      %v3877 = vadd.f32 0.0, %v3876
      %v3878 = vpop.f32.mrb[0].mxu0
      %v3879 = vpop.f32.mrb[0].mxu0
      %v3880 = vadd.f32 0.0, %v3879
      %v3881 = vpop.f32.mrb[0].mxu0
      %3882 = vmatprep.mubr.bf16.mxu0 0
      %3883 = vmatmul.mubr.bf16.gmra.mrb[0].mxu0 %v3745
      %v3884 = vpop.f32.mrb[0].mxu0
      %v3885 = vadd.f32 0.0, %v3884
      %v3886 = vpop.f32.mrb[0].mxu0
      %v3887 = vpop.f32.mrb[0].mxu0
      %v3888 = vadd.f32 0.0, %v3887
      %v3889 = vpop.f32.mrb[0].mxu0
      %3890 = vmatprep.mubr.bf16.mxu0 0
      %3891 = vmatmul.mubr.bf16.gmra.mrb[0].mxu0 %v3748
      %v3892 = vpop.f32.mrb[0].mxu0
      %v3893 = vadd.f32 0.0, %v3892
      %v3894 = vpop.f32.mrb[0].mxu0
      %v3895 = vpop.f32.mrb[0].mxu0
      %v3896 = vadd.f32 0.0, %v3895
      %v3897 = vpop.f32.mrb[0].mxu0
      %3898 = vmatprep.mubr.bf16.mxu0 0
      %3899 = vmatmul.mubr.bf16.gmra.mrb[0].mxu0 %v3751
      %v3900 = vpop.f32.mrb[0].mxu0
      %v3901 = vadd.f32 0.0, %v3900
      %v3902 = vpop.f32.mrb[0].mxu0
      %v3903 = vpop.f32.mrb[0].mxu0
      %v3904 = vadd.f32 0.0, %v3903
      %v3905 = vpop.f32.mrb[0].mxu0
      %3906 = vmatprep.mubr.bf16.mxu0 0
      %3907 = vmatmul.mubr.bf16.gmra.mrb[0].mxu0 %v3754
      %v3908 = vpop.f32.mrb[0].mxu0
      %v3909 = vadd.f32 0.0, %v3908
      %v3910 = vpop.f32.mrb[0].mxu0
      %v3911 = vpop.f32.mrb[0].mxu0
      %v3912 = vadd.f32 0.0, %v3911
      %v3913 = vpop.f32.mrb[0].mxu0
      %3914 = vmatprep.mubr.bf16.mxu0 0
      %3915 = vmatmul.mubr.bf16.gmra.mrb[0].mxu0 %v3757
      %v3916 = vpop.f32.mrb[0].mxu0
      %v3917 = vadd.f32 0.0, %v3916
      %v3918 = vpop.f32.mrb[0].mxu0
      %v3919 = vpop.f32.mrb[0].mxu0
      %v3920 = vadd.f32 0.0, %v3919
      %v3921 = vpop.f32.mrb[0].mxu0
      %3922 = vmatprep.mubr.bf16.mxu0 0
      %3923 = vmatmul.mubr.bf16.gmra.mrb[0].mxu0 %v3760
      %v3924 = vpop.f32.mrb[0].mxu0
      %v3925 = vadd.f32 0.0, %v3924
      %v3926 = vpop.f32.mrb[0].mxu0
      %v3927 = vpop.f32.mrb[0].mxu0
      %v3928 = vadd.f32 0.0, %v3927
      %v3929 = vpop.f32.mrb[0].mxu0
      %3930 = vmatprep.mubr.bf16.mxu0 0
      %3931 = vmatmul.mubr.bf16.gmra.mrb[0].mxu0 %v3763
      %v3932 = vpop.f32.mrb[0].mxu0
      %v3933 = vadd.f32 0.0, %v3932
      %v3934 = vpop.f32.mrb[0].mxu0
      %v3935 = vpop.f32.mrb[0].mxu0
      %v3936 = vadd.f32 0.0, %v3935
      %v3937 = vpop.f32.mrb[0].mxu0
      %3938 = vmatprep.mubr.bf16.mxu0 0
      %3939 = vmatmul.mubr.bf16.gmra.mrb[0].mxu0 %v3766
      %v3940 = vpop.f32.mrb[0].mxu0
      %v3941 = vadd.f32 0.0, %v3940
      %v3942 = vpop.f32.mrb[0].mxu0
      %v3943 = vpop.f32.mrb[0].mxu0
      %v3944 = vadd.f32 0.0, %v3943
      %v3945 = vpop.f32.mrb[0].mxu0
      %3946 = vmatprep.mubr.bf16.mxu0 0
      %3947 = vmatmul.mubr.bf16.gmra.mrb[0].mxu0 %v3769
      %v3948 = vpop.f32.mrb[0].mxu0
      %v3949 = vadd.f32 0.0, %v3948
      %v3950 = vpop.f32.mrb[0].mxu0
      %v3951 = vpop.f32.mrb[0].mxu0
      %v3952 = vadd.f32 0.0, %v3951
      %v3953 = vpop.f32.mrb[0].mxu0
      %3954 = vmatprep.mubr.bf16.mxu0 0
      %3955 = vmatmul.mubr.bf16.gmra.mrb[0].mxu0 %v3772
      %v3956 = vpop.f32.mrb[0].mxu0
      %v3957 = vadd.f32 0.0, %v3956
      %v3958 = vpop.f32.mrb[0].mxu0
      %v3959 = vpop.f32.mrb[0].mxu0
      %v3960 = vadd.f32 0.0, %v3959
      %v3961 = vpop.f32.mrb[0].mxu0
      %3962 = vmatprep.mubr.bf16.mxu0 0
      %3963 = vmatmul.mubr.bf16.gmra.mrb[0].mxu0 %v3775
      %v3964 = vpop.f32.mrb[0].mxu0
      %v3965 = vadd.f32 0.0, %v3964
      %v3966 = vpop.f32.mrb[0].mxu0
      %v3967 = vpop.f32.mrb[0].mxu0
      %v3968 = vadd.f32 0.0, %v3967
      %v3969 = vpop.f32.mrb[0].mxu0
      %3970 = vmatprep.mubr.bf16.mxu0 0
      %3971 = vmatmul.mubr.bf16.gmra.mrb[0].mxu0 %v3778
      %v3972 = vpop.f32.mrb[0].mxu0
      %v3973 = vadd.f32 0.0, %v3972
      %v3974 = vpop.f32.mrb[0].mxu0
      %v3975 = vpop.f32.mrb[0].mxu0
      %v3976 = vadd.f32 0.0, %v3975
      %v3977 = vpop.f32.mrb[0].mxu0
      %3978 = vmatprep.mubr.bf16.mxu0 0
      %3979 = vmatmul.mubr.bf16.gmra.mrb[0].mxu0 %v3781
      %v3980 = vpop.f32.mrb[0].mxu0
      %v3981 = vadd.f32 0.0, %v3980
      %v3982 = vpop.f32.mrb[0].mxu0
      %v3983 = vpop.f32.mrb[0].mxu0
      %v3984 = vpop.f32.mrb[0].mxu0
      %3985 = vdwg.mxu0
      %v3986 = vadd.f32 %v3573, %v3821
      %v3987 = vadd.f32 %v3574, %v3824
      %v3988 = vadd.f32 %v3575, %v3829
      %v3989 = vadd.f32 %v3576, %v3832
      %v3990 = vadd.f32 %v3577, %v3837
      %v3991 = vadd.f32 %v3578, %v3840
      %v3992 = vadd.f32 %v3579, %v3845
      %v3993 = vadd.f32 %v3580, %v3848
      %v3994 = vadd.f32 %v3581, %v3853
      %v3995 = vadd.f32 %v3582, %v3856
      %v3996 = vadd.f32 %v3583, %v3861
      %v3997 = vadd.f32 %v3584, %v3864
      %v3998 = vadd.f32 %v3585, %v3869
      %v3999 = vadd.f32 %v3586, %v3872
      %v4000 = vadd.f32 %v3587, %v3877
      %v4001 = vadd.f32 %v3588, %v3880
      %v4002 = vadd.f32 %v3589, %v3885
      %v4003 = vadd.f32 %v3590, %v3888
      %v4004 = vadd.f32 %v3591, %v3893
      %v4005 = vadd.f32 %v3592, %v3896
      %v4006 = vadd.f32 %v3593, %v3901
      %v4007 = vadd.f32 %v3594, %v3904
      %v4008 = vadd.f32 %v3595, %v3909
      %v4009 = vadd.f32 %v3596, %v3912
      %v4010 = vadd.f32 %v3597, %v3917
      %v4011 = vadd.f32 %v3598, %v3920
      %v4012 = vadd.f32 %v3599, %v3925
      %v4013 = vadd.f32 %v3600, %v3928
      %v4014 = vadd.f32 %v3601, %v3933
      %v4015 = vadd.f32 %v3602, %v3936
      %v4016 = vadd.f32 %v3603, %v3941
      %v4017 = vadd.f32 %v3604, %v3944
      %v4018 = vadd.f32 %v3605, %v3949
      %v4019 = vadd.f32 %v3606, %v3952
      %v4020 = vadd.f32 %v3607, %v3957
      %v4021 = vadd.f32 %v3608, %v3960
      %v4022 = vadd.f32 %v3609, %v3965
      %v4023 = vadd.f32 %v3610, %v3968
      %v4024 = vadd.f32 %v3611, %v3973
      %v4025 = vadd.f32 %v3612, %v3976
      %v4026 = vadd.f32 %v3613, %v3981
      %v4027 = vld [vmem:[%s3] sm:$0x1]
      %v4029 = vlaneseq
      %v4030 = vshrl.u32 %v4029, 7
      %v4031 = vsub.s32 0, %v4030
      %v4032 = vrot.slane %v4027, %v4031
      %v4034 = vadd.f32 %v3986, %v4032
      %v4035 = vadd.f32 %v3987, %v4032
      %v4036 = vadd.f32 %v3988, %v4032
      %v4037 = vadd.f32 %v3989, %v4032
      %v4038 = vadd.f32 %v3990, %v4032
      %v4039 = vadd.f32 %v3991, %v4032
      %v4040 = vadd.f32 %v3992, %v4032
      %v4041 = vadd.f32 %v3993, %v4032
      %v4042 = vadd.f32 %v3994, %v4032
      %v4043 = vadd.f32 %v3995, %v4032
      %v4044 = vadd.f32 %v3996, %v4032
      %v4045 = vadd.f32 %v3997, %v4032
      %v4046 = vadd.f32 %v3998, %v4032
      %v4047 = vadd.f32 %v3999, %v4032
      %v4048 = vadd.f32 %v4000, %v4032
      %v4049 = vadd.f32 %v4001, %v4032
      %v4050 = vadd.f32 %v4002, %v4032
      %v4051 = vadd.f32 %v4003, %v4032
      %v4052 = vadd.f32 %v4004, %v4032
      %v4053 = vadd.f32 %v4005, %v4032
      %v4054 = vadd.f32 %v4006, %v4032
      %v4055 = vadd.f32 %v4007, %v4032
      %v4056 = vadd.f32 %v4008, %v4032
      %v4057 = vadd.f32 %v4009, %v4032
      %v4058 = vadd.f32 %v4010, %v4032
      %v4059 = vadd.f32 %v4011, %v4032
      %v4060 = vadd.f32 %v4012, %v4032
      %v4061 = vadd.f32 %v4013, %v4032
      %v4062 = vadd.f32 %v4014, %v4032
      %v4063 = vadd.f32 %v4015, %v4032
      %v4064 = vadd.f32 %v4016, %v4032
      %v4065 = vadd.f32 %v4017, %v4032
      %v4066 = vadd.f32 %v4018, %v4032
      %v4067 = vadd.f32 %v4019, %v4032
      %v4068 = vadd.f32 %v4020, %v4032
      %v4069 = vadd.f32 %v4021, %v4032
      %v4070 = vadd.f32 %v4022, %v4032
      %v4071 = vadd.f32 %v4023, %v4032
      %v4072 = vadd.f32 %v4024, %v4032
      %v4073 = vadd.f32 %v4025, %v4032
      %v4074 = vadd.f32 %v4026, %v4032
      %v4075 = vmax.f32 %v4034, 0.0
      %v4076 = vmax.f32 %v4035, 0.0
      %v4077 = vmax.f32 %v4036, 0.0
      %v4078 = vmax.f32 %v4037, 0.0
      %v4079 = vmax.f32 %v4038, 0.0
      %v4080 = vmax.f32 %v4039, 0.0
      %v4081 = vmax.f32 %v4040, 0.0
      %v4082 = vmax.f32 %v4041, 0.0
      %v4083 = vmax.f32 %v4042, 0.0
      %v4084 = vmax.f32 %v4043, 0.0
      %v4085 = vmax.f32 %v4044, 0.0
      %v4086 = vmax.f32 %v4045, 0.0
      %v4087 = vmax.f32 %v4046, 0.0
      %v4088 = vmax.f32 %v4047, 0.0
      %v4089 = vmax.f32 %v4048, 0.0
      %v4090 = vmax.f32 %v4049, 0.0
      %v4091 = vmax.f32 %v4050, 0.0
      %v4092 = vmax.f32 %v4051, 0.0
      %v4093 = vmax.f32 %v4052, 0.0
      %v4094 = vmax.f32 %v4053, 0.0
      %v4095 = vmax.f32 %v4054, 0.0
      %v4096 = vmax.f32 %v4055, 0.0
      %v4097 = vmax.f32 %v4056, 0.0
      %v4098 = vmax.f32 %v4057, 0.0
      %v4099 = vmax.f32 %v4058, 0.0
      %v4100 = vmax.f32 %v4059, 0.0
      %v4101 = vmax.f32 %v4060, 0.0
      %v4102 = vmax.f32 %v4061, 0.0
      %v4103 = vmax.f32 %v4062, 0.0
      %v4104 = vmax.f32 %v4063, 0.0
      %v4105 = vmax.f32 %v4064, 0.0
      %v4106 = vmax.f32 %v4065, 0.0
      %v4107 = vmax.f32 %v4066, 0.0
      %v4108 = vmax.f32 %v4067, 0.0
      %v4109 = vmax.f32 %v4068, 0.0
      %v4110 = vmax.f32 %v4069, 0.0
      %v4111 = vmax.f32 %v4070, 0.0
      %v4112 = vmax.f32 %v4071, 0.0
      %v4113 = vmax.f32 %v4072, 0.0
      %v4114 = vmax.f32 %v4073, 0.0
      %v4115 = vmax.f32 %v4074, 0.0
      %v4116 = vld [vmem:[%s1] sm:$0xff]
      %v4117 = vld [vmem:[%s1 + $0x8] sm:$0xff]
      %v4118 = vld [vmem:[%s1 + $0x10] sm:$0xff]
      %v4119 = vld [vmem:[%s1 + $0x18] sm:$0xff]
      %v4120 = vld [vmem:[%s1 + $0x20] sm:$0xff]
      %v4121 = vld [vmem:[%s1 + $0x28] sm:$0xff]
      %v4122 = vld [vmem:[%s1 + $0x30] sm:$0xff]
      %v4123 = vld [vmem:[%s1 + $0x38] sm:$0xff]
      %v4124 = vld [vmem:[%s1 + $0x40] sm:$0xff]
      %v4125 = vld [vmem:[%s1 + $0x48] sm:$0xff]
      %v4126 = vld [vmem:[%s1 + $0x50] sm:$0xff]
      %v4127 = vld [vmem:[%s1 + $0x58] sm:$0xff]
      %v4128 = vld [vmem:[%s1 + $0x60] sm:$0xff]
      %v4129 = vld [vmem:[%s1 + $0x68] sm:$0xff]
      %v4130 = vld [vmem:[%s1 + $0x70] sm:$0xff]
      %v4131 = vld [vmem:[%s1 + $0x78] sm:$0xff]
      %v4132 = vld [vmem:[%s1 + $0x80] sm:$0xff]
      %v4133 = vld [vmem:[%s1 + $0x88] sm:$0xff]
      %v4134 = vld [vmem:[%s1 + $0x90] sm:$0xff]
      %v4135 = vld [vmem:[%s1 + $0x98] sm:$0xff]
      %v4136 = vld [vmem:[%s1 + $0xa0] sm:$0xff]
      %v4137 = vld [vmem:[%s1 + $0xa8] sm:$0xff]
      %v4138 = vld [vmem:[%s1 + $0xb0] sm:$0xff]
      %v4139 = vld [vmem:[%s1 + $0xb8] sm:$0xff]
      %v4140 = vld [vmem:[%s1 + $0xc0] sm:$0xff]
      %v4141 = vld [vmem:[%s1 + $0xc8] sm:$0xff]
      %v4142 = vld [vmem:[%s1 + $0xd0] sm:$0xff]
      %v4143 = vld [vmem:[%s1 + $0xd8] sm:$0xff]
      %v4144 = vld [vmem:[%s1 + $0xe0] sm:$0xff]
      %v4145 = vld [vmem:[%s1 + $0xe8] sm:$0xff]
      %v4146 = vld [vmem:[%s1 + $0xf0] sm:$0xff]
      %v4147 = vld [vmem:[%s1 + $0xf8] sm:$0xff]
      %v4148 = vld [vmem:[%s1 + $0x100] sm:$0xff]
      %v4149 = vld [vmem:[%s1 + $0x108] sm:$0xff]
      %v4150 = vld [vmem:[%s1 + $0x110] sm:$0xff]
      %v4151 = vld [vmem:[%s1 + $0x118] sm:$0xff]
      %v4152 = vld [vmem:[%s1 + $0x120] sm:$0xff]
      %v4153 = vld [vmem:[%s1 + $0x128] sm:$0xff]
      %v4154 = vld [vmem:[%s1 + $0x130] sm:$0xff]
      %v4155 = vld [vmem:[%s1 + $0x138] sm:$0xff]
      %v4156 = vld [vmem:[%s1 + $0x140] sm:$0xff]
      %4158 = vset.pattern.permute.xlu0 0
      %4159 = vperm.xlu0 %4158, %v4116
      %v4160 = vpop.permute.xlu0 %4159
      %4163 = vset.pattern.permute.xlu0 0
      %4164 = vperm.xlu0 %4163, %v4117
      %v4165 = vpop.permute.xlu0 %4164
      %4168 = vset.pattern.permute.xlu0 0
      %4169 = vperm.xlu0 %4168, %v4118
      %v4170 = vpop.permute.xlu0 %4169
      %4173 = vset.pattern.permute.xlu0 0
      %4174 = vperm.xlu0 %4173, %v4119
      %v4175 = vpop.permute.xlu0 %4174
      %4178 = vset.pattern.permute.xlu0 0
      %4179 = vperm.xlu0 %4178, %v4120
      %v4180 = vpop.permute.xlu0 %4179
      %4183 = vset.pattern.permute.xlu0 0
      %4184 = vperm.xlu0 %4183, %v4121
      %v4185 = vpop.permute.xlu0 %4184
      %4188 = vset.pattern.permute.xlu0 0
      %4189 = vperm.xlu0 %4188, %v4122
      %v4190 = vpop.permute.xlu0 %4189
      %4193 = vset.pattern.permute.xlu0 0
      %4194 = vperm.xlu0 %4193, %v4123
      %v4195 = vpop.permute.xlu0 %4194
      %4198 = vset.pattern.permute.xlu0 0
      %4199 = vperm.xlu0 %4198, %v4124
      %v4200 = vpop.permute.xlu0 %4199
      %4203 = vset.pattern.permute.xlu0 0
      %4204 = vperm.xlu0 %4203, %v4125
      %v4205 = vpop.permute.xlu0 %4204
      %4208 = vset.pattern.permute.xlu0 0
      %4209 = vperm.xlu0 %4208, %v4126
      %v4210 = vpop.permute.xlu0 %4209
      %4213 = vset.pattern.permute.xlu0 0
      %4214 = vperm.xlu0 %4213, %v4127
      %v4215 = vpop.permute.xlu0 %4214
      %4218 = vset.pattern.permute.xlu0 0
      %4219 = vperm.xlu0 %4218, %v4128
      %v4220 = vpop.permute.xlu0 %4219
      %4223 = vset.pattern.permute.xlu0 0
      %4224 = vperm.xlu0 %4223, %v4129
      %v4225 = vpop.permute.xlu0 %4224
      %4228 = vset.pattern.permute.xlu0 0
      %4229 = vperm.xlu0 %4228, %v4130
      %v4230 = vpop.permute.xlu0 %4229
      %4233 = vset.pattern.permute.xlu0 0
      %4234 = vperm.xlu0 %4233, %v4131
      %v4235 = vpop.permute.xlu0 %4234
      %4238 = vset.pattern.permute.xlu0 0
      %4239 = vperm.xlu0 %4238, %v4132
      %v4240 = vpop.permute.xlu0 %4239
      %4243 = vset.pattern.permute.xlu0 0
      %4244 = vperm.xlu0 %4243, %v4133
      %v4245 = vpop.permute.xlu0 %4244
      %4248 = vset.pattern.permute.xlu0 0
      %4249 = vperm.xlu0 %4248, %v4134
      %v4250 = vpop.permute.xlu0 %4249
      %4253 = vset.pattern.permute.xlu0 0
      %4254 = vperm.xlu0 %4253, %v4135
      %v4255 = vpop.permute.xlu0 %4254
      %4258 = vset.pattern.permute.xlu0 0
      %4259 = vperm.xlu0 %4258, %v4136
      %v4260 = vpop.permute.xlu0 %4259
      %4263 = vset.pattern.permute.xlu0 0
      %4264 = vperm.xlu0 %4263, %v4137
      %v4265 = vpop.permute.xlu0 %4264
      %4268 = vset.pattern.permute.xlu0 0
      %4269 = vperm.xlu0 %4268, %v4138
      %v4270 = vpop.permute.xlu0 %4269
      %4273 = vset.pattern.permute.xlu0 0
      %4274 = vperm.xlu0 %4273, %v4139
      %v4275 = vpop.permute.xlu0 %4274
      %4278 = vset.pattern.permute.xlu0 0
      %4279 = vperm.xlu0 %4278, %v4140
      %v4280 = vpop.permute.xlu0 %4279
      %4283 = vset.pattern.permute.xlu0 0
      %4284 = vperm.xlu0 %4283, %v4141
      %v4285 = vpop.permute.xlu0 %4284
      %4288 = vset.pattern.permute.xlu0 0
      %4289 = vperm.xlu0 %4288, %v4142
      %v4290 = vpop.permute.xlu0 %4289
      %4293 = vset.pattern.permute.xlu0 0
      %4294 = vperm.xlu0 %4293, %v4143
      %v4295 = vpop.permute.xlu0 %4294
      %4298 = vset.pattern.permute.xlu0 0
      %4299 = vperm.xlu0 %4298, %v4144
      %v4300 = vpop.permute.xlu0 %4299
      %4303 = vset.pattern.permute.xlu0 0
      %4304 = vperm.xlu0 %4303, %v4145
      %v4305 = vpop.permute.xlu0 %4304
      %4308 = vset.pattern.permute.xlu0 0
      %4309 = vperm.xlu0 %4308, %v4146
      %v4310 = vpop.permute.xlu0 %4309
      %4313 = vset.pattern.permute.xlu0 0
      %4314 = vperm.xlu0 %4313, %v4147
      %v4315 = vpop.permute.xlu0 %4314
      %4318 = vset.pattern.permute.xlu0 0
      %4319 = vperm.xlu0 %4318, %v4148
      %v4320 = vpop.permute.xlu0 %4319
      %4323 = vset.pattern.permute.xlu0 0
      %4324 = vperm.xlu0 %4323, %v4149
      %v4325 = vpop.permute.xlu0 %4324
      %4328 = vset.pattern.permute.xlu0 0
      %4329 = vperm.xlu0 %4328, %v4150
      %v4330 = vpop.permute.xlu0 %4329
      %4333 = vset.pattern.permute.xlu0 0
      %4334 = vperm.xlu0 %4333, %v4151
      %v4335 = vpop.permute.xlu0 %4334
      %4338 = vset.pattern.permute.xlu0 0
      %4339 = vperm.xlu0 %4338, %v4152
      %v4340 = vpop.permute.xlu0 %4339
      %4343 = vset.pattern.permute.xlu0 0
      %4344 = vperm.xlu0 %4343, %v4153
      %v4345 = vpop.permute.xlu0 %4344
      %4348 = vset.pattern.permute.xlu0 0
      %4349 = vperm.xlu0 %4348, %v4154
      %v4350 = vpop.permute.xlu0 %4349
      %4353 = vset.pattern.permute.xlu0 0
      %4354 = vperm.xlu0 %4353, %v4155
      %v4355 = vpop.permute.xlu0 %4354
      %4358 = vset.pattern.permute.xlu0 0
      %4359 = vperm.xlu0 %4358, %v4156
      %v4360 = vpop.permute.xlu0 %4359
      %v4362 = vmul.f32 %v4075, %v4160
      %v4363 = vmul.f32 %v4076, %v4165
      %v4364 = vmul.f32 %v4077, %v4170
      %v4365 = vmul.f32 %v4078, %v4175
      %v4366 = vmul.f32 %v4079, %v4180
      %v4367 = vmul.f32 %v4080, %v4185
      %v4368 = vmul.f32 %v4081, %v4190
      %v4369 = vmul.f32 %v4082, %v4195
      %v4370 = vmul.f32 %v4083, %v4200
      %v4371 = vmul.f32 %v4084, %v4205
      %v4372 = vmul.f32 %v4085, %v4210
      %v4373 = vmul.f32 %v4086, %v4215
      %v4374 = vmul.f32 %v4087, %v4220
      %v4375 = vmul.f32 %v4088, %v4225
      %v4376 = vmul.f32 %v4089, %v4230
      %v4377 = vmul.f32 %v4090, %v4235
      %v4378 = vmul.f32 %v4091, %v4240
      %v4379 = vmul.f32 %v4092, %v4245
      %v4380 = vmul.f32 %v4093, %v4250
      %v4381 = vmul.f32 %v4094, %v4255
      %v4382 = vmul.f32 %v4095, %v4260
      %v4383 = vmul.f32 %v4096, %v4265
      %v4384 = vmul.f32 %v4097, %v4270
      %v4385 = vmul.f32 %v4098, %v4275
      %v4386 = vmul.f32 %v4099, %v4280
      %v4387 = vmul.f32 %v4100, %v4285
      %v4388 = vmul.f32 %v4101, %v4290
      %v4389 = vmul.f32 %v4102, %v4295
      %v4390 = vmul.f32 %v4103, %v4300
      %v4391 = vmul.f32 %v4104, %v4305
      %v4392 = vmul.f32 %v4105, %v4310
      %v4393 = vmul.f32 %v4106, %v4315
      %v4394 = vmul.f32 %v4107, %v4320
      %v4395 = vmul.f32 %v4108, %v4325
      %v4396 = vmul.f32 %v4109, %v4330
      %v4397 = vmul.f32 %v4110, %v4335
      %v4398 = vmul.f32 %v4111, %v4340
      %v4399 = vmul.f32 %v4112, %v4345
      %v4400 = vmul.f32 %v4113, %v4350
      %v4401 = vmul.f32 %v4114, %v4355
      %v4402 = vmul.f32 %v4115, %v4360
      %vm4403 = vcmask 261120
      %v4404 = vsel %vm4403, %v4362, 0.0
      %v4405 = vsel %vm4403, %v4363, 0.0
      %v4406 = vadd.f32 %v4404, %v4405
      %v4407 = vsel %vm4403, %v4364, 0.0
      %v4408 = vadd.f32 %v4406, %v4407
      %v4409 = vsel %vm4403, %v4365, 0.0
      %v4410 = vadd.f32 %v4408, %v4409
      %v4411 = vsel %vm4403, %v4366, 0.0
      %v4412 = vadd.f32 %v4410, %v4411
      %v4413 = vsel %vm4403, %v4367, 0.0
      %v4414 = vadd.f32 %v4412, %v4413
      %v4415 = vsel %vm4403, %v4368, 0.0
      %v4416 = vadd.f32 %v4414, %v4415
      %v4417 = vsel %vm4403, %v4369, 0.0
      %v4418 = vadd.f32 %v4416, %v4417
      %v4419 = vsel %vm4403, %v4370, 0.0
      %v4420 = vadd.f32 %v4418, %v4419
      %v4421 = vsel %vm4403, %v4371, 0.0
      %v4422 = vadd.f32 %v4420, %v4421
      %v4423 = vsel %vm4403, %v4372, 0.0
      %v4424 = vadd.f32 %v4422, %v4423
      %v4425 = vsel %vm4403, %v4373, 0.0
      %v4426 = vadd.f32 %v4424, %v4425
      %v4427 = vsel %vm4403, %v4374, 0.0
      %v4428 = vadd.f32 %v4426, %v4427
      %v4429 = vsel %vm4403, %v4375, 0.0
      %v4430 = vadd.f32 %v4428, %v4429
      %v4431 = vsel %vm4403, %v4376, 0.0
      %v4432 = vadd.f32 %v4430, %v4431
      %v4433 = vsel %vm4403, %v4377, 0.0
      %v4434 = vadd.f32 %v4432, %v4433
      %v4435 = vsel %vm4403, %v4378, 0.0
      %v4436 = vadd.f32 %v4434, %v4435
      %v4437 = vsel %vm4403, %v4379, 0.0
      %v4438 = vadd.f32 %v4436, %v4437
      %v4439 = vsel %vm4403, %v4380, 0.0
      %v4440 = vadd.f32 %v4438, %v4439
      %v4441 = vsel %vm4403, %v4381, 0.0
      %v4442 = vadd.f32 %v4440, %v4441
      %v4443 = vsel %vm4403, %v4382, 0.0
      %v4444 = vadd.f32 %v4442, %v4443
      %v4445 = vsel %vm4403, %v4383, 0.0
      %v4446 = vadd.f32 %v4444, %v4445
      %v4447 = vsel %vm4403, %v4384, 0.0
      %v4448 = vadd.f32 %v4446, %v4447
      %v4449 = vsel %vm4403, %v4385, 0.0
      %v4450 = vadd.f32 %v4448, %v4449
      %v4451 = vsel %vm4403, %v4386, 0.0
      %v4452 = vadd.f32 %v4450, %v4451
      %v4453 = vsel %vm4403, %v4387, 0.0
      %v4454 = vadd.f32 %v4452, %v4453
      %v4455 = vsel %vm4403, %v4388, 0.0
      %v4456 = vadd.f32 %v4454, %v4455
      %v4457 = vsel %vm4403, %v4389, 0.0
      %v4458 = vadd.f32 %v4456, %v4457
      %v4459 = vsel %vm4403, %v4390, 0.0
      %v4460 = vadd.f32 %v4458, %v4459
      %v4461 = vsel %vm4403, %v4391, 0.0
      %v4462 = vadd.f32 %v4460, %v4461
      %v4463 = vsel %vm4403, %v4392, 0.0
      %v4464 = vadd.f32 %v4462, %v4463
      %v4465 = vsel %vm4403, %v4393, 0.0
      %v4466 = vadd.f32 %v4464, %v4465
      %v4467 = vsel %vm4403, %v4394, 0.0
      %v4468 = vadd.f32 %v4466, %v4467
      %v4469 = vsel %vm4403, %v4395, 0.0
      %v4470 = vadd.f32 %v4468, %v4469
      %v4471 = vsel %vm4403, %v4396, 0.0
      %v4472 = vadd.f32 %v4470, %v4471
      %v4473 = vsel %vm4403, %v4397, 0.0
      %v4474 = vadd.f32 %v4472, %v4473
      %v4475 = vsel %vm4403, %v4398, 0.0
      %v4476 = vadd.f32 %v4474, %v4475
      %v4477 = vsel %vm4403, %v4399, 0.0
      %v4478 = vadd.f32 %v4476, %v4477
      %v4479 = vsel %vm4403, %v4400, 0.0
      %v4480 = vadd.f32 %v4478, %v4479
      %v4481 = vsel %vm4403, %v4401, 0.0
      %v4482 = vadd.f32 %v4480, %v4481
      %v4483 = vsel %vm4403, %v4402, 0.0
      %v4484 = vadd.f32 %v4482, %v4483
      %v4485 = vrot.slane %v4484, 4
      %v4486 = vadd.f32 %v4484, %v4485
      %v4487 = vrot.slane %v4486, 2
      %v4488 = vadd.f32 %v4486, %v4487
      %v4489 = vrot.slane %v4488, 1
      %v4490 = vadd.f32 %v4488, %v4489
      %s4491 = scalar_lea.vmem [#allocation2], %s37
      %vm4492 = vcmask 253952
      %4493 = vst.msk [vmem:[%s4491] sm:$0x1] %vm4492, %v4490
      %v4494 = vld [vmem:[%s4] sm:$0xf]
      %s4495 = scalar_lea.vmem %s4, 4
      %v4496 = vld [vmem:[%s4495] sm:$0xf]
      %v4498 = vsel %vm1067, %v4496, 0
      %4500 = vmatprep.subr.bf16.mxu0 0
      %4501 = vmatpush1.bf16.msra.mxu0 %v4498
      %4502 = vmatprep.subr.bf16.mxu0 0
      %4503 = vmatpush1.bf16.msra.mxu0 0
      %4504 = vmatprep.subr.bf16.mxu0 0
      %4505 = vmatpush1.bf16.msra.mxu0 0
      %4506 = vmatprep.subr.bf16.mxu0 0
      %4507 = vmatpush1.bf16.msra.mxu0 0
      %4508 = vmatprep.subr.bf16.mxu0 0
      %4509 = vmatpush1.bf16.msra.mxu0 0
      %4510 = vmatprep.subr.bf16.mxu0 0
      %4511 = vmatpush1.bf16.msra.mxu0 0
      %4512 = vmatprep.subr.bf16.mxu0 0
      %4513 = vmatpush1.bf16.msra.mxu0 0
      %4514 = vmatprep.subr.bf16.mxu0 0
      %4515 = vmatpush1.bf16.msra.mxu0 0
      %4516 = vmatprep.subr.bf16.mxu0 0
      %4517 = vmatpush1.bf16.msra.mxu0 0
      %4518 = vmatprep.subr.bf16.mxu0 0
      %4519 = vmatpush1.bf16.msra.mxu0 0
      %4520 = vmatprep.subr.bf16.mxu0 0
      %4521 = vmatpush1.bf16.msra.mxu0 0
      %4522 = vmatprep.subr.bf16.mxu0 0
      %4523 = vmatpush1.bf16.msra.mxu0 0
      %4524 = vmatprep.subr.bf16.mxu0 0
      %4525 = vmatpush1.bf16.msra.mxu0 0
      %4526 = vmatprep.subr.bf16.mxu0 0
      %4527 = vmatpush1.bf16.msra.mxu0 0
      %4528 = vmatprep.subr.bf16.mxu0 0
      %4529 = vmatpush1.bf16.msra.mxu0 0
      %4530 = vmatprep.subr.bf16.mxu0 0
      %4531 = vmatpush1.bf16.msra.mxu0 0
      %4532 = vmatprep.mubr.bf16.mxu0 0
      %4533 = vmatmul.mubr.bf16.gmra.mrb[0].mxu0 %v1005
      %v4534 = vpop.f32.mrb[0].mxu0
      %v4535 = vadd.f32 0.0, %v4534
      %v4536 = vpop.f32.mrb[0].mxu0
      %v4537 = vpop.f32.mrb[0].mxu0
      %v4538 = vadd.f32 0.0, %v4537
      %v4539 = vpop.f32.mrb[0].mxu0
      %4540 = vmatprep.mubr.bf16.mxu0 0
      %4541 = vmatmul.mubr.bf16.gmra.mrb[0].mxu0 %v1008
      %v4542 = vpop.f32.mrb[0].mxu0
      %v4543 = vadd.f32 0.0, %v4542
      %v4544 = vpop.f32.mrb[0].mxu0
      %v4545 = vpop.f32.mrb[0].mxu0
      %v4546 = vadd.f32 0.0, %v4545
      %v4547 = vpop.f32.mrb[0].mxu0
      %4548 = vmatprep.mubr.bf16.mxu0 0
      %4549 = vmatmul.mubr.bf16.gmra.mrb[0].mxu0 %v1011
      %v4550 = vpop.f32.mrb[0].mxu0
      %v4551 = vadd.f32 0.0, %v4550
      %v4552 = vpop.f32.mrb[0].mxu0
      %v4553 = vpop.f32.mrb[0].mxu0
      %v4554 = vadd.f32 0.0, %v4553
      %v4555 = vpop.f32.mrb[0].mxu0
      %4556 = vmatprep.mubr.bf16.mxu0 0
      %4557 = vmatmul.mubr.bf16.gmra.mrb[0].mxu0 %v1014
      %v4558 = vpop.f32.mrb[0].mxu0
      %v4559 = vadd.f32 0.0, %v4558
      %v4560 = vpop.f32.mrb[0].mxu0
      %v4561 = vpop.f32.mrb[0].mxu0
      %v4562 = vadd.f32 0.0, %v4561
      %v4563 = vpop.f32.mrb[0].mxu0
      %4564 = vmatprep.mubr.bf16.mxu0 0
      %4565 = vmatmul.mubr.bf16.gmra.mrb[0].mxu0 %v1017
      %v4566 = vpop.f32.mrb[0].mxu0
      %v4567 = vadd.f32 0.0, %v4566
      %v4568 = vpop.f32.mrb[0].mxu0
      %v4569 = vpop.f32.mrb[0].mxu0
      %v4570 = vadd.f32 0.0, %v4569
      %v4571 = vpop.f32.mrb[0].mxu0
      %4572 = vmatprep.mubr.bf16.mxu0 0
      %4573 = vmatmul.mubr.bf16.gmra.mrb[0].mxu0 %v1020
      %v4574 = vpop.f32.mrb[0].mxu0
      %v4575 = vadd.f32 0.0, %v4574
      %v4576 = vpop.f32.mrb[0].mxu0
      %v4577 = vpop.f32.mrb[0].mxu0
      %v4578 = vadd.f32 0.0, %v4577
      %v4579 = vpop.f32.mrb[0].mxu0
      %4580 = vmatprep.mubr.bf16.mxu0 0
      %4581 = vmatmul.mubr.bf16.gmra.mrb[0].mxu0 %v1023
      %v4582 = vpop.f32.mrb[0].mxu0
      %v4583 = vadd.f32 0.0, %v4582
      %v4584 = vpop.f32.mrb[0].mxu0
      %v4585 = vpop.f32.mrb[0].mxu0
      %v4586 = vadd.f32 0.0, %v4585
      %v4587 = vpop.f32.mrb[0].mxu0
      %4588 = vmatprep.mubr.bf16.mxu0 0
      %4589 = vmatmul.mubr.bf16.gmra.mrb[0].mxu0 %v1026
      %v4590 = vpop.f32.mrb[0].mxu0
      %v4591 = vadd.f32 0.0, %v4590
      %v4592 = vpop.f32.mrb[0].mxu0
      %v4593 = vpop.f32.mrb[0].mxu0
      %v4594 = vadd.f32 0.0, %v4593
      %v4595 = vpop.f32.mrb[0].mxu0
      %4596 = vmatprep.mubr.bf16.mxu0 0
      %4597 = vmatmul.mubr.bf16.gmra.mrb[0].mxu0 %v1029
      %v4598 = vpop.f32.mrb[0].mxu0
      %v4599 = vadd.f32 0.0, %v4598
      %v4600 = vpop.f32.mrb[0].mxu0
      %v4601 = vpop.f32.mrb[0].mxu0
      %v4602 = vadd.f32 0.0, %v4601
      %v4603 = vpop.f32.mrb[0].mxu0
      %4604 = vmatprep.mubr.bf16.mxu0 0
      %4605 = vmatmul.mubr.bf16.gmra.mrb[0].mxu0 %v1032
      %v4606 = vpop.f32.mrb[0].mxu0
      %v4607 = vadd.f32 0.0, %v4606
      %v4608 = vpop.f32.mrb[0].mxu0
      %v4609 = vpop.f32.mrb[0].mxu0
      %v4610 = vadd.f32 0.0, %v4609
      %v4611 = vpop.f32.mrb[0].mxu0
      %4612 = vmatprep.mubr.bf16.mxu0 0
      %4613 = vmatmul.mubr.bf16.gmra.mrb[0].mxu0 %v1035
      %v4614 = vpop.f32.mrb[0].mxu0
      %v4615 = vadd.f32 0.0, %v4614
      %v4616 = vpop.f32.mrb[0].mxu0
      %v4617 = vpop.f32.mrb[0].mxu0
      %v4618 = vadd.f32 0.0, %v4617
      %v4619 = vpop.f32.mrb[0].mxu0
      %4620 = vmatprep.mubr.bf16.mxu0 0
      %4621 = vmatmul.mubr.bf16.gmra.mrb[0].mxu0 %v1038
      %v4622 = vpop.f32.mrb[0].mxu0
      %v4623 = vadd.f32 0.0, %v4622
      %v4624 = vpop.f32.mrb[0].mxu0
      %v4625 = vpop.f32.mrb[0].mxu0
      %v4626 = vadd.f32 0.0, %v4625
      %v4627 = vpop.f32.mrb[0].mxu0
      %4628 = vmatprep.mubr.bf16.mxu0 0
      %4629 = vmatmul.mubr.bf16.gmra.mrb[0].mxu0 %v1041
      %v4630 = vpop.f32.mrb[0].mxu0
      %v4631 = vadd.f32 0.0, %v4630
      %v4632 = vpop.f32.mrb[0].mxu0
      %v4633 = vpop.f32.mrb[0].mxu0
      %v4634 = vadd.f32 0.0, %v4633
      %v4635 = vpop.f32.mrb[0].mxu0
      %4636 = vmatprep.mubr.bf16.mxu0 0
      %4637 = vmatmul.mubr.bf16.gmra.mrb[0].mxu0 %v1044
      %v4638 = vpop.f32.mrb[0].mxu0
      %v4639 = vadd.f32 0.0, %v4638
      %v4640 = vpop.f32.mrb[0].mxu0
      %v4641 = vpop.f32.mrb[0].mxu0
      %v4642 = vadd.f32 0.0, %v4641
      %v4643 = vpop.f32.mrb[0].mxu0
      %4644 = vmatprep.mubr.bf16.mxu0 0
      %4645 = vmatmul.mubr.bf16.gmra.mrb[0].mxu0 %v1047
      %v4646 = vpop.f32.mrb[0].mxu0
      %v4647 = vadd.f32 0.0, %v4646
      %v4648 = vpop.f32.mrb[0].mxu0
      %v4649 = vpop.f32.mrb[0].mxu0
      %v4650 = vadd.f32 0.0, %v4649
      %v4651 = vpop.f32.mrb[0].mxu0
      %4652 = vmatprep.mubr.bf16.mxu0 0
      %4653 = vmatmul.mubr.bf16.gmra.mrb[0].mxu0 %v1050
      %v4654 = vpop.f32.mrb[0].mxu0
      %v4655 = vadd.f32 0.0, %v4654
      %v4656 = vpop.f32.mrb[0].mxu0
      %v4657 = vpop.f32.mrb[0].mxu0
      %v4658 = vadd.f32 0.0, %v4657
      %v4659 = vpop.f32.mrb[0].mxu0
      %4660 = vmatprep.mubr.bf16.mxu0 0
      %4661 = vmatmul.mubr.bf16.gmra.mrb[0].mxu0 %v1053
      %v4662 = vpop.f32.mrb[0].mxu0
      %v4663 = vadd.f32 0.0, %v4662
      %v4664 = vpop.f32.mrb[0].mxu0
      %v4665 = vpop.f32.mrb[0].mxu0
      %v4666 = vadd.f32 0.0, %v4665
      %v4667 = vpop.f32.mrb[0].mxu0
      %4668 = vmatprep.mubr.bf16.mxu0 0
      %4669 = vmatmul.mubr.bf16.gmra.mrb[0].mxu0 %v1056
      %v4670 = vpop.f32.mrb[0].mxu0
      %v4671 = vadd.f32 0.0, %v4670
      %v4672 = vpop.f32.mrb[0].mxu0
      %v4673 = vpop.f32.mrb[0].mxu0
      %v4674 = vadd.f32 0.0, %v4673
      %v4675 = vpop.f32.mrb[0].mxu0
      %4676 = vmatprep.mubr.bf16.mxu0 0
      %4677 = vmatmul.mubr.bf16.gmra.mrb[0].mxu0 %v1059
      %v4678 = vpop.f32.mrb[0].mxu0
      %v4679 = vadd.f32 0.0, %v4678
      %v4680 = vpop.f32.mrb[0].mxu0
      %v4681 = vpop.f32.mrb[0].mxu0
      %v4682 = vadd.f32 0.0, %v4681
      %v4683 = vpop.f32.mrb[0].mxu0
      %4684 = vmatprep.mubr.bf16.mxu0 0
      %4685 = vmatmul.mubr.bf16.gmra.mrb[0].mxu0 %v1062
      %v4686 = vpop.f32.mrb[0].mxu0
      %v4687 = vadd.f32 0.0, %v4686
      %v4688 = vpop.f32.mrb[0].mxu0
      %v4689 = vpop.f32.mrb[0].mxu0
      %v4690 = vadd.f32 0.0, %v4689
      %v4691 = vpop.f32.mrb[0].mxu0
      %4692 = vmatprep.mubr.bf16.mxu0 0
      %4693 = vmatmul.mubr.bf16.gmra.mrb[0].mxu0 %v1065
      %v4694 = vpop.f32.mrb[0].mxu0
      %v4695 = vadd.f32 0.0, %v4694
      %v4696 = vpop.f32.mrb[0].mxu0
      %v4697 = vpop.f32.mrb[0].mxu0
      %v4698 = vpop.f32.mrb[0].mxu0
      %4699 = vdwg.mxu0
      %v4701 = vsel %vm1067, %v4494, 0
      %4703 = vmatprep.subr.bf16.mxu0 0
      %4704 = vmatpush1.bf16.msra.mxu0 %v4701
      %4705 = vmatprep.subr.bf16.mxu0 0
      %4706 = vmatpush1.bf16.msra.mxu0 0
      %4707 = vmatprep.subr.bf16.mxu0 0
      %4708 = vmatpush1.bf16.msra.mxu0 0
      %4709 = vmatprep.subr.bf16.mxu0 0
      %4710 = vmatpush1.bf16.msra.mxu0 0
      %4711 = vmatprep.subr.bf16.mxu0 0
      %4712 = vmatpush1.bf16.msra.mxu0 0
      %4713 = vmatprep.subr.bf16.mxu0 0
      %4714 = vmatpush1.bf16.msra.mxu0 0
      %4715 = vmatprep.subr.bf16.mxu0 0
      %4716 = vmatpush1.bf16.msra.mxu0 0
      %4717 = vmatprep.subr.bf16.mxu0 0
      %4718 = vmatpush1.bf16.msra.mxu0 0
      %4719 = vmatprep.subr.bf16.mxu0 0
      %4720 = vmatpush1.bf16.msra.mxu0 0
      %4721 = vmatprep.subr.bf16.mxu0 0
      %4722 = vmatpush1.bf16.msra.mxu0 0
      %4723 = vmatprep.subr.bf16.mxu0 0
      %4724 = vmatpush1.bf16.msra.mxu0 0
      %4725 = vmatprep.subr.bf16.mxu0 0
      %4726 = vmatpush1.bf16.msra.mxu0 0
      %4727 = vmatprep.subr.bf16.mxu0 0
      %4728 = vmatpush1.bf16.msra.mxu0 0
      %4729 = vmatprep.subr.bf16.mxu0 0
      %4730 = vmatpush1.bf16.msra.mxu0 0
      %4731 = vmatprep.subr.bf16.mxu0 0
      %4732 = vmatpush1.bf16.msra.mxu0 0
      %4733 = vmatprep.subr.bf16.mxu0 0
      %4734 = vmatpush1.bf16.msra.mxu0 0
      %4735 = vmatprep.mubr.bf16.mxu0 0
      %4736 = vmatmul.mubr.bf16.gmra.mrb[0].mxu0 %v1272
      %v4737 = vpop.f32.mrb[0].mxu0
      %v4738 = vadd.f32 %v4535, %v4737
      %v4739 = vpop.f32.mrb[0].mxu0
      %v4740 = vpop.f32.mrb[0].mxu0
      %v4741 = vadd.f32 %v4538, %v4740
      %v4742 = vpop.f32.mrb[0].mxu0
      %4743 = vmatprep.mubr.bf16.mxu0 0
      %4744 = vmatmul.mubr.bf16.gmra.mrb[0].mxu0 %v1275
      %v4745 = vpop.f32.mrb[0].mxu0
      %v4746 = vadd.f32 %v4543, %v4745
      %v4747 = vpop.f32.mrb[0].mxu0
      %v4748 = vpop.f32.mrb[0].mxu0
      %v4749 = vadd.f32 %v4546, %v4748
      %v4750 = vpop.f32.mrb[0].mxu0
      %4751 = vmatprep.mubr.bf16.mxu0 0
      %4752 = vmatmul.mubr.bf16.gmra.mrb[0].mxu0 %v1278
      %v4753 = vpop.f32.mrb[0].mxu0
      %v4754 = vadd.f32 %v4551, %v4753
      %v4755 = vpop.f32.mrb[0].mxu0
      %v4756 = vpop.f32.mrb[0].mxu0
      %v4757 = vadd.f32 %v4554, %v4756
      %v4758 = vpop.f32.mrb[0].mxu0
      %4759 = vmatprep.mubr.bf16.mxu0 0
      %4760 = vmatmul.mubr.bf16.gmra.mrb[0].mxu0 %v1281
      %v4761 = vpop.f32.mrb[0].mxu0
      %v4762 = vadd.f32 %v4559, %v4761
      %v4763 = vpop.f32.mrb[0].mxu0
      %v4764 = vpop.f32.mrb[0].mxu0
      %v4765 = vadd.f32 %v4562, %v4764
      %v4766 = vpop.f32.mrb[0].mxu0
      %4767 = vmatprep.mubr.bf16.mxu0 0
      %4768 = vmatmul.mubr.bf16.gmra.mrb[0].mxu0 %v1284
      %v4769 = vpop.f32.mrb[0].mxu0
      %v4770 = vadd.f32 %v4567, %v4769
      %v4771 = vpop.f32.mrb[0].mxu0
      %v4772 = vpop.f32.mrb[0].mxu0
      %v4773 = vadd.f32 %v4570, %v4772
      %v4774 = vpop.f32.mrb[0].mxu0
      %4775 = vmatprep.mubr.bf16.mxu0 0
      %4776 = vmatmul.mubr.bf16.gmra.mrb[0].mxu0 %v1287
      %v4777 = vpop.f32.mrb[0].mxu0
      %v4778 = vadd.f32 %v4575, %v4777
      %v4779 = vpop.f32.mrb[0].mxu0
      %v4780 = vpop.f32.mrb[0].mxu0
      %v4781 = vadd.f32 %v4578, %v4780
      %v4782 = vpop.f32.mrb[0].mxu0
      %4783 = vmatprep.mubr.bf16.mxu0 0
      %4784 = vmatmul.mubr.bf16.gmra.mrb[0].mxu0 %v1290
      %v4785 = vpop.f32.mrb[0].mxu0
      %v4786 = vadd.f32 %v4583, %v4785
      %v4787 = vpop.f32.mrb[0].mxu0
      %v4788 = vpop.f32.mrb[0].mxu0
      %v4789 = vadd.f32 %v4586, %v4788
      %v4790 = vpop.f32.mrb[0].mxu0
      %4791 = vmatprep.mubr.bf16.mxu0 0
      %4792 = vmatmul.mubr.bf16.gmra.mrb[0].mxu0 %v1293
      %v4793 = vpop.f32.mrb[0].mxu0
      %v4794 = vadd.f32 %v4591, %v4793
      %v4795 = vpop.f32.mrb[0].mxu0
      %v4796 = vpop.f32.mrb[0].mxu0
      %v4797 = vadd.f32 %v4594, %v4796
      %v4798 = vpop.f32.mrb[0].mxu0
      %4799 = vmatprep.mubr.bf16.mxu0 0
      %4800 = vmatmul.mubr.bf16.gmra.mrb[0].mxu0 %v1296
      %v4801 = vpop.f32.mrb[0].mxu0
      %v4802 = vadd.f32 %v4599, %v4801
      %v4803 = vpop.f32.mrb[0].mxu0
      %v4804 = vpop.f32.mrb[0].mxu0
      %v4805 = vadd.f32 %v4602, %v4804
      %v4806 = vpop.f32.mrb[0].mxu0
      %4807 = vmatprep.mubr.bf16.mxu0 0
      %4808 = vmatmul.mubr.bf16.gmra.mrb[0].mxu0 %v1299
      %v4809 = vpop.f32.mrb[0].mxu0
      %v4810 = vadd.f32 %v4607, %v4809
      %v4811 = vpop.f32.mrb[0].mxu0
      %v4812 = vpop.f32.mrb[0].mxu0
      %v4813 = vadd.f32 %v4610, %v4812
      %v4814 = vpop.f32.mrb[0].mxu0
      %4815 = vmatprep.mubr.bf16.mxu0 0
      %4816 = vmatmul.mubr.bf16.gmra.mrb[0].mxu0 %v1302
      %v4817 = vpop.f32.mrb[0].mxu0
      %v4818 = vadd.f32 %v4615, %v4817
      %v4819 = vpop.f32.mrb[0].mxu0
      %v4820 = vpop.f32.mrb[0].mxu0
      %v4821 = vadd.f32 %v4618, %v4820
      %v4822 = vpop.f32.mrb[0].mxu0
      %4823 = vmatprep.mubr.bf16.mxu0 0
      %4824 = vmatmul.mubr.bf16.gmra.mrb[0].mxu0 %v1305
      %v4825 = vpop.f32.mrb[0].mxu0
      %v4826 = vadd.f32 %v4623, %v4825
      %v4827 = vpop.f32.mrb[0].mxu0
      %v4828 = vpop.f32.mrb[0].mxu0
      %v4829 = vadd.f32 %v4626, %v4828
      %v4830 = vpop.f32.mrb[0].mxu0
      %4831 = vmatprep.mubr.bf16.mxu0 0
      %4832 = vmatmul.mubr.bf16.gmra.mrb[0].mxu0 %v1308
      %v4833 = vpop.f32.mrb[0].mxu0
      %v4834 = vadd.f32 %v4631, %v4833
      %v4835 = vpop.f32.mrb[0].mxu0
      %v4836 = vpop.f32.mrb[0].mxu0
      %v4837 = vadd.f32 %v4634, %v4836
      %v4838 = vpop.f32.mrb[0].mxu0
      %4839 = vmatprep.mubr.bf16.mxu0 0
      %4840 = vmatmul.mubr.bf16.gmra.mrb[0].mxu0 %v1311
      %v4841 = vpop.f32.mrb[0].mxu0
      %v4842 = vadd.f32 %v4639, %v4841
      %v4843 = vpop.f32.mrb[0].mxu0
      %v4844 = vpop.f32.mrb[0].mxu0
      %v4845 = vadd.f32 %v4642, %v4844
      %v4846 = vpop.f32.mrb[0].mxu0
      %4847 = vmatprep.mubr.bf16.mxu0 0
      %4848 = vmatmul.mubr.bf16.gmra.mrb[0].mxu0 %v1314
      %v4849 = vpop.f32.mrb[0].mxu0
      %v4850 = vadd.f32 %v4647, %v4849
      %v4851 = vpop.f32.mrb[0].mxu0
      %v4852 = vpop.f32.mrb[0].mxu0
      %v4853 = vadd.f32 %v4650, %v4852
      %v4854 = vpop.f32.mrb[0].mxu0
      %4855 = vmatprep.mubr.bf16.mxu0 0
      %4856 = vmatmul.mubr.bf16.gmra.mrb[0].mxu0 %v1317
      %v4857 = vpop.f32.mrb[0].mxu0
      %v4858 = vadd.f32 %v4655, %v4857
      %v4859 = vpop.f32.mrb[0].mxu0
      %v4860 = vpop.f32.mrb[0].mxu0
      %v4861 = vadd.f32 %v4658, %v4860
      %v4862 = vpop.f32.mrb[0].mxu0
      %4863 = vmatprep.mubr.bf16.mxu0 0
      %4864 = vmatmul.mubr.bf16.gmra.mrb[0].mxu0 %v1320
      %v4865 = vpop.f32.mrb[0].mxu0
      %v4866 = vadd.f32 %v4663, %v4865
      %v4867 = vpop.f32.mrb[0].mxu0
      %v4868 = vpop.f32.mrb[0].mxu0
      %v4869 = vadd.f32 %v4666, %v4868
      %v4870 = vpop.f32.mrb[0].mxu0
      %4871 = vmatprep.mubr.bf16.mxu0 0
      %4872 = vmatmul.mubr.bf16.gmra.mrb[0].mxu0 %v1323
      %v4873 = vpop.f32.mrb[0].mxu0
      %v4874 = vadd.f32 %v4671, %v4873
      %v4875 = vpop.f32.mrb[0].mxu0
      %v4876 = vpop.f32.mrb[0].mxu0
      %v4877 = vadd.f32 %v4674, %v4876
      %v4878 = vpop.f32.mrb[0].mxu0
      %4879 = vmatprep.mubr.bf16.mxu0 0
      %4880 = vmatmul.mubr.bf16.gmra.mrb[0].mxu0 %v1326
      %v4881 = vpop.f32.mrb[0].mxu0
      %v4882 = vadd.f32 %v4679, %v4881
      %v4883 = vpop.f32.mrb[0].mxu0
      %v4884 = vpop.f32.mrb[0].mxu0
      %v4885 = vadd.f32 %v4682, %v4884
      %v4886 = vpop.f32.mrb[0].mxu0
      %4887 = vmatprep.mubr.bf16.mxu0 0
      %4888 = vmatmul.mubr.bf16.gmra.mrb[0].mxu0 %v1329
      %v4889 = vpop.f32.mrb[0].mxu0
      %v4890 = vadd.f32 %v4687, %v4889
      %v4891 = vpop.f32.mrb[0].mxu0
      %v4892 = vpop.f32.mrb[0].mxu0
      %v4893 = vadd.f32 %v4690, %v4892
      %v4894 = vpop.f32.mrb[0].mxu0
      %4895 = vmatprep.mubr.bf16.mxu0 0
      %4896 = vmatmul.mubr.bf16.gmra.mrb[0].mxu0 %v1332
      %v4897 = vpop.f32.mrb[0].mxu0
      %v4898 = vadd.f32 %v4695, %v4897
      %v4899 = vpop.f32.mrb[0].mxu0
      %v4900 = vpop.f32.mrb[0].mxu0
      %v4901 = vpop.f32.mrb[0].mxu0
      %4902 = vdwg.mxu0
      %s4903 = scalar_lea.vmem %s4, 8
      %v4904 = vld [vmem:[%s4903] sm:$0xf]
      %v4906 = vsel %vm1067, %v4904, 0
      %4908 = vmatprep.subr.bf16.mxu0 0
      %4909 = vmatpush1.bf16.msra.mxu0 %v4906
      %4910 = vmatprep.subr.bf16.mxu0 0
      %4911 = vmatpush1.bf16.msra.mxu0 0
      %4912 = vmatprep.subr.bf16.mxu0 0
      %4913 = vmatpush1.bf16.msra.mxu0 0
      %4914 = vmatprep.subr.bf16.mxu0 0
      %4915 = vmatpush1.bf16.msra.mxu0 0
      %4916 = vmatprep.subr.bf16.mxu0 0
      %4917 = vmatpush1.bf16.msra.mxu0 0
      %4918 = vmatprep.subr.bf16.mxu0 0
      %4919 = vmatpush1.bf16.msra.mxu0 0
      %4920 = vmatprep.subr.bf16.mxu0 0
      %4921 = vmatpush1.bf16.msra.mxu0 0
      %4922 = vmatprep.subr.bf16.mxu0 0
      %4923 = vmatpush1.bf16.msra.mxu0 0
      %4924 = vmatprep.subr.bf16.mxu0 0
      %4925 = vmatpush1.bf16.msra.mxu0 0
      %4926 = vmatprep.subr.bf16.mxu0 0
      %4927 = vmatpush1.bf16.msra.mxu0 0
      %4928 = vmatprep.subr.bf16.mxu0 0
      %4929 = vmatpush1.bf16.msra.mxu0 0
      %4930 = vmatprep.subr.bf16.mxu0 0
      %4931 = vmatpush1.bf16.msra.mxu0 0
      %4932 = vmatprep.subr.bf16.mxu0 0
      %4933 = vmatpush1.bf16.msra.mxu0 0
      %4934 = vmatprep.subr.bf16.mxu0 0
      %4935 = vmatpush1.bf16.msra.mxu0 0
      %4936 = vmatprep.subr.bf16.mxu0 0
      %4937 = vmatpush1.bf16.msra.mxu0 0
      %4938 = vmatprep.subr.bf16.mxu0 0
      %4939 = vmatpush1.bf16.msra.mxu0 0
      %4940 = vmatprep.mubr.bf16.mxu0 0
      %4941 = vmatmul.mubr.bf16.gmra.mrb[0].mxu0 %v1644
      %v4942 = vpop.f32.mrb[0].mxu0
      %v4943 = vadd.f32 0.0, %v4942
      %v4944 = vpop.f32.mrb[0].mxu0
      %v4945 = vpop.f32.mrb[0].mxu0
      %v4946 = vadd.f32 0.0, %v4945
      %v4947 = vpop.f32.mrb[0].mxu0
      %4948 = vmatprep.mubr.bf16.mxu0 0
      %4949 = vmatmul.mubr.bf16.gmra.mrb[0].mxu0 %v1647
      %v4950 = vpop.f32.mrb[0].mxu0
      %v4951 = vadd.f32 0.0, %v4950
      %v4952 = vpop.f32.mrb[0].mxu0
      %v4953 = vpop.f32.mrb[0].mxu0
      %v4954 = vadd.f32 0.0, %v4953
      %v4955 = vpop.f32.mrb[0].mxu0
      %4956 = vmatprep.mubr.bf16.mxu0 0
      %4957 = vmatmul.mubr.bf16.gmra.mrb[0].mxu0 %v1650
      %v4958 = vpop.f32.mrb[0].mxu0
      %v4959 = vadd.f32 0.0, %v4958
      %v4960 = vpop.f32.mrb[0].mxu0
      %v4961 = vpop.f32.mrb[0].mxu0
      %v4962 = vadd.f32 0.0, %v4961
      %v4963 = vpop.f32.mrb[0].mxu0
      %4964 = vmatprep.mubr.bf16.mxu0 0
      %4965 = vmatmul.mubr.bf16.gmra.mrb[0].mxu0 %v1653
      %v4966 = vpop.f32.mrb[0].mxu0
      %v4967 = vadd.f32 0.0, %v4966
      %v4968 = vpop.f32.mrb[0].mxu0
      %v4969 = vpop.f32.mrb[0].mxu0
      %v4970 = vadd.f32 0.0, %v4969
      %v4971 = vpop.f32.mrb[0].mxu0
      %4972 = vmatprep.mubr.bf16.mxu0 0
      %4973 = vmatmul.mubr.bf16.gmra.mrb[0].mxu0 %v1656
      %v4974 = vpop.f32.mrb[0].mxu0
      %v4975 = vadd.f32 0.0, %v4974
      %v4976 = vpop.f32.mrb[0].mxu0
      %v4977 = vpop.f32.mrb[0].mxu0
      %v4978 = vadd.f32 0.0, %v4977
      %v4979 = vpop.f32.mrb[0].mxu0
      %4980 = vmatprep.mubr.bf16.mxu0 0
      %4981 = vmatmul.mubr.bf16.gmra.mrb[0].mxu0 %v1659
      %v4982 = vpop.f32.mrb[0].mxu0
      %v4983 = vadd.f32 0.0, %v4982
      %v4984 = vpop.f32.mrb[0].mxu0
      %v4985 = vpop.f32.mrb[0].mxu0
      %v4986 = vadd.f32 0.0, %v4985
      %v4987 = vpop.f32.mrb[0].mxu0
      %4988 = vmatprep.mubr.bf16.mxu0 0
      %4989 = vmatmul.mubr.bf16.gmra.mrb[0].mxu0 %v1662
      %v4990 = vpop.f32.mrb[0].mxu0
      %v4991 = vadd.f32 0.0, %v4990
      %v4992 = vpop.f32.mrb[0].mxu0
      %v4993 = vpop.f32.mrb[0].mxu0
      %v4994 = vadd.f32 0.0, %v4993
      %v4995 = vpop.f32.mrb[0].mxu0
      %4996 = vmatprep.mubr.bf16.mxu0 0
      %4997 = vmatmul.mubr.bf16.gmra.mrb[0].mxu0 %v1665
      %v4998 = vpop.f32.mrb[0].mxu0
      %v4999 = vadd.f32 0.0, %v4998
      %v5000 = vpop.f32.mrb[0].mxu0
      %v5001 = vpop.f32.mrb[0].mxu0
      %v5002 = vadd.f32 0.0, %v5001
      %v5003 = vpop.f32.mrb[0].mxu0
      %5004 = vmatprep.mubr.bf16.mxu0 0
      %5005 = vmatmul.mubr.bf16.gmra.mrb[0].mxu0 %v1668
      %v5006 = vpop.f32.mrb[0].mxu0
      %v5007 = vadd.f32 0.0, %v5006
      %v5008 = vpop.f32.mrb[0].mxu0
      %v5009 = vpop.f32.mrb[0].mxu0
      %v5010 = vadd.f32 0.0, %v5009
      %v5011 = vpop.f32.mrb[0].mxu0
      %5012 = vmatprep.mubr.bf16.mxu0 0
      %5013 = vmatmul.mubr.bf16.gmra.mrb[0].mxu0 %v1671
      %v5014 = vpop.f32.mrb[0].mxu0
      %v5015 = vadd.f32 0.0, %v5014
      %v5016 = vpop.f32.mrb[0].mxu0
      %v5017 = vpop.f32.mrb[0].mxu0
      %v5018 = vadd.f32 0.0, %v5017
      %v5019 = vpop.f32.mrb[0].mxu0
      %5020 = vmatprep.mubr.bf16.mxu0 0
      %5021 = vmatmul.mubr.bf16.gmra.mrb[0].mxu0 %v1674
      %v5022 = vpop.f32.mrb[0].mxu0
      %v5023 = vadd.f32 0.0, %v5022
      %v5024 = vpop.f32.mrb[0].mxu0
      %v5025 = vpop.f32.mrb[0].mxu0
      %v5026 = vadd.f32 0.0, %v5025
      %v5027 = vpop.f32.mrb[0].mxu0
      %5028 = vmatprep.mubr.bf16.mxu0 0
      %5029 = vmatmul.mubr.bf16.gmra.mrb[0].mxu0 %v1677
      %v5030 = vpop.f32.mrb[0].mxu0
      %v5031 = vadd.f32 0.0, %v5030
      %v5032 = vpop.f32.mrb[0].mxu0
      %v5033 = vpop.f32.mrb[0].mxu0
      %v5034 = vadd.f32 0.0, %v5033
      %v5035 = vpop.f32.mrb[0].mxu0
      %5036 = vmatprep.mubr.bf16.mxu0 0
      %5037 = vmatmul.mubr.bf16.gmra.mrb[0].mxu0 %v1680
      %v5038 = vpop.f32.mrb[0].mxu0
      %v5039 = vadd.f32 0.0, %v5038
      %v5040 = vpop.f32.mrb[0].mxu0
      %v5041 = vpop.f32.mrb[0].mxu0
      %v5042 = vadd.f32 0.0, %v5041
      %v5043 = vpop.f32.mrb[0].mxu0
      %5044 = vmatprep.mubr.bf16.mxu0 0
      %5045 = vmatmul.mubr.bf16.gmra.mrb[0].mxu0 %v1683
      %v5046 = vpop.f32.mrb[0].mxu0
      %v5047 = vadd.f32 0.0, %v5046
      %v5048 = vpop.f32.mrb[0].mxu0
      %v5049 = vpop.f32.mrb[0].mxu0
      %v5050 = vadd.f32 0.0, %v5049
      %v5051 = vpop.f32.mrb[0].mxu0
      %5052 = vmatprep.mubr.bf16.mxu0 0
      %5053 = vmatmul.mubr.bf16.gmra.mrb[0].mxu0 %v1686
      %v5054 = vpop.f32.mrb[0].mxu0
      %v5055 = vadd.f32 0.0, %v5054
      %v5056 = vpop.f32.mrb[0].mxu0
      %v5057 = vpop.f32.mrb[0].mxu0
      %v5058 = vadd.f32 0.0, %v5057
      %v5059 = vpop.f32.mrb[0].mxu0
      %5060 = vmatprep.mubr.bf16.mxu0 0
      %5061 = vmatmul.mubr.bf16.gmra.mrb[0].mxu0 %v1689
      %v5062 = vpop.f32.mrb[0].mxu0
      %v5063 = vadd.f32 0.0, %v5062
      %v5064 = vpop.f32.mrb[0].mxu0
      %v5065 = vpop.f32.mrb[0].mxu0
      %v5066 = vadd.f32 0.0, %v5065
      %v5067 = vpop.f32.mrb[0].mxu0
      %5068 = vmatprep.mubr.bf16.mxu0 0
      %5069 = vmatmul.mubr.bf16.gmra.mrb[0].mxu0 %v1692
      %v5070 = vpop.f32.mrb[0].mxu0
      %v5071 = vadd.f32 0.0, %v5070
      %v5072 = vpop.f32.mrb[0].mxu0
      %v5073 = vpop.f32.mrb[0].mxu0
      %v5074 = vadd.f32 0.0, %v5073
      %v5075 = vpop.f32.mrb[0].mxu0
      %5076 = vmatprep.mubr.bf16.mxu0 0
      %5077 = vmatmul.mubr.bf16.gmra.mrb[0].mxu0 %v1695
      %v5078 = vpop.f32.mrb[0].mxu0
      %v5079 = vadd.f32 0.0, %v5078
      %v5080 = vpop.f32.mrb[0].mxu0
      %v5081 = vpop.f32.mrb[0].mxu0
      %v5082 = vadd.f32 0.0, %v5081
      %v5083 = vpop.f32.mrb[0].mxu0
      %5084 = vmatprep.mubr.bf16.mxu0 0
      %5085 = vmatmul.mubr.bf16.gmra.mrb[0].mxu0 %v1698
      %v5086 = vpop.f32.mrb[0].mxu0
      %v5087 = vadd.f32 0.0, %v5086
      %v5088 = vpop.f32.mrb[0].mxu0
      %v5089 = vpop.f32.mrb[0].mxu0
      %v5090 = vadd.f32 0.0, %v5089
      %v5091 = vpop.f32.mrb[0].mxu0
      %5092 = vmatprep.mubr.bf16.mxu0 0
      %5093 = vmatmul.mubr.bf16.gmra.mrb[0].mxu0 %v1701
      %v5094 = vpop.f32.mrb[0].mxu0
      %v5095 = vadd.f32 0.0, %v5094
      %v5096 = vpop.f32.mrb[0].mxu0
      %v5097 = vpop.f32.mrb[0].mxu0
      %v5098 = vadd.f32 0.0, %v5097
      %v5099 = vpop.f32.mrb[0].mxu0
      %5100 = vmatprep.mubr.bf16.mxu0 0
      %5101 = vmatmul.mubr.bf16.gmra.mrb[0].mxu0 %v1704
      %v5102 = vpop.f32.mrb[0].mxu0
      %v5103 = vadd.f32 0.0, %v5102
      %v5104 = vpop.f32.mrb[0].mxu0
      %v5105 = vpop.f32.mrb[0].mxu0
      %v5106 = vpop.f32.mrb[0].mxu0
      %5107 = vdwg.mxu0
      %v5108 = vadd.f32 %v4738, %v4943
      %v5109 = vadd.f32 %v4741, %v4946
      %v5110 = vadd.f32 %v4746, %v4951
      %v5111 = vadd.f32 %v4749, %v4954
      %v5112 = vadd.f32 %v4754, %v4959
      %v5113 = vadd.f32 %v4757, %v4962
      %v5114 = vadd.f32 %v4762, %v4967
      %v5115 = vadd.f32 %v4765, %v4970
      %v5116 = vadd.f32 %v4770, %v4975
      %v5117 = vadd.f32 %v4773, %v4978
      %v5118 = vadd.f32 %v4778, %v4983
      %v5119 = vadd.f32 %v4781, %v4986
      %v5120 = vadd.f32 %v4786, %v4991
      %v5121 = vadd.f32 %v4789, %v4994
      %v5122 = vadd.f32 %v4794, %v4999
      %v5123 = vadd.f32 %v4797, %v5002
      %v5124 = vadd.f32 %v4802, %v5007
      %v5125 = vadd.f32 %v4805, %v5010
      %v5126 = vadd.f32 %v4810, %v5015
      %v5127 = vadd.f32 %v4813, %v5018
      %v5128 = vadd.f32 %v4818, %v5023
      %v5129 = vadd.f32 %v4821, %v5026
      %v5130 = vadd.f32 %v4826, %v5031
      %v5131 = vadd.f32 %v4829, %v5034
      %v5132 = vadd.f32 %v4834, %v5039
      %v5133 = vadd.f32 %v4837, %v5042
      %v5134 = vadd.f32 %v4842, %v5047
      %v5135 = vadd.f32 %v4845, %v5050
      %v5136 = vadd.f32 %v4850, %v5055
      %v5137 = vadd.f32 %v4853, %v5058
      %v5138 = vadd.f32 %v4858, %v5063
      %v5139 = vadd.f32 %v4861, %v5066
      %v5140 = vadd.f32 %v4866, %v5071
      %v5141 = vadd.f32 %v4869, %v5074
      %v5142 = vadd.f32 %v4874, %v5079
      %v5143 = vadd.f32 %v4877, %v5082
      %v5144 = vadd.f32 %v4882, %v5087
      %v5145 = vadd.f32 %v4885, %v5090
      %v5146 = vadd.f32 %v4890, %v5095
      %v5147 = vadd.f32 %v4893, %v5098
      %v5148 = vadd.f32 %v4898, %v5103
      %s5149 = scalar_lea.vmem %s4, 12
      %v5150 = vld [vmem:[%s5149] sm:$0xf]
      %v5152 = vsel %vm1067, %v5150, 0
      %5154 = vmatprep.subr.bf16.mxu0 0
      %5155 = vmatpush1.bf16.msra.mxu0 %v5152
      %5156 = vmatprep.subr.bf16.mxu0 0
      %5157 = vmatpush1.bf16.msra.mxu0 0
      %5158 = vmatprep.subr.bf16.mxu0 0
      %5159 = vmatpush1.bf16.msra.mxu0 0
      %5160 = vmatprep.subr.bf16.mxu0 0
      %5161 = vmatpush1.bf16.msra.mxu0 0
      %5162 = vmatprep.subr.bf16.mxu0 0
      %5163 = vmatpush1.bf16.msra.mxu0 0
      %5164 = vmatprep.subr.bf16.mxu0 0
      %5165 = vmatpush1.bf16.msra.mxu0 0
      %5166 = vmatprep.subr.bf16.mxu0 0
      %5167 = vmatpush1.bf16.msra.mxu0 0
      %5168 = vmatprep.subr.bf16.mxu0 0
      %5169 = vmatpush1.bf16.msra.mxu0 0
      %5170 = vmatprep.subr.bf16.mxu0 0
      %5171 = vmatpush1.bf16.msra.mxu0 0
      %5172 = vmatprep.subr.bf16.mxu0 0
      %5173 = vmatpush1.bf16.msra.mxu0 0
      %5174 = vmatprep.subr.bf16.mxu0 0
      %5175 = vmatpush1.bf16.msra.mxu0 0
      %5176 = vmatprep.subr.bf16.mxu0 0
      %5177 = vmatpush1.bf16.msra.mxu0 0
      %5178 = vmatprep.subr.bf16.mxu0 0
      %5179 = vmatpush1.bf16.msra.mxu0 0
      %5180 = vmatprep.subr.bf16.mxu0 0
      %5181 = vmatpush1.bf16.msra.mxu0 0
      %5182 = vmatprep.subr.bf16.mxu0 0
      %5183 = vmatpush1.bf16.msra.mxu0 0
      %5184 = vmatprep.subr.bf16.mxu0 0
      %5185 = vmatpush1.bf16.msra.mxu0 0
      %5186 = vmatprep.mubr.bf16.mxu0 0
      %5187 = vmatmul.mubr.bf16.gmra.mrb[0].mxu0 %v1647
      %v5188 = vpop.f32.mrb[0].mxu0
      %v5189 = vadd.f32 0.0, %v5188
      %v5190 = vpop.f32.mrb[0].mxu0
      %v5191 = vpop.f32.mrb[0].mxu0
      %v5192 = vadd.f32 0.0, %v5191
      %v5193 = vpop.f32.mrb[0].mxu0
      %5194 = vmatprep.mubr.bf16.mxu0 0
      %5195 = vmatmul.mubr.bf16.gmra.mrb[0].mxu0 %v1650
      %v5196 = vpop.f32.mrb[0].mxu0
      %v5197 = vadd.f32 0.0, %v5196
      %v5198 = vpop.f32.mrb[0].mxu0
      %v5199 = vpop.f32.mrb[0].mxu0
      %v5200 = vadd.f32 0.0, %v5199
      %v5201 = vpop.f32.mrb[0].mxu0
      %5202 = vmatprep.mubr.bf16.mxu0 0
      %5203 = vmatmul.mubr.bf16.gmra.mrb[0].mxu0 %v1653
      %v5204 = vpop.f32.mrb[0].mxu0
      %v5205 = vadd.f32 0.0, %v5204
      %v5206 = vpop.f32.mrb[0].mxu0
      %v5207 = vpop.f32.mrb[0].mxu0
      %v5208 = vadd.f32 0.0, %v5207
      %v5209 = vpop.f32.mrb[0].mxu0
      %5210 = vmatprep.mubr.bf16.mxu0 0
      %5211 = vmatmul.mubr.bf16.gmra.mrb[0].mxu0 %v1656
      %v5212 = vpop.f32.mrb[0].mxu0
      %v5213 = vadd.f32 0.0, %v5212
      %v5214 = vpop.f32.mrb[0].mxu0
      %v5215 = vpop.f32.mrb[0].mxu0
      %v5216 = vadd.f32 0.0, %v5215
      %v5217 = vpop.f32.mrb[0].mxu0
      %5218 = vmatprep.mubr.bf16.mxu0 0
      %5219 = vmatmul.mubr.bf16.gmra.mrb[0].mxu0 %v1659
      %v5220 = vpop.f32.mrb[0].mxu0
      %v5221 = vadd.f32 0.0, %v5220
      %v5222 = vpop.f32.mrb[0].mxu0
      %v5223 = vpop.f32.mrb[0].mxu0
      %v5224 = vadd.f32 0.0, %v5223
      %v5225 = vpop.f32.mrb[0].mxu0
      %5226 = vmatprep.mubr.bf16.mxu0 0
      %5227 = vmatmul.mubr.bf16.gmra.mrb[0].mxu0 %v1662
      %v5228 = vpop.f32.mrb[0].mxu0
      %v5229 = vadd.f32 0.0, %v5228
      %v5230 = vpop.f32.mrb[0].mxu0
      %v5231 = vpop.f32.mrb[0].mxu0
      %v5232 = vadd.f32 0.0, %v5231
      %v5233 = vpop.f32.mrb[0].mxu0
      %5234 = vmatprep.mubr.bf16.mxu0 0
      %5235 = vmatmul.mubr.bf16.gmra.mrb[0].mxu0 %v1665
      %v5236 = vpop.f32.mrb[0].mxu0
      %v5237 = vadd.f32 0.0, %v5236
      %v5238 = vpop.f32.mrb[0].mxu0
      %v5239 = vpop.f32.mrb[0].mxu0
      %v5240 = vadd.f32 0.0, %v5239
      %v5241 = vpop.f32.mrb[0].mxu0
      %5242 = vmatprep.mubr.bf16.mxu0 0
      %5243 = vmatmul.mubr.bf16.gmra.mrb[0].mxu0 %v1668
      %v5244 = vpop.f32.mrb[0].mxu0
      %v5245 = vadd.f32 0.0, %v5244
      %v5246 = vpop.f32.mrb[0].mxu0
      %v5247 = vpop.f32.mrb[0].mxu0
      %v5248 = vadd.f32 0.0, %v5247
      %v5249 = vpop.f32.mrb[0].mxu0
      %5250 = vmatprep.mubr.bf16.mxu0 0
      %5251 = vmatmul.mubr.bf16.gmra.mrb[0].mxu0 %v1671
      %v5252 = vpop.f32.mrb[0].mxu0
      %v5253 = vadd.f32 0.0, %v5252
      %v5254 = vpop.f32.mrb[0].mxu0
      %v5255 = vpop.f32.mrb[0].mxu0
      %v5256 = vadd.f32 0.0, %v5255
      %v5257 = vpop.f32.mrb[0].mxu0
      %5258 = vmatprep.mubr.bf16.mxu0 0
      %5259 = vmatmul.mubr.bf16.gmra.mrb[0].mxu0 %v1674
      %v5260 = vpop.f32.mrb[0].mxu0
      %v5261 = vadd.f32 0.0, %v5260
      %v5262 = vpop.f32.mrb[0].mxu0
      %v5263 = vpop.f32.mrb[0].mxu0
      %v5264 = vadd.f32 0.0, %v5263
      %v5265 = vpop.f32.mrb[0].mxu0
      %5266 = vmatprep.mubr.bf16.mxu0 0
      %5267 = vmatmul.mubr.bf16.gmra.mrb[0].mxu0 %v1677
      %v5268 = vpop.f32.mrb[0].mxu0
      %v5269 = vadd.f32 0.0, %v5268
      %v5270 = vpop.f32.mrb[0].mxu0
      %v5271 = vpop.f32.mrb[0].mxu0
      %v5272 = vadd.f32 0.0, %v5271
      %v5273 = vpop.f32.mrb[0].mxu0
      %5274 = vmatprep.mubr.bf16.mxu0 0
      %5275 = vmatmul.mubr.bf16.gmra.mrb[0].mxu0 %v1680
      %v5276 = vpop.f32.mrb[0].mxu0
      %v5277 = vadd.f32 0.0, %v5276
      %v5278 = vpop.f32.mrb[0].mxu0
      %v5279 = vpop.f32.mrb[0].mxu0
      %v5280 = vadd.f32 0.0, %v5279
      %v5281 = vpop.f32.mrb[0].mxu0
      %5282 = vmatprep.mubr.bf16.mxu0 0
      %5283 = vmatmul.mubr.bf16.gmra.mrb[0].mxu0 %v1683
      %v5284 = vpop.f32.mrb[0].mxu0
      %v5285 = vadd.f32 0.0, %v5284
      %v5286 = vpop.f32.mrb[0].mxu0
      %v5287 = vpop.f32.mrb[0].mxu0
      %v5288 = vadd.f32 0.0, %v5287
      %v5289 = vpop.f32.mrb[0].mxu0
      %5290 = vmatprep.mubr.bf16.mxu0 0
      %5291 = vmatmul.mubr.bf16.gmra.mrb[0].mxu0 %v1686
      %v5292 = vpop.f32.mrb[0].mxu0
      %v5293 = vadd.f32 0.0, %v5292
      %v5294 = vpop.f32.mrb[0].mxu0
      %v5295 = vpop.f32.mrb[0].mxu0
      %v5296 = vadd.f32 0.0, %v5295
      %v5297 = vpop.f32.mrb[0].mxu0
      %5298 = vmatprep.mubr.bf16.mxu0 0
      %5299 = vmatmul.mubr.bf16.gmra.mrb[0].mxu0 %v1689
      %v5300 = vpop.f32.mrb[0].mxu0
      %v5301 = vadd.f32 0.0, %v5300
      %v5302 = vpop.f32.mrb[0].mxu0
      %v5303 = vpop.f32.mrb[0].mxu0
      %v5304 = vadd.f32 0.0, %v5303
      %v5305 = vpop.f32.mrb[0].mxu0
      %5306 = vmatprep.mubr.bf16.mxu0 0
      %5307 = vmatmul.mubr.bf16.gmra.mrb[0].mxu0 %v1692
      %v5308 = vpop.f32.mrb[0].mxu0
      %v5309 = vadd.f32 0.0, %v5308
      %v5310 = vpop.f32.mrb[0].mxu0
      %v5311 = vpop.f32.mrb[0].mxu0
      %v5312 = vadd.f32 0.0, %v5311
      %v5313 = vpop.f32.mrb[0].mxu0
      %5314 = vmatprep.mubr.bf16.mxu0 0
      %5315 = vmatmul.mubr.bf16.gmra.mrb[0].mxu0 %v1695
      %v5316 = vpop.f32.mrb[0].mxu0
      %v5317 = vadd.f32 0.0, %v5316
      %v5318 = vpop.f32.mrb[0].mxu0
      %v5319 = vpop.f32.mrb[0].mxu0
      %v5320 = vadd.f32 0.0, %v5319
      %v5321 = vpop.f32.mrb[0].mxu0
      %5322 = vmatprep.mubr.bf16.mxu0 0
      %5323 = vmatmul.mubr.bf16.gmra.mrb[0].mxu0 %v1698
      %v5324 = vpop.f32.mrb[0].mxu0
      %v5325 = vadd.f32 0.0, %v5324
      %v5326 = vpop.f32.mrb[0].mxu0
      %v5327 = vpop.f32.mrb[0].mxu0
      %v5328 = vadd.f32 0.0, %v5327
      %v5329 = vpop.f32.mrb[0].mxu0
      %5330 = vmatprep.mubr.bf16.mxu0 0
      %5331 = vmatmul.mubr.bf16.gmra.mrb[0].mxu0 %v1701
      %v5332 = vpop.f32.mrb[0].mxu0
      %v5333 = vadd.f32 0.0, %v5332
      %v5334 = vpop.f32.mrb[0].mxu0
      %v5335 = vpop.f32.mrb[0].mxu0
      %v5336 = vadd.f32 0.0, %v5335
      %v5337 = vpop.f32.mrb[0].mxu0
      %5338 = vmatprep.mubr.bf16.mxu0 0
      %5339 = vmatmul.mubr.bf16.gmra.mrb[0].mxu0 %v1955
      %v5340 = vpop.f32.mrb[0].mxu0
      %v5341 = vadd.f32 0.0, %v5340
      %v5342 = vpop.f32.mrb[0].mxu0
      %v5343 = vpop.f32.mrb[0].mxu0
      %v5344 = vadd.f32 0.0, %v5343
      %v5345 = vpop.f32.mrb[0].mxu0
      %5346 = vmatprep.mubr.bf16.mxu0 0
      %5347 = vmatmul.mubr.bf16.gmra.mrb[0].mxu0 %v1958
      %v5348 = vpop.f32.mrb[0].mxu0
      %v5349 = vadd.f32 0.0, %v5348
      %v5350 = vpop.f32.mrb[0].mxu0
      %v5351 = vpop.f32.mrb[0].mxu0
      %v5352 = vpop.f32.mrb[0].mxu0
      %5353 = vdwg.mxu0
      %v5354 = vadd.f32 %v5108, %v5189
      %v5355 = vadd.f32 %v5109, %v5192
      %v5356 = vadd.f32 %v5110, %v5197
      %v5357 = vadd.f32 %v5111, %v5200
      %v5358 = vadd.f32 %v5112, %v5205
      %v5359 = vadd.f32 %v5113, %v5208
      %v5360 = vadd.f32 %v5114, %v5213
      %v5361 = vadd.f32 %v5115, %v5216
      %v5362 = vadd.f32 %v5116, %v5221
      %v5363 = vadd.f32 %v5117, %v5224
      %v5364 = vadd.f32 %v5118, %v5229
      %v5365 = vadd.f32 %v5119, %v5232
      %v5366 = vadd.f32 %v5120, %v5237
      %v5367 = vadd.f32 %v5121, %v5240
      %v5368 = vadd.f32 %v5122, %v5245
      %v5369 = vadd.f32 %v5123, %v5248
      %v5370 = vadd.f32 %v5124, %v5253
      %v5371 = vadd.f32 %v5125, %v5256
      %v5372 = vadd.f32 %v5126, %v5261
      %v5373 = vadd.f32 %v5127, %v5264
      %v5374 = vadd.f32 %v5128, %v5269
      %v5375 = vadd.f32 %v5129, %v5272
      %v5376 = vadd.f32 %v5130, %v5277
      %v5377 = vadd.f32 %v5131, %v5280
      %v5378 = vadd.f32 %v5132, %v5285
      %v5379 = vadd.f32 %v5133, %v5288
      %v5380 = vadd.f32 %v5134, %v5293
      %v5381 = vadd.f32 %v5135, %v5296
      %v5382 = vadd.f32 %v5136, %v5301
      %v5383 = vadd.f32 %v5137, %v5304
      %v5384 = vadd.f32 %v5138, %v5309
      %v5385 = vadd.f32 %v5139, %v5312
      %v5386 = vadd.f32 %v5140, %v5317
      %v5387 = vadd.f32 %v5141, %v5320
      %v5388 = vadd.f32 %v5142, %v5325
      %v5389 = vadd.f32 %v5143, %v5328
      %v5390 = vadd.f32 %v5144, %v5333
      %v5391 = vadd.f32 %v5145, %v5336
      %v5392 = vadd.f32 %v5146, %v5341
      %v5393 = vadd.f32 %v5147, %v5344
      %v5394 = vadd.f32 %v5148, %v5349
      %s5395 = scalar_lea.vmem %s4, 16
      %v5396 = vld [vmem:[%s5395] sm:$0xf]
      %v5398 = vsel %vm1067, %v5396, 0
      %5400 = vmatprep.subr.bf16.mxu0 0
      %5401 = vmatpush1.bf16.msra.mxu0 %v5398
      %5402 = vmatprep.subr.bf16.mxu0 0
      %5403 = vmatpush1.bf16.msra.mxu0 0
      %5404 = vmatprep.subr.bf16.mxu0 0
      %5405 = vmatpush1.bf16.msra.mxu0 0
      %5406 = vmatprep.subr.bf16.mxu0 0
      %5407 = vmatpush1.bf16.msra.mxu0 0
      %5408 = vmatprep.subr.bf16.mxu0 0
      %5409 = vmatpush1.bf16.msra.mxu0 0
      %5410 = vmatprep.subr.bf16.mxu0 0
      %5411 = vmatpush1.bf16.msra.mxu0 0
      %5412 = vmatprep.subr.bf16.mxu0 0
      %5413 = vmatpush1.bf16.msra.mxu0 0
      %5414 = vmatprep.subr.bf16.mxu0 0
      %5415 = vmatpush1.bf16.msra.mxu0 0
      %5416 = vmatprep.subr.bf16.mxu0 0
      %5417 = vmatpush1.bf16.msra.mxu0 0
      %5418 = vmatprep.subr.bf16.mxu0 0
      %5419 = vmatpush1.bf16.msra.mxu0 0
      %5420 = vmatprep.subr.bf16.mxu0 0
      %5421 = vmatpush1.bf16.msra.mxu0 0
      %5422 = vmatprep.subr.bf16.mxu0 0
      %5423 = vmatpush1.bf16.msra.mxu0 0
      %5424 = vmatprep.subr.bf16.mxu0 0
      %5425 = vmatpush1.bf16.msra.mxu0 0
      %5426 = vmatprep.subr.bf16.mxu0 0
      %5427 = vmatpush1.bf16.msra.mxu0 0
      %5428 = vmatprep.subr.bf16.mxu0 0
      %5429 = vmatpush1.bf16.msra.mxu0 0
      %5430 = vmatprep.subr.bf16.mxu0 0
      %5431 = vmatpush1.bf16.msra.mxu0 0
      %5432 = vmatprep.mubr.bf16.mxu0 0
      %5433 = vmatmul.mubr.bf16.gmra.mrb[0].mxu0 %v2228
      %v5434 = vpop.f32.mrb[0].mxu0
      %v5435 = vadd.f32 0.0, %v5434
      %v5436 = vpop.f32.mrb[0].mxu0
      %v5437 = vpop.f32.mrb[0].mxu0
      %v5438 = vadd.f32 0.0, %v5437
      %v5439 = vpop.f32.mrb[0].mxu0
      %5440 = vmatprep.mubr.bf16.mxu0 0
      %5441 = vmatmul.mubr.bf16.gmra.mrb[0].mxu0 %v2231
      %v5442 = vpop.f32.mrb[0].mxu0
      %v5443 = vadd.f32 0.0, %v5442
      %v5444 = vpop.f32.mrb[0].mxu0
      %v5445 = vpop.f32.mrb[0].mxu0
      %v5446 = vadd.f32 0.0, %v5445
      %v5447 = vpop.f32.mrb[0].mxu0
      %5448 = vmatprep.mubr.bf16.mxu0 0
      %5449 = vmatmul.mubr.bf16.gmra.mrb[0].mxu0 %v2234
      %v5450 = vpop.f32.mrb[0].mxu0
      %v5451 = vadd.f32 0.0, %v5450
      %v5452 = vpop.f32.mrb[0].mxu0
      %v5453 = vpop.f32.mrb[0].mxu0
      %v5454 = vadd.f32 0.0, %v5453
      %v5455 = vpop.f32.mrb[0].mxu0
      %5456 = vmatprep.mubr.bf16.mxu0 0
      %5457 = vmatmul.mubr.bf16.gmra.mrb[0].mxu0 %v2237
      %v5458 = vpop.f32.mrb[0].mxu0
      %v5459 = vadd.f32 0.0, %v5458
      %v5460 = vpop.f32.mrb[0].mxu0
      %v5461 = vpop.f32.mrb[0].mxu0
      %v5462 = vadd.f32 0.0, %v5461
      %v5463 = vpop.f32.mrb[0].mxu0
      %5464 = vmatprep.mubr.bf16.mxu0 0
      %5465 = vmatmul.mubr.bf16.gmra.mrb[0].mxu0 %v2240
      %v5466 = vpop.f32.mrb[0].mxu0
      %v5467 = vadd.f32 0.0, %v5466
      %v5468 = vpop.f32.mrb[0].mxu0
      %v5469 = vpop.f32.mrb[0].mxu0
      %v5470 = vadd.f32 0.0, %v5469
      %v5471 = vpop.f32.mrb[0].mxu0
      %5472 = vmatprep.mubr.bf16.mxu0 0
      %5473 = vmatmul.mubr.bf16.gmra.mrb[0].mxu0 %v2243
      %v5474 = vpop.f32.mrb[0].mxu0
      %v5475 = vadd.f32 0.0, %v5474
      %v5476 = vpop.f32.mrb[0].mxu0
      %v5477 = vpop.f32.mrb[0].mxu0
      %v5478 = vadd.f32 0.0, %v5477
      %v5479 = vpop.f32.mrb[0].mxu0
      %5480 = vmatprep.mubr.bf16.mxu0 0
      %5481 = vmatmul.mubr.bf16.gmra.mrb[0].mxu0 %v2246
      %v5482 = vpop.f32.mrb[0].mxu0
      %v5483 = vadd.f32 0.0, %v5482
      %v5484 = vpop.f32.mrb[0].mxu0
      %v5485 = vpop.f32.mrb[0].mxu0
      %v5486 = vadd.f32 0.0, %v5485
      %v5487 = vpop.f32.mrb[0].mxu0
      %5488 = vmatprep.mubr.bf16.mxu0 0
      %5489 = vmatmul.mubr.bf16.gmra.mrb[0].mxu0 %v2249
      %v5490 = vpop.f32.mrb[0].mxu0
      %v5491 = vadd.f32 0.0, %v5490
      %v5492 = vpop.f32.mrb[0].mxu0
      %v5493 = vpop.f32.mrb[0].mxu0
      %v5494 = vadd.f32 0.0, %v5493
      %v5495 = vpop.f32.mrb[0].mxu0
      %5496 = vmatprep.mubr.bf16.mxu0 0
      %5497 = vmatmul.mubr.bf16.gmra.mrb[0].mxu0 %v2252
      %v5498 = vpop.f32.mrb[0].mxu0
      %v5499 = vadd.f32 0.0, %v5498
      %v5500 = vpop.f32.mrb[0].mxu0
      %v5501 = vpop.f32.mrb[0].mxu0
      %v5502 = vadd.f32 0.0, %v5501
      %v5503 = vpop.f32.mrb[0].mxu0
      %5504 = vmatprep.mubr.bf16.mxu0 0
      %5505 = vmatmul.mubr.bf16.gmra.mrb[0].mxu0 %v2255
      %v5506 = vpop.f32.mrb[0].mxu0
      %v5507 = vadd.f32 0.0, %v5506
      %v5508 = vpop.f32.mrb[0].mxu0
      %v5509 = vpop.f32.mrb[0].mxu0
      %v5510 = vadd.f32 0.0, %v5509
      %v5511 = vpop.f32.mrb[0].mxu0
      %5512 = vmatprep.mubr.bf16.mxu0 0
      %5513 = vmatmul.mubr.bf16.gmra.mrb[0].mxu0 %v2258
      %v5514 = vpop.f32.mrb[0].mxu0
      %v5515 = vadd.f32 0.0, %v5514
      %v5516 = vpop.f32.mrb[0].mxu0
      %v5517 = vpop.f32.mrb[0].mxu0
      %v5518 = vadd.f32 0.0, %v5517
      %v5519 = vpop.f32.mrb[0].mxu0
      %5520 = vmatprep.mubr.bf16.mxu0 0
      %5521 = vmatmul.mubr.bf16.gmra.mrb[0].mxu0 %v2261
      %v5522 = vpop.f32.mrb[0].mxu0
      %v5523 = vadd.f32 0.0, %v5522
      %v5524 = vpop.f32.mrb[0].mxu0
      %v5525 = vpop.f32.mrb[0].mxu0
      %v5526 = vadd.f32 0.0, %v5525
      %v5527 = vpop.f32.mrb[0].mxu0
      %5528 = vmatprep.mubr.bf16.mxu0 0
      %5529 = vmatmul.mubr.bf16.gmra.mrb[0].mxu0 %v2264
      %v5530 = vpop.f32.mrb[0].mxu0
      %v5531 = vadd.f32 0.0, %v5530
      %v5532 = vpop.f32.mrb[0].mxu0
      %v5533 = vpop.f32.mrb[0].mxu0
      %v5534 = vadd.f32 0.0, %v5533
      %v5535 = vpop.f32.mrb[0].mxu0
      %5536 = vmatprep.mubr.bf16.mxu0 0
      %5537 = vmatmul.mubr.bf16.gmra.mrb[0].mxu0 %v2267
      %v5538 = vpop.f32.mrb[0].mxu0
      %v5539 = vadd.f32 0.0, %v5538
      %v5540 = vpop.f32.mrb[0].mxu0
      %v5541 = vpop.f32.mrb[0].mxu0
      %v5542 = vadd.f32 0.0, %v5541
      %v5543 = vpop.f32.mrb[0].mxu0
      %5544 = vmatprep.mubr.bf16.mxu0 0
      %5545 = vmatmul.mubr.bf16.gmra.mrb[0].mxu0 %v2270
      %v5546 = vpop.f32.mrb[0].mxu0
      %v5547 = vadd.f32 0.0, %v5546
      %v5548 = vpop.f32.mrb[0].mxu0
      %v5549 = vpop.f32.mrb[0].mxu0
      %v5550 = vadd.f32 0.0, %v5549
      %v5551 = vpop.f32.mrb[0].mxu0
      %5552 = vmatprep.mubr.bf16.mxu0 0
      %5553 = vmatmul.mubr.bf16.gmra.mrb[0].mxu0 %v2273
      %v5554 = vpop.f32.mrb[0].mxu0
      %v5555 = vadd.f32 0.0, %v5554
      %v5556 = vpop.f32.mrb[0].mxu0
      %v5557 = vpop.f32.mrb[0].mxu0
      %v5558 = vadd.f32 0.0, %v5557
      %v5559 = vpop.f32.mrb[0].mxu0
      %5560 = vmatprep.mubr.bf16.mxu0 0
      %5561 = vmatmul.mubr.bf16.gmra.mrb[0].mxu0 %v2276
      %v5562 = vpop.f32.mrb[0].mxu0
      %v5563 = vadd.f32 0.0, %v5562
      %v5564 = vpop.f32.mrb[0].mxu0
      %v5565 = vpop.f32.mrb[0].mxu0
      %v5566 = vadd.f32 0.0, %v5565
      %v5567 = vpop.f32.mrb[0].mxu0
      %5568 = vmatprep.mubr.bf16.mxu0 0
      %5569 = vmatmul.mubr.bf16.gmra.mrb[0].mxu0 %v2279
      %v5570 = vpop.f32.mrb[0].mxu0
      %v5571 = vadd.f32 0.0, %v5570
      %v5572 = vpop.f32.mrb[0].mxu0
      %v5573 = vpop.f32.mrb[0].mxu0
      %v5574 = vadd.f32 0.0, %v5573
      %v5575 = vpop.f32.mrb[0].mxu0
      %5576 = vmatprep.mubr.bf16.mxu0 0
      %5577 = vmatmul.mubr.bf16.gmra.mrb[0].mxu0 %v2282
      %v5578 = vpop.f32.mrb[0].mxu0
      %v5579 = vadd.f32 0.0, %v5578
      %v5580 = vpop.f32.mrb[0].mxu0
      %v5581 = vpop.f32.mrb[0].mxu0
      %v5582 = vadd.f32 0.0, %v5581
      %v5583 = vpop.f32.mrb[0].mxu0
      %5584 = vmatprep.mubr.bf16.mxu0 0
      %5585 = vmatmul.mubr.bf16.gmra.mrb[0].mxu0 %v2285
      %v5586 = vpop.f32.mrb[0].mxu0
      %v5587 = vadd.f32 0.0, %v5586
      %v5588 = vpop.f32.mrb[0].mxu0
      %v5589 = vpop.f32.mrb[0].mxu0
      %v5590 = vadd.f32 0.0, %v5589
      %v5591 = vpop.f32.mrb[0].mxu0
      %5592 = vmatprep.mubr.bf16.mxu0 0
      %5593 = vmatmul.mubr.bf16.gmra.mrb[0].mxu0 %v2288
      %v5594 = vpop.f32.mrb[0].mxu0
      %v5595 = vadd.f32 0.0, %v5594
      %v5596 = vpop.f32.mrb[0].mxu0
      %v5597 = vpop.f32.mrb[0].mxu0
      %v5598 = vpop.f32.mrb[0].mxu0
      %5599 = vdwg.mxu0
      %v5600 = vadd.f32 %v5354, %v5435
      %v5601 = vadd.f32 %v5355, %v5438
      %v5602 = vadd.f32 %v5356, %v5443
      %v5603 = vadd.f32 %v5357, %v5446
      %v5604 = vadd.f32 %v5358, %v5451
      %v5605 = vadd.f32 %v5359, %v5454
      %v5606 = vadd.f32 %v5360, %v5459
      %v5607 = vadd.f32 %v5361, %v5462
      %v5608 = vadd.f32 %v5362, %v5467
      %v5609 = vadd.f32 %v5363, %v5470
      %v5610 = vadd.f32 %v5364, %v5475
      %v5611 = vadd.f32 %v5365, %v5478
      %v5612 = vadd.f32 %v5366, %v5483
      %v5613 = vadd.f32 %v5367, %v5486
      %v5614 = vadd.f32 %v5368, %v5491
      %v5615 = vadd.f32 %v5369, %v5494
      %v5616 = vadd.f32 %v5370, %v5499
      %v5617 = vadd.f32 %v5371, %v5502
      %v5618 = vadd.f32 %v5372, %v5507
      %v5619 = vadd.f32 %v5373, %v5510
      %v5620 = vadd.f32 %v5374, %v5515
      %v5621 = vadd.f32 %v5375, %v5518
      %v5622 = vadd.f32 %v5376, %v5523
      %v5623 = vadd.f32 %v5377, %v5526
      %v5624 = vadd.f32 %v5378, %v5531
      %v5625 = vadd.f32 %v5379, %v5534
      %v5626 = vadd.f32 %v5380, %v5539
      %v5627 = vadd.f32 %v5381, %v5542
      %v5628 = vadd.f32 %v5382, %v5547
      %v5629 = vadd.f32 %v5383, %v5550
      %v5630 = vadd.f32 %v5384, %v5555
      %v5631 = vadd.f32 %v5385, %v5558
      %v5632 = vadd.f32 %v5386, %v5563
      %v5633 = vadd.f32 %v5387, %v5566
      %v5634 = vadd.f32 %v5388, %v5571
      %v5635 = vadd.f32 %v5389, %v5574
      %v5636 = vadd.f32 %v5390, %v5579
      %v5637 = vadd.f32 %v5391, %v5582
      %v5638 = vadd.f32 %v5392, %v5587
      %v5639 = vadd.f32 %v5393, %v5590
      %v5640 = vadd.f32 %v5394, %v5595
      %s5641 = scalar_lea.vmem %s4, 20
      %v5642 = vld [vmem:[%s5641] sm:$0xf]
      %v5644 = vsel %vm1067, %v5642, 0
      %5646 = vmatprep.subr.bf16.mxu0 0
      %5647 = vmatpush1.bf16.msra.mxu0 %v5644
      %5648 = vmatprep.subr.bf16.mxu0 0
      %5649 = vmatpush1.bf16.msra.mxu0 0
      %5650 = vmatprep.subr.bf16.mxu0 0
      %5651 = vmatpush1.bf16.msra.mxu0 0
      %5652 = vmatprep.subr.bf16.mxu0 0
      %5653 = vmatpush1.bf16.msra.mxu0 0
      %5654 = vmatprep.subr.bf16.mxu0 0
      %5655 = vmatpush1.bf16.msra.mxu0 0
      %5656 = vmatprep.subr.bf16.mxu0 0
      %5657 = vmatpush1.bf16.msra.mxu0 0
      %5658 = vmatprep.subr.bf16.mxu0 0
      %5659 = vmatpush1.bf16.msra.mxu0 0
      %5660 = vmatprep.subr.bf16.mxu0 0
      %5661 = vmatpush1.bf16.msra.mxu0 0
      %5662 = vmatprep.subr.bf16.mxu0 0
      %5663 = vmatpush1.bf16.msra.mxu0 0
      %5664 = vmatprep.subr.bf16.mxu0 0
      %5665 = vmatpush1.bf16.msra.mxu0 0
      %5666 = vmatprep.subr.bf16.mxu0 0
      %5667 = vmatpush1.bf16.msra.mxu0 0
      %5668 = vmatprep.subr.bf16.mxu0 0
      %5669 = vmatpush1.bf16.msra.mxu0 0
      %5670 = vmatprep.subr.bf16.mxu0 0
      %5671 = vmatpush1.bf16.msra.mxu0 0
      %5672 = vmatprep.subr.bf16.mxu0 0
      %5673 = vmatpush1.bf16.msra.mxu0 0
      %5674 = vmatprep.subr.bf16.mxu0 0
      %5675 = vmatpush1.bf16.msra.mxu0 0
      %5676 = vmatprep.subr.bf16.mxu0 0
      %5677 = vmatpush1.bf16.msra.mxu0 0
      %5678 = vmatprep.mubr.bf16.mxu0 0
      %5679 = vmatmul.mubr.bf16.gmra.mrb[0].mxu0 %v2641
      %v5680 = vpop.f32.mrb[0].mxu0
      %v5681 = vadd.f32 0.0, %v5680
      %v5682 = vpop.f32.mrb[0].mxu0
      %v5683 = vpop.f32.mrb[0].mxu0
      %v5684 = vadd.f32 0.0, %v5683
      %v5685 = vpop.f32.mrb[0].mxu0
      %5686 = vmatprep.mubr.bf16.mxu0 0
      %5687 = vmatmul.mubr.bf16.gmra.mrb[0].mxu0 %v2644
      %v5688 = vpop.f32.mrb[0].mxu0
      %v5689 = vadd.f32 0.0, %v5688
      %v5690 = vpop.f32.mrb[0].mxu0
      %v5691 = vpop.f32.mrb[0].mxu0
      %v5692 = vadd.f32 0.0, %v5691
      %v5693 = vpop.f32.mrb[0].mxu0
      %5694 = vmatprep.mubr.bf16.mxu0 0
      %5695 = vmatmul.mubr.bf16.gmra.mrb[0].mxu0 %v2647
      %v5696 = vpop.f32.mrb[0].mxu0
      %v5697 = vadd.f32 0.0, %v5696
      %v5698 = vpop.f32.mrb[0].mxu0
      %v5699 = vpop.f32.mrb[0].mxu0
      %v5700 = vadd.f32 0.0, %v5699
      %v5701 = vpop.f32.mrb[0].mxu0
      %5702 = vmatprep.mubr.bf16.mxu0 0
      %5703 = vmatmul.mubr.bf16.gmra.mrb[0].mxu0 %v2650
      %v5704 = vpop.f32.mrb[0].mxu0
      %v5705 = vadd.f32 0.0, %v5704
      %v5706 = vpop.f32.mrb[0].mxu0
      %v5707 = vpop.f32.mrb[0].mxu0
      %v5708 = vadd.f32 0.0, %v5707
      %v5709 = vpop.f32.mrb[0].mxu0
      %5710 = vmatprep.mubr.bf16.mxu0 0
      %5711 = vmatmul.mubr.bf16.gmra.mrb[0].mxu0 %v2653
      %v5712 = vpop.f32.mrb[0].mxu0
      %v5713 = vadd.f32 0.0, %v5712
      %v5714 = vpop.f32.mrb[0].mxu0
      %v5715 = vpop.f32.mrb[0].mxu0
      %v5716 = vadd.f32 0.0, %v5715
      %v5717 = vpop.f32.mrb[0].mxu0
      %5718 = vmatprep.mubr.bf16.mxu0 0
      %5719 = vmatmul.mubr.bf16.gmra.mrb[0].mxu0 %v2656
      %v5720 = vpop.f32.mrb[0].mxu0
      %v5721 = vadd.f32 0.0, %v5720
      %v5722 = vpop.f32.mrb[0].mxu0
      %v5723 = vpop.f32.mrb[0].mxu0
      %v5724 = vadd.f32 0.0, %v5723
      %v5725 = vpop.f32.mrb[0].mxu0
      %5726 = vmatprep.mubr.bf16.mxu0 0
      %5727 = vmatmul.mubr.bf16.gmra.mrb[0].mxu0 %v2659
      %v5728 = vpop.f32.mrb[0].mxu0
      %v5729 = vadd.f32 0.0, %v5728
      %v5730 = vpop.f32.mrb[0].mxu0
      %v5731 = vpop.f32.mrb[0].mxu0
      %v5732 = vadd.f32 0.0, %v5731
      %v5733 = vpop.f32.mrb[0].mxu0
      %5734 = vmatprep.mubr.bf16.mxu0 0
      %5735 = vmatmul.mubr.bf16.gmra.mrb[0].mxu0 %v2662
      %v5736 = vpop.f32.mrb[0].mxu0
      %v5737 = vadd.f32 0.0, %v5736
      %v5738 = vpop.f32.mrb[0].mxu0
      %v5739 = vpop.f32.mrb[0].mxu0
      %v5740 = vadd.f32 0.0, %v5739
      %v5741 = vpop.f32.mrb[0].mxu0
      %5742 = vmatprep.mubr.bf16.mxu0 0
      %5743 = vmatmul.mubr.bf16.gmra.mrb[0].mxu0 %v2665
      %v5744 = vpop.f32.mrb[0].mxu0
      %v5745 = vadd.f32 0.0, %v5744
      %v5746 = vpop.f32.mrb[0].mxu0
      %v5747 = vpop.f32.mrb[0].mxu0
      %v5748 = vadd.f32 0.0, %v5747
      %v5749 = vpop.f32.mrb[0].mxu0
      %5750 = vmatprep.mubr.bf16.mxu0 0
      %5751 = vmatmul.mubr.bf16.gmra.mrb[0].mxu0 %v2668
      %v5752 = vpop.f32.mrb[0].mxu0
      %v5753 = vadd.f32 0.0, %v5752
      %v5754 = vpop.f32.mrb[0].mxu0
      %v5755 = vpop.f32.mrb[0].mxu0
      %v5756 = vadd.f32 0.0, %v5755
      %v5757 = vpop.f32.mrb[0].mxu0
      %5758 = vmatprep.mubr.bf16.mxu0 0
      %5759 = vmatmul.mubr.bf16.gmra.mrb[0].mxu0 %v2671
      %v5760 = vpop.f32.mrb[0].mxu0
      %v5761 = vadd.f32 0.0, %v5760
      %v5762 = vpop.f32.mrb[0].mxu0
      %v5763 = vpop.f32.mrb[0].mxu0
      %v5764 = vadd.f32 0.0, %v5763
      %v5765 = vpop.f32.mrb[0].mxu0
      %5766 = vmatprep.mubr.bf16.mxu0 0
      %5767 = vmatmul.mubr.bf16.gmra.mrb[0].mxu0 %v2674
      %v5768 = vpop.f32.mrb[0].mxu0
      %v5769 = vadd.f32 0.0, %v5768
      %v5770 = vpop.f32.mrb[0].mxu0
      %v5771 = vpop.f32.mrb[0].mxu0
      %v5772 = vadd.f32 0.0, %v5771
      %v5773 = vpop.f32.mrb[0].mxu0
      %5774 = vmatprep.mubr.bf16.mxu0 0
      %5775 = vmatmul.mubr.bf16.gmra.mrb[0].mxu0 %v2677
      %v5776 = vpop.f32.mrb[0].mxu0
      %v5777 = vadd.f32 0.0, %v5776
      %v5778 = vpop.f32.mrb[0].mxu0
      %v5779 = vpop.f32.mrb[0].mxu0
      %v5780 = vadd.f32 0.0, %v5779
      %v5781 = vpop.f32.mrb[0].mxu0
      %5782 = vmatprep.mubr.bf16.mxu0 0
      %5783 = vmatmul.mubr.bf16.gmra.mrb[0].mxu0 %v2680
      %v5784 = vpop.f32.mrb[0].mxu0
      %v5785 = vadd.f32 0.0, %v5784
      %v5786 = vpop.f32.mrb[0].mxu0
      %v5787 = vpop.f32.mrb[0].mxu0
      %v5788 = vadd.f32 0.0, %v5787
      %v5789 = vpop.f32.mrb[0].mxu0
      %5790 = vmatprep.mubr.bf16.mxu0 0
      %5791 = vmatmul.mubr.bf16.gmra.mrb[0].mxu0 %v2683
      %v5792 = vpop.f32.mrb[0].mxu0
      %v5793 = vadd.f32 0.0, %v5792
      %v5794 = vpop.f32.mrb[0].mxu0
      %v5795 = vpop.f32.mrb[0].mxu0
      %v5796 = vadd.f32 0.0, %v5795
      %v5797 = vpop.f32.mrb[0].mxu0
      %5798 = vmatprep.mubr.bf16.mxu0 0
      %5799 = vmatmul.mubr.bf16.gmra.mrb[0].mxu0 %v2686
      %v5800 = vpop.f32.mrb[0].mxu0
      %v5801 = vadd.f32 0.0, %v5800
      %v5802 = vpop.f32.mrb[0].mxu0
      %v5803 = vpop.f32.mrb[0].mxu0
      %v5804 = vadd.f32 0.0, %v5803
      %v5805 = vpop.f32.mrb[0].mxu0
      %5806 = vmatprep.mubr.bf16.mxu0 0
      %5807 = vmatmul.mubr.bf16.gmra.mrb[0].mxu0 %v2689
      %v5808 = vpop.f32.mrb[0].mxu0
      %v5809 = vadd.f32 0.0, %v5808
      %v5810 = vpop.f32.mrb[0].mxu0
      %v5811 = vpop.f32.mrb[0].mxu0
      %v5812 = vadd.f32 0.0, %v5811
      %v5813 = vpop.f32.mrb[0].mxu0
      %5814 = vmatprep.mubr.bf16.mxu0 0
      %5815 = vmatmul.mubr.bf16.gmra.mrb[0].mxu0 %v2692
      %v5816 = vpop.f32.mrb[0].mxu0
      %v5817 = vadd.f32 0.0, %v5816
      %v5818 = vpop.f32.mrb[0].mxu0
      %v5819 = vpop.f32.mrb[0].mxu0
      %v5820 = vadd.f32 0.0, %v5819
      %v5821 = vpop.f32.mrb[0].mxu0
      %5822 = vmatprep.mubr.bf16.mxu0 0
      %5823 = vmatmul.mubr.bf16.gmra.mrb[0].mxu0 %v2695
      %v5824 = vpop.f32.mrb[0].mxu0
      %v5825 = vadd.f32 0.0, %v5824
      %v5826 = vpop.f32.mrb[0].mxu0
      %v5827 = vpop.f32.mrb[0].mxu0
      %v5828 = vadd.f32 0.0, %v5827
      %v5829 = vpop.f32.mrb[0].mxu0
      %5830 = vmatprep.mubr.bf16.mxu0 0
      %5831 = vmatmul.mubr.bf16.gmra.mrb[0].mxu0 %v2698
      %v5832 = vpop.f32.mrb[0].mxu0
      %v5833 = vadd.f32 0.0, %v5832
      %v5834 = vpop.f32.mrb[0].mxu0
      %v5835 = vpop.f32.mrb[0].mxu0
      %v5836 = vadd.f32 0.0, %v5835
      %v5837 = vpop.f32.mrb[0].mxu0
      %5838 = vmatprep.mubr.bf16.mxu0 0
      %5839 = vmatmul.mubr.bf16.gmra.mrb[0].mxu0 %v2701
      %v5840 = vpop.f32.mrb[0].mxu0
      %v5841 = vadd.f32 0.0, %v5840
      %v5842 = vpop.f32.mrb[0].mxu0
      %v5843 = vpop.f32.mrb[0].mxu0
      %v5844 = vpop.f32.mrb[0].mxu0
      %5845 = vdwg.mxu0
      %v5846 = vadd.f32 %v5600, %v5681
      %v5847 = vadd.f32 %v5601, %v5684
      %v5848 = vadd.f32 %v5602, %v5689
      %v5849 = vadd.f32 %v5603, %v5692
      %v5850 = vadd.f32 %v5604, %v5697
      %v5851 = vadd.f32 %v5605, %v5700
      %v5852 = vadd.f32 %v5606, %v5705
      %v5853 = vadd.f32 %v5607, %v5708
      %v5854 = vadd.f32 %v5608, %v5713
      %v5855 = vadd.f32 %v5609, %v5716
      %v5856 = vadd.f32 %v5610, %v5721
      %v5857 = vadd.f32 %v5611, %v5724
      %v5858 = vadd.f32 %v5612, %v5729
      %v5859 = vadd.f32 %v5613, %v5732
      %v5860 = vadd.f32 %v5614, %v5737
      %v5861 = vadd.f32 %v5615, %v5740
      %v5862 = vadd.f32 %v5616, %v5745
      %v5863 = vadd.f32 %v5617, %v5748
      %v5864 = vadd.f32 %v5618, %v5753
      %v5865 = vadd.f32 %v5619, %v5756
      %v5866 = vadd.f32 %v5620, %v5761
      %v5867 = vadd.f32 %v5621, %v5764
      %v5868 = vadd.f32 %v5622, %v5769
      %v5869 = vadd.f32 %v5623, %v5772
      %v5870 = vadd.f32 %v5624, %v5777
      %v5871 = vadd.f32 %v5625, %v5780
      %v5872 = vadd.f32 %v5626, %v5785
      %v5873 = vadd.f32 %v5627, %v5788
      %v5874 = vadd.f32 %v5628, %v5793
      %v5875 = vadd.f32 %v5629, %v5796
      %v5876 = vadd.f32 %v5630, %v5801
      %v5877 = vadd.f32 %v5631, %v5804
      %v5878 = vadd.f32 %v5632, %v5809
      %v5879 = vadd.f32 %v5633, %v5812
      %v5880 = vadd.f32 %v5634, %v5817
      %v5881 = vadd.f32 %v5635, %v5820
      %v5882 = vadd.f32 %v5636, %v5825
      %v5883 = vadd.f32 %v5637, %v5828
      %v5884 = vadd.f32 %v5638, %v5833
      %v5885 = vadd.f32 %v5639, %v5836
      %v5886 = vadd.f32 %v5640, %v5841
      %s5887 = scalar_lea.vmem %s4, 24
      %v5888 = vld [vmem:[%s5887] sm:$0xf]
      %v5890 = vsel %vm1067, %v5888, 0
      %5892 = vmatprep.subr.bf16.mxu0 0
      %5893 = vmatpush1.bf16.msra.mxu0 %v5890
      %5894 = vmatprep.subr.bf16.mxu0 0
      %5895 = vmatpush1.bf16.msra.mxu0 0
      %5896 = vmatprep.subr.bf16.mxu0 0
      %5897 = vmatpush1.bf16.msra.mxu0 0
      %5898 = vmatprep.subr.bf16.mxu0 0
      %5899 = vmatpush1.bf16.msra.mxu0 0
      %5900 = vmatprep.subr.bf16.mxu0 0
      %5901 = vmatpush1.bf16.msra.mxu0 0
      %5902 = vmatprep.subr.bf16.mxu0 0
      %5903 = vmatpush1.bf16.msra.mxu0 0
      %5904 = vmatprep.subr.bf16.mxu0 0
      %5905 = vmatpush1.bf16.msra.mxu0 0
      %5906 = vmatprep.subr.bf16.mxu0 0
      %5907 = vmatpush1.bf16.msra.mxu0 0
      %5908 = vmatprep.subr.bf16.mxu0 0
      %5909 = vmatpush1.bf16.msra.mxu0 0
      %5910 = vmatprep.subr.bf16.mxu0 0
      %5911 = vmatpush1.bf16.msra.mxu0 0
      %5912 = vmatprep.subr.bf16.mxu0 0
      %5913 = vmatpush1.bf16.msra.mxu0 0
      %5914 = vmatprep.subr.bf16.mxu0 0
      %5915 = vmatpush1.bf16.msra.mxu0 0
      %5916 = vmatprep.subr.bf16.mxu0 0
      %5917 = vmatpush1.bf16.msra.mxu0 0
      %5918 = vmatprep.subr.bf16.mxu0 0
      %5919 = vmatpush1.bf16.msra.mxu0 0
      %5920 = vmatprep.subr.bf16.mxu0 0
      %5921 = vmatpush1.bf16.msra.mxu0 0
      %5922 = vmatprep.subr.bf16.mxu0 0
      %5923 = vmatpush1.bf16.msra.mxu0 0
      %5924 = vmatprep.mubr.bf16.mxu0 0
      %5925 = vmatmul.mubr.bf16.gmra.mrb[0].mxu0 %v2644
      %v5926 = vpop.f32.mrb[0].mxu0
      %v5927 = vadd.f32 0.0, %v5926
      %v5928 = vpop.f32.mrb[0].mxu0
      %v5929 = vpop.f32.mrb[0].mxu0
      %v5930 = vadd.f32 0.0, %v5929
      %v5931 = vpop.f32.mrb[0].mxu0
      %5932 = vmatprep.mubr.bf16.mxu0 0
      %5933 = vmatmul.mubr.bf16.gmra.mrb[0].mxu0 %v2647
      %v5934 = vpop.f32.mrb[0].mxu0
      %v5935 = vadd.f32 0.0, %v5934
      %v5936 = vpop.f32.mrb[0].mxu0
      %v5937 = vpop.f32.mrb[0].mxu0
      %v5938 = vadd.f32 0.0, %v5937
      %v5939 = vpop.f32.mrb[0].mxu0
      %5940 = vmatprep.mubr.bf16.mxu0 0
      %5941 = vmatmul.mubr.bf16.gmra.mrb[0].mxu0 %v2650
      %v5942 = vpop.f32.mrb[0].mxu0
      %v5943 = vadd.f32 0.0, %v5942
      %v5944 = vpop.f32.mrb[0].mxu0
      %v5945 = vpop.f32.mrb[0].mxu0
      %v5946 = vadd.f32 0.0, %v5945
      %v5947 = vpop.f32.mrb[0].mxu0
      %5948 = vmatprep.mubr.bf16.mxu0 0
      %5949 = vmatmul.mubr.bf16.gmra.mrb[0].mxu0 %v2653
      %v5950 = vpop.f32.mrb[0].mxu0
      %v5951 = vadd.f32 0.0, %v5950
      %v5952 = vpop.f32.mrb[0].mxu0
      %v5953 = vpop.f32.mrb[0].mxu0
      %v5954 = vadd.f32 0.0, %v5953
      %v5955 = vpop.f32.mrb[0].mxu0
      %5956 = vmatprep.mubr.bf16.mxu0 0
      %5957 = vmatmul.mubr.bf16.gmra.mrb[0].mxu0 %v2656
      %v5958 = vpop.f32.mrb[0].mxu0
      %v5959 = vadd.f32 0.0, %v5958
      %v5960 = vpop.f32.mrb[0].mxu0
      %v5961 = vpop.f32.mrb[0].mxu0
      %v5962 = vadd.f32 0.0, %v5961
      %v5963 = vpop.f32.mrb[0].mxu0
      %5964 = vmatprep.mubr.bf16.mxu0 0
      %5965 = vmatmul.mubr.bf16.gmra.mrb[0].mxu0 %v2659
      %v5966 = vpop.f32.mrb[0].mxu0
      %v5967 = vadd.f32 0.0, %v5966
      %v5968 = vpop.f32.mrb[0].mxu0
      %v5969 = vpop.f32.mrb[0].mxu0
      %v5970 = vadd.f32 0.0, %v5969
      %v5971 = vpop.f32.mrb[0].mxu0
      %5972 = vmatprep.mubr.bf16.mxu0 0
      %5973 = vmatmul.mubr.bf16.gmra.mrb[0].mxu0 %v2662
      %v5974 = vpop.f32.mrb[0].mxu0
      %v5975 = vadd.f32 0.0, %v5974
      %v5976 = vpop.f32.mrb[0].mxu0
      %v5977 = vpop.f32.mrb[0].mxu0
      %v5978 = vadd.f32 0.0, %v5977
      %v5979 = vpop.f32.mrb[0].mxu0
      %5980 = vmatprep.mubr.bf16.mxu0 0
      %5981 = vmatmul.mubr.bf16.gmra.mrb[0].mxu0 %v2665
      %v5982 = vpop.f32.mrb[0].mxu0
      %v5983 = vadd.f32 0.0, %v5982
      %v5984 = vpop.f32.mrb[0].mxu0
      %v5985 = vpop.f32.mrb[0].mxu0
      %v5986 = vadd.f32 0.0, %v5985
      %v5987 = vpop.f32.mrb[0].mxu0
      %5988 = vmatprep.mubr.bf16.mxu0 0
      %5989 = vmatmul.mubr.bf16.gmra.mrb[0].mxu0 %v2668
      %v5990 = vpop.f32.mrb[0].mxu0
      %v5991 = vadd.f32 0.0, %v5990
      %v5992 = vpop.f32.mrb[0].mxu0
      %v5993 = vpop.f32.mrb[0].mxu0
      %v5994 = vadd.f32 0.0, %v5993
      %v5995 = vpop.f32.mrb[0].mxu0
      %5996 = vmatprep.mubr.bf16.mxu0 0
      %5997 = vmatmul.mubr.bf16.gmra.mrb[0].mxu0 %v2671
      %v5998 = vpop.f32.mrb[0].mxu0
      %v5999 = vadd.f32 0.0, %v5998
      %v6000 = vpop.f32.mrb[0].mxu0
      %v6001 = vpop.f32.mrb[0].mxu0
      %v6002 = vadd.f32 0.0, %v6001
      %v6003 = vpop.f32.mrb[0].mxu0
      %6004 = vmatprep.mubr.bf16.mxu0 0
      %6005 = vmatmul.mubr.bf16.gmra.mrb[0].mxu0 %v2674
      %v6006 = vpop.f32.mrb[0].mxu0
      %v6007 = vadd.f32 0.0, %v6006
      %v6008 = vpop.f32.mrb[0].mxu0
      %v6009 = vpop.f32.mrb[0].mxu0
      %v6010 = vadd.f32 0.0, %v6009
      %v6011 = vpop.f32.mrb[0].mxu0
      %6012 = vmatprep.mubr.bf16.mxu0 0
      %6013 = vmatmul.mubr.bf16.gmra.mrb[0].mxu0 %v2677
      %v6014 = vpop.f32.mrb[0].mxu0
      %v6015 = vadd.f32 0.0, %v6014
      %v6016 = vpop.f32.mrb[0].mxu0
      %v6017 = vpop.f32.mrb[0].mxu0
      %v6018 = vadd.f32 0.0, %v6017
      %v6019 = vpop.f32.mrb[0].mxu0
      %6020 = vmatprep.mubr.bf16.mxu0 0
      %6021 = vmatmul.mubr.bf16.gmra.mrb[0].mxu0 %v2680
      %v6022 = vpop.f32.mrb[0].mxu0
      %v6023 = vadd.f32 0.0, %v6022
      %v6024 = vpop.f32.mrb[0].mxu0
      %v6025 = vpop.f32.mrb[0].mxu0
      %v6026 = vadd.f32 0.0, %v6025
      %v6027 = vpop.f32.mrb[0].mxu0
      %6028 = vmatprep.mubr.bf16.mxu0 0
      %6029 = vmatmul.mubr.bf16.gmra.mrb[0].mxu0 %v2683
      %v6030 = vpop.f32.mrb[0].mxu0
      %v6031 = vadd.f32 0.0, %v6030
      %v6032 = vpop.f32.mrb[0].mxu0
      %v6033 = vpop.f32.mrb[0].mxu0
      %v6034 = vadd.f32 0.0, %v6033
      %v6035 = vpop.f32.mrb[0].mxu0
      %6036 = vmatprep.mubr.bf16.mxu0 0
      %6037 = vmatmul.mubr.bf16.gmra.mrb[0].mxu0 %v2686
      %v6038 = vpop.f32.mrb[0].mxu0
      %v6039 = vadd.f32 0.0, %v6038
      %v6040 = vpop.f32.mrb[0].mxu0
      %v6041 = vpop.f32.mrb[0].mxu0
      %v6042 = vadd.f32 0.0, %v6041
      %v6043 = vpop.f32.mrb[0].mxu0
      %6044 = vmatprep.mubr.bf16.mxu0 0
      %6045 = vmatmul.mubr.bf16.gmra.mrb[0].mxu0 %v2689
      %v6046 = vpop.f32.mrb[0].mxu0
      %v6047 = vadd.f32 0.0, %v6046
      %v6048 = vpop.f32.mrb[0].mxu0
      %v6049 = vpop.f32.mrb[0].mxu0
      %v6050 = vadd.f32 0.0, %v6049
      %v6051 = vpop.f32.mrb[0].mxu0
      %6052 = vmatprep.mubr.bf16.mxu0 0
      %6053 = vmatmul.mubr.bf16.gmra.mrb[0].mxu0 %v2692
      %v6054 = vpop.f32.mrb[0].mxu0
      %v6055 = vadd.f32 0.0, %v6054
      %v6056 = vpop.f32.mrb[0].mxu0
      %v6057 = vpop.f32.mrb[0].mxu0
      %v6058 = vadd.f32 0.0, %v6057
      %v6059 = vpop.f32.mrb[0].mxu0
      %6060 = vmatprep.mubr.bf16.mxu0 0
      %6061 = vmatmul.mubr.bf16.gmra.mrb[0].mxu0 %v2695
      %v6062 = vpop.f32.mrb[0].mxu0
      %v6063 = vadd.f32 0.0, %v6062
      %v6064 = vpop.f32.mrb[0].mxu0
      %v6065 = vpop.f32.mrb[0].mxu0
      %v6066 = vadd.f32 0.0, %v6065
      %v6067 = vpop.f32.mrb[0].mxu0
      %6068 = vmatprep.mubr.bf16.mxu0 0
      %6069 = vmatmul.mubr.bf16.gmra.mrb[0].mxu0 %v2698
      %v6070 = vpop.f32.mrb[0].mxu0
      %v6071 = vadd.f32 0.0, %v6070
      %v6072 = vpop.f32.mrb[0].mxu0
      %v6073 = vpop.f32.mrb[0].mxu0
      %v6074 = vadd.f32 0.0, %v6073
      %v6075 = vpop.f32.mrb[0].mxu0
      %6076 = vmatprep.mubr.bf16.mxu0 0
      %6077 = vmatmul.mubr.bf16.gmra.mrb[0].mxu0 %v2952
      %v6078 = vpop.f32.mrb[0].mxu0
      %v6079 = vadd.f32 0.0, %v6078
      %v6080 = vpop.f32.mrb[0].mxu0
      %v6081 = vpop.f32.mrb[0].mxu0
      %v6082 = vadd.f32 0.0, %v6081
      %v6083 = vpop.f32.mrb[0].mxu0
      %6084 = vmatprep.mubr.bf16.mxu0 0
      %6085 = vmatmul.mubr.bf16.gmra.mrb[0].mxu0 %v2955
      %v6086 = vpop.f32.mrb[0].mxu0
      %v6087 = vadd.f32 0.0, %v6086
      %v6088 = vpop.f32.mrb[0].mxu0
      %v6089 = vpop.f32.mrb[0].mxu0
      %v6090 = vpop.f32.mrb[0].mxu0
      %6091 = vdwg.mxu0
      %v6092 = vadd.f32 %v5846, %v5927
      %v6093 = vadd.f32 %v5847, %v5930
      %v6094 = vadd.f32 %v5848, %v5935
      %v6095 = vadd.f32 %v5849, %v5938
      %v6096 = vadd.f32 %v5850, %v5943
      %v6097 = vadd.f32 %v5851, %v5946
      %v6098 = vadd.f32 %v5852, %v5951
      %v6099 = vadd.f32 %v5853, %v5954
      %v6100 = vadd.f32 %v5854, %v5959
      %v6101 = vadd.f32 %v5855, %v5962
      %v6102 = vadd.f32 %v5856, %v5967
      %v6103 = vadd.f32 %v5857, %v5970
      %v6104 = vadd.f32 %v5858, %v5975
      %v6105 = vadd.f32 %v5859, %v5978
      %v6106 = vadd.f32 %v5860, %v5983
      %v6107 = vadd.f32 %v5861, %v5986
      %v6108 = vadd.f32 %v5862, %v5991
      %v6109 = vadd.f32 %v5863, %v5994
      %v6110 = vadd.f32 %v5864, %v5999
      %v6111 = vadd.f32 %v5865, %v6002
      %v6112 = vadd.f32 %v5866, %v6007
      %v6113 = vadd.f32 %v5867, %v6010
      %v6114 = vadd.f32 %v5868, %v6015
      %v6115 = vadd.f32 %v5869, %v6018
      %v6116 = vadd.f32 %v5870, %v6023
      %v6117 = vadd.f32 %v5871, %v6026
      %v6118 = vadd.f32 %v5872, %v6031
      %v6119 = vadd.f32 %v5873, %v6034
      %v6120 = vadd.f32 %v5874, %v6039
      %v6121 = vadd.f32 %v5875, %v6042
      %v6122 = vadd.f32 %v5876, %v6047
      %v6123 = vadd.f32 %v5877, %v6050
      %v6124 = vadd.f32 %v5878, %v6055
      %v6125 = vadd.f32 %v5879, %v6058
      %v6126 = vadd.f32 %v5880, %v6063
      %v6127 = vadd.f32 %v5881, %v6066
      %v6128 = vadd.f32 %v5882, %v6071
      %v6129 = vadd.f32 %v5883, %v6074
      %v6130 = vadd.f32 %v5884, %v6079
      %v6131 = vadd.f32 %v5885, %v6082
      %v6132 = vadd.f32 %v5886, %v6087
      %s6133 = scalar_lea.vmem %s4, 28
      %v6134 = vld [vmem:[%s6133] sm:$0xf]
      %v6136 = vsel %vm1067, %v6134, 0
      %6138 = vmatprep.subr.bf16.mxu0 0
      %6139 = vmatpush1.bf16.msra.mxu0 %v6136
      %6140 = vmatprep.subr.bf16.mxu0 0
      %6141 = vmatpush1.bf16.msra.mxu0 0
      %6142 = vmatprep.subr.bf16.mxu0 0
      %6143 = vmatpush1.bf16.msra.mxu0 0
      %6144 = vmatprep.subr.bf16.mxu0 0
      %6145 = vmatpush1.bf16.msra.mxu0 0
      %6146 = vmatprep.subr.bf16.mxu0 0
      %6147 = vmatpush1.bf16.msra.mxu0 0
      %6148 = vmatprep.subr.bf16.mxu0 0
      %6149 = vmatpush1.bf16.msra.mxu0 0
      %6150 = vmatprep.subr.bf16.mxu0 0
      %6151 = vmatpush1.bf16.msra.mxu0 0
      %6152 = vmatprep.subr.bf16.mxu0 0
      %6153 = vmatpush1.bf16.msra.mxu0 0
      %6154 = vmatprep.subr.bf16.mxu0 0
      %6155 = vmatpush1.bf16.msra.mxu0 0
      %6156 = vmatprep.subr.bf16.mxu0 0
      %6157 = vmatpush1.bf16.msra.mxu0 0
      %6158 = vmatprep.subr.bf16.mxu0 0
      %6159 = vmatpush1.bf16.msra.mxu0 0
      %6160 = vmatprep.subr.bf16.mxu0 0
      %6161 = vmatpush1.bf16.msra.mxu0 0
      %6162 = vmatprep.subr.bf16.mxu0 0
      %6163 = vmatpush1.bf16.msra.mxu0 0
      %6164 = vmatprep.subr.bf16.mxu0 0
      %6165 = vmatpush1.bf16.msra.mxu0 0
      %6166 = vmatprep.subr.bf16.mxu0 0
      %6167 = vmatpush1.bf16.msra.mxu0 0
      %6168 = vmatprep.subr.bf16.mxu0 0
      %6169 = vmatpush1.bf16.msra.mxu0 0
      %6170 = vmatprep.mubr.bf16.mxu0 0
      %6171 = vmatmul.mubr.bf16.gmra.mrb[0].mxu0 %v3308
      %v6172 = vpop.f32.mrb[0].mxu0
      %v6173 = vadd.f32 0.0, %v6172
      %v6174 = vpop.f32.mrb[0].mxu0
      %v6175 = vpop.f32.mrb[0].mxu0
      %v6176 = vadd.f32 0.0, %v6175
      %v6177 = vpop.f32.mrb[0].mxu0
      %6178 = vmatprep.mubr.bf16.mxu0 0
      %6179 = vmatmul.mubr.bf16.gmra.mrb[0].mxu0 %v3311
      %v6180 = vpop.f32.mrb[0].mxu0
      %v6181 = vadd.f32 0.0, %v6180
      %v6182 = vpop.f32.mrb[0].mxu0
      %v6183 = vpop.f32.mrb[0].mxu0
      %v6184 = vadd.f32 0.0, %v6183
      %v6185 = vpop.f32.mrb[0].mxu0
      %6186 = vmatprep.mubr.bf16.mxu0 0
      %6187 = vmatmul.mubr.bf16.gmra.mrb[0].mxu0 %v3314
      %v6188 = vpop.f32.mrb[0].mxu0
      %v6189 = vadd.f32 0.0, %v6188
      %v6190 = vpop.f32.mrb[0].mxu0
      %v6191 = vpop.f32.mrb[0].mxu0
      %v6192 = vadd.f32 0.0, %v6191
      %v6193 = vpop.f32.mrb[0].mxu0
      %6194 = vmatprep.mubr.bf16.mxu0 0
      %6195 = vmatmul.mubr.bf16.gmra.mrb[0].mxu0 %v3317
      %v6196 = vpop.f32.mrb[0].mxu0
      %v6197 = vadd.f32 0.0, %v6196
      %v6198 = vpop.f32.mrb[0].mxu0
      %v6199 = vpop.f32.mrb[0].mxu0
      %v6200 = vadd.f32 0.0, %v6199
      %v6201 = vpop.f32.mrb[0].mxu0
      %6202 = vmatprep.mubr.bf16.mxu0 0
      %6203 = vmatmul.mubr.bf16.gmra.mrb[0].mxu0 %v3320
      %v6204 = vpop.f32.mrb[0].mxu0
      %v6205 = vadd.f32 0.0, %v6204
      %v6206 = vpop.f32.mrb[0].mxu0
      %v6207 = vpop.f32.mrb[0].mxu0
      %v6208 = vadd.f32 0.0, %v6207
      %v6209 = vpop.f32.mrb[0].mxu0
      %6210 = vmatprep.mubr.bf16.mxu0 0
      %6211 = vmatmul.mubr.bf16.gmra.mrb[0].mxu0 %v3323
      %v6212 = vpop.f32.mrb[0].mxu0
      %v6213 = vadd.f32 0.0, %v6212
      %v6214 = vpop.f32.mrb[0].mxu0
      %v6215 = vpop.f32.mrb[0].mxu0
      %v6216 = vadd.f32 0.0, %v6215
      %v6217 = vpop.f32.mrb[0].mxu0
      %6218 = vmatprep.mubr.bf16.mxu0 0
      %6219 = vmatmul.mubr.bf16.gmra.mrb[0].mxu0 %v3326
      %v6220 = vpop.f32.mrb[0].mxu0
      %v6221 = vadd.f32 0.0, %v6220
      %v6222 = vpop.f32.mrb[0].mxu0
      %v6223 = vpop.f32.mrb[0].mxu0
      %v6224 = vadd.f32 0.0, %v6223
      %v6225 = vpop.f32.mrb[0].mxu0
      %6226 = vmatprep.mubr.bf16.mxu0 0
      %6227 = vmatmul.mubr.bf16.gmra.mrb[0].mxu0 %v3329
      %v6228 = vpop.f32.mrb[0].mxu0
      %v6229 = vadd.f32 0.0, %v6228
      %v6230 = vpop.f32.mrb[0].mxu0
      %v6231 = vpop.f32.mrb[0].mxu0
      %v6232 = vadd.f32 0.0, %v6231
      %v6233 = vpop.f32.mrb[0].mxu0
      %6234 = vmatprep.mubr.bf16.mxu0 0
      %6235 = vmatmul.mubr.bf16.gmra.mrb[0].mxu0 %v3332
      %v6236 = vpop.f32.mrb[0].mxu0
      %v6237 = vadd.f32 0.0, %v6236
      %v6238 = vpop.f32.mrb[0].mxu0
      %v6239 = vpop.f32.mrb[0].mxu0
      %v6240 = vadd.f32 0.0, %v6239
      %v6241 = vpop.f32.mrb[0].mxu0
      %6242 = vmatprep.mubr.bf16.mxu0 0
      %6243 = vmatmul.mubr.bf16.gmra.mrb[0].mxu0 %v3335
      %v6244 = vpop.f32.mrb[0].mxu0
      %v6245 = vadd.f32 0.0, %v6244
      %v6246 = vpop.f32.mrb[0].mxu0
      %v6247 = vpop.f32.mrb[0].mxu0
      %v6248 = vadd.f32 0.0, %v6247
      %v6249 = vpop.f32.mrb[0].mxu0
      %6250 = vmatprep.mubr.bf16.mxu0 0
      %6251 = vmatmul.mubr.bf16.gmra.mrb[0].mxu0 %v3338
      %v6252 = vpop.f32.mrb[0].mxu0
      %v6253 = vadd.f32 0.0, %v6252
      %v6254 = vpop.f32.mrb[0].mxu0
      %v6255 = vpop.f32.mrb[0].mxu0
      %v6256 = vadd.f32 0.0, %v6255
      %v6257 = vpop.f32.mrb[0].mxu0
      %6258 = vmatprep.mubr.bf16.mxu0 0
      %6259 = vmatmul.mubr.bf16.gmra.mrb[0].mxu0 %v3341
      %v6260 = vpop.f32.mrb[0].mxu0
      %v6261 = vadd.f32 0.0, %v6260
      %v6262 = vpop.f32.mrb[0].mxu0
      %v6263 = vpop.f32.mrb[0].mxu0
      %v6264 = vadd.f32 0.0, %v6263
      %v6265 = vpop.f32.mrb[0].mxu0
      %6266 = vmatprep.mubr.bf16.mxu0 0
      %6267 = vmatmul.mubr.bf16.gmra.mrb[0].mxu0 %v3344
      %v6268 = vpop.f32.mrb[0].mxu0
      %v6269 = vadd.f32 0.0, %v6268
      %v6270 = vpop.f32.mrb[0].mxu0
      %v6271 = vpop.f32.mrb[0].mxu0
      %v6272 = vadd.f32 0.0, %v6271
      %v6273 = vpop.f32.mrb[0].mxu0
      %6274 = vmatprep.mubr.bf16.mxu0 0
      %6275 = vmatmul.mubr.bf16.gmra.mrb[0].mxu0 %v3347
      %v6276 = vpop.f32.mrb[0].mxu0
      %v6277 = vadd.f32 0.0, %v6276
      %v6278 = vpop.f32.mrb[0].mxu0
      %v6279 = vpop.f32.mrb[0].mxu0
      %v6280 = vadd.f32 0.0, %v6279
      %v6281 = vpop.f32.mrb[0].mxu0
      %6282 = vmatprep.mubr.bf16.mxu0 0
      %6283 = vmatmul.mubr.bf16.gmra.mrb[0].mxu0 %v3350
      %v6284 = vpop.f32.mrb[0].mxu0
      %v6285 = vadd.f32 0.0, %v6284
      %v6286 = vpop.f32.mrb[0].mxu0
      %v6287 = vpop.f32.mrb[0].mxu0
      %v6288 = vadd.f32 0.0, %v6287
      %v6289 = vpop.f32.mrb[0].mxu0
      %6290 = vmatprep.mubr.bf16.mxu0 0
      %6291 = vmatmul.mubr.bf16.gmra.mrb[0].mxu0 %v3353
      %v6292 = vpop.f32.mrb[0].mxu0
      %v6293 = vadd.f32 0.0, %v6292
      %v6294 = vpop.f32.mrb[0].mxu0
      %v6295 = vpop.f32.mrb[0].mxu0
      %v6296 = vadd.f32 0.0, %v6295
      %v6297 = vpop.f32.mrb[0].mxu0
      %6298 = vmatprep.mubr.bf16.mxu0 0
      %6299 = vmatmul.mubr.bf16.gmra.mrb[0].mxu0 %v3356
      %v6300 = vpop.f32.mrb[0].mxu0
      %v6301 = vadd.f32 0.0, %v6300
      %v6302 = vpop.f32.mrb[0].mxu0
      %v6303 = vpop.f32.mrb[0].mxu0
      %v6304 = vadd.f32 0.0, %v6303
      %v6305 = vpop.f32.mrb[0].mxu0
      %6306 = vmatprep.mubr.bf16.mxu0 0
      %6307 = vmatmul.mubr.bf16.gmra.mrb[0].mxu0 %v3359
      %v6308 = vpop.f32.mrb[0].mxu0
      %v6309 = vadd.f32 0.0, %v6308
      %v6310 = vpop.f32.mrb[0].mxu0
      %v6311 = vpop.f32.mrb[0].mxu0
      %v6312 = vadd.f32 0.0, %v6311
      %v6313 = vpop.f32.mrb[0].mxu0
      %6314 = vmatprep.mubr.bf16.mxu0 0
      %6315 = vmatmul.mubr.bf16.gmra.mrb[0].mxu0 %v3362
      %v6316 = vpop.f32.mrb[0].mxu0
      %v6317 = vadd.f32 0.0, %v6316
      %v6318 = vpop.f32.mrb[0].mxu0
      %v6319 = vpop.f32.mrb[0].mxu0
      %v6320 = vadd.f32 0.0, %v6319
      %v6321 = vpop.f32.mrb[0].mxu0
      %6322 = vmatprep.mubr.bf16.mxu0 0
      %6323 = vmatmul.mubr.bf16.gmra.mrb[0].mxu0 %v3365
      %v6324 = vpop.f32.mrb[0].mxu0
      %v6325 = vadd.f32 0.0, %v6324
      %v6326 = vpop.f32.mrb[0].mxu0
      %v6327 = vpop.f32.mrb[0].mxu0
      %v6328 = vadd.f32 0.0, %v6327
      %v6329 = vpop.f32.mrb[0].mxu0
      %6330 = vmatprep.mubr.bf16.mxu0 0
      %6331 = vmatmul.mubr.bf16.gmra.mrb[0].mxu0 %v3368
      %v6332 = vpop.f32.mrb[0].mxu0
      %v6333 = vadd.f32 0.0, %v6332
      %v6334 = vpop.f32.mrb[0].mxu0
      %v6335 = vpop.f32.mrb[0].mxu0
      %v6336 = vpop.f32.mrb[0].mxu0
      %6337 = vdwg.mxu0
      %v6338 = vadd.f32 %v6092, %v6173
      %v6339 = vadd.f32 %v6093, %v6176
      %v6340 = vadd.f32 %v6094, %v6181
      %v6341 = vadd.f32 %v6095, %v6184
      %v6342 = vadd.f32 %v6096, %v6189
      %v6343 = vadd.f32 %v6097, %v6192
      %v6344 = vadd.f32 %v6098, %v6197
      %v6345 = vadd.f32 %v6099, %v6200
      %v6346 = vadd.f32 %v6100, %v6205
      %v6347 = vadd.f32 %v6101, %v6208
      %v6348 = vadd.f32 %v6102, %v6213
      %v6349 = vadd.f32 %v6103, %v6216
      %v6350 = vadd.f32 %v6104, %v6221
      %v6351 = vadd.f32 %v6105, %v6224
      %v6352 = vadd.f32 %v6106, %v6229
      %v6353 = vadd.f32 %v6107, %v6232
      %v6354 = vadd.f32 %v6108, %v6237
      %v6355 = vadd.f32 %v6109, %v6240
      %v6356 = vadd.f32 %v6110, %v6245
      %v6357 = vadd.f32 %v6111, %v6248
      %v6358 = vadd.f32 %v6112, %v6253
      %v6359 = vadd.f32 %v6113, %v6256
      %v6360 = vadd.f32 %v6114, %v6261
      %v6361 = vadd.f32 %v6115, %v6264
      %v6362 = vadd.f32 %v6116, %v6269
      %v6363 = vadd.f32 %v6117, %v6272
      %v6364 = vadd.f32 %v6118, %v6277
      %v6365 = vadd.f32 %v6119, %v6280
      %v6366 = vadd.f32 %v6120, %v6285
      %v6367 = vadd.f32 %v6121, %v6288
      %v6368 = vadd.f32 %v6122, %v6293
      %v6369 = vadd.f32 %v6123, %v6296
      %v6370 = vadd.f32 %v6124, %v6301
      %v6371 = vadd.f32 %v6125, %v6304
      %v6372 = vadd.f32 %v6126, %v6309
      %v6373 = vadd.f32 %v6127, %v6312
      %v6374 = vadd.f32 %v6128, %v6317
      %v6375 = vadd.f32 %v6129, %v6320
      %v6376 = vadd.f32 %v6130, %v6325
      %v6377 = vadd.f32 %v6131, %v6328
      %v6378 = vadd.f32 %v6132, %v6333
      %s6379 = scalar_lea.vmem %s4, 32
      %v6380 = vld [vmem:[%s6379] sm:$0xf]
      %v6382 = vsel %vm1067, %v6380, 0
      %6384 = vmatprep.subr.bf16.mxu0 0
      %6385 = vmatpush1.bf16.msra.mxu0 %v6382
      %6386 = vmatprep.subr.bf16.mxu0 0
      %6387 = vmatpush1.bf16.msra.mxu0 0
      %6388 = vmatprep.subr.bf16.mxu0 0
      %6389 = vmatpush1.bf16.msra.mxu0 0
      %6390 = vmatprep.subr.bf16.mxu0 0
      %6391 = vmatpush1.bf16.msra.mxu0 0
      %6392 = vmatprep.subr.bf16.mxu0 0
      %6393 = vmatpush1.bf16.msra.mxu0 0
      %6394 = vmatprep.subr.bf16.mxu0 0
      %6395 = vmatpush1.bf16.msra.mxu0 0
      %6396 = vmatprep.subr.bf16.mxu0 0
      %6397 = vmatpush1.bf16.msra.mxu0 0
      %6398 = vmatprep.subr.bf16.mxu0 0
      %6399 = vmatpush1.bf16.msra.mxu0 0
      %6400 = vmatprep.subr.bf16.mxu0 0
      %6401 = vmatpush1.bf16.msra.mxu0 0
      %6402 = vmatprep.subr.bf16.mxu0 0
      %6403 = vmatpush1.bf16.msra.mxu0 0
      %6404 = vmatprep.subr.bf16.mxu0 0
      %6405 = vmatpush1.bf16.msra.mxu0 0
      %6406 = vmatprep.subr.bf16.mxu0 0
      %6407 = vmatpush1.bf16.msra.mxu0 0
      %6408 = vmatprep.subr.bf16.mxu0 0
      %6409 = vmatpush1.bf16.msra.mxu0 0
      %6410 = vmatprep.subr.bf16.mxu0 0
      %6411 = vmatpush1.bf16.msra.mxu0 0
      %6412 = vmatprep.subr.bf16.mxu0 0
      %6413 = vmatpush1.bf16.msra.mxu0 0
      %6414 = vmatprep.subr.bf16.mxu0 0
      %6415 = vmatpush1.bf16.msra.mxu0 0
      %6416 = vmatprep.mubr.bf16.mxu0 0
      %6417 = vmatmul.mubr.bf16.gmra.mrb[0].mxu0 %v3721
      %v6418 = vpop.f32.mrb[0].mxu0
      %v6419 = vadd.f32 0.0, %v6418
      %v6420 = vpop.f32.mrb[0].mxu0
      %v6421 = vpop.f32.mrb[0].mxu0
      %v6422 = vadd.f32 0.0, %v6421
      %v6423 = vpop.f32.mrb[0].mxu0
      %6424 = vmatprep.mubr.bf16.mxu0 0
      %6425 = vmatmul.mubr.bf16.gmra.mrb[0].mxu0 %v3724
      %v6426 = vpop.f32.mrb[0].mxu0
      %v6427 = vadd.f32 0.0, %v6426
      %v6428 = vpop.f32.mrb[0].mxu0
      %v6429 = vpop.f32.mrb[0].mxu0
      %v6430 = vadd.f32 0.0, %v6429
      %v6431 = vpop.f32.mrb[0].mxu0
      %6432 = vmatprep.mubr.bf16.mxu0 0
      %6433 = vmatmul.mubr.bf16.gmra.mrb[0].mxu0 %v3727
      %v6434 = vpop.f32.mrb[0].mxu0
      %v6435 = vadd.f32 0.0, %v6434
      %v6436 = vpop.f32.mrb[0].mxu0
      %v6437 = vpop.f32.mrb[0].mxu0
      %v6438 = vadd.f32 0.0, %v6437
      %v6439 = vpop.f32.mrb[0].mxu0
      %6440 = vmatprep.mubr.bf16.mxu0 0
      %6441 = vmatmul.mubr.bf16.gmra.mrb[0].mxu0 %v3730
      %v6442 = vpop.f32.mrb[0].mxu0
      %v6443 = vadd.f32 0.0, %v6442
      %v6444 = vpop.f32.mrb[0].mxu0
      %v6445 = vpop.f32.mrb[0].mxu0
      %v6446 = vadd.f32 0.0, %v6445
      %v6447 = vpop.f32.mrb[0].mxu0
      %6448 = vmatprep.mubr.bf16.mxu0 0
      %6449 = vmatmul.mubr.bf16.gmra.mrb[0].mxu0 %v3733
      %v6450 = vpop.f32.mrb[0].mxu0
      %v6451 = vadd.f32 0.0, %v6450
      %v6452 = vpop.f32.mrb[0].mxu0
      %v6453 = vpop.f32.mrb[0].mxu0
      %v6454 = vadd.f32 0.0, %v6453
      %v6455 = vpop.f32.mrb[0].mxu0
      %6456 = vmatprep.mubr.bf16.mxu0 0
      %6457 = vmatmul.mubr.bf16.gmra.mrb[0].mxu0 %v3736
      %v6458 = vpop.f32.mrb[0].mxu0
      %v6459 = vadd.f32 0.0, %v6458
      %v6460 = vpop.f32.mrb[0].mxu0
      %v6461 = vpop.f32.mrb[0].mxu0
      %v6462 = vadd.f32 0.0, %v6461
      %v6463 = vpop.f32.mrb[0].mxu0
      %6464 = vmatprep.mubr.bf16.mxu0 0
      %6465 = vmatmul.mubr.bf16.gmra.mrb[0].mxu0 %v3739
      %v6466 = vpop.f32.mrb[0].mxu0
      %v6467 = vadd.f32 0.0, %v6466
      %v6468 = vpop.f32.mrb[0].mxu0
      %v6469 = vpop.f32.mrb[0].mxu0
      %v6470 = vadd.f32 0.0, %v6469
      %v6471 = vpop.f32.mrb[0].mxu0
      %6472 = vmatprep.mubr.bf16.mxu0 0
      %6473 = vmatmul.mubr.bf16.gmra.mrb[0].mxu0 %v3742
      %v6474 = vpop.f32.mrb[0].mxu0
      %v6475 = vadd.f32 0.0, %v6474
      %v6476 = vpop.f32.mrb[0].mxu0
      %v6477 = vpop.f32.mrb[0].mxu0
      %v6478 = vadd.f32 0.0, %v6477
      %v6479 = vpop.f32.mrb[0].mxu0
      %6480 = vmatprep.mubr.bf16.mxu0 0
      %6481 = vmatmul.mubr.bf16.gmra.mrb[0].mxu0 %v3745
      %v6482 = vpop.f32.mrb[0].mxu0
      %v6483 = vadd.f32 0.0, %v6482
      %v6484 = vpop.f32.mrb[0].mxu0
      %v6485 = vpop.f32.mrb[0].mxu0
      %v6486 = vadd.f32 0.0, %v6485
      %v6487 = vpop.f32.mrb[0].mxu0
      %6488 = vmatprep.mubr.bf16.mxu0 0
      %6489 = vmatmul.mubr.bf16.gmra.mrb[0].mxu0 %v3748
      %v6490 = vpop.f32.mrb[0].mxu0
      %v6491 = vadd.f32 0.0, %v6490
      %v6492 = vpop.f32.mrb[0].mxu0
      %v6493 = vpop.f32.mrb[0].mxu0
      %v6494 = vadd.f32 0.0, %v6493
      %v6495 = vpop.f32.mrb[0].mxu0
      %6496 = vmatprep.mubr.bf16.mxu0 0
      %6497 = vmatmul.mubr.bf16.gmra.mrb[0].mxu0 %v3751
      %v6498 = vpop.f32.mrb[0].mxu0
      %v6499 = vadd.f32 0.0, %v6498
      %v6500 = vpop.f32.mrb[0].mxu0
      %v6501 = vpop.f32.mrb[0].mxu0
      %v6502 = vadd.f32 0.0, %v6501
      %v6503 = vpop.f32.mrb[0].mxu0
      %6504 = vmatprep.mubr.bf16.mxu0 0
      %6505 = vmatmul.mubr.bf16.gmra.mrb[0].mxu0 %v3754
      %v6506 = vpop.f32.mrb[0].mxu0
      %v6507 = vadd.f32 0.0, %v6506
      %v6508 = vpop.f32.mrb[0].mxu0
      %v6509 = vpop.f32.mrb[0].mxu0
      %v6510 = vadd.f32 0.0, %v6509
      %v6511 = vpop.f32.mrb[0].mxu0
      %6512 = vmatprep.mubr.bf16.mxu0 0
      %6513 = vmatmul.mubr.bf16.gmra.mrb[0].mxu0 %v3757
      %v6514 = vpop.f32.mrb[0].mxu0
      %v6515 = vadd.f32 0.0, %v6514
      %v6516 = vpop.f32.mrb[0].mxu0
      %v6517 = vpop.f32.mrb[0].mxu0
      %v6518 = vadd.f32 0.0, %v6517
      %v6519 = vpop.f32.mrb[0].mxu0
      %6520 = vmatprep.mubr.bf16.mxu0 0
      %6521 = vmatmul.mubr.bf16.gmra.mrb[0].mxu0 %v3760
      %v6522 = vpop.f32.mrb[0].mxu0
      %v6523 = vadd.f32 0.0, %v6522
      %v6524 = vpop.f32.mrb[0].mxu0
      %v6525 = vpop.f32.mrb[0].mxu0
      %v6526 = vadd.f32 0.0, %v6525
      %v6527 = vpop.f32.mrb[0].mxu0
      %6528 = vmatprep.mubr.bf16.mxu0 0
      %6529 = vmatmul.mubr.bf16.gmra.mrb[0].mxu0 %v3763
      %v6530 = vpop.f32.mrb[0].mxu0
      %v6531 = vadd.f32 0.0, %v6530
      %v6532 = vpop.f32.mrb[0].mxu0
      %v6533 = vpop.f32.mrb[0].mxu0
      %v6534 = vadd.f32 0.0, %v6533
      %v6535 = vpop.f32.mrb[0].mxu0
      %6536 = vmatprep.mubr.bf16.mxu0 0
      %6537 = vmatmul.mubr.bf16.gmra.mrb[0].mxu0 %v3766
      %v6538 = vpop.f32.mrb[0].mxu0
      %v6539 = vadd.f32 0.0, %v6538
      %v6540 = vpop.f32.mrb[0].mxu0
      %v6541 = vpop.f32.mrb[0].mxu0
      %v6542 = vadd.f32 0.0, %v6541
      %v6543 = vpop.f32.mrb[0].mxu0
      %6544 = vmatprep.mubr.bf16.mxu0 0
      %6545 = vmatmul.mubr.bf16.gmra.mrb[0].mxu0 %v3769
      %v6546 = vpop.f32.mrb[0].mxu0
      %v6547 = vadd.f32 0.0, %v6546
      %v6548 = vpop.f32.mrb[0].mxu0
      %v6549 = vpop.f32.mrb[0].mxu0
      %v6550 = vadd.f32 0.0, %v6549
      %v6551 = vpop.f32.mrb[0].mxu0
      %6552 = vmatprep.mubr.bf16.mxu0 0
      %6553 = vmatmul.mubr.bf16.gmra.mrb[0].mxu0 %v3772
      %v6554 = vpop.f32.mrb[0].mxu0
      %v6555 = vadd.f32 0.0, %v6554
      %v6556 = vpop.f32.mrb[0].mxu0
      %v6557 = vpop.f32.mrb[0].mxu0
      %v6558 = vadd.f32 0.0, %v6557
      %v6559 = vpop.f32.mrb[0].mxu0
      %6560 = vmatprep.mubr.bf16.mxu0 0
      %6561 = vmatmul.mubr.bf16.gmra.mrb[0].mxu0 %v3775
      %v6562 = vpop.f32.mrb[0].mxu0
      %v6563 = vadd.f32 0.0, %v6562
      %v6564 = vpop.f32.mrb[0].mxu0
      %v6565 = vpop.f32.mrb[0].mxu0
      %v6566 = vadd.f32 0.0, %v6565
      %v6567 = vpop.f32.mrb[0].mxu0
      %6568 = vmatprep.mubr.bf16.mxu0 0
      %6569 = vmatmul.mubr.bf16.gmra.mrb[0].mxu0 %v3778
      %v6570 = vpop.f32.mrb[0].mxu0
      %v6571 = vadd.f32 0.0, %v6570
      %v6572 = vpop.f32.mrb[0].mxu0
      %v6573 = vpop.f32.mrb[0].mxu0
      %v6574 = vadd.f32 0.0, %v6573
      %v6575 = vpop.f32.mrb[0].mxu0
      %6576 = vmatprep.mubr.bf16.mxu0 0
      %6577 = vmatmul.mubr.bf16.gmra.mrb[0].mxu0 %v3781
      %v6578 = vpop.f32.mrb[0].mxu0
      %v6579 = vadd.f32 0.0, %v6578
      %v6580 = vpop.f32.mrb[0].mxu0
      %v6581 = vpop.f32.mrb[0].mxu0
      %v6582 = vpop.f32.mrb[0].mxu0
      %6583 = vdwg.mxu0
      %v6584 = vadd.f32 %v6338, %v6419
      %v6585 = vadd.f32 %v6339, %v6422
      %v6586 = vadd.f32 %v6340, %v6427
      %v6587 = vadd.f32 %v6341, %v6430
      %v6588 = vadd.f32 %v6342, %v6435
      %v6589 = vadd.f32 %v6343, %v6438
      %v6590 = vadd.f32 %v6344, %v6443
      %v6591 = vadd.f32 %v6345, %v6446
      %v6592 = vadd.f32 %v6346, %v6451
      %v6593 = vadd.f32 %v6347, %v6454
      %v6594 = vadd.f32 %v6348, %v6459
      %v6595 = vadd.f32 %v6349, %v6462
      %v6596 = vadd.f32 %v6350, %v6467
      %v6597 = vadd.f32 %v6351, %v6470
      %v6598 = vadd.f32 %v6352, %v6475
      %v6599 = vadd.f32 %v6353, %v6478
      %v6600 = vadd.f32 %v6354, %v6483
      %v6601 = vadd.f32 %v6355, %v6486
      %v6602 = vadd.f32 %v6356, %v6491
      %v6603 = vadd.f32 %v6357, %v6494
      %v6604 = vadd.f32 %v6358, %v6499
      %v6605 = vadd.f32 %v6359, %v6502
      %v6606 = vadd.f32 %v6360, %v6507
      %v6607 = vadd.f32 %v6361, %v6510
      %v6608 = vadd.f32 %v6362, %v6515
      %v6609 = vadd.f32 %v6363, %v6518
      %v6610 = vadd.f32 %v6364, %v6523
      %v6611 = vadd.f32 %v6365, %v6526
      %v6612 = vadd.f32 %v6366, %v6531
      %v6613 = vadd.f32 %v6367, %v6534
      %v6614 = vadd.f32 %v6368, %v6539
      %v6615 = vadd.f32 %v6369, %v6542
      %v6616 = vadd.f32 %v6370, %v6547
      %v6617 = vadd.f32 %v6371, %v6550
      %v6618 = vadd.f32 %v6372, %v6555
      %v6619 = vadd.f32 %v6373, %v6558
      %v6620 = vadd.f32 %v6374, %v6563
      %v6621 = vadd.f32 %v6375, %v6566
      %v6622 = vadd.f32 %v6376, %v6571
      %v6623 = vadd.f32 %v6377, %v6574
      %v6624 = vadd.f32 %v6378, %v6579
      %v6625 = vld [vmem:[%s5] sm:$0x1]
      %v6627 = vlaneseq
      %v6628 = vshrl.u32 %v6627, 7
      %v6629 = vsub.s32 0, %v6628
      %v6630 = vrot.slane %v6625, %v6629
      %v6632 = vadd.f32 %v6584, %v6630
      %v6633 = vadd.f32 %v6585, %v6630
      %v6634 = vadd.f32 %v6586, %v6630
      %v6635 = vadd.f32 %v6587, %v6630
      %v6636 = vadd.f32 %v6588, %v6630
      %v6637 = vadd.f32 %v6589, %v6630
      %v6638 = vadd.f32 %v6590, %v6630
      %v6639 = vadd.f32 %v6591, %v6630
      %v6640 = vadd.f32 %v6592, %v6630
      %v6641 = vadd.f32 %v6593, %v6630
      %v6642 = vadd.f32 %v6594, %v6630
      %v6643 = vadd.f32 %v6595, %v6630
      %v6644 = vadd.f32 %v6596, %v6630
      %v6645 = vadd.f32 %v6597, %v6630
      %v6646 = vadd.f32 %v6598, %v6630
      %v6647 = vadd.f32 %v6599, %v6630
      %v6648 = vadd.f32 %v6600, %v6630
      %v6649 = vadd.f32 %v6601, %v6630
      %v6650 = vadd.f32 %v6602, %v6630
      %v6651 = vadd.f32 %v6603, %v6630
      %v6652 = vadd.f32 %v6604, %v6630
      %v6653 = vadd.f32 %v6605, %v6630
      %v6654 = vadd.f32 %v6606, %v6630
      %v6655 = vadd.f32 %v6607, %v6630
      %v6656 = vadd.f32 %v6608, %v6630
      %v6657 = vadd.f32 %v6609, %v6630
      %v6658 = vadd.f32 %v6610, %v6630
      %v6659 = vadd.f32 %v6611, %v6630
      %v6660 = vadd.f32 %v6612, %v6630
      %v6661 = vadd.f32 %v6613, %v6630
      %v6662 = vadd.f32 %v6614, %v6630
      %v6663 = vadd.f32 %v6615, %v6630
      %v6664 = vadd.f32 %v6616, %v6630
      %v6665 = vadd.f32 %v6617, %v6630
      %v6666 = vadd.f32 %v6618, %v6630
      %v6667 = vadd.f32 %v6619, %v6630
      %v6668 = vadd.f32 %v6620, %v6630
      %v6669 = vadd.f32 %v6621, %v6630
      %v6670 = vadd.f32 %v6622, %v6630
      %v6671 = vadd.f32 %v6623, %v6630
      %v6672 = vadd.f32 %v6624, %v6630
      %v6673 = vmax.f32 %v6632, 0.0
      %v6674 = vmax.f32 %v6633, 0.0
      %v6675 = vmax.f32 %v6634, 0.0
      %v6676 = vmax.f32 %v6635, 0.0
      %v6677 = vmax.f32 %v6636, 0.0
      %v6678 = vmax.f32 %v6637, 0.0
      %v6679 = vmax.f32 %v6638, 0.0
      %v6680 = vmax.f32 %v6639, 0.0
      %v6681 = vmax.f32 %v6640, 0.0
      %v6682 = vmax.f32 %v6641, 0.0
      %v6683 = vmax.f32 %v6642, 0.0
      %v6684 = vmax.f32 %v6643, 0.0
      %v6685 = vmax.f32 %v6644, 0.0
      %v6686 = vmax.f32 %v6645, 0.0
      %v6687 = vmax.f32 %v6646, 0.0
      %v6688 = vmax.f32 %v6647, 0.0
      %v6689 = vmax.f32 %v6648, 0.0
      %v6690 = vmax.f32 %v6649, 0.0
      %v6691 = vmax.f32 %v6650, 0.0
      %v6692 = vmax.f32 %v6651, 0.0
      %v6693 = vmax.f32 %v6652, 0.0
      %v6694 = vmax.f32 %v6653, 0.0
      %v6695 = vmax.f32 %v6654, 0.0
      %v6696 = vmax.f32 %v6655, 0.0
      %v6697 = vmax.f32 %v6656, 0.0
      %v6698 = vmax.f32 %v6657, 0.0
      %v6699 = vmax.f32 %v6658, 0.0
      %v6700 = vmax.f32 %v6659, 0.0
      %v6701 = vmax.f32 %v6660, 0.0
      %v6702 = vmax.f32 %v6661, 0.0
      %v6703 = vmax.f32 %v6662, 0.0
      %v6704 = vmax.f32 %v6663, 0.0
      %v6705 = vmax.f32 %v6664, 0.0
      %v6706 = vmax.f32 %v6665, 0.0
      %v6707 = vmax.f32 %v6666, 0.0
      %v6708 = vmax.f32 %v6667, 0.0
      %v6709 = vmax.f32 %v6668, 0.0
      %v6710 = vmax.f32 %v6669, 0.0
      %v6711 = vmax.f32 %v6670, 0.0
      %v6712 = vmax.f32 %v6671, 0.0
      %v6713 = vmax.f32 %v6672, 0.0
      %v6714 = vld [vmem:[%s1] sm:$0xff]
      %v6715 = vld [vmem:[%s1 + $0x8] sm:$0xff]
      %v6716 = vld [vmem:[%s1 + $0x10] sm:$0xff]
      %v6717 = vld [vmem:[%s1 + $0x18] sm:$0xff]
      %v6718 = vld [vmem:[%s1 + $0x20] sm:$0xff]
      %v6719 = vld [vmem:[%s1 + $0x28] sm:$0xff]
      %v6720 = vld [vmem:[%s1 + $0x30] sm:$0xff]
      %v6721 = vld [vmem:[%s1 + $0x38] sm:$0xff]
      %v6722 = vld [vmem:[%s1 + $0x40] sm:$0xff]
      %v6723 = vld [vmem:[%s1 + $0x48] sm:$0xff]
      %v6724 = vld [vmem:[%s1 + $0x50] sm:$0xff]
      %v6725 = vld [vmem:[%s1 + $0x58] sm:$0xff]
      %v6726 = vld [vmem:[%s1 + $0x60] sm:$0xff]
      %v6727 = vld [vmem:[%s1 + $0x68] sm:$0xff]
      %v6728 = vld [vmem:[%s1 + $0x70] sm:$0xff]
      %v6729 = vld [vmem:[%s1 + $0x78] sm:$0xff]
      %v6730 = vld [vmem:[%s1 + $0x80] sm:$0xff]
      %v6731 = vld [vmem:[%s1 + $0x88] sm:$0xff]
      %v6732 = vld [vmem:[%s1 + $0x90] sm:$0xff]
      %v6733 = vld [vmem:[%s1 + $0x98] sm:$0xff]
      %v6734 = vld [vmem:[%s1 + $0xa0] sm:$0xff]
      %v6735 = vld [vmem:[%s1 + $0xa8] sm:$0xff]
      %v6736 = vld [vmem:[%s1 + $0xb0] sm:$0xff]
      %v6737 = vld [vmem:[%s1 + $0xb8] sm:$0xff]
      %v6738 = vld [vmem:[%s1 + $0xc0] sm:$0xff]
      %v6739 = vld [vmem:[%s1 + $0xc8] sm:$0xff]
      %v6740 = vld [vmem:[%s1 + $0xd0] sm:$0xff]
      %v6741 = vld [vmem:[%s1 + $0xd8] sm:$0xff]
      %v6742 = vld [vmem:[%s1 + $0xe0] sm:$0xff]
      %v6743 = vld [vmem:[%s1 + $0xe8] sm:$0xff]
      %v6744 = vld [vmem:[%s1 + $0xf0] sm:$0xff]
      %v6745 = vld [vmem:[%s1 + $0xf8] sm:$0xff]
      %v6746 = vld [vmem:[%s1 + $0x100] sm:$0xff]
      %v6747 = vld [vmem:[%s1 + $0x108] sm:$0xff]
      %v6748 = vld [vmem:[%s1 + $0x110] sm:$0xff]
      %v6749 = vld [vmem:[%s1 + $0x118] sm:$0xff]
      %v6750 = vld [vmem:[%s1 + $0x120] sm:$0xff]
      %v6751 = vld [vmem:[%s1 + $0x128] sm:$0xff]
      %v6752 = vld [vmem:[%s1 + $0x130] sm:$0xff]
      %v6753 = vld [vmem:[%s1 + $0x138] sm:$0xff]
      %v6754 = vld [vmem:[%s1 + $0x140] sm:$0xff]
      %6756 = vset.pattern.permute.xlu0 0
      %6757 = vperm.xlu0 %6756, %v6714
      %v6758 = vpop.permute.xlu0 %6757
      %6761 = vset.pattern.permute.xlu0 0
      %6762 = vperm.xlu0 %6761, %v6715
      %v6763 = vpop.permute.xlu0 %6762
      %6766 = vset.pattern.permute.xlu0 0
      %6767 = vperm.xlu0 %6766, %v6716
      %v6768 = vpop.permute.xlu0 %6767
      %6771 = vset.pattern.permute.xlu0 0
      %6772 = vperm.xlu0 %6771, %v6717
      %v6773 = vpop.permute.xlu0 %6772
      %6776 = vset.pattern.permute.xlu0 0
      %6777 = vperm.xlu0 %6776, %v6718
      %v6778 = vpop.permute.xlu0 %6777
      %6781 = vset.pattern.permute.xlu0 0
      %6782 = vperm.xlu0 %6781, %v6719
      %v6783 = vpop.permute.xlu0 %6782
      %6786 = vset.pattern.permute.xlu0 0
      %6787 = vperm.xlu0 %6786, %v6720
      %v6788 = vpop.permute.xlu0 %6787
      %6791 = vset.pattern.permute.xlu0 0
      %6792 = vperm.xlu0 %6791, %v6721
      %v6793 = vpop.permute.xlu0 %6792
      %6796 = vset.pattern.permute.xlu0 0
      %6797 = vperm.xlu0 %6796, %v6722
      %v6798 = vpop.permute.xlu0 %6797
      %6801 = vset.pattern.permute.xlu0 0
      %6802 = vperm.xlu0 %6801, %v6723
      %v6803 = vpop.permute.xlu0 %6802
      %6806 = vset.pattern.permute.xlu0 0
      %6807 = vperm.xlu0 %6806, %v6724
      %v6808 = vpop.permute.xlu0 %6807
      %6811 = vset.pattern.permute.xlu0 0
      %6812 = vperm.xlu0 %6811, %v6725
      %v6813 = vpop.permute.xlu0 %6812
      %6816 = vset.pattern.permute.xlu0 0
      %6817 = vperm.xlu0 %6816, %v6726
      %v6818 = vpop.permute.xlu0 %6817
      %6821 = vset.pattern.permute.xlu0 0
      %6822 = vperm.xlu0 %6821, %v6727
      %v6823 = vpop.permute.xlu0 %6822
      %6826 = vset.pattern.permute.xlu0 0
      %6827 = vperm.xlu0 %6826, %v6728
      %v6828 = vpop.permute.xlu0 %6827
      %6831 = vset.pattern.permute.xlu0 0
      %6832 = vperm.xlu0 %6831, %v6729
      %v6833 = vpop.permute.xlu0 %6832
      %6836 = vset.pattern.permute.xlu0 0
      %6837 = vperm.xlu0 %6836, %v6730
      %v6838 = vpop.permute.xlu0 %6837
      %6841 = vset.pattern.permute.xlu0 0
      %6842 = vperm.xlu0 %6841, %v6731
      %v6843 = vpop.permute.xlu0 %6842
      %6846 = vset.pattern.permute.xlu0 0
      %6847 = vperm.xlu0 %6846, %v6732
      %v6848 = vpop.permute.xlu0 %6847
      %6851 = vset.pattern.permute.xlu0 0
      %6852 = vperm.xlu0 %6851, %v6733
      %v6853 = vpop.permute.xlu0 %6852
      %6856 = vset.pattern.permute.xlu0 0
      %6857 = vperm.xlu0 %6856, %v6734
      %v6858 = vpop.permute.xlu0 %6857
      %6861 = vset.pattern.permute.xlu0 0
      %6862 = vperm.xlu0 %6861, %v6735
      %v6863 = vpop.permute.xlu0 %6862
      %6866 = vset.pattern.permute.xlu0 0
      %6867 = vperm.xlu0 %6866, %v6736
      %v6868 = vpop.permute.xlu0 %6867
      %6871 = vset.pattern.permute.xlu0 0
      %6872 = vperm.xlu0 %6871, %v6737
      %v6873 = vpop.permute.xlu0 %6872
      %6876 = vset.pattern.permute.xlu0 0
      %6877 = vperm.xlu0 %6876, %v6738
      %v6878 = vpop.permute.xlu0 %6877
      %6881 = vset.pattern.permute.xlu0 0
      %6882 = vperm.xlu0 %6881, %v6739
      %v6883 = vpop.permute.xlu0 %6882
      %6886 = vset.pattern.permute.xlu0 0
      %6887 = vperm.xlu0 %6886, %v6740
      %v6888 = vpop.permute.xlu0 %6887
      %6891 = vset.pattern.permute.xlu0 0
      %6892 = vperm.xlu0 %6891, %v6741
      %v6893 = vpop.permute.xlu0 %6892
      %6896 = vset.pattern.permute.xlu0 0
      %6897 = vperm.xlu0 %6896, %v6742
      %v6898 = vpop.permute.xlu0 %6897
      %6901 = vset.pattern.permute.xlu0 0
      %6902 = vperm.xlu0 %6901, %v6743
      %v6903 = vpop.permute.xlu0 %6902
      %6906 = vset.pattern.permute.xlu0 0
      %6907 = vperm.xlu0 %6906, %v6744
      %v6908 = vpop.permute.xlu0 %6907
      %6911 = vset.pattern.permute.xlu0 0
      %6912 = vperm.xlu0 %6911, %v6745
      %v6913 = vpop.permute.xlu0 %6912
      %6916 = vset.pattern.permute.xlu0 0
      %6917 = vperm.xlu0 %6916, %v6746
      %v6918 = vpop.permute.xlu0 %6917
      %6921 = vset.pattern.permute.xlu0 0
      %6922 = vperm.xlu0 %6921, %v6747
      %v6923 = vpop.permute.xlu0 %6922
      %6926 = vset.pattern.permute.xlu0 0
      %6927 = vperm.xlu0 %6926, %v6748
      %v6928 = vpop.permute.xlu0 %6927
      %6931 = vset.pattern.permute.xlu0 0
      %6932 = vperm.xlu0 %6931, %v6749
      %v6933 = vpop.permute.xlu0 %6932
      %6936 = vset.pattern.permute.xlu0 0
      %6937 = vperm.xlu0 %6936, %v6750
      %v6938 = vpop.permute.xlu0 %6937
      %6941 = vset.pattern.permute.xlu0 0
      %6942 = vperm.xlu0 %6941, %v6751
      %v6943 = vpop.permute.xlu0 %6942
      %6946 = vset.pattern.permute.xlu0 0
      %6947 = vperm.xlu0 %6946, %v6752
      %v6948 = vpop.permute.xlu0 %6947
      %6951 = vset.pattern.permute.xlu0 0
      %6952 = vperm.xlu0 %6951, %v6753
      %v6953 = vpop.permute.xlu0 %6952
      %6956 = vset.pattern.permute.xlu0 0
      %6957 = vperm.xlu0 %6956, %v6754
      %v6958 = vpop.permute.xlu0 %6957
      %v6960 = vmul.f32 %v6673, %v6758
      %v6961 = vmul.f32 %v6674, %v6763
      %v6962 = vmul.f32 %v6675, %v6768
      %v6963 = vmul.f32 %v6676, %v6773
      %v6964 = vmul.f32 %v6677, %v6778
      %v6965 = vmul.f32 %v6678, %v6783
      %v6966 = vmul.f32 %v6679, %v6788
      %v6967 = vmul.f32 %v6680, %v6793
      %v6968 = vmul.f32 %v6681, %v6798
      %v6969 = vmul.f32 %v6682, %v6803
      %v6970 = vmul.f32 %v6683, %v6808
      %v6971 = vmul.f32 %v6684, %v6813
      %v6972 = vmul.f32 %v6685, %v6818
      %v6973 = vmul.f32 %v6686, %v6823
      %v6974 = vmul.f32 %v6687, %v6828
      %v6975 = vmul.f32 %v6688, %v6833
      %v6976 = vmul.f32 %v6689, %v6838
      %v6977 = vmul.f32 %v6690, %v6843
      %v6978 = vmul.f32 %v6691, %v6848
      %v6979 = vmul.f32 %v6692, %v6853
      %v6980 = vmul.f32 %v6693, %v6858
      %v6981 = vmul.f32 %v6694, %v6863
      %v6982 = vmul.f32 %v6695, %v6868
      %v6983 = vmul.f32 %v6696, %v6873
      %v6984 = vmul.f32 %v6697, %v6878
      %v6985 = vmul.f32 %v6698, %v6883
      %v6986 = vmul.f32 %v6699, %v6888
      %v6987 = vmul.f32 %v6700, %v6893
      %v6988 = vmul.f32 %v6701, %v6898
      %v6989 = vmul.f32 %v6702, %v6903
      %v6990 = vmul.f32 %v6703, %v6908
      %v6991 = vmul.f32 %v6704, %v6913
      %v6992 = vmul.f32 %v6705, %v6918
      %v6993 = vmul.f32 %v6706, %v6923
      %v6994 = vmul.f32 %v6707, %v6928
      %v6995 = vmul.f32 %v6708, %v6933
      %v6996 = vmul.f32 %v6709, %v6938
      %v6997 = vmul.f32 %v6710, %v6943
      %v6998 = vmul.f32 %v6711, %v6948
      %v6999 = vmul.f32 %v6712, %v6953
      %v7000 = vmul.f32 %v6713, %v6958
      %v7001 = vsel %vm4403, %v6960, 0.0
      %v7002 = vsel %vm4403, %v6961, 0.0
      %v7003 = vadd.f32 %v7001, %v7002
      %v7004 = vsel %vm4403, %v6962, 0.0
      %v7005 = vadd.f32 %v7003, %v7004
      %v7006 = vsel %vm4403, %v6963, 0.0
      %v7007 = vadd.f32 %v7005, %v7006
      %v7008 = vsel %vm4403, %v6964, 0.0
      %v7009 = vadd.f32 %v7007, %v7008
      %v7010 = vsel %vm4403, %v6965, 0.0
      %v7011 = vadd.f32 %v7009, %v7010
      %v7012 = vsel %vm4403, %v6966, 0.0
      %v7013 = vadd.f32 %v7011, %v7012
      %v7014 = vsel %vm4403, %v6967, 0.0
      %v7015 = vadd.f32 %v7013, %v7014
      %v7016 = vsel %vm4403, %v6968, 0.0
      %v7017 = vadd.f32 %v7015, %v7016
      %v7018 = vsel %vm4403, %v6969, 0.0
      %v7019 = vadd.f32 %v7017, %v7018
      %v7020 = vsel %vm4403, %v6970, 0.0
      %v7021 = vadd.f32 %v7019, %v7020
      %v7022 = vsel %vm4403, %v6971, 0.0
      %v7023 = vadd.f32 %v7021, %v7022
      %v7024 = vsel %vm4403, %v6972, 0.0
      %v7025 = vadd.f32 %v7023, %v7024
      %v7026 = vsel %vm4403, %v6973, 0.0
      %v7027 = vadd.f32 %v7025, %v7026
      %v7028 = vsel %vm4403, %v6974, 0.0
      %v7029 = vadd.f32 %v7027, %v7028
      %v7030 = vsel %vm4403, %v6975, 0.0
      %v7031 = vadd.f32 %v7029, %v7030
      %v7032 = vsel %vm4403, %v6976, 0.0
      %v7033 = vadd.f32 %v7031, %v7032
      %v7034 = vsel %vm4403, %v6977, 0.0
      %v7035 = vadd.f32 %v7033, %v7034
      %v7036 = vsel %vm4403, %v6978, 0.0
      %v7037 = vadd.f32 %v7035, %v7036
      %v7038 = vsel %vm4403, %v6979, 0.0
      %v7039 = vadd.f32 %v7037, %v7038
      %v7040 = vsel %vm4403, %v6980, 0.0
      %v7041 = vadd.f32 %v7039, %v7040
      %v7042 = vsel %vm4403, %v6981, 0.0
      %v7043 = vadd.f32 %v7041, %v7042
      %v7044 = vsel %vm4403, %v6982, 0.0
      %v7045 = vadd.f32 %v7043, %v7044
      %v7046 = vsel %vm4403, %v6983, 0.0
      %v7047 = vadd.f32 %v7045, %v7046
      %v7048 = vsel %vm4403, %v6984, 0.0
      %v7049 = vadd.f32 %v7047, %v7048
      %v7050 = vsel %vm4403, %v6985, 0.0
      %v7051 = vadd.f32 %v7049, %v7050
      %v7052 = vsel %vm4403, %v6986, 0.0
      %v7053 = vadd.f32 %v7051, %v7052
      %v7054 = vsel %vm4403, %v6987, 0.0
      %v7055 = vadd.f32 %v7053, %v7054
      %v7056 = vsel %vm4403, %v6988, 0.0
      %v7057 = vadd.f32 %v7055, %v7056
      %v7058 = vsel %vm4403, %v6989, 0.0
      %v7059 = vadd.f32 %v7057, %v7058
      %v7060 = vsel %vm4403, %v6990, 0.0
      %v7061 = vadd.f32 %v7059, %v7060
      %v7062 = vsel %vm4403, %v6991, 0.0
      %v7063 = vadd.f32 %v7061, %v7062
      %v7064 = vsel %vm4403, %v6992, 0.0
      %v7065 = vadd.f32 %v7063, %v7064
      %v7066 = vsel %vm4403, %v6993, 0.0
      %v7067 = vadd.f32 %v7065, %v7066
      %v7068 = vsel %vm4403, %v6994, 0.0
      %v7069 = vadd.f32 %v7067, %v7068
      %v7070 = vsel %vm4403, %v6995, 0.0
      %v7071 = vadd.f32 %v7069, %v7070
      %v7072 = vsel %vm4403, %v6996, 0.0
      %v7073 = vadd.f32 %v7071, %v7072
      %v7074 = vsel %vm4403, %v6997, 0.0
      %v7075 = vadd.f32 %v7073, %v7074
      %v7076 = vsel %vm4403, %v6998, 0.0
      %v7077 = vadd.f32 %v7075, %v7076
      %v7078 = vsel %vm4403, %v6999, 0.0
      %v7079 = vadd.f32 %v7077, %v7078
      %v7080 = vsel %vm4403, %v7000, 0.0
      %v7081 = vadd.f32 %v7079, %v7080
      %v7082 = vrot.slane %v7081, 4
      %v7083 = vadd.f32 %v7081, %v7082
      %v7084 = vrot.slane %v7083, 2
      %v7085 = vadd.f32 %v7083, %v7084
      %v7086 = vrot.slane %v7085, 1
      %v7087 = vadd.f32 %v7085, %v7086
      %s7088 = scalar_lea.vmem [#allocation3], %s37
      %7089 = vst.msk [vmem:[%s7088] sm:$0x1] %vm4492, %v7087
      %p7090 = scmp.eq.s32.totalorder %s37, 15
      // Predicated region
      $region117: #{byol_forward.1} parent=115 // pred_check
        %p7091 = pneg %p7090
      $region118: #{byol_forward.1} parent=115 // pred_check_branch
        %7093 = sbr.rel (%p7091) target = $region120
      $region119: #{byol_forward.1} parent=115 // pred_region
        %v7094 = vld [vmem:[#allocation2] sm:$0xff]
        %v7095 = vld [vmem:[#allocation2 + $0x8] sm:$0xff]
        %v7096 = vld [vmem:[%s6] sm:$0xf]
        %v7097 = vld [vmem:[%s6 + $0x4] sm:$0xf]
        %v7098 = vld [vmem:[%s6 + $0x8] sm:$0xf]
        %v7099 = vld [vmem:[%s6 + $0xc] sm:$0xf]
        %v7100 = vld [vmem:[%s7] sm:$0x1]
        %v7101 = vld [vmem:[%s8] sm:$0x1]
        %v7102 = vld [vmem:[%s9] sm:$0x1]
        %v7103 = vld [vmem:[%s10] sm:$0xf]
        %v7104 = vld [vmem:[%s10 + $0x4] sm:$0xf]
        %v7105 = vld [vmem:[%s10 + $0x8] sm:$0xf]
        %v7106 = vld [vmem:[%s10 + $0xc] sm:$0xf]
        %v7107 = vld [vmem:[%s11] sm:$0x1]
        %v7108 = vpack.c.bf16 %v7095, %v7094
        %v7110 = vlaneseq
        %v7111 = vshrl.u32 %v7110, 7
        %v7112 = vsub.s32 0, %v7111
        %v7113 = vrot.slane %v7100, %v7112
        %v7119 = vunpack.c.l.b16 %v7096
        %v7120 = vunpack.c.l.b16 %v7097
        %v7121 = vunpack.c.l.b16 %v7098
        %v7122 = vunpack.c.l.b16 %v7099
        %v7123 = vpack.c.b16 %v7120, %v7119
        %v7124 = vpack.c.b16 %v7122, %v7121
        %v7128 = vsel %vm4403, %v7108, 0
        %7130 = vmatprep.subr.bf16.mxu0 0
        %7131 = vmatpush1.bf16.msra.mxu0 %v7123
        %7132 = vmatprep.subr.bf16.mxu0 0
        %7133 = vmatpush1.bf16.msra.mxu0 %v7124
        %7134 = vmatprep.subr.bf16.mxu0 0
        %7135 = vmatpush1.bf16.msra.mxu0 0
        %7136 = vmatprep.subr.bf16.mxu0 0
        %7137 = vmatpush1.bf16.msra.mxu0 0
        %7138 = vmatprep.subr.bf16.mxu0 0
        %7139 = vmatpush1.bf16.msra.mxu0 0
        %7140 = vmatprep.subr.bf16.mxu0 0
        %7141 = vmatpush1.bf16.msra.mxu0 0
        %7142 = vmatprep.subr.bf16.mxu0 0
        %7143 = vmatpush1.bf16.msra.mxu0 0
        %7144 = vmatprep.subr.bf16.mxu0 0
        %7145 = vmatpush1.bf16.msra.mxu0 0
        %7146 = vmatprep.subr.bf16.mxu0 0
        %7147 = vmatpush1.bf16.msra.mxu0 0
        %7148 = vmatprep.subr.bf16.mxu0 0
        %7149 = vmatpush1.bf16.msra.mxu0 0
        %7150 = vmatprep.subr.bf16.mxu0 0
        %7151 = vmatpush1.bf16.msra.mxu0 0
        %7152 = vmatprep.subr.bf16.mxu0 0
        %7153 = vmatpush1.bf16.msra.mxu0 0
        %7154 = vmatprep.subr.bf16.mxu0 0
        %7155 = vmatpush1.bf16.msra.mxu0 0
        %7156 = vmatprep.subr.bf16.mxu0 0
        %7157 = vmatpush1.bf16.msra.mxu0 0
        %7158 = vmatprep.subr.bf16.mxu0 0
        %7159 = vmatpush1.bf16.msra.mxu0 0
        %7160 = vmatprep.subr.bf16.mxu0 0
        %7161 = vmatpush1.bf16.msra.mxu0 0
        %7162 = vmatprep.mubr.bf16.mxu0 0
        %7163 = vmatmul.mubr.bf16.gmra.mrb[0].mxu0 %v7128
        %v7164 = vpop.f32.mrb[0].mxu0
        %v7165 = vadd.f32 %v7113, %v7164
        %v7166 = vpop.f32.mrb[0].mxu0
        %v7167 = vpop.f32.mrb[0].mxu0
        %v7168 = vadd.f32 %v7113, %v7167
        %v7169 = vpop.f32.mrb[0].mxu0
        %7170 = vdwg.mxu0
        %v7171 = vsel %vm4403, %v7165, 0.0
        %v7172 = vrot.slane %v7171, 4
        %v7173 = vadd.f32 %v7171, %v7172
        %v7174 = vrot.slane %v7173, 2
        %v7175 = vadd.f32 %v7173, %v7174
        %v7176 = vrot.slane %v7175, 1
        %v7177 = vadd.f32 %v7175, %v7176
        %v7178 = vrcp.pop 8.0
        %v7179 = vmul.f32 %v7177, %v7178
        %v7180 = vsub.f32 %v7165, %v7179
        %v7181 = vmul.f32 %v7180, %v7180
        %v7182 = vsel %vm4403, %v7181, 0.0
        %v7183 = vrot.slane %v7182, 4
        %v7184 = vadd.f32 %v7182, %v7183
        %v7185 = vrot.slane %v7184, 2
        %v7186 = vadd.f32 %v7184, %v7185
        %v7187 = vrot.slane %v7186, 1
        %v7188 = vadd.f32 %v7186, %v7187
        %v7189 = vmul.f32 %v7188, %v7178
        %v7190 = vadd.f32 %v7189, 1e-05
        %v7191 = vrsqrt.pop %v7190
        %v7192 = vmul.f32 %v7180, %v7191
        %v7193 = vsel %vm4403, %v7168, 0.0
        %v7194 = vrot.slane %v7193, 4
        %v7195 = vadd.f32 %v7193, %v7194
        %v7196 = vrot.slane %v7195, 2
        %v7197 = vadd.f32 %v7195, %v7196
        %v7198 = vrot.slane %v7197, 1
        %v7199 = vadd.f32 %v7197, %v7198
        %v7200 = vmul.f32 %v7199, %v7178
        %v7201 = vsub.f32 %v7168, %v7200
        %v7202 = vmul.f32 %v7201, %v7201
        %v7203 = vsel %vm4403, %v7202, 0.0
        %v7204 = vrot.slane %v7203, 4
        %v7205 = vadd.f32 %v7203, %v7204
        %v7206 = vrot.slane %v7205, 2
        %v7207 = vadd.f32 %v7205, %v7206
        %v7208 = vrot.slane %v7207, 1
        %v7209 = vadd.f32 %v7207, %v7208
        %v7210 = vmul.f32 %v7209, %v7178
        %v7211 = vadd.f32 %v7210, 1e-05
        %v7212 = vrsqrt.pop %v7211
        %v7213 = vmul.f32 %v7201, %v7212
        %v7215 = vlaneseq
        %v7216 = vshrl.u32 %v7215, 7
        %v7217 = vsub.s32 0, %v7216
        %v7218 = vrot.slane %v7101, %v7217
        %v7220 = vmul.f32 %v7192, %v7218
        %v7221 = vmul.f32 %v7213, %v7218
        %v7223 = vlaneseq
        %v7224 = vshrl.u32 %v7223, 7
        %v7225 = vsub.s32 0, %v7224
        %v7226 = vrot.slane %v7102, %v7225
        %v7228 = vadd.f32 %v7220, %v7226
        %v7229 = vadd.f32 %v7221, %v7226
        %v7230 = vmax.f32 %v7228, 0.0
        %v7231 = vmax.f32 %v7229, 0.0
        %v7232 = vpack.c.bf16 %v7231, %v7230
        %v7234 = vlaneseq
        %v7235 = vshrl.u32 %v7234, 7
        %v7236 = vsub.s32 0, %v7235
        %v7237 = vrot.slane %v7107, %v7236
        %v7243 = vunpack.c.l.b16 %v7103
        %v7244 = vunpack.c.l.b16 %v7104
        %v7245 = vunpack.c.l.b16 %v7105
        %v7246 = vunpack.c.l.b16 %v7106
        %v7247 = vpack.c.b16 %v7244, %v7243
        %v7248 = vpack.c.b16 %v7246, %v7245
        %v7252 = vsel %vm4403, %v7232, 0
        %7254 = vmatprep.subr.bf16.mxu0 0
        %7255 = vmatpush1.bf16.msra.mxu0 %v7247
        %7256 = vmatprep.subr.bf16.mxu0 0
        %7257 = vmatpush1.bf16.msra.mxu0 %v7248
        %7258 = vmatprep.subr.bf16.mxu0 0
        %7259 = vmatpush1.bf16.msra.mxu0 0
        %7260 = vmatprep.subr.bf16.mxu0 0
        %7261 = vmatpush1.bf16.msra.mxu0 0
        %7262 = vmatprep.subr.bf16.mxu0 0
        %7263 = vmatpush1.bf16.msra.mxu0 0
        %7264 = vmatprep.subr.bf16.mxu0 0
        %7265 = vmatpush1.bf16.msra.mxu0 0
        %7266 = vmatprep.subr.bf16.mxu0 0
        %7267 = vmatpush1.bf16.msra.mxu0 0
        %7268 = vmatprep.subr.bf16.mxu0 0
        %7269 = vmatpush1.bf16.msra.mxu0 0
        %7270 = vmatprep.subr.bf16.mxu0 0
        %7271 = vmatpush1.bf16.msra.mxu0 0
        %7272 = vmatprep.subr.bf16.mxu0 0
        %7273 = vmatpush1.bf16.msra.mxu0 0
        %7274 = vmatprep.subr.bf16.mxu0 0
        %7275 = vmatpush1.bf16.msra.mxu0 0
        %7276 = vmatprep.subr.bf16.mxu0 0
        %7277 = vmatpush1.bf16.msra.mxu0 0
        %7278 = vmatprep.subr.bf16.mxu0 0
        %7279 = vmatpush1.bf16.msra.mxu0 0
        %7280 = vmatprep.subr.bf16.mxu0 0
        %7281 = vmatpush1.bf16.msra.mxu0 0
        %7282 = vmatprep.subr.bf16.mxu0 0
        %7283 = vmatpush1.bf16.msra.mxu0 0
        %7284 = vmatprep.subr.bf16.mxu0 0
        %7285 = vmatpush1.bf16.msra.mxu0 0
        %7286 = vmatprep.mubr.bf16.mxu0 0
        %7287 = vmatmul.mubr.bf16.gmra.mrb[0].mxu0 %v7252
        %v7288 = vpop.f32.mrb[0].mxu0
        %v7289 = vadd.f32 %v7237, %v7288
        %v7290 = vpop.f32.mrb[0].mxu0
        %v7291 = vpop.f32.mrb[0].mxu0
        %v7292 = vadd.f32 %v7237, %v7291
        %v7293 = vpop.f32.mrb[0].mxu0
        %7294 = vdwg.mxu0
        %v7295 = vld [vmem:[#allocation3] sm:$0xff]
        %v7296 = vld [vmem:[#allocation3 + $0x8] sm:$0xff]
        %v7297 = vld [vmem:[%s12] sm:$0xf]
        %v7298 = vld [vmem:[%s12 + $0x4] sm:$0xf]
        %v7299 = vld [vmem:[%s12 + $0x8] sm:$0xf]
        %v7300 = vld [vmem:[%s12 + $0xc] sm:$0xf]
        %v7301 = vld [vmem:[%s13] sm:$0x1]
        %v7302 = vld [vmem:[%s14] sm:$0x1]
        %v7303 = vld [vmem:[%s15] sm:$0x1]
        %v7304 = vld [vmem:[%s16] sm:$0xf]
        %v7305 = vld [vmem:[%s16 + $0x4] sm:$0xf]
        %v7306 = vld [vmem:[%s16 + $0x8] sm:$0xf]
        %v7307 = vld [vmem:[%s16 + $0xc] sm:$0xf]
        %v7308 = vld [vmem:[%s17] sm:$0x1]
        %v7309 = vpack.c.bf16 %v7296, %v7295
        %v7311 = vlaneseq
        %v7312 = vshrl.u32 %v7311, 7
        %v7313 = vsub.s32 0, %v7312
        %v7314 = vrot.slane %v7301, %v7313
        %v7320 = vunpack.c.l.b16 %v7297
        %v7321 = vunpack.c.l.b16 %v7298
        %v7322 = vunpack.c.l.b16 %v7299
        %v7323 = vunpack.c.l.b16 %v7300
        %v7324 = vpack.c.b16 %v7321, %v7320
        %v7325 = vpack.c.b16 %v7323, %v7322
        %v7329 = vsel %vm4403, %v7309, 0
        %7331 = vmatprep.subr.bf16.mxu0 0
        %7332 = vmatpush1.bf16.msra.mxu0 %v7324
        %7333 = vmatprep.subr.bf16.mxu0 0
        %7334 = vmatpush1.bf16.msra.mxu0 %v7325
        %7335 = vmatprep.subr.bf16.mxu0 0
        %7336 = vmatpush1.bf16.msra.mxu0 0
        %7337 = vmatprep.subr.bf16.mxu0 0
        %7338 = vmatpush1.bf16.msra.mxu0 0
        %7339 = vmatprep.subr.bf16.mxu0 0
        %7340 = vmatpush1.bf16.msra.mxu0 0
        %7341 = vmatprep.subr.bf16.mxu0 0
        %7342 = vmatpush1.bf16.msra.mxu0 0
        %7343 = vmatprep.subr.bf16.mxu0 0
        %7344 = vmatpush1.bf16.msra.mxu0 0
        %7345 = vmatprep.subr.bf16.mxu0 0
        %7346 = vmatpush1.bf16.msra.mxu0 0
        %7347 = vmatprep.subr.bf16.mxu0 0
        %7348 = vmatpush1.bf16.msra.mxu0 0
        %7349 = vmatprep.subr.bf16.mxu0 0
        %7350 = vmatpush1.bf16.msra.mxu0 0
        %7351 = vmatprep.subr.bf16.mxu0 0
        %7352 = vmatpush1.bf16.msra.mxu0 0
        %7353 = vmatprep.subr.bf16.mxu0 0
        %7354 = vmatpush1.bf16.msra.mxu0 0
        %7355 = vmatprep.subr.bf16.mxu0 0
        %7356 = vmatpush1.bf16.msra.mxu0 0
        %7357 = vmatprep.subr.bf16.mxu0 0
        %7358 = vmatpush1.bf16.msra.mxu0 0
        %7359 = vmatprep.subr.bf16.mxu0 0
        %7360 = vmatpush1.bf16.msra.mxu0 0
        %7361 = vmatprep.subr.bf16.mxu0 0
        %7362 = vmatpush1.bf16.msra.mxu0 0
        %7363 = vmatprep.mubr.bf16.mxu0 0
        %7364 = vmatmul.mubr.bf16.gmra.mrb[0].mxu0 %v7329
        %v7365 = vpop.f32.mrb[0].mxu0
        %v7366 = vadd.f32 %v7314, %v7365
        %v7367 = vpop.f32.mrb[0].mxu0
        %v7368 = vpop.f32.mrb[0].mxu0
        %v7369 = vadd.f32 %v7314, %v7368
        %v7370 = vpop.f32.mrb[0].mxu0
        %7371 = vdwg.mxu0
        %v7372 = vsel %vm4403, %v7366, 0.0
        %v7373 = vrot.slane %v7372, 4
        %v7374 = vadd.f32 %v7372, %v7373
        %v7375 = vrot.slane %v7374, 2
        %v7376 = vadd.f32 %v7374, %v7375
        %v7377 = vrot.slane %v7376, 1
        %v7378 = vadd.f32 %v7376, %v7377
        %v7379 = vmul.f32 %v7378, %v7178
        %v7380 = vsub.f32 %v7366, %v7379
        %v7381 = vmul.f32 %v7380, %v7380
        %v7382 = vsel %vm4403, %v7381, 0.0
        %v7383 = vrot.slane %v7382, 4
        %v7384 = vadd.f32 %v7382, %v7383
        %v7385 = vrot.slane %v7384, 2
        %v7386 = vadd.f32 %v7384, %v7385
        %v7387 = vrot.slane %v7386, 1
        %v7388 = vadd.f32 %v7386, %v7387
        %v7389 = vmul.f32 %v7388, %v7178
        %v7390 = vadd.f32 %v7389, 1e-05
        %v7391 = vrsqrt.pop %v7390
        %v7392 = vmul.f32 %v7380, %v7391
        %v7393 = vsel %vm4403, %v7369, 0.0
        %v7394 = vrot.slane %v7393, 4
        %v7395 = vadd.f32 %v7393, %v7394
        %v7396 = vrot.slane %v7395, 2
        %v7397 = vadd.f32 %v7395, %v7396
        %v7398 = vrot.slane %v7397, 1
        %v7399 = vadd.f32 %v7397, %v7398
        %v7400 = vmul.f32 %v7399, %v7178
        %v7401 = vsub.f32 %v7369, %v7400
        %v7402 = vmul.f32 %v7401, %v7401
        %v7403 = vsel %vm4403, %v7402, 0.0
        %v7404 = vrot.slane %v7403, 4
        %v7405 = vadd.f32 %v7403, %v7404
        %v7406 = vrot.slane %v7405, 2
        %v7407 = vadd.f32 %v7405, %v7406
        %v7408 = vrot.slane %v7407, 1
        %v7409 = vadd.f32 %v7407, %v7408
        %v7410 = vmul.f32 %v7409, %v7178
        %v7411 = vadd.f32 %v7410, 1e-05
        %v7412 = vrsqrt.pop %v7411
        %v7413 = vmul.f32 %v7401, %v7412
        %v7415 = vlaneseq
        %v7416 = vshrl.u32 %v7415, 7
        %v7417 = vsub.s32 0, %v7416
        %v7418 = vrot.slane %v7302, %v7417
        %v7420 = vmul.f32 %v7392, %v7418
        %v7421 = vmul.f32 %v7413, %v7418
        %v7423 = vlaneseq
        %v7424 = vshrl.u32 %v7423, 7
        %v7425 = vsub.s32 0, %v7424
        %v7426 = vrot.slane %v7303, %v7425
        %v7428 = vadd.f32 %v7420, %v7426
        %v7429 = vadd.f32 %v7421, %v7426
        %v7430 = vmax.f32 %v7428, 0.0
        %v7431 = vmax.f32 %v7429, 0.0
        %v7432 = vpack.c.bf16 %v7431, %v7430
        %v7434 = vlaneseq
        %v7435 = vshrl.u32 %v7434, 7
        %v7436 = vsub.s32 0, %v7435
        %v7437 = vrot.slane %v7308, %v7436
        %v7443 = vunpack.c.l.b16 %v7304
        %v7444 = vunpack.c.l.b16 %v7305
        %v7445 = vunpack.c.l.b16 %v7306
        %v7446 = vunpack.c.l.b16 %v7307
        %v7447 = vpack.c.b16 %v7444, %v7443
        %v7448 = vpack.c.b16 %v7446, %v7445
        %v7452 = vsel %vm4403, %v7432, 0
        %7454 = vmatprep.subr.bf16.mxu0 0
        %7455 = vmatpush1.bf16.msra.mxu0 %v7447
        %7456 = vmatprep.subr.bf16.mxu0 0
        %7457 = vmatpush1.bf16.msra.mxu0 %v7448
        %7458 = vmatprep.subr.bf16.mxu0 0
        %7459 = vmatpush1.bf16.msra.mxu0 0
        %7460 = vmatprep.subr.bf16.mxu0 0
        %7461 = vmatpush1.bf16.msra.mxu0 0
        %7462 = vmatprep.subr.bf16.mxu0 0
        %7463 = vmatpush1.bf16.msra.mxu0 0
        %7464 = vmatprep.subr.bf16.mxu0 0
        %7465 = vmatpush1.bf16.msra.mxu0 0
        %7466 = vmatprep.subr.bf16.mxu0 0
        %7467 = vmatpush1.bf16.msra.mxu0 0
        %7468 = vmatprep.subr.bf16.mxu0 0
        %7469 = vmatpush1.bf16.msra.mxu0 0
        %7470 = vmatprep.subr.bf16.mxu0 0
        %7471 = vmatpush1.bf16.msra.mxu0 0
        %7472 = vmatprep.subr.bf16.mxu0 0
        %7473 = vmatpush1.bf16.msra.mxu0 0
        %7474 = vmatprep.subr.bf16.mxu0 0
        %7475 = vmatpush1.bf16.msra.mxu0 0
        %7476 = vmatprep.subr.bf16.mxu0 0
        %7477 = vmatpush1.bf16.msra.mxu0 0
        %7478 = vmatprep.subr.bf16.mxu0 0
        %7479 = vmatpush1.bf16.msra.mxu0 0
        %7480 = vmatprep.subr.bf16.mxu0 0
        %7481 = vmatpush1.bf16.msra.mxu0 0
        %7482 = vmatprep.subr.bf16.mxu0 0
        %7483 = vmatpush1.bf16.msra.mxu0 0
        %7484 = vmatprep.subr.bf16.mxu0 0
        %7485 = vmatpush1.bf16.msra.mxu0 0
        %7486 = vmatprep.mubr.bf16.mxu0 0
        %7487 = vmatmul.mubr.bf16.gmra.mrb[0].mxu0 %v7452
        %v7488 = vpop.f32.mrb[0].mxu0
        %v7489 = vadd.f32 %v7437, %v7488
        %v7490 = vpop.f32.mrb[0].mxu0
        %v7491 = vpop.f32.mrb[0].mxu0
        %v7492 = vadd.f32 %v7437, %v7491
        %v7493 = vpop.f32.mrb[0].mxu0
        %7494 = vdwg.mxu0
        %v7495 = vld [vmem:[%s18] sm:$0xf]
        %v7496 = vld [vmem:[%s18 + $0x4] sm:$0xf]
        %v7497 = vld [vmem:[%s18 + $0x8] sm:$0xf]
        %v7498 = vld [vmem:[%s18 + $0xc] sm:$0xf]
        %v7499 = vld [vmem:[%s18 + $0x10] sm:$0xf]
        %v7500 = vld [vmem:[%s18 + $0x14] sm:$0xf]
        %v7501 = vld [vmem:[%s18 + $0x18] sm:$0xf]
        %v7502 = vld [vmem:[%s18 + $0x1c] sm:$0xf]
        %v7503 = vld [vmem:[%s18 + $0x20] sm:$0xf]
        %v7504 = vld [vmem:[%s18 + $0x24] sm:$0xf]
        %v7505 = vld [vmem:[%s18 + $0x28] sm:$0xf]
        %v7506 = vld [vmem:[%s18 + $0x2c] sm:$0xf]
        %v7507 = vld [vmem:[%s18 + $0x30] sm:$0xf]
        %v7508 = vld [vmem:[%s18 + $0x34] sm:$0xf]
        %v7509 = vld [vmem:[%s18 + $0x38] sm:$0xf]
        %v7510 = vld [vmem:[%s18 + $0x3c] sm:$0xf]
        %v7511 = vld [vmem:[%s19] sm:$0x1]
        %v7512 = vld [vmem:[%s20] sm:$0x1]
        %v7513 = vld [vmem:[%s21] sm:$0x1]
        %v7514 = vld [vmem:[%s22] sm:$0xf]
        %v7515 = vld [vmem:[%s22 + $0x4] sm:$0xf]
        %v7516 = vld [vmem:[%s22 + $0x8] sm:$0xf]
        %v7517 = vld [vmem:[%s22 + $0xc] sm:$0xf]
        %v7518 = vld [vmem:[%s23] sm:$0x1]
        %v7519 = vpack.c.bf16 %v7292, %v7289
        %v7521 = vlaneseq
        %v7522 = vshrl.u32 %v7521, 7
        %v7523 = vsub.s32 0, %v7522
        %v7524 = vrot.slane %v7511, %v7523
        %v7542 = vunpack.c.l.b16 %v7495
        %v7543 = vunpack.c.l.b16 %v7496
        %v7544 = vunpack.c.l.b16 %v7497
        %v7545 = vunpack.c.l.b16 %v7498
        %v7546 = vunpack.c.l.b16 %v7499
        %v7547 = vunpack.c.l.b16 %v7500
        %v7548 = vunpack.c.l.b16 %v7501
        %v7549 = vunpack.c.l.b16 %v7502
        %v7550 = vunpack.c.l.b16 %v7503
        %v7551 = vunpack.c.l.b16 %v7504
        %v7552 = vunpack.c.l.b16 %v7505
        %v7553 = vunpack.c.l.b16 %v7506
        %v7554 = vunpack.c.l.b16 %v7507
        %v7555 = vunpack.c.l.b16 %v7508
        %v7556 = vunpack.c.l.b16 %v7509
        %v7557 = vunpack.c.l.b16 %v7510
        %v7558 = vpack.c.b16 %v7543, %v7542
        %v7559 = vpack.c.b16 %v7545, %v7544
        %v7560 = vpack.c.b16 %v7547, %v7546
        %v7561 = vpack.c.b16 %v7549, %v7548
        %v7562 = vpack.c.b16 %v7551, %v7550
        %v7563 = vpack.c.b16 %v7553, %v7552
        %v7564 = vpack.c.b16 %v7555, %v7554
        %v7565 = vpack.c.b16 %v7557, %v7556
        %7574 = vmatprep.subr.bf16.mxu0 0
        %7575 = vmatpush1.bf16.msra.mxu0 %v7558
        %7576 = vmatprep.subr.bf16.mxu0 0
        %7577 = vmatpush1.bf16.msra.mxu0 %v7559
        %7578 = vmatprep.subr.bf16.mxu0 0
        %7579 = vmatpush1.bf16.msra.mxu0 %v7560
        %7580 = vmatprep.subr.bf16.mxu0 0
        %7581 = vmatpush1.bf16.msra.mxu0 %v7561
        %7582 = vmatprep.subr.bf16.mxu0 0
        %7583 = vmatpush1.bf16.msra.mxu0 %v7562
        %7584 = vmatprep.subr.bf16.mxu0 0
        %7585 = vmatpush1.bf16.msra.mxu0 %v7563
        %7586 = vmatprep.subr.bf16.mxu0 0
        %7587 = vmatpush1.bf16.msra.mxu0 %v7564
        %7588 = vmatprep.subr.bf16.mxu0 0
        %7589 = vmatpush1.bf16.msra.mxu0 %v7565
        %7590 = vmatprep.subr.bf16.mxu0 0
        %7591 = vmatpush1.bf16.msra.mxu0 0
        %7592 = vmatprep.subr.bf16.mxu0 0
        %7593 = vmatpush1.bf16.msra.mxu0 0
        %7594 = vmatprep.subr.bf16.mxu0 0
        %7595 = vmatpush1.bf16.msra.mxu0 0
        %7596 = vmatprep.subr.bf16.mxu0 0
        %7597 = vmatpush1.bf16.msra.mxu0 0
        %7598 = vmatprep.subr.bf16.mxu0 0
        %7599 = vmatpush1.bf16.msra.mxu0 0
        %7600 = vmatprep.subr.bf16.mxu0 0
        %7601 = vmatpush1.bf16.msra.mxu0 0
        %7602 = vmatprep.subr.bf16.mxu0 0
        %7603 = vmatpush1.bf16.msra.mxu0 0
        %7604 = vmatprep.subr.bf16.mxu0 0
        %7605 = vmatpush1.bf16.msra.mxu0 0
        %7606 = vmatprep.mubr.bf16.mxu0 0
        %7607 = vmatmul.mubr.bf16.gmra.mrb[0].mxu0 %v7519
        %v7608 = vpop.f32.mrb[0].mxu0
        %v7609 = vadd.f32 %v7524, %v7608
        %v7610 = vpop.f32.mrb[0].mxu0
        %v7611 = vpop.f32.mrb[0].mxu0
        %v7612 = vadd.f32 %v7524, %v7611
        %v7613 = vpop.f32.mrb[0].mxu0
        %7614 = vdwg.mxu0
        %v7615 = vsel %vm4403, %v7609, 0.0
        %v7616 = vrot.slane %v7615, 4
        %v7617 = vadd.f32 %v7615, %v7616
        %v7618 = vrot.slane %v7617, 2
        %v7619 = vadd.f32 %v7617, %v7618
        %v7620 = vrot.slane %v7619, 1
        %v7621 = vadd.f32 %v7619, %v7620
        %v7622 = vmul.f32 %v7621, %v7178
        %v7623 = vsub.f32 %v7609, %v7622
        %v7624 = vmul.f32 %v7623, %v7623
        %v7625 = vsel %vm4403, %v7624, 0.0
        %v7626 = vrot.slane %v7625, 4
        %v7627 = vadd.f32 %v7625, %v7626
        %v7628 = vrot.slane %v7627, 2
        %v7629 = vadd.f32 %v7627, %v7628
        %v7630 = vrot.slane %v7629, 1
        %v7631 = vadd.f32 %v7629, %v7630
        %v7632 = vmul.f32 %v7631, %v7178
        %v7633 = vadd.f32 %v7632, 1e-05
        %v7634 = vrsqrt.pop %v7633
        %v7635 = vmul.f32 %v7623, %v7634
        %v7636 = vsel %vm4403, %v7612, 0.0
        %v7637 = vrot.slane %v7636, 4
        %v7638 = vadd.f32 %v7636, %v7637
        %v7639 = vrot.slane %v7638, 2
        %v7640 = vadd.f32 %v7638, %v7639
        %v7641 = vrot.slane %v7640, 1
        %v7642 = vadd.f32 %v7640, %v7641
        %v7643 = vmul.f32 %v7642, %v7178
        %v7644 = vsub.f32 %v7612, %v7643
        %v7645 = vmul.f32 %v7644, %v7644
        %v7646 = vsel %vm4403, %v7645, 0.0
        %v7647 = vrot.slane %v7646, 4
        %v7648 = vadd.f32 %v7646, %v7647
        %v7649 = vrot.slane %v7648, 2
        %v7650 = vadd.f32 %v7648, %v7649
        %v7651 = vrot.slane %v7650, 1
        %v7652 = vadd.f32 %v7650, %v7651
        %v7653 = vmul.f32 %v7652, %v7178
        %v7654 = vadd.f32 %v7653, 1e-05
        %v7655 = vrsqrt.pop %v7654
        %v7656 = vmul.f32 %v7644, %v7655
        %v7658 = vlaneseq
        %v7659 = vshrl.u32 %v7658, 7
        %v7660 = vsub.s32 0, %v7659
        %v7661 = vrot.slane %v7512, %v7660
        %v7663 = vmul.f32 %v7635, %v7661
        %v7664 = vmul.f32 %v7656, %v7661
        %v7666 = vlaneseq
        %v7667 = vshrl.u32 %v7666, 7
        %v7668 = vsub.s32 0, %v7667
        %v7669 = vrot.slane %v7513, %v7668
        %v7671 = vadd.f32 %v7663, %v7669
        %v7672 = vadd.f32 %v7664, %v7669
        %v7673 = vmax.f32 %v7671, 0.0
        %v7674 = vmax.f32 %v7672, 0.0
        %v7675 = vpack.c.bf16 %v7674, %v7673
        %v7677 = vlaneseq
        %v7678 = vshrl.u32 %v7677, 7
        %v7679 = vsub.s32 0, %v7678
        %v7680 = vrot.slane %v7518, %v7679
        %v7686 = vunpack.c.l.b16 %v7514
        %v7687 = vunpack.c.l.b16 %v7515
        %v7688 = vunpack.c.l.b16 %v7516
        %v7689 = vunpack.c.l.b16 %v7517
        %v7690 = vpack.c.b16 %v7687, %v7686
        %v7691 = vpack.c.b16 %v7689, %v7688
        %v7695 = vsel %vm4403, %v7675, 0
        %7697 = vmatprep.subr.bf16.mxu0 0
        %7698 = vmatpush1.bf16.msra.mxu0 %v7690
        %7699 = vmatprep.subr.bf16.mxu0 0
        %7700 = vmatpush1.bf16.msra.mxu0 %v7691
        %7701 = vmatprep.subr.bf16.mxu0 0
        %7702 = vmatpush1.bf16.msra.mxu0 0
        %7703 = vmatprep.subr.bf16.mxu0 0
        %7704 = vmatpush1.bf16.msra.mxu0 0
        %7705 = vmatprep.subr.bf16.mxu0 0
        %7706 = vmatpush1.bf16.msra.mxu0 0
        %7707 = vmatprep.subr.bf16.mxu0 0
        %7708 = vmatpush1.bf16.msra.mxu0 0
        %7709 = vmatprep.subr.bf16.mxu0 0
        %7710 = vmatpush1.bf16.msra.mxu0 0
        %7711 = vmatprep.subr.bf16.mxu0 0
        %7712 = vmatpush1.bf16.msra.mxu0 0
        %7713 = vmatprep.subr.bf16.mxu0 0
        %7714 = vmatpush1.bf16.msra.mxu0 0
        %7715 = vmatprep.subr.bf16.mxu0 0
        %7716 = vmatpush1.bf16.msra.mxu0 0
        %7717 = vmatprep.subr.bf16.mxu0 0
        %7718 = vmatpush1.bf16.msra.mxu0 0
        %7719 = vmatprep.subr.bf16.mxu0 0
        %7720 = vmatpush1.bf16.msra.mxu0 0
        %7721 = vmatprep.subr.bf16.mxu0 0
        %7722 = vmatpush1.bf16.msra.mxu0 0
        %7723 = vmatprep.subr.bf16.mxu0 0
        %7724 = vmatpush1.bf16.msra.mxu0 0
        %7725 = vmatprep.subr.bf16.mxu0 0
        %7726 = vmatpush1.bf16.msra.mxu0 0
        %7727 = vmatprep.subr.bf16.mxu0 0
        %7728 = vmatpush1.bf16.msra.mxu0 0
        %7729 = vmatprep.mubr.bf16.mxu0 0
        %7730 = vmatmul.mubr.bf16.gmra.mrb[0].mxu0 %v7695
        %v7731 = vpop.f32.mrb[0].mxu0
        %v7732 = vadd.f32 %v7680, %v7731
        %v7733 = vpop.f32.mrb[0].mxu0
        %v7734 = vpop.f32.mrb[0].mxu0
        %v7735 = vadd.f32 %v7680, %v7734
        %v7736 = vpop.f32.mrb[0].mxu0
        %7737 = vdwg.mxu0
        %7738 = vst [vmem:[%s24] sm:$0xff] %v7732
        %7739 = vst [vmem:[%s24 + $0x8] sm:$0xff] %v7735
        %7740 = vst [vmem:[%s25] sm:$0xff] %v7489
        %7741 = vst [vmem:[%s25 + $0x8] sm:$0xff] %v7492
      $region120: #{byol_forward.1} parent=115 // pred_fallthru
        _
      // Predicated region
      $region121: #{byol_forward.1} parent=115 // pred_check
        %p7742 = pneg %p559
      $region122: #{byol_forward.1} parent=115 // pred_check_branch
        %7744 = sbr.rel (%p7742) target = $region124
      $region123: #{byol_forward.1} parent=115 // pred_region
        _
      $region124: #{byol_forward.1} parent=115 // pred_fallthru
        _
      // Predicated region
      $region125: #{byol_forward.1} parent=115 // pred_check
        %p7745 = pneg %p580
      $region126: #{byol_forward.1} parent=115 // pred_check_branch
        %7747 = sbr.rel (%p7745) target = $region128
      $region127: #{byol_forward.1} parent=115 // pred_region
        _
      $region128: #{byol_forward.1} parent=115 // pred_fallthru
        _
      // Predicated region
      $region129: #{byol_forward.1} parent=115 // pred_check
        %p7748 = pneg %p559
      $region130: #{byol_forward.1} parent=115 // pred_check_branch
        %7750 = sbr.rel (%p7748) target = $region132
      $region131: #{byol_forward.1} parent=115 // pred_region
        _
      $region132: #{byol_forward.1} parent=115 // pred_fallthru
        _
      // Predicated region
      $region133: #{byol_forward.1} parent=115 // pred_check
        %p7751 = pneg %p580
      $region134: #{byol_forward.1} parent=115 // pred_check_branch
        %7753 = sbr.rel (%p7751) target = $region136
      $region135: #{byol_forward.1} parent=115 // pred_region
        _
      $region136: #{byol_forward.1} parent=115 // pred_fallthru
        _
    $region116: #{byol_forward.1} parent=5 // pred_fallthru
      _
    %p7754 = scmp.le.s32.totalorder 2, %s32
    // Predicated region
    $region137: #{byol_forward.1} parent=5 // pred_check
      %p7755 = pneg %p7754
    $region138: #{byol_forward.1} parent=5 // pred_check_branch
      %7757 = sbr.rel (%p7755) target = $region140
    $region139: #{byol_forward.1} parent=5 // pred_region
      %s7758 = ssub.s32 %s32, 2
    $region140: #{byol_forward.1} parent=5 // pred_fallthru
      _
  $region6: #{byol_forward.1} parent=0 // loop_footer
    %s36 = sadd.s32 1, %s32
  $region7: #{byol_forward.1} parent=0 // loop_footer_branch
    %31 = sbr.rel target = $region3
  $region8: #{byol_forward.1} parent=0 // loop_exit
    _

</llo_original>
